<compile_context>
chip_gen: v5e
topology: v5e:2x2
jax: 0.10.0
libtpu: 0.0.40
codegen_flags: <defaults>
</compile_context>

<pallas_src>
import functools

import jax
import jax.numpy as jnp
import numpy as np
from jax import lax
from jax.experimental import pallas as pl
from jax.experimental.pallas import tpu as pltpu

LANES = 128
NUM_CLASSES = 10
IMG = 28  # 28x28x1 input is what the 64*4*4 fc1 dimension implies.


def _round_up(n, m):
    return (n + m - 1) // m * m


def _vmem_limit_bytes():
    """Generation-aware VMEM budget (v5e/v6e: 128 MiB physical, v7x: 64 MiB)."""
    try:
        cap = int(pltpu.get_tpu_info().vmem_capacity_bytes)
    except Exception:
        cap = 64 * 1024 * 1024
    return max(32 * 1024 * 1024, min((cap * 3) // 4, 96 * 1024 * 1024))


def _row_tiling(m, max_tile):
    """(tile, grid, padded_m).  Tiles are multiples of 16 (bf16 native sublane
    tile) and the grid has >=2 steps whenever m allows, so a 'parallel' grid
    axis can shard across v7x's two TensorCores (harmless on 1-TC chips)."""
    if m <= 32:
        tile = _round_up(m, 8)
    else:
        tile = min(_round_up(max_tile, 16), _round_up(pl.cdiv(m, 2), 16))
    grid = pl.cdiv(m, tile)
    return tile, grid, tile * grid


# ------------------------------ Pallas kernels ------------------------------

def conv_pool_kernel(x_ref, w_ref, b_ref, o_ref, *, slab_tab, n_kh):
    """Fused Conv2d(5x5, VALID, stride 1) + bias + ReLU + MaxPool2d(2,2).

    The conv is evaluated directly on a "parity slab" layout of the input
    (see conv_relu_pool): for each pool-window position (dh, dw), the conv
    output equals  sum_kh  slab(dh,kh) @ band_weight(dw,kh)  -- i.e. 20 plain
    2-D MXU matmuls.  No im2col tensor is ever materialized.

    x_ref : (6, TM, Kc)     bf16  6 slabs; TM rows = (image, pooled-row)
    w_ref : (2*KH, Kc, Nc)  bf16  banded weights, Nc = Wp*Cout (lane dense)
    b_ref : (1, Nc)         f32   bias tiled over the pooled-col positions
    o_ref : (TM, Nc)        bf16  pooled activations
    """
    pooled = None
    for dh in range(2):
        for dw in range(2):
            acc = None
            for kh in range(n_kh):
                y = jnp.dot(x_ref[slab_tab[dh][kh]], w_ref[dw * n_kh + kh],
                            preferred_element_type=jnp.float32)
                acc = y if acc is None else acc + y
            pooled = acc if pooled is None else jnp.maximum(pooled, acc)
    # relu(max_j(y_j) + b) == max_j(relu(y_j + b)): shared bias, relu monotone.
    o_ref[...] = jnp.maximum(pooled + b_ref[...], 0.0).astype(o_ref.dtype)


def mlp_kernel(x_ref, w1_ref, b1_ref, w2_ref, b2_ref, w3_ref, b3_ref, o_ref):
    """Fused Linear->ReLU->Linear->ReLU->Linear (dropout = eval identity).
    bf16 matmul inputs, f32 accumulation and epilogues; every operand is a
    full 128-lane multiple (hidden 64 and logits 10 are zero-padded)."""
    h = jnp.dot(x_ref[...], w1_ref[...], preferred_element_type=jnp.float32)
    h = jnp.maximum(h + b1_ref[...], 0.0)
    h = jnp.dot(h.astype(jnp.bfloat16), w2_ref[...],
                preferred_element_type=jnp.float32)
    h = jnp.maximum(h + b2_ref[...], 0.0)
    out = jnp.dot(h.astype(jnp.bfloat16), w3_ref[...],
                  preferred_element_type=jnp.float32)
    o_ref[...] = (out + b3_ref[...]).astype(o_ref.dtype)


# ------------------------------ layer wrappers -------------------------------

def conv_relu_pool(x_nhwc, wband, bias_row, *, max_tile_rows=512):
    """VALID 5x5 conv + bias + ReLU + MaxPool2d(2,2) as one pallas_call.

    x: (B, H, W, Cin) -> (B, Hp, Wp, Cout) bf16, where Hp = (H-4)//2.

    Input prep (cheap, no inflation beyond ~2-2.6x):
      slab(pi, a)[b*Hp + p, pj*Wd*Cin + s*Cin + ci] = x[b, 2*(a+p)+pi, 2*s+pj, ci]
    i.e. a space-to-depth by row/col parity plus 3 row-shifted copies (a=0..2).
    The conv output at (2p+dh, 2q+dw) then only needs slab(pi,a) with
    pi=(dh+kh)%2, a=(dh+kh)//2 -- a plain leading-dim index in the kernel.
    """
    B, H, W_in, Cin = x_nhwc.shape
    KH = wband.shape[0] // 2
    Hd, Wd = H // 2, W_in // 2
    Hp, Wp = (H - KH + 1) // 2, (W_in - KH + 1) // 2
    Kc, Nc = wband.shape[1], wband.shape[2]
    Cout = Nc // Wp
    assert Kc == 2 * Wd * Cin and Nc % LANES == 0

    xb = x_nhwc.astype(jnp.bfloat16)
    # (B, H, W, Cin) -> (pi, B, r, pj, s, ci) -> (2, B, Hd, 2*Wd*Cin)
    s2d = xb.reshape(B, Hd, 2, Wd, 2, Cin).transpose(2, 0, 1, 4, 3, 5)
    s2d = s2d.reshape(2, B, Hd, Kc)
    # three row-shifted copies (a = 0, 1, 2) -> (6, B*Hp, Kc), slab id = pi*3+a
    slabs = jnp.stack([s2d[:, :, a:a + Hp, :] for a in range(3)], axis=1)
    x_slab = slabs.reshape(6, B * Hp, Kc)

    M = B * Hp
    tile_m, grid_m, m_pad = _row_tiling(M, max_tile_rows)
    if m_pad != M:  # explicit zero padding -- no reliance on OOB semantics
        x_slab = jnp.pad(x_slab, ((0, 0), (0, m_pad - M), (0, 0)))

    slab_tab = tuple(
        tuple(((dh + kh) % 2) * 3 + (dh + kh) // 2 for kh in range(KH))
        for dh in range(2))
    kernel = functools.partial(conv_pool_kernel, slab_tab=slab_tab, n_kh=KH)

    out = pl.pallas_call(
        kernel,
        out_shape=jax.ShapeDtypeStruct((m_pad, Nc), jnp.bfloat16),
        grid_spec=pltpu.PrefetchScalarGridSpec(
            num_scalar_prefetch=0,
            grid=(grid_m,),
            in_specs=[
                pl.BlockSpec((6, tile_m, Kc), lambda i: (0, i, 0)),
                pl.BlockSpec(wband.shape, lambda i: (0, 0, 0)),   # resident
                pl.BlockSpec((1, Nc), lambda i: (0, 0)),
            ],
            out_specs=pl.BlockSpec((tile_m, Nc), lambda i: (i, 0)),
        ),
        compiler_params=pltpu.CompilerParams(
            dimension_semantics=("parallel",),
            vmem_limit_bytes=_vmem_limit_bytes()),
    )(x_slab, wband, bias_row)
    return out[:M].reshape(B, Hp, Wp, Cout)


def mlp(feat, kp, *, max_tile_rows=1024):
    """Fused 3-layer classifier, gridded over batch rows."""
    B, D = feat.shape
    D1 = kp["w1"].shape[1]
    D2p = kp["w2"].shape[1]
    Np = kp["w3"].shape[1]

    tile_b, grid_b, b_pad = _row_tiling(B, max_tile_rows)
    x = feat.astype(jnp.bfloat16)
    if b_pad != B:
        x = jnp.pad(x, ((0, b_pad - B), (0, 0)))

    out = pl.pallas_call(
        mlp_kernel,
        out_shape=jax.ShapeDtypeStruct((b_pad, Np), jnp.float32),
        grid_spec=pltpu.PrefetchScalarGridSpec(
            num_scalar_prefetch=0,
            grid=(grid_b,),
            in_specs=[
                pl.BlockSpec((tile_b, D), lambda i: (i, 0)),
                pl.BlockSpec((D, D1), lambda i: (0, 0)),
                pl.BlockSpec((1, D1), lambda i: (0, 0)),
                pl.BlockSpec((D1, D2p), lambda i: (0, 0)),
                pl.BlockSpec((1, D2p), lambda i: (0, 0)),
                pl.BlockSpec((D2p, Np), lambda i: (0, 0)),
                pl.BlockSpec((1, Np), lambda i: (0, 0)),
            ],
            out_specs=pl.BlockSpec((tile_b, Np), lambda i: (i, 0)),
        ),
        compiler_params=pltpu.CompilerParams(
            dimension_semantics=("parallel",),
            vmem_limit_bytes=_vmem_limit_bytes()),
    )(x, kp["w1"], kp["b1"], kp["w2"], kp["b2"], kp["w3"], kp["b3"])
    return out[:B]


# --------------------------- one-time parameter prep --------------------------

def _band_conv_weights(w_hwio, b, img_w):
    """Banded weight matrices for conv_pool_kernel.

    band[dw*KH + kh, pj*Wd*Cin + s*Cin + ci, q*Cout + co] = w[kh, kw, ci, co]
      with kw = 2*(s - q) + pj - dw, zero when kw is out of [0, KW).
    """
    KH, KW, Cin, Cout = w_hwio.shape
    Wd = img_w // 2
    Wp = (img_w - KW + 1) // 2
    w = np.asarray(jax.device_get(w_hwio), dtype=np.float32)
    band = np.zeros((2, KH, 2 * Wd * Cin, Wp * Cout), np.float32)
    for dw in range(2):
        for kh in range(KH):
            for pj in range(2):
                for q in range(Wp):
                    for s in range(Wd):
                        kw = 2 * (s - q) + pj - dw
                        if 0 <= kw < KW:
                            k0 = pj * Wd * Cin + s * Cin
                            band[dw, kh, k0:k0 + Cin,
                                 q * Cout:(q + 1) * Cout] = w[kh, kw]
    band = band.reshape(2 * KH, 2 * Wd * Cin, Wp * Cout)
    bias = np.tile(np.asarray(jax.device_get(b), np.float32).reshape(1, Cout),
                   (1, Wp))
    return jnp.asarray(band, jnp.bfloat16), jnp.asarray(bias, jnp.float32)


def prepare_params(p):
    """Host-side, one-time preprocessing of raw params into kernel layouts."""
    h1 = IMG
    h2 = (h1 - p["cw1"].shape[0] + 1) // 2          # 12
    h3 = (h2 - p["cw2"].shape[0] + 1) // 2          # 4
    c2 = p["cw2"].shape[3]                          # 64

    c1_w, c1_b = _band_conv_weights(p["cw1"], p["cb1"], h1)
    c2_w, c2_b = _band_conv_weights(p["cw2"], p["cb2"], h2)

    d1 = p["fw1"].shape[1]
    d2 = p["fw2"].shape[1]
    n_out = p["fw3"].shape[1]
    d2p = _round_up(d2, LANES)    # pad hidden 64 -> 128 lanes (exact)
    np_ = LANES                   # pad 10 logits -> 128 lanes

    # torch flattens NCHW; our conv output flattens NHWC -> permute fc1 rows
    # once, weight side (hoisted out of the forward pass).
    fw1 = (p["fw1"].reshape(c2, h3, h3, d1).transpose(1, 2, 0, 3)
           .reshape(h3 * h3 * c2, d1))

    return {
        "c1_w": c1_w, "c1_b": c1_b, "c2_w": c2_w, "c2_b": c2_b,
        "w1": fw1.astype(jnp.bfloat16),
        "b1": p["fb1"].astype(jnp.float32).reshape(1, d1),
        "w2": jnp.pad(p["fw2"].astype(jnp.bfloat16), ((0, 0), (0, d2p - d2))),
        "b2": jnp.pad(p["fb2"].astype(jnp.float32).reshape(1, d2),
                      ((0, 0), (0, d2p - d2))),
        "w3": jnp.pad(p["fw3"].astype(jnp.bfloat16),
                      ((0, d2p - d2), (0, np_ - n_out))),
        "b3": jnp.pad(p["fb3"].astype(jnp.float32).reshape(1, n_out),
                      ((0, 0), (0, np_ - n_out))),
    }


# -------------------------------- full forward --------------------------------

@jax.jit
def mynet_forward(x_nchw, kp):
    x = x_nchw.transpose(0, 2, 3, 1)                           # NCHW -> NHWC
    x = conv_relu_pool(x, kp["c1_w"], kp["c1_b"], max_tile_rows=1024)  # (B,12,12,32)
    x = conv_relu_pool(x, kp["c2_w"], kp["c2_b"], max_tile_rows=512)   # (B,4,4,64)
    feat = x.reshape(x.shape[0], -1)        # NHWC flatten (fc1 rows pre-permuted)
    logits = mlp(feat, kp, max_tile_rows=1024)
    return logits[:, :NUM_CLASSES]


def init_params(key):
    ks = jax.random.split(key, 10)
    f32 = jnp.float32

    def nrm(k, shape, scale):
        return (scale * jax.random.normal(k, shape)).astype(f32)

    return {
        "cw1": nrm(ks[0], (5, 5, 1, 32), 0.1),    "cb1": nrm(ks[1], (32,), 0.01),
        "cw2": nrm(ks[2], (5, 5, 32, 64), 0.05),  "cb2": nrm(ks[3], (64,), 0.01),
        "fw1": nrm(ks[4], (64 * 4 * 4, 128), 0.03), "fb1": nrm(ks[5], (128,), 0.01),
        "fw2": nrm(ks[6], (128, 64), 0.05),         "fb2": nrm(ks[7], (64,), 0.01),
        "fw3": nrm(ks[8], (64, 10), 0.1),           "fb3": nrm(ks[9], (10,), 0.01),
    }


# ------------------------------ pure-JAX reference -----------------------------

def reference_forward(x_nchw, p):
    """XLA reference with the same precision policy as the Pallas path
    (bf16 matmul/conv inputs, f32 accumulation, bf16 intermediates)."""
    bf, f32 = jnp.bfloat16, jnp.float32
    x = x_nchw.transpose(0, 2, 3, 1)

    def conv_relu_pool_ref(x, w, b):
        y = lax.conv_general_dilated(
            x.astype(bf), w.astype(bf), window_strides=(1, 1), padding="VALID",
            dimension_numbers=("NHWC", "HWIO", "NHWC"),
            preferred_element_type=f32)
        y = jnp.maximum(y + b.astype(f32), 0.0)
        B, H, W, C = y.shape
        y = jnp.max(y.reshape(B, H // 2, 2, W // 2, 2, C), axis=(2, 4))
        return y.astype(bf)

    x = conv_relu_pool_ref(x, p["cw1"], p["cb1"])
    x = conv_relu_pool_ref(x, p["cw2"], p["cb2"])
    f = x.transpose(0, 3, 1, 2).reshape(x.shape[0], -1)   # torch NCHW flatten

    def dense(a, w, b):
        return jnp.dot(a.astype(bf), w.astype(bf),
                       preferred_element_type=f32) + b.astype(f32)

    h = jnp.maximum(dense(f, p["fw1"], p["fb1"]), 0.0).astype(bf)
    h = jnp.maximum(dense(h, p["fw2"], p["fb2"]), 0.0).astype(bf)
    return dense(h, p["fw3"], p["fb3"])


if __name__ == "__main__":
    key = jax.random.PRNGKey(0)
    k_x, k_p = jax.random.split(key)
    # MNIST-style input implied by the module (28x28 -> 64*4*4 before the FC).
    x = jax.random.normal(k_x, (2, 1, 28, 28), dtype=jnp.float32)
    params = init_params(k_p)
    kparams = prepare_params(params)

    out = jax.block_until_ready(mynet_forward(x, kparams))
    assert out.shape == (2, NUM_CLASSES), out.shape

    ref = jax.block_until_ready(reference_forward(x, params))
    err = float(jnp.max(jnp.abs(out - ref)))
    # Both paths use bf16 inputs with f32 accumulation; only the f32 summation
    # order differs, so the results agree to well within this tolerance.
    assert jnp.allclose(out, ref, rtol=2e-2, atol=2e-2), f"max abs err {err}"

    print("KERNEL_OK")
</pallas_src>

<mosaic_0001>
module attributes {stable_mosaic.version = 11 : i64} {
  func.func @conv_pool_kernel(%arg0: i32, %arg1: memref<6x24x28xbf16, #tpu.memory_space<vmem>>, %arg2: memref<10x28x384xbf16, #tpu.memory_space<vmem>>, %arg3: memref<1x384xf32, #tpu.memory_space<vmem>>, %arg4: memref<24x384xbf16, #tpu.memory_space<vmem>>) attributes {dimension_semantics = [#tpu.dimension_semantics<parallel>], iteration_bounds = array<i64: 1>, scalar_prefetch = 0 : i64, scratch_operands = 0 : i64, tpu.core_type = #tpu.core_type<tc>, window_params = [{transform_indices = @transform_0, window_bounds = array<i64: 6, 24, 28>}, {pipeline_mode = #tpu.pipeline_mode<synchronous>, transform_indices = @transform_1, window_bounds = array<i64: 10, 28, 384>}, {pipeline_mode = #tpu.pipeline_mode<synchronous>, transform_indices = @transform_2, window_bounds = array<i64: 1, 384>}, {transform_indices = @transform_3, window_bounds = array<i64: 24, 384>}]} {
    %c0 = arith.constant 0 : index
    %c0_0 = arith.constant 0 : index
    %c0_1 = arith.constant 0 : index
    %0 = vector.load %arg1[%c0, %c0_0, %c0_1] : memref<6x24x28xbf16, #tpu.memory_space<vmem>>, vector<1x24x28xbf16>
    %1 = vector.shape_cast %0 : vector<1x24x28xbf16> to vector<24x28xbf16>
    %c0_2 = arith.constant 0 : index
    %c0_3 = arith.constant 0 : index
    %c0_4 = arith.constant 0 : index
    %2 = vector.load %arg2[%c0_2, %c0_3, %c0_4] : memref<10x28x384xbf16, #tpu.memory_space<vmem>>, vector<1x28x384xbf16>
    %3 = vector.shape_cast %2 : vector<1x28x384xbf16> to vector<28x384xbf16>
    %cst = arith.constant dense<0.000000e+00> : vector<24x384xf32>
    %4 = tpu.matmul %1, %3, %cst {dimension_numbers = #tpu.dot_dimension_numbers<[1], [0], [0], [1], [0, 0, 1, 1], [], []>} : vector<24x28xbf16>, vector<28x384xbf16>, vector<24x384xf32> -> vector<24x384xf32>
    %c3 = arith.constant 3 : index
    %c0_5 = arith.constant 0 : index
    %c0_6 = arith.constant 0 : index
    %5 = vector.load %arg1[%c3, %c0_5, %c0_6] : memref<6x24x28xbf16, #tpu.memory_space<vmem>>, vector<1x24x28xbf16>
    %6 = vector.shape_cast %5 : vector<1x24x28xbf16> to vector<24x28xbf16>
    %c1 = arith.constant 1 : index
    %c0_7 = arith.constant 0 : index
    %c0_8 = arith.constant 0 : index
    %7 = vector.load %arg2[%c1, %c0_7, %c0_8] : memref<10x28x384xbf16, #tpu.memory_space<vmem>>, vector<1x28x384xbf16>
    %8 = vector.shape_cast %7 : vector<1x28x384xbf16> to vector<28x384xbf16>
    %cst_9 = arith.constant dense<0.000000e+00> : vector<24x384xf32>
    %9 = tpu.matmul %6, %8, %cst_9 {dimension_numbers = #tpu.dot_dimension_numbers<[1], [0], [0], [1], [0, 0, 1, 1], [], []>} : vector<24x28xbf16>, vector<28x384xbf16>, vector<24x384xf32> -> vector<24x384xf32>
    %10 = arith.addf %4, %9 : vector<24x384xf32>
    %c1_10 = arith.constant 1 : index
    %c0_11 = arith.constant 0 : index
    %c0_12 = arith.constant 0 : index
    %11 = vector.load %arg1[%c1_10, %c0_11, %c0_12] : memref<6x24x28xbf16, #tpu.memory_space<vmem>>, vector<1x24x28xbf16>
    %12 = vector.shape_cast %11 : vector<1x24x28xbf16> to vector<24x28xbf16>
    %c2 = arith.constant 2 : index
    %c0_13 = arith.constant 0 : index
    %c0_14 = arith.constant 0 : index
    %13 = vector.load %arg2[%c2, %c0_13, %c0_14] : memref<10x28x384xbf16, #tpu.memory_space<vmem>>, vector<1x28x384xbf16>
    %14 = vector.shape_cast %13 : vector<1x28x384xbf16> to vector<28x384xbf16>
    %cst_15 = arith.constant dense<0.000000e+00> : vector<24x384xf32>
    %15 = tpu.matmul %12, %14, %cst_15 {dimension_numbers = #tpu.dot_dimension_numbers<[1], [0], [0], [1], [0, 0, 1, 1], [], []>} : vector<24x28xbf16>, vector<28x384xbf16>, vector<24x384xf32> -> vector<24x384xf32>
    %16 = arith.addf %10, %15 : vector<24x384xf32>
    %c4 = arith.constant 4 : index
    %c0_16 = arith.constant 0 : index
    %c0_17 = arith.constant 0 : index
    %17 = vector.load %arg1[%c4, %c0_16, %c0_17] : memref<6x24x28xbf16, #tpu.memory_space<vmem>>, vector<1x24x28xbf16>
    %18 = vector.shape_cast %17 : vector<1x24x28xbf16> to vector<24x28xbf16>
    %c3_18 = arith.constant 3 : index
    %c0_19 = arith.constant 0 : index
    %c0_20 = arith.constant 0 : index
    %19 = vector.load %arg2[%c3_18, %c0_19, %c0_20] : memref<10x28x384xbf16, #tpu.memory_space<vmem>>, vector<1x28x384xbf16>
    %20 = vector.shape_cast %19 : vector<1x28x384xbf16> to vector<28x384xbf16>
    %cst_21 = arith.constant dense<0.000000e+00> : vector<24x384xf32>
    %21 = tpu.matmul %18, %20, %cst_21 {dimension_numbers = #tpu.dot_dimension_numbers<[1], [0], [0], [1], [0, 0, 1, 1], [], []>} : vector<24x28xbf16>, vector<28x384xbf16>, vector<24x384xf32> -> vector<24x384xf32>
    %22 = arith.addf %16, %21 : vector<24x384xf32>
    %c2_22 = arith.constant 2 : index
    %c0_23 = arith.constant 0 : index
    %c0_24 = arith.constant 0 : index
    %23 = vector.load %arg1[%c2_22, %c0_23, %c0_24] : memref<6x24x28xbf16, #tpu.memory_space<vmem>>, vector<1x24x28xbf16>
    %24 = vector.shape_cast %23 : vector<1x24x28xbf16> to vector<24x28xbf16>
    %c4_25 = arith.constant 4 : index
    %c0_26 = arith.constant 0 : index
    %c0_27 = arith.constant 0 : index
    %25 = vector.load %arg2[%c4_25, %c0_26, %c0_27] : memref<10x28x384xbf16, #tpu.memory_space<vmem>>, vector<1x28x384xbf16>
    %26 = vector.shape_cast %25 : vector<1x28x384xbf16> to vector<28x384xbf16>
    %cst_28 = arith.constant dense<0.000000e+00> : vector<24x384xf32>
    %27 = tpu.matmul %24, %26, %cst_28 {dimension_numbers = #tpu.dot_dimension_numbers<[1], [0], [0], [1], [0, 0, 1, 1], [], []>} : vector<24x28xbf16>, vector<28x384xbf16>, vector<24x384xf32> -> vector<24x384xf32>
    %28 = arith.addf %22, %27 : vector<24x384xf32>
    %c0_29 = arith.constant 0 : index
    %c0_30 = arith.constant 0 : index
    %c0_31 = arith.constant 0 : index
    %29 = vector.load %arg1[%c0_29, %c0_30, %c0_31] : memref<6x24x28xbf16, #tpu.memory_space<vmem>>, vector<1x24x28xbf16>
    %30 = vector.shape_cast %29 : vector<1x24x28xbf16> to vector<24x28xbf16>
    %c5 = arith.constant 5 : index
    %c0_32 = arith.constant 0 : index
    %c0_33 = arith.constant 0 : index
    %31 = vector.load %arg2[%c5, %c0_32, %c0_33] : memref<10x28x384xbf16, #tpu.memory_space<vmem>>, vector<1x28x384xbf16>
    %32 = vector.shape_cast %31 : vector<1x28x384xbf16> to vector<28x384xbf16>
    %cst_34 = arith.constant dense<0.000000e+00> : vector<24x384xf32>
    %33 = tpu.matmul %30, %32, %cst_34 {dimension_numbers = #tpu.dot_dimension_numbers<[1], [0], [0], [1], [0, 0, 1, 1], [], []>} : vector<24x28xbf16>, vector<28x384xbf16>, vector<24x384xf32> -> vector<24x384xf32>
    %c3_35 = arith.constant 3 : index
    %c0_36 = arith.constant 0 : index
    %c0_37 = arith.constant 0 : index
    %34 = vector.load %arg1[%c3_35, %c0_36, %c0_37] : memref<6x24x28xbf16, #tpu.memory_space<vmem>>, vector<1x24x28xbf16>
    %35 = vector.shape_cast %34 : vector<1x24x28xbf16> to vector<24x28xbf16>
    %c6 = arith.constant 6 : index
    %c0_38 = arith.constant 0 : index
    %c0_39 = arith.constant 0 : index
    %36 = vector.load %arg2[%c6, %c0_38, %c0_39] : memref<10x28x384xbf16, #tpu.memory_space<vmem>>, vector<1x28x384xbf16>
    %37 = vector.shape_cast %36 : vector<1x28x384xbf16> to vector<28x384xbf16>
    %cst_40 = arith.constant dense<0.000000e+00> : vector<24x384xf32>
    %38 = tpu.matmul %35, %37, %cst_40 {dimension_numbers = #tpu.dot_dimension_numbers<[1], [0], [0], [1], [0, 0, 1, 1], [], []>} : vector<24x28xbf16>, vector<28x384xbf16>, vector<24x384xf32> -> vector<24x384xf32>
    %39 = arith.addf %33, %38 : vector<24x384xf32>
    %c1_41 = arith.constant 1 : index
    %c0_42 = arith.constant 0 : index
    %c0_43 = arith.constant 0 : index
    %40 = vector.load %arg1[%c1_41, %c0_42, %c0_43] : memref<6x24x28xbf16, #tpu.memory_space<vmem>>, vector<1x24x28xbf16>
    %41 = vector.shape_cast %40 : vector<1x24x28xbf16> to vector<24x28xbf16>
    %c7 = arith.constant 7 : index
    %c0_44 = arith.constant 0 : index
    %c0_45 = arith.constant 0 : index
    %42 = vector.load %arg2[%c7, %c0_44, %c0_45] : memref<10x28x384xbf16, #tpu.memory_space<vmem>>, vector<1x28x384xbf16>
    %43 = vector.shape_cast %42 : vector<1x28x384xbf16> to vector<28x384xbf16>
    %cst_46 = arith.constant dense<0.000000e+00> : vector<24x384xf32>
    %44 = tpu.matmul %41, %43, %cst_46 {dimension_numbers = #tpu.dot_dimension_numbers<[1], [0], [0], [1], [0, 0, 1, 1], [], []>} : vector<24x28xbf16>, vector<28x384xbf16>, vector<24x384xf32> -> vector<24x384xf32>
    %45 = arith.addf %39, %44 : vector<24x384xf32>
    %c4_47 = arith.constant 4 : index
    %c0_48 = arith.constant 0 : index
    %c0_49 = arith.constant 0 : index
    %46 = vector.load %arg1[%c4_47, %c0_48, %c0_49] : memref<6x24x28xbf16, #tpu.memory_space<vmem>>, vector<1x24x28xbf16>
    %47 = vector.shape_cast %46 : vector<1x24x28xbf16> to vector<24x28xbf16>
    %c8 = arith.constant 8 : index
    %c0_50 = arith.constant 0 : index
    %c0_51 = arith.constant 0 : index
    %48 = vector.load %arg2[%c8, %c0_50, %c0_51] : memref<10x28x384xbf16, #tpu.memory_space<vmem>>, vector<1x28x384xbf16>
    %49 = vector.shape_cast %48 : vector<1x28x384xbf16> to vector<28x384xbf16>
    %cst_52 = arith.constant dense<0.000000e+00> : vector<24x384xf32>
    %50 = tpu.matmul %47, %49, %cst_52 {dimension_numbers = #tpu.dot_dimension_numbers<[1], [0], [0], [1], [0, 0, 1, 1], [], []>} : vector<24x28xbf16>, vector<28x384xbf16>, vector<24x384xf32> -> vector<24x384xf32>
    %51 = arith.addf %45, %50 : vector<24x384xf32>
    %c2_53 = arith.constant 2 : index
    %c0_54 = arith.constant 0 : index
    %c0_55 = arith.constant 0 : index
    %52 = vector.load %arg1[%c2_53, %c0_54, %c0_55] : memref<6x24x28xbf16, #tpu.memory_space<vmem>>, vector<1x24x28xbf16>
    %53 = vector.shape_cast %52 : vector<1x24x28xbf16> to vector<24x28xbf16>
    %c9 = arith.constant 9 : index
    %c0_56 = arith.constant 0 : index
    %c0_57 = arith.constant 0 : index
    %54 = vector.load %arg2[%c9, %c0_56, %c0_57] : memref<10x28x384xbf16, #tpu.memory_space<vmem>>, vector<1x28x384xbf16>
    %55 = vector.shape_cast %54 : vector<1x28x384xbf16> to vector<28x384xbf16>
    %cst_58 = arith.constant dense<0.000000e+00> : vector<24x384xf32>
    %56 = tpu.matmul %53, %55, %cst_58 {dimension_numbers = #tpu.dot_dimension_numbers<[1], [0], [0], [1], [0, 0, 1, 1], [], []>} : vector<24x28xbf16>, vector<28x384xbf16>, vector<24x384xf32> -> vector<24x384xf32>
    %57 = arith.addf %51, %56 : vector<24x384xf32>
    %58 = arith.maximumf %28, %57 : vector<24x384xf32>
    %c3_59 = arith.constant 3 : index
    %c0_60 = arith.constant 0 : index
    %c0_61 = arith.constant 0 : index
    %59 = vector.load %arg1[%c3_59, %c0_60, %c0_61] : memref<6x24x28xbf16, #tpu.memory_space<vmem>>, vector<1x24x28xbf16>
    %60 = vector.shape_cast %59 : vector<1x24x28xbf16> to vector<24x28xbf16>
    %c0_62 = arith.constant 0 : index
    %c0_63 = arith.constant 0 : index
    %c0_64 = arith.constant 0 : index
    %61 = vector.load %arg2[%c0_62, %c0_63, %c0_64] : memref<10x28x384xbf16, #tpu.memory_space<vmem>>, vector<1x28x384xbf16>
    %62 = vector.shape_cast %61 : vector<1x28x384xbf16> to vector<28x384xbf16>
    %cst_65 = arith.constant dense<0.000000e+00> : vector<24x384xf32>
    %63 = tpu.matmul %60, %62, %cst_65 {dimension_numbers = #tpu.dot_dimension_numbers<[1], [0], [0], [1], [0, 0, 1, 1], [], []>} : vector<24x28xbf16>, vector<28x384xbf16>, vector<24x384xf32> -> vector<24x384xf32>
    %c1_66 = arith.constant 1 : index
    %c0_67 = arith.constant 0 : index
    %c0_68 = arith.constant 0 : index
    %64 = vector.load %arg1[%c1_66, %c0_67, %c0_68] : memref<6x24x28xbf16, #tpu.memory_space<vmem>>, vector<1x24x28xbf16>
    %65 = vector.shape_cast %64 : vector<1x24x28xbf16> to vector<24x28xbf16>
    %c1_69 = arith.constant 1 : index
    %c0_70 = arith.constant 0 : index
    %c0_71 = arith.constant 0 : index
    %66 = vector.load %arg2[%c1_69, %c0_70, %c0_71] : memref<10x28x384xbf16, #tpu.memory_space<vmem>>, vector<1x28x384xbf16>
    %67 = vector.shape_cast %66 : vector<1x28x384xbf16> to vector<28x384xbf16>
    %cst_72 = arith.constant dense<0.000000e+00> : vector<24x384xf32>
    %68 = tpu.matmul %65, %67, %cst_72 {dimension_numbers = #tpu.dot_dimension_numbers<[1], [0], [0], [1], [0, 0, 1, 1], [], []>} : vector<24x28xbf16>, vector<28x384xbf16>, vector<24x384xf32> -> vector<24x384xf32>
    %69 = arith.addf %63, %68 : vector<24x384xf32>
    %c4_73 = arith.constant 4 : index
    %c0_74 = arith.constant 0 : index
    %c0_75 = arith.constant 0 : index
    %70 = vector.load %arg1[%c4_73, %c0_74, %c0_75] : memref<6x24x28xbf16, #tpu.memory_space<vmem>>, vector<1x24x28xbf16>
    %71 = vector.shape_cast %70 : vector<1x24x28xbf16> to vector<24x28xbf16>
    %c2_76 = arith.constant 2 : index
    %c0_77 = arith.constant 0 : index
    %c0_78 = arith.constant 0 : index
    %72 = vector.load %arg2[%c2_76, %c0_77, %c0_78] : memref<10x28x384xbf16, #tpu.memory_space<vmem>>, vector<1x28x384xbf16>
    %73 = vector.shape_cast %72 : vector<1x28x384xbf16> to vector<28x384xbf16>
    %cst_79 = arith.constant dense<0.000000e+00> : vector<24x384xf32>
    %74 = tpu.matmul %71, %73, %cst_79 {dimension_numbers = #tpu.dot_dimension_numbers<[1], [0], [0], [1], [0, 0, 1, 1], [], []>} : vector<24x28xbf16>, vector<28x384xbf16>, vector<24x384xf32> -> vector<24x384xf32>
    %75 = arith.addf %69, %74 : vector<24x384xf32>
    %c2_80 = arith.constant 2 : index
    %c0_81 = arith.constant 0 : index
    %c0_82 = arith.constant 0 : index
    %76 = vector.load %arg1[%c2_80, %c0_81, %c0_82] : memref<6x24x28xbf16, #tpu.memory_space<vmem>>, vector<1x24x28xbf16>
    %77 = vector.shape_cast %76 : vector<1x24x28xbf16> to vector<24x28xbf16>
    %c3_83 = arith.constant 3 : index
    %c0_84 = arith.constant 0 : index
    %c0_85 = arith.constant 0 : index
    %78 = vector.load %arg2[%c3_83, %c0_84, %c0_85] : memref<10x28x384xbf16, #tpu.memory_space<vmem>>, vector<1x28x384xbf16>
    %79 = vector.shape_cast %78 : vector<1x28x384xbf16> to vector<28x384xbf16>
    %cst_86 = arith.constant dense<0.000000e+00> : vector<24x384xf32>
    %80 = tpu.matmul %77, %79, %cst_86 {dimension_numbers = #tpu.dot_dimension_numbers<[1], [0], [0], [1], [0, 0, 1, 1], [], []>} : vector<24x28xbf16>, vector<28x384xbf16>, vector<24x384xf32> -> vector<24x384xf32>
    %81 = arith.addf %75, %80 : vector<24x384xf32>
    %c5_87 = arith.constant 5 : index
    %c0_88 = arith.constant 0 : index
    %c0_89 = arith.constant 0 : index
    %82 = vector.load %arg1[%c5_87, %c0_88, %c0_89] : memref<6x24x28xbf16, #tpu.memory_space<vmem>>, vector<1x24x28xbf16>
    %83 = vector.shape_cast %82 : vector<1x24x28xbf16> to vector<24x28xbf16>
    %c4_90 = arith.constant 4 : index
    %c0_91 = arith.constant 0 : index
    %c0_92 = arith.constant 0 : index
    %84 = vector.load %arg2[%c4_90, %c0_91, %c0_92] : memref<10x28x384xbf16, #tpu.memory_space<vmem>>, vector<1x28x384xbf16>
    %85 = vector.shape_cast %84 : vector<1x28x384xbf16> to vector<28x384xbf16>
    %cst_93 = arith.constant dense<0.000000e+00> : vector<24x384xf32>
    %86 = tpu.matmul %83, %85, %cst_93 {dimension_numbers = #tpu.dot_dimension_numbers<[1], [0], [0], [1], [0, 0, 1, 1], [], []>} : vector<24x28xbf16>, vector<28x384xbf16>, vector<24x384xf32> -> vector<24x384xf32>
    %87 = arith.addf %81, %86 : vector<24x384xf32>
    %88 = arith.maximumf %58, %87 : vector<24x384xf32>
    %c3_94 = arith.constant 3 : index
    %c0_95 = arith.constant 0 : index
    %c0_96 = arith.constant 0 : index
    %89 = vector.load %arg1[%c3_94, %c0_95, %c0_96] : memref<6x24x28xbf16, #tpu.memory_space<vmem>>, vector<1x24x28xbf16>
    %90 = vector.shape_cast %89 : vector<1x24x28xbf16> to vector<24x28xbf16>
    %c5_97 = arith.constant 5 : index
    %c0_98 = arith.constant 0 : index
    %c0_99 = arith.constant 0 : index
    %91 = vector.load %arg2[%c5_97, %c0_98, %c0_99] : memref<10x28x384xbf16, #tpu.memory_space<vmem>>, vector<1x28x384xbf16>
    %92 = vector.shape_cast %91 : vector<1x28x384xbf16> to vector<28x384xbf16>
    %cst_100 = arith.constant dense<0.000000e+00> : vector<24x384xf32>
    %93 = tpu.matmul %90, %92, %cst_100 {dimension_numbers = #tpu.dot_dimension_numbers<[1], [0], [0], [1], [0, 0, 1, 1], [], []>} : vector<24x28xbf16>, vector<28x384xbf16>, vector<24x384xf32> -> vector<24x384xf32>
    %c1_101 = arith.constant 1 : index
    %c0_102 = arith.constant 0 : index
    %c0_103 = arith.constant 0 : index
    %94 = vector.load %arg1[%c1_101, %c0_102, %c0_103] : memref<6x24x28xbf16, #tpu.memory_space<vmem>>, vector<1x24x28xbf16>
    %95 = vector.shape_cast %94 : vector<1x24x28xbf16> to vector<24x28xbf16>
    %c6_104 = arith.constant 6 : index
    %c0_105 = arith.constant 0 : index
    %c0_106 = arith.constant 0 : index
    %96 = vector.load %arg2[%c6_104, %c0_105, %c0_106] : memref<10x28x384xbf16, #tpu.memory_space<vmem>>, vector<1x28x384xbf16>
    %97 = vector.shape_cast %96 : vector<1x28x384xbf16> to vector<28x384xbf16>
    %cst_107 = arith.constant dense<0.000000e+00> : vector<24x384xf32>
    %98 = tpu.matmul %95, %97, %cst_107 {dimension_numbers = #tpu.dot_dimension_numbers<[1], [0], [0], [1], [0, 0, 1, 1], [], []>} : vector<24x28xbf16>, vector<28x384xbf16>, vector<24x384xf32> -> vector<24x384xf32>
    %99 = arith.addf %93, %98 : vector<24x384xf32>
    %c4_108 = arith.constant 4 : index
    %c0_109 = arith.constant 0 : index
    %c0_110 = arith.constant 0 : index
    %100 = vector.load %arg1[%c4_108, %c0_109, %c0_110] : memref<6x24x28xbf16, #tpu.memory_space<vmem>>, vector<1x24x28xbf16>
    %101 = vector.shape_cast %100 : vector<1x24x28xbf16> to vector<24x28xbf16>
    %c7_111 = arith.constant 7 : index
    %c0_112 = arith.constant 0 : index
    %c0_113 = arith.constant 0 : index
    %102 = vector.load %arg2[%c7_111, %c0_112, %c0_113] : memref<10x28x384xbf16, #tpu.memory_space<vmem>>, vector<1x28x384xbf16>
    %103 = vector.shape_cast %102 : vector<1x28x384xbf16> to vector<28x384xbf16>
    %cst_114 = arith.constant dense<0.000000e+00> : vector<24x384xf32>
    %104 = tpu.matmul %101, %103, %cst_114 {dimension_numbers = #tpu.dot_dimension_numbers<[1], [0], [0], [1], [0, 0, 1, 1], [], []>} : vector<24x28xbf16>, vector<28x384xbf16>, vector<24x384xf32> -> vector<24x384xf32>
    %105 = arith.addf %99, %104 : vector<24x384xf32>
    %c2_115 = arith.constant 2 : index
    %c0_116 = arith.constant 0 : index
    %c0_117 = arith.constant 0 : index
    %106 = vector.load %arg1[%c2_115, %c0_116, %c0_117] : memref<6x24x28xbf16, #tpu.memory_space<vmem>>, vector<1x24x28xbf16>
    %107 = vector.shape_cast %106 : vector<1x24x28xbf16> to vector<24x28xbf16>
    %c8_118 = arith.constant 8 : index
    %c0_119 = arith.constant 0 : index
    %c0_120 = arith.constant 0 : index
    %108 = vector.load %arg2[%c8_118, %c0_119, %c0_120] : memref<10x28x384xbf16, #tpu.memory_space<vmem>>, vector<1x28x384xbf16>
    %109 = vector.shape_cast %108 : vector<1x28x384xbf16> to vector<28x384xbf16>
    %cst_121 = arith.constant dense<0.000000e+00> : vector<24x384xf32>
    %110 = tpu.matmul %107, %109, %cst_121 {dimension_numbers = #tpu.dot_dimension_numbers<[1], [0], [0], [1], [0, 0, 1, 1], [], []>} : vector<24x28xbf16>, vector<28x384xbf16>, vector<24x384xf32> -> vector<24x384xf32>
    %111 = arith.addf %105, %110 : vector<24x384xf32>
    %c5_122 = arith.constant 5 : index
    %c0_123 = arith.constant 0 : index
    %c0_124 = arith.constant 0 : index
    %112 = vector.load %arg1[%c5_122, %c0_123, %c0_124] : memref<6x24x28xbf16, #tpu.memory_space<vmem>>, vector<1x24x28xbf16>
    %113 = vector.shape_cast %112 : vector<1x24x28xbf16> to vector<24x28xbf16>
    %c9_125 = arith.constant 9 : index
    %c0_126 = arith.constant 0 : index
    %c0_127 = arith.constant 0 : index
    %114 = vector.load %arg2[%c9_125, %c0_126, %c0_127] : memref<10x28x384xbf16, #tpu.memory_space<vmem>>, vector<1x28x384xbf16>
    %115 = vector.shape_cast %114 : vector<1x28x384xbf16> to vector<28x384xbf16>
    %cst_128 = arith.constant dense<0.000000e+00> : vector<24x384xf32>
    %116 = tpu.matmul %113, %115, %cst_128 {dimension_numbers = #tpu.dot_dimension_numbers<[1], [0], [0], [1], [0, 0, 1, 1], [], []>} : vector<24x28xbf16>, vector<28x384xbf16>, vector<24x384xf32> -> vector<24x384xf32>
    %117 = arith.addf %111, %116 : vector<24x384xf32>
    %118 = arith.maximumf %88, %117 : vector<24x384xf32>
    %c0_129 = arith.constant 0 : index
    %c0_130 = arith.constant 0 : index
    %119 = vector.load %arg3[%c0_129, %c0_130] : memref<1x384xf32, #tpu.memory_space<vmem>>, vector<1x384xf32>
    %120 = vector.broadcast %119 : vector<1x384xf32> to vector<24x384xf32>
    %121 = arith.addf %118, %120 : vector<24x384xf32>
    %cst_131 = arith.constant 0.000000e+00 : f32
    %122 = vector.broadcast %cst_131 : f32 to vector<24x384xf32>
    %123 = arith.maximumf %121, %122 : vector<24x384xf32>
    %124 = arith.truncf %123 : vector<24x384xf32> to vector<24x384xbf16>
    %c0_132 = arith.constant 0 : index
    %c0_133 = arith.constant 0 : index
    %125 = vector.load %arg4[%c0_132, %c0_133] : memref<24x384xbf16, #tpu.memory_space<vmem>>, vector<24x384xbf16>
    tpu.vector_store %arg4[%c0_132, %c0_133], %124 {strides = array<i32>} : memref<24x384xbf16, #tpu.memory_space<vmem>>, vector<24x384xbf16>,
    return
  }
  func.func @transform_0(%arg0: i32) -> (i32, i32, i32) {
    %c0_i32 = arith.constant 0 : i32
    %c0_i32_0 = arith.constant 0 : i32
    %c0_i32_1 = arith.constant 0 : i32
    return %c0_i32, %arg0, %c0_i32_0 : i32, i32, i32
  }
  func.func @transform_1(%arg0: i32) -> (i32, i32, i32) {
    %c0_i32 = arith.constant 0 : i32
    %c0_i32_0 = arith.constant 0 : i32
    %c0_i32_1 = arith.constant 0 : i32
    %c0_i32_2 = arith.constant 0 : i32
    return %c0_i32, %c0_i32_0, %c0_i32_1 : i32, i32, i32
  }
  func.func @transform_2(%arg0: i32) -> (i32, i32) {
    %c0_i32 = arith.constant 0 : i32
    %c0_i32_0 = arith.constant 0 : i32
    %c0_i32_1 = arith.constant 0 : i32
    return %c0_i32, %c0_i32_0 : i32, i32
  }
  func.func @transform_3(%arg0: i32) -> (i32, i32) {
    %c0_i32 = arith.constant 0 : i32
    %c0_i32_0 = arith.constant 0 : i32
    return %arg0, %c0_i32 : i32, i32
  }
}

module attributes {stable_mosaic.version = 11 : i64} {
  func.func @conv_pool_kernel(%arg0: i32, %arg1: memref<6x8x384xbf16, #tpu.memory_space<vmem>>, %arg2: memref<10x384x256xbf16, #tpu.memory_space<vmem>>, %arg3: memref<1x256xf32, #tpu.memory_space<vmem>>, %arg4: memref<8x256xbf16, #tpu.memory_space<vmem>>) attributes {dimension_semantics = [#tpu.dimension_semantics<parallel>], iteration_bounds = array<i64: 1>, scalar_prefetch = 0 : i64, scratch_operands = 0 : i64, tpu.core_type = #tpu.core_type<tc>, window_params = [{transform_indices = @transform_0, window_bounds = array<i64: 6, 8, 384>}, {pipeline_mode = #tpu.pipeline_mode<synchronous>, transform_indices = @transform_1, window_bounds = array<i64: 10, 384, 256>}, {pipeline_mode = #tpu.pipeline_mode<synchronous>, transform_indices = @transform_2, window_bounds = array<i64: 1, 256>}, {transform_indices = @transform_3, window_bounds = array<i64: 8, 256>}]} {
    %c0 = arith.constant 0 : index
    %c0_0 = arith.constant 0 : index
    %c0_1 = arith.constant 0 : index
    %0 = vector.load %arg1[%c0, %c0_0, %c0_1] : memref<6x8x384xbf16, #tpu.memory_space<vmem>>, vector<1x8x384xbf16>
    %1 = vector.shape_cast %0 : vector<1x8x384xbf16> to vector<8x384xbf16>
    %c0_2 = arith.constant 0 : index
    %c0_3 = arith.constant 0 : index
    %c0_4 = arith.constant 0 : index
    %2 = vector.load %arg2[%c0_2, %c0_3, %c0_4] : memref<10x384x256xbf16, #tpu.memory_space<vmem>>, vector<1x384x256xbf16>
    %3 = vector.shape_cast %2 : vector<1x384x256xbf16> to vector<384x256xbf16>
    %cst = arith.constant dense<0.000000e+00> : vector<8x256xf32>
    %4 = tpu.matmul %1, %3, %cst {dimension_numbers = #tpu.dot_dimension_numbers<[1], [0], [0], [1], [0, 0, 1, 1], [], []>} : vector<8x384xbf16>, vector<384x256xbf16>, vector<8x256xf32> -> vector<8x256xf32>
    %c3 = arith.constant 3 : index
    %c0_5 = arith.constant 0 : index
    %c0_6 = arith.constant 0 : index
    %5 = vector.load %arg1[%c3, %c0_5, %c0_6] : memref<6x8x384xbf16, #tpu.memory_space<vmem>>, vector<1x8x384xbf16>
    %6 = vector.shape_cast %5 : vector<1x8x384xbf16> to vector<8x384xbf16>
    %c1 = arith.constant 1 : index
    %c0_7 = arith.constant 0 : index
    %c0_8 = arith.constant 0 : index
    %7 = vector.load %arg2[%c1, %c0_7, %c0_8] : memref<10x384x256xbf16, #tpu.memory_space<vmem>>, vector<1x384x256xbf16>
    %8 = vector.shape_cast %7 : vector<1x384x256xbf16> to vector<384x256xbf16>
    %cst_9 = arith.constant dense<0.000000e+00> : vector<8x256xf32>
    %9 = tpu.matmul %6, %8, %cst_9 {dimension_numbers = #tpu.dot_dimension_numbers<[1], [0], [0], [1], [0, 0, 1, 1], [], []>} : vector<8x384xbf16>, vector<384x256xbf16>, vector<8x256xf32> -> vector<8x256xf32>
    %10 = arith.addf %4, %9 : vector<8x256xf32>
    %c1_10 = arith.constant 1 : index
    %c0_11 = arith.constant 0 : index
    %c0_12 = arith.constant 0 : index
    %11 = vector.load %arg1[%c1_10, %c0_11, %c0_12] : memref<6x8x384xbf16, #tpu.memory_space<vmem>>, vector<1x8x384xbf16>
    %12 = vector.shape_cast %11 : vector<1x8x384xbf16> to vector<8x384xbf16>
    %c2 = arith.constant 2 : index
    %c0_13 = arith.constant 0 : index
    %c0_14 = arith.constant 0 : index
    %13 = vector.load %arg2[%c2, %c0_13, %c0_14] : memref<10x384x256xbf16, #tpu.memory_space<vmem>>, vector<1x384x256xbf16>
    %14 = vector.shape_cast %13 : vector<1x384x256xbf16> to vector<384x256xbf16>
    %cst_15 = arith.constant dense<0.000000e+00> : vector<8x256xf32>
    %15 = tpu.matmul %12, %14, %cst_15 {dimension_numbers = #tpu.dot_dimension_numbers<[1], [0], [0], [1], [0, 0, 1, 1], [], []>} : vector<8x384xbf16>, vector<384x256xbf16>, vector<8x256xf32> -> vector<8x256xf32>
    %16 = arith.addf %10, %15 : vector<8x256xf32>
    %c4 = arith.constant 4 : index
    %c0_16 = arith.constant 0 : index
    %c0_17 = arith.constant 0 : index
    %17 = vector.load %arg1[%c4, %c0_16, %c0_17] : memref<6x8x384xbf16, #tpu.memory_space<vmem>>, vector<1x8x384xbf16>
    %18 = vector.shape_cast %17 : vector<1x8x384xbf16> to vector<8x384xbf16>
    %c3_18 = arith.constant 3 : index
    %c0_19 = arith.constant 0 : index
    %c0_20 = arith.constant 0 : index
    %19 = vector.load %arg2[%c3_18, %c0_19, %c0_20] : memref<10x384x256xbf16, #tpu.memory_space<vmem>>, vector<1x384x256xbf16>
    %20 = vector.shape_cast %19 : vector<1x384x256xbf16> to vector<384x256xbf16>
    %cst_21 = arith.constant dense<0.000000e+00> : vector<8x256xf32>
    %21 = tpu.matmul %18, %20, %cst_21 {dimension_numbers = #tpu.dot_dimension_numbers<[1], [0], [0], [1], [0, 0, 1, 1], [], []>} : vector<8x384xbf16>, vector<384x256xbf16>, vector<8x256xf32> -> vector<8x256xf32>
    %22 = arith.addf %16, %21 : vector<8x256xf32>
    %c2_22 = arith.constant 2 : index
    %c0_23 = arith.constant 0 : index
    %c0_24 = arith.constant 0 : index
    %23 = vector.load %arg1[%c2_22, %c0_23, %c0_24] : memref<6x8x384xbf16, #tpu.memory_space<vmem>>, vector<1x8x384xbf16>
    %24 = vector.shape_cast %23 : vector<1x8x384xbf16> to vector<8x384xbf16>
    %c4_25 = arith.constant 4 : index
    %c0_26 = arith.constant 0 : index
    %c0_27 = arith.constant 0 : index
    %25 = vector.load %arg2[%c4_25, %c0_26, %c0_27] : memref<10x384x256xbf16, #tpu.memory_space<vmem>>, vector<1x384x256xbf16>
    %26 = vector.shape_cast %25 : vector<1x384x256xbf16> to vector<384x256xbf16>
    %cst_28 = arith.constant dense<0.000000e+00> : vector<8x256xf32>
    %27 = tpu.matmul %24, %26, %cst_28 {dimension_numbers = #tpu.dot_dimension_numbers<[1], [0], [0], [1], [0, 0, 1, 1], [], []>} : vector<8x384xbf16>, vector<384x256xbf16>, vector<8x256xf32> -> vector<8x256xf32>
    %28 = arith.addf %22, %27 : vector<8x256xf32>
    %c0_29 = arith.constant 0 : index
    %c0_30 = arith.constant 0 : index
    %c0_31 = arith.constant 0 : index
    %29 = vector.load %arg1[%c0_29, %c0_30, %c0_31] : memref<6x8x384xbf16, #tpu.memory_space<vmem>>, vector<1x8x384xbf16>
    %30 = vector.shape_cast %29 : vector<1x8x384xbf16> to vector<8x384xbf16>
    %c5 = arith.constant 5 : index
    %c0_32 = arith.constant 0 : index
    %c0_33 = arith.constant 0 : index
    %31 = vector.load %arg2[%c5, %c0_32, %c0_33] : memref<10x384x256xbf16, #tpu.memory_space<vmem>>, vector<1x384x256xbf16>
    %32 = vector.shape_cast %31 : vector<1x384x256xbf16> to vector<384x256xbf16>
    %cst_34 = arith.constant dense<0.000000e+00> : vector<8x256xf32>
    %33 = tpu.matmul %30, %32, %cst_34 {dimension_numbers = #tpu.dot_dimension_numbers<[1], [0], [0], [1], [0, 0, 1, 1], [], []>} : vector<8x384xbf16>, vector<384x256xbf16>, vector<8x256xf32> -> vector<8x256xf32>
    %c3_35 = arith.constant 3 : index
    %c0_36 = arith.constant 0 : index
    %c0_37 = arith.constant 0 : index
    %34 = vector.load %arg1[%c3_35, %c0_36, %c0_37] : memref<6x8x384xbf16, #tpu.memory_space<vmem>>, vector<1x8x384xbf16>
    %35 = vector.shape_cast %34 : vector<1x8x384xbf16> to vector<8x384xbf16>
    %c6 = arith.constant 6 : index
    %c0_38 = arith.constant 0 : index
    %c0_39 = arith.constant 0 : index
    %36 = vector.load %arg2[%c6, %c0_38, %c0_39] : memref<10x384x256xbf16, #tpu.memory_space<vmem>>, vector<1x384x256xbf16>
    %37 = vector.shape_cast %36 : vector<1x384x256xbf16> to vector<384x256xbf16>
    %cst_40 = arith.constant dense<0.000000e+00> : vector<8x256xf32>
    %38 = tpu.matmul %35, %37, %cst_40 {dimension_numbers = #tpu.dot_dimension_numbers<[1], [0], [0], [1], [0, 0, 1, 1], [], []>} : vector<8x384xbf16>, vector<384x256xbf16>, vector<8x256xf32> -> vector<8x256xf32>
    %39 = arith.addf %33, %38 : vector<8x256xf32>
    %c1_41 = arith.constant 1 : index
    %c0_42 = arith.constant 0 : index
    %c0_43 = arith.constant 0 : index
    %40 = vector.load %arg1[%c1_41, %c0_42, %c0_43] : memref<6x8x384xbf16, #tpu.memory_space<vmem>>, vector<1x8x384xbf16>
    %41 = vector.shape_cast %40 : vector<1x8x384xbf16> to vector<8x384xbf16>
    %c7 = arith.constant 7 : index
    %c0_44 = arith.constant 0 : index
    %c0_45 = arith.constant 0 : index
    %42 = vector.load %arg2[%c7, %c0_44, %c0_45] : memref<10x384x256xbf16, #tpu.memory_space<vmem>>, vector<1x384x256xbf16>
    %43 = vector.shape_cast %42 : vector<1x384x256xbf16> to vector<384x256xbf16>
    %cst_46 = arith.constant dense<0.000000e+00> : vector<8x256xf32>
    %44 = tpu.matmul %41, %43, %cst_46 {dimension_numbers = #tpu.dot_dimension_numbers<[1], [0], [0], [1], [0, 0, 1, 1], [], []>} : vector<8x384xbf16>, vector<384x256xbf16>, vector<8x256xf32> -> vector<8x256xf32>
    %45 = arith.addf %39, %44 : vector<8x256xf32>
    %c4_47 = arith.constant 4 : index
    %c0_48 = arith.constant 0 : index
    %c0_49 = arith.constant 0 : index
    %46 = vector.load %arg1[%c4_47, %c0_48, %c0_49] : memref<6x8x384xbf16, #tpu.memory_space<vmem>>, vector<1x8x384xbf16>
    %47 = vector.shape_cast %46 : vector<1x8x384xbf16> to vector<8x384xbf16>
    %c8 = arith.constant 8 : index
    %c0_50 = arith.constant 0 : index
    %c0_51 = arith.constant 0 : index
    %48 = vector.load %arg2[%c8, %c0_50, %c0_51] : memref<10x384x256xbf16, #tpu.memory_space<vmem>>, vector<1x384x256xbf16>
    %49 = vector.shape_cast %48 : vector<1x384x256xbf16> to vector<384x256xbf16>
    %cst_52 = arith.constant dense<0.000000e+00> : vector<8x256xf32>
    %50 = tpu.matmul %47, %49, %cst_52 {dimension_numbers = #tpu.dot_dimension_numbers<[1], [0], [0], [1], [0, 0, 1, 1], [], []>} : vector<8x384xbf16>, vector<384x256xbf16>, vector<8x256xf32> -> vector<8x256xf32>
    %51 = arith.addf %45, %50 : vector<8x256xf32>
    %c2_53 = arith.constant 2 : index
    %c0_54 = arith.constant 0 : index
    %c0_55 = arith.constant 0 : index
    %52 = vector.load %arg1[%c2_53, %c0_54, %c0_55] : memref<6x8x384xbf16, #tpu.memory_space<vmem>>, vector<1x8x384xbf16>
    %53 = vector.shape_cast %52 : vector<1x8x384xbf16> to vector<8x384xbf16>
    %c9 = arith.constant 9 : index
    %c0_56 = arith.constant 0 : index
    %c0_57 = arith.constant 0 : index
    %54 = vector.load %arg2[%c9, %c0_56, %c0_57] : memref<10x384x256xbf16, #tpu.memory_space<vmem>>, vector<1x384x256xbf16>
    %55 = vector.shape_cast %54 : vector<1x384x256xbf16> to vector<384x256xbf16>
    %cst_58 = arith.constant dense<0.000000e+00> : vector<8x256xf32>
    %56 = tpu.matmul %53, %55, %cst_58 {dimension_numbers = #tpu.dot_dimension_numbers<[1], [0], [0], [1], [0, 0, 1, 1], [], []>} : vector<8x384xbf16>, vector<384x256xbf16>, vector<8x256xf32> -> vector<8x256xf32>
    %57 = arith.addf %51, %56 : vector<8x256xf32>
    %58 = arith.maximumf %28, %57 : vector<8x256xf32>
    %c3_59 = arith.constant 3 : index
    %c0_60 = arith.constant 0 : index
    %c0_61 = arith.constant 0 : index
    %59 = vector.load %arg1[%c3_59, %c0_60, %c0_61] : memref<6x8x384xbf16, #tpu.memory_space<vmem>>, vector<1x8x384xbf16>
    %60 = vector.shape_cast %59 : vector<1x8x384xbf16> to vector<8x384xbf16>
    %c0_62 = arith.constant 0 : index
    %c0_63 = arith.constant 0 : index
    %c0_64 = arith.constant 0 : index
    %61 = vector.load %arg2[%c0_62, %c0_63, %c0_64] : memref<10x384x256xbf16, #tpu.memory_space<vmem>>, vector<1x384x256xbf16>
    %62 = vector.shape_cast %61 : vector<1x384x256xbf16> to vector<384x256xbf16>
    %cst_65 = arith.constant dense<0.000000e+00> : vector<8x256xf32>
    %63 = tpu.matmul %60, %62, %cst_65 {dimension_numbers = #tpu.dot_dimension_numbers<[1], [0], [0], [1], [0, 0, 1, 1], [], []>} : vector<8x384xbf16>, vector<384x256xbf16>, vector<8x256xf32> -> vector<8x256xf32>
    %c1_66 = arith.constant 1 : index
    %c0_67 = arith.constant 0 : index
    %c0_68 = arith.constant 0 : index
    %64 = vector.load %arg1[%c1_66, %c0_67, %c0_68] : memref<6x8x384xbf16, #tpu.memory_space<vmem>>, vector<1x8x384xbf16>
    %65 = vector.shape_cast %64 : vector<1x8x384xbf16> to vector<8x384xbf16>
    %c1_69 = arith.constant 1 : index
    %c0_70 = arith.constant 0 : index
    %c0_71 = arith.constant 0 : index
    %66 = vector.load %arg2[%c1_69, %c0_70, %c0_71] : memref<10x384x256xbf16, #tpu.memory_space<vmem>>, vector<1x384x256xbf16>
    %67 = vector.shape_cast %66 : vector<1x384x256xbf16> to vector<384x256xbf16>
    %cst_72 = arith.constant dense<0.000000e+00> : vector<8x256xf32>
    %68 = tpu.matmul %65, %67, %cst_72 {dimension_numbers = #tpu.dot_dimension_numbers<[1], [0], [0], [1], [0, 0, 1, 1], [], []>} : vector<8x384xbf16>, vector<384x256xbf16>, vector<8x256xf32> -> vector<8x256xf32>
    %69 = arith.addf %63, %68 : vector<8x256xf32>
    %c4_73 = arith.constant 4 : index
    %c0_74 = arith.constant 0 : index
    %c0_75 = arith.constant 0 : index
    %70 = vector.load %arg1[%c4_73, %c0_74, %c0_75] : memref<6x8x384xbf16, #tpu.memory_space<vmem>>, vector<1x8x384xbf16>
    %71 = vector.shape_cast %70 : vector<1x8x384xbf16> to vector<8x384xbf16>
    %c2_76 = arith.constant 2 : index
    %c0_77 = arith.constant 0 : index
    %c0_78 = arith.constant 0 : index
    %72 = vector.load %arg2[%c2_76, %c0_77, %c0_78] : memref<10x384x256xbf16, #tpu.memory_space<vmem>>, vector<1x384x256xbf16>
    %73 = vector.shape_cast %72 : vector<1x384x256xbf16> to vector<384x256xbf16>
    %cst_79 = arith.constant dense<0.000000e+00> : vector<8x256xf32>
    %74 = tpu.matmul %71, %73, %cst_79 {dimension_numbers = #tpu.dot_dimension_numbers<[1], [0], [0], [1], [0, 0, 1, 1], [], []>} : vector<8x384xbf16>, vector<384x256xbf16>, vector<8x256xf32> -> vector<8x256xf32>
    %75 = arith.addf %69, %74 : vector<8x256xf32>
    %c2_80 = arith.constant 2 : index
    %c0_81 = arith.constant 0 : index
    %c0_82 = arith.constant 0 : index
    %76 = vector.load %arg1[%c2_80, %c0_81, %c0_82] : memref<6x8x384xbf16, #tpu.memory_space<vmem>>, vector<1x8x384xbf16>
    %77 = vector.shape_cast %76 : vector<1x8x384xbf16> to vector<8x384xbf16>
    %c3_83 = arith.constant 3 : index
    %c0_84 = arith.constant 0 : index
    %c0_85 = arith.constant 0 : index
    %78 = vector.load %arg2[%c3_83, %c0_84, %c0_85] : memref<10x384x256xbf16, #tpu.memory_space<vmem>>, vector<1x384x256xbf16>
    %79 = vector.shape_cast %78 : vector<1x384x256xbf16> to vector<384x256xbf16>
    %cst_86 = arith.constant dense<0.000000e+00> : vector<8x256xf32>
    %80 = tpu.matmul %77, %79, %cst_86 {dimension_numbers = #tpu.dot_dimension_numbers<[1], [0], [0], [1], [0, 0, 1, 1], [], []>} : vector<8x384xbf16>, vector<384x256xbf16>, vector<8x256xf32> -> vector<8x256xf32>
    %81 = arith.addf %75, %80 : vector<8x256xf32>
    %c5_87 = arith.constant 5 : index
    %c0_88 = arith.constant 0 : index
    %c0_89 = arith.constant 0 : index
    %82 = vector.load %arg1[%c5_87, %c0_88, %c0_89] : memref<6x8x384xbf16, #tpu.memory_space<vmem>>, vector<1x8x384xbf16>
    %83 = vector.shape_cast %82 : vector<1x8x384xbf16> to vector<8x384xbf16>
    %c4_90 = arith.constant 4 : index
    %c0_91 = arith.constant 0 : index
    %c0_92 = arith.constant 0 : index
    %84 = vector.load %arg2[%c4_90, %c0_91, %c0_92] : memref<10x384x256xbf16, #tpu.memory_space<vmem>>, vector<1x384x256xbf16>
    %85 = vector.shape_cast %84 : vector<1x384x256xbf16> to vector<384x256xbf16>
    %cst_93 = arith.constant dense<0.000000e+00> : vector<8x256xf32>
    %86 = tpu.matmul %83, %85, %cst_93 {dimension_numbers = #tpu.dot_dimension_numbers<[1], [0], [0], [1], [0, 0, 1, 1], [], []>} : vector<8x384xbf16>, vector<384x256xbf16>, vector<8x256xf32> -> vector<8x256xf32>
    %87 = arith.addf %81, %86 : vector<8x256xf32>
    %88 = arith.maximumf %58, %87 : vector<8x256xf32>
    %c3_94 = arith.constant 3 : index
    %c0_95 = arith.constant 0 : index
    %c0_96 = arith.constant 0 : index
    %89 = vector.load %arg1[%c3_94, %c0_95, %c0_96] : memref<6x8x384xbf16, #tpu.memory_space<vmem>>, vector<1x8x384xbf16>
    %90 = vector.shape_cast %89 : vector<1x8x384xbf16> to vector<8x384xbf16>
    %c5_97 = arith.constant 5 : index
    %c0_98 = arith.constant 0 : index
    %c0_99 = arith.constant 0 : index
    %91 = vector.load %arg2[%c5_97, %c0_98, %c0_99] : memref<10x384x256xbf16, #tpu.memory_space<vmem>>, vector<1x384x256xbf16>
    %92 = vector.shape_cast %91 : vector<1x384x256xbf16> to vector<384x256xbf16>
    %cst_100 = arith.constant dense<0.000000e+00> : vector<8x256xf32>
    %93 = tpu.matmul %90, %92, %cst_100 {dimension_numbers = #tpu.dot_dimension_numbers<[1], [0], [0], [1], [0, 0, 1, 1], [], []>} : vector<8x384xbf16>, vector<384x256xbf16>, vector<8x256xf32> -> vector<8x256xf32>
    %c1_101 = arith.constant 1 : index
    %c0_102 = arith.constant 0 : index
    %c0_103 = arith.constant 0 : index
    %94 = vector.load %arg1[%c1_101, %c0_102, %c0_103] : memref<6x8x384xbf16, #tpu.memory_space<vmem>>, vector<1x8x384xbf16>
    %95 = vector.shape_cast %94 : vector<1x8x384xbf16> to vector<8x384xbf16>
    %c6_104 = arith.constant 6 : index
    %c0_105 = arith.constant 0 : index
    %c0_106 = arith.constant 0 : index
    %96 = vector.load %arg2[%c6_104, %c0_105, %c0_106] : memref<10x384x256xbf16, #tpu.memory_space<vmem>>, vector<1x384x256xbf16>
    %97 = vector.shape_cast %96 : vector<1x384x256xbf16> to vector<384x256xbf16>
    %cst_107 = arith.constant dense<0.000000e+00> : vector<8x256xf32>
    %98 = tpu.matmul %95, %97, %cst_107 {dimension_numbers = #tpu.dot_dimension_numbers<[1], [0], [0], [1], [0, 0, 1, 1], [], []>} : vector<8x384xbf16>, vector<384x256xbf16>, vector<8x256xf32> -> vector<8x256xf32>
    %99 = arith.addf %93, %98 : vector<8x256xf32>
    %c4_108 = arith.constant 4 : index
    %c0_109 = arith.constant 0 : index
    %c0_110 = arith.constant 0 : index
    %100 = vector.load %arg1[%c4_108, %c0_109, %c0_110] : memref<6x8x384xbf16, #tpu.memory_space<vmem>>, vector<1x8x384xbf16>
    %101 = vector.shape_cast %100 : vector<1x8x384xbf16> to vector<8x384xbf16>
    %c7_111 = arith.constant 7 : index
    %c0_112 = arith.constant 0 : index
    %c0_113 = arith.constant 0 : index
    %102 = vector.load %arg2[%c7_111, %c0_112, %c0_113] : memref<10x384x256xbf16, #tpu.memory_space<vmem>>, vector<1x384x256xbf16>
    %103 = vector.shape_cast %102 : vector<1x384x256xbf16> to vector<384x256xbf16>
    %cst_114 = arith.constant dense<0.000000e+00> : vector<8x256xf32>
    %104 = tpu.matmul %101, %103, %cst_114 {dimension_numbers = #tpu.dot_dimension_numbers<[1], [0], [0], [1], [0, 0, 1, 1], [], []>} : vector<8x384xbf16>, vector<384x256xbf16>, vector<8x256xf32> -> vector<8x256xf32>
    %105 = arith.addf %99, %104 : vector<8x256xf32>
    %c2_115 = arith.constant 2 : index
    %c0_116 = arith.constant 0 : index
    %c0_117 = arith.constant 0 : index
    %106 = vector.load %arg1[%c2_115, %c0_116, %c0_117] : memref<6x8x384xbf16, #tpu.memory_space<vmem>>, vector<1x8x384xbf16>
    %107 = vector.shape_cast %106 : vector<1x8x384xbf16> to vector<8x384xbf16>
    %c8_118 = arith.constant 8 : index
    %c0_119 = arith.constant 0 : index
    %c0_120 = arith.constant 0 : index
    %108 = vector.load %arg2[%c8_118, %c0_119, %c0_120] : memref<10x384x256xbf16, #tpu.memory_space<vmem>>, vector<1x384x256xbf16>
    %109 = vector.shape_cast %108 : vector<1x384x256xbf16> to vector<384x256xbf16>
    %cst_121 = arith.constant dense<0.000000e+00> : vector<8x256xf32>
    %110 = tpu.matmul %107, %109, %cst_121 {dimension_numbers = #tpu.dot_dimension_numbers<[1], [0], [0], [1], [0, 0, 1, 1], [], []>} : vector<8x384xbf16>, vector<384x256xbf16>, vector<8x256xf32> -> vector<8x256xf32>
    %111 = arith.addf %105, %110 : vector<8x256xf32>
    %c5_122 = arith.constant 5 : index
    %c0_123 = arith.constant 0 : index
    %c0_124 = arith.constant 0 : index
    %112 = vector.load %arg1[%c5_122, %c0_123, %c0_124] : memref<6x8x384xbf16, #tpu.memory_space<vmem>>, vector<1x8x384xbf16>
    %113 = vector.shape_cast %112 : vector<1x8x384xbf16> to vector<8x384xbf16>
    %c9_125 = arith.constant 9 : index
    %c0_126 = arith.constant 0 : index
    %c0_127 = arith.constant 0 : index
    %114 = vector.load %arg2[%c9_125, %c0_126, %c0_127] : memref<10x384x256xbf16, #tpu.memory_space<vmem>>, vector<1x384x256xbf16>
    %115 = vector.shape_cast %114 : vector<1x384x256xbf16> to vector<384x256xbf16>
    %cst_128 = arith.constant dense<0.000000e+00> : vector<8x256xf32>
    %116 = tpu.matmul %113, %115, %cst_128 {dimension_numbers = #tpu.dot_dimension_numbers<[1], [0], [0], [1], [0, 0, 1, 1], [], []>} : vector<8x384xbf16>, vector<384x256xbf16>, vector<8x256xf32> -> vector<8x256xf32>
    %117 = arith.addf %111, %116 : vector<8x256xf32>
    %118 = arith.maximumf %88, %117 : vector<8x256xf32>
    %c0_129 = arith.constant 0 : index
    %c0_130 = arith.constant 0 : index
    %119 = vector.load %arg3[%c0_129, %c0_130] : memref<1x256xf32, #tpu.memory_space<vmem>>, vector<1x256xf32>
    %120 = vector.broadcast %119 : vector<1x256xf32> to vector<8x256xf32>
    %121 = arith.addf %118, %120 : vector<8x256xf32>
    %cst_131 = arith.constant 0.000000e+00 : f32
    %122 = vector.broadcast %cst_131 : f32 to vector<8x256xf32>
    %123 = arith.maximumf %121, %122 : vector<8x256xf32>
    %124 = arith.truncf %123 : vector<8x256xf32> to vector<8x256xbf16>
    %c0_132 = arith.constant 0 : index
    %c0_133 = arith.constant 0 : index
    %125 = vector.load %arg4[%c0_132, %c0_133] : memref<8x256xbf16, #tpu.memory_space<vmem>>, vector<8x256xbf16>
    tpu.vector_store %arg4[%c0_132, %c0_133], %124 {strides = array<i32>} : memref<8x256xbf16, #tpu.memory_space<vmem>>, vector<8x256xbf16>,
    return
  }
  func.func @transform_0(%arg0: i32) -> (i32, i32, i32) {
    %c0_i32 = arith.constant 0 : i32
    %c0_i32_0 = arith.constant 0 : i32
    %c0_i32_1 = arith.constant 0 : i32
    return %c0_i32, %arg0, %c0_i32_0 : i32, i32, i32
  }
  func.func @transform_1(%arg0: i32) -> (i32, i32, i32) {
    %c0_i32 = arith.constant 0 : i32
    %c0_i32_0 = arith.constant 0 : i32
    %c0_i32_1 = arith.constant 0 : i32
    %c0_i32_2 = arith.constant 0 : i32
    return %c0_i32, %c0_i32_0, %c0_i32_1 : i32, i32, i32
  }
  func.func @transform_2(%arg0: i32) -> (i32, i32) {
    %c0_i32 = arith.constant 0 : i32
    %c0_i32_0 = arith.constant 0 : i32
    %c0_i32_1 = arith.constant 0 : i32
    return %c0_i32, %c0_i32_0 : i32, i32
  }
  func.func @transform_3(%arg0: i32) -> (i32, i32) {
    %c0_i32 = arith.constant 0 : i32
    %c0_i32_0 = arith.constant 0 : i32
    return %arg0, %c0_i32 : i32, i32
  }
}

module attributes {stable_mosaic.version = 11 : i64} {
  func.func @mlp_kernel(%arg0: i32, %arg1: memref<8x1024xbf16, #tpu.memory_space<vmem>>, %arg2: memref<1024x128xbf16, #tpu.memory_space<vmem>>, %arg3: memref<1x128xf32, #tpu.memory_space<vmem>>, %arg4: memref<128x128xbf16, #tpu.memory_space<vmem>>, %arg5: memref<1x128xf32, #tpu.memory_space<vmem>>, %arg6: memref<128x128xbf16, #tpu.memory_space<vmem>>, %arg7: memref<1x128xf32, #tpu.memory_space<vmem>>, %arg8: memref<8x128xf32, #tpu.memory_space<vmem>>) attributes {dimension_semantics = [#tpu.dimension_semantics<parallel>], iteration_bounds = array<i64: 1>, scalar_prefetch = 0 : i64, scratch_operands = 0 : i64, tpu.core_type = #tpu.core_type<tc>, window_params = [{transform_indices = @transform_0, window_bounds = array<i64: 8, 1024>}, {pipeline_mode = #tpu.pipeline_mode<synchronous>, transform_indices = @transform_1, window_bounds = array<i64: 1024, 128>}, {pipeline_mode = #tpu.pipeline_mode<synchronous>, transform_indices = @transform_2, window_bounds = array<i64: 1, 128>}, {pipeline_mode = #tpu.pipeline_mode<synchronous>, transform_indices = @transform_3, window_bounds = array<i64: 128, 128>}, {pipeline_mode = #tpu.pipeline_mode<synchronous>, transform_indices = @transform_4, window_bounds = array<i64: 1, 128>}, {pipeline_mode = #tpu.pipeline_mode<synchronous>, transform_indices = @transform_5, window_bounds = array<i64: 128, 128>}, {pipeline_mode = #tpu.pipeline_mode<synchronous>, transform_indices = @transform_6, window_bounds = array<i64: 1, 128>}, {transform_indices = @transform_7, window_bounds = array<i64: 8, 128>}]} {
    %c0 = arith.constant 0 : index
    %c0_0 = arith.constant 0 : index
    %0 = vector.load %arg1[%c0, %c0_0] : memref<8x1024xbf16, #tpu.memory_space<vmem>>, vector<8x1024xbf16>
    %c0_1 = arith.constant 0 : index
    %c0_2 = arith.constant 0 : index
    %1 = vector.load %arg2[%c0_1, %c0_2] : memref<1024x128xbf16, #tpu.memory_space<vmem>>, vector<1024x128xbf16>
    %cst = arith.constant dense<0.000000e+00> : vector<8x128xf32>
    %2 = tpu.matmul %0, %1, %cst {dimension_numbers = #tpu.dot_dimension_numbers<[1], [0], [0], [1], [0, 0, 1, 1], [], []>} : vector<8x1024xbf16>, vector<1024x128xbf16>, vector<8x128xf32> -> vector<8x128xf32>
    %c0_3 = arith.constant 0 : index
    %c0_4 = arith.constant 0 : index
    %3 = vector.load %arg3[%c0_3, %c0_4] : memref<1x128xf32, #tpu.memory_space<vmem>>, vector<1x128xf32>
    %4 = vector.broadcast %3 : vector<1x128xf32> to vector<8x128xf32>
    %5 = arith.addf %2, %4 : vector<8x128xf32>
    %cst_5 = arith.constant 0.000000e+00 : f32
    %6 = vector.broadcast %cst_5 : f32 to vector<8x128xf32>
    %7 = arith.maximumf %5, %6 : vector<8x128xf32>
    %8 = arith.truncf %7 : vector<8x128xf32> to vector<8x128xbf16>
    %c0_6 = arith.constant 0 : index
    %c0_7 = arith.constant 0 : index
    %9 = vector.load %arg4[%c0_6, %c0_7] : memref<128x128xbf16, #tpu.memory_space<vmem>>, vector<128x128xbf16>
    %cst_8 = arith.constant dense<0.000000e+00> : vector<8x128xf32>
    %10 = tpu.matmul %8, %9, %cst_8 {dimension_numbers = #tpu.dot_dimension_numbers<[1], [0], [0], [1], [0, 0, 1, 1], [], []>} : vector<8x128xbf16>, vector<128x128xbf16>, vector<8x128xf32> -> vector<8x128xf32>
    %c0_9 = arith.constant 0 : index
    %c0_10 = arith.constant 0 : index
    %11 = vector.load %arg5[%c0_9, %c0_10] : memref<1x128xf32, #tpu.memory_space<vmem>>, vector<1x128xf32>
    %12 = vector.broadcast %11 : vector<1x128xf32> to vector<8x128xf32>
    %13 = arith.addf %10, %12 : vector<8x128xf32>
    %cst_11 = arith.constant 0.000000e+00 : f32
    %14 = vector.broadcast %cst_11 : f32 to vector<8x128xf32>
    %15 = arith.maximumf %13, %14 : vector<8x128xf32>
    %16 = arith.truncf %15 : vector<8x128xf32> to vector<8x128xbf16>
    %c0_12 = arith.constant 0 : index
    %c0_13 = arith.constant 0 : index
    %17 = vector.load %arg6[%c0_12, %c0_13] : memref<128x128xbf16, #tpu.memory_space<vmem>>, vector<128x128xbf16>
    %cst_14 = arith.constant dense<0.000000e+00> : vector<8x128xf32>
    %18 = tpu.matmul %16, %17, %cst_14 {dimension_numbers = #tpu.dot_dimension_numbers<[1], [0], [0], [1], [0, 0, 1, 1], [], []>} : vector<8x128xbf16>, vector<128x128xbf16>, vector<8x128xf32> -> vector<8x128xf32>
    %c0_15 = arith.constant 0 : index
    %c0_16 = arith.constant 0 : index
    %19 = vector.load %arg7[%c0_15, %c0_16] : memref<1x128xf32, #tpu.memory_space<vmem>>, vector<1x128xf32>
    %20 = vector.broadcast %19 : vector<1x128xf32> to vector<8x128xf32>
    %21 = arith.addf %18, %20 : vector<8x128xf32>
    %c0_17 = arith.constant 0 : index
    %c0_18 = arith.constant 0 : index
    %22 = vector.load %arg8[%c0_17, %c0_18] : memref<8x128xf32, #tpu.memory_space<vmem>>, vector<8x128xf32>
    tpu.vector_store %arg8[%c0_17, %c0_18], %21 {strides = array<i32>} : memref<8x128xf32, #tpu.memory_space<vmem>>, vector<8x128xf32>,
    return
  }
  func.func @transform_0(%arg0: i32) -> (i32, i32) {
    %c0_i32 = arith.constant 0 : i32
    %c0_i32_0 = arith.constant 0 : i32
    return %arg0, %c0_i32 : i32, i32
  }
  func.func @transform_1(%arg0: i32) -> (i32, i32) {
    %c0_i32 = arith.constant 0 : i32
    %c0_i32_0 = arith.constant 0 : i32
    %c0_i32_1 = arith.constant 0 : i32
    return %c0_i32, %c0_i32_0 : i32, i32
  }
  func.func @transform_2(%arg0: i32) -> (i32, i32) {
    %c0_i32 = arith.constant 0 : i32
    %c0_i32_0 = arith.constant 0 : i32
    %c0_i32_1 = arith.constant 0 : i32
    return %c0_i32, %c0_i32_0 : i32, i32
  }
  func.func @transform_3(%arg0: i32) -> (i32, i32) {
    %c0_i32 = arith.constant 0 : i32
    %c0_i32_0 = arith.constant 0 : i32
    %c0_i32_1 = arith.constant 0 : i32
    return %c0_i32, %c0_i32_0 : i32, i32
  }
  func.func @transform_4(%arg0: i32) -> (i32, i32) {
    %c0_i32 = arith.constant 0 : i32
    %c0_i32_0 = arith.constant 0 : i32
    %c0_i32_1 = arith.constant 0 : i32
    return %c0_i32, %c0_i32_0 : i32, i32
  }
  func.func @transform_5(%arg0: i32) -> (i32, i32) {
    %c0_i32 = arith.constant 0 : i32
    %c0_i32_0 = arith.constant 0 : i32
    %c0_i32_1 = arith.constant 0 : i32
    return %c0_i32, %c0_i32_0 : i32, i32
  }
  func.func @transform_6(%arg0: i32) -> (i32, i32) {
    %c0_i32 = arith.constant 0 : i32
    %c0_i32_0 = arith.constant 0 : i32
    %c0_i32_1 = arith.constant 0 : i32
    return %c0_i32, %c0_i32_0 : i32, i32
  }
  func.func @transform_7(%arg0: i32) -> (i32, i32) {
    %c0_i32 = arith.constant 0 : i32
    %c0_i32_0 = arith.constant 0 : i32
    return %arg0, %c0_i32 : i32, i32
  }
}

</mosaic_0001>

<llo_original>
// kernel: mynet_forward.3
$region0: #{mynet_forward.3}
  #allocation0 [shape = 'u32[]', space=smem, size = 0x4, offset = 0x4, fixed_abs, tag = 'smem constant byte address 0x4 - core index']
  #allocation1 [shape = 'u32[72,128]{1,0:T(1,128)}', space=vmem, size = 0x9000, scoped, tag = 'internal scratch']
  %s0 = inlined_call_operand.vmem [shape: bf16[6,24,28], index: 0, kind: input, shape index: {}]
  %s1 = inlined_call_operand.hbm [shape: bf16[10,28,384], index: 1, kind: input, shape index: {}]
  %s2 = inlined_call_operand.hbm [shape: f32[1,384], index: 2, kind: input, shape index: {}]
  %s3 = inlined_call_operand.vmem [shape: bf16[24,384], index: 3, kind: output, shape index: {}]
  %s4 = sld [smem:[#allocation0]]
  $region30: #{mynet_forward.3} parent=0
    _
  %s6 = ssub.s32 1, %s4
  %s7 = scalar_select 0, %s6, %s4
  $region1: #{mynet_forward.3} parent=0
    #allocation2 [shape = 'u8[245760]{0}', space=vmem, size = 0x3c000, scoped, tag = 'input window, operand 1, single buffered']
    #allocation3 [shape = 's32[1]{0}', space=sflag, size = 0x4, scoped, tag = 'scoped memory for mynet_forward.3']
    #allocation4 [shape = 'u8[1536]{0}', space=vmem, size = 0x800, scoped, tag = 'input window, operand 2, single buffered']
    #allocation5 [shape = 's32[1]{0}', space=sflag, size = 0x4, scoped, tag = 'scoped memory for mynet_forward.3']
    %8 = vsyncpa [#allocation3], 0
    %9 = vsyncpa [#allocation5], 0
    // Predicated region
    $region2: #{mynet_forward.3} parent=1 // pred_check
      _
    $region3: #{mynet_forward.3} parent=1 // pred_check_branch
      %11 = sbr.rel (0) target = $region5
    $region4: #{mynet_forward.3} parent=1 // pred_region
      _
    $region5: #{mynet_forward.3} parent=1 // pred_fallthru
      _
    // Predicated region
    $region6: #{mynet_forward.3} parent=1 // pred_check
      _
    $region7: #{mynet_forward.3} parent=1 // pred_check_branch
      %13 = sbr.rel (0) target = $region9
    $region8: #{mynet_forward.3} parent=1 // pred_region
      %15 = vsyncadd [#allocation3], 0
      %s16 = sshll.u32 %s1, 4
      %s17 = int_to_ptr.hbm [resolvable:$true] %s16
      %s18 = sshll.u32 [#allocation2], 4
      %s19 = int_to_ptr.vmem [resolvable:$true] %s18
      %24 = dma.hbm_to_vmem [thread:$0]  %s17, 7680, %s19, [#allocation3], 192, 192, 12
    $region9: #{mynet_forward.3} parent=1 // pred_fallthru
      _
    // Predicated region
    $region10: #{mynet_forward.3} parent=1 // pred_check
      _
    $region11: #{mynet_forward.3} parent=1 // pred_check_branch
      %26 = sbr.rel (0) target = $region13
    $region12: #{mynet_forward.3} parent=1 // pred_region
      %28 = vsyncadd [#allocation5], 0
      %s30 = sshll.u32 %s2, 4
      %s31 = int_to_ptr.hbm [resolvable:$true] %s30
      %s32 = sshll.u32 [#allocation4], 4
      %s33 = int_to_ptr.vmem [resolvable:$true] %s32
      %35 = dma.hbm_to_vmem [thread:$0]  %s31, 48, %s33, [#allocation5]
    $region13: #{mynet_forward.3} parent=1 // pred_fallthru
      _
    // Predicated region
    $region14: #{mynet_forward.3} parent=1 // pred_check
      _
    $region15: #{mynet_forward.3} parent=1 // pred_check_branch
      %37 = sbr.rel (0) target = $region17
    $region16: #{mynet_forward.3} parent=1 // pred_region
      %39 = dma.done [#allocation3], 7680
    $region17: #{mynet_forward.3} parent=1 // pred_fallthru
      _
    // Predicated region
    $region18: #{mynet_forward.3} parent=1 // pred_check
      _
    $region19: #{mynet_forward.3} parent=1 // pred_check_branch
      %41 = sbr.rel (0) target = $region21
    $region20: #{mynet_forward.3} parent=1 // pred_region
      %43 = dma.done [#allocation5], 48
    $region21: #{mynet_forward.3} parent=1 // pred_fallthru
      _
    %v45 = vld [vmem:[%s0] sm:$0xf]
    %v46 = vld [vmem:[%s0 + $0x4] sm:$0xf]
    %v47 = vld [vmem:[%s0 + $0x8] sm:$0xf]
    %v48 = vld [vmem:[#allocation2] sm:$0xff]
    %v49 = vld [vmem:[#allocation2 + $0x8] sm:$0xf]
    %v50 = vld [vmem:[#allocation2 + $0xc] sm:$0xff]
    %v51 = vld [vmem:[#allocation2 + $0x14] sm:$0xf]
    %v52 = vld [vmem:[#allocation2 + $0x18] sm:$0xff]
    %v53 = vld [vmem:[#allocation2 + $0x20] sm:$0xf]
    %v54 = vld [vmem:[#allocation2 + $0x24] sm:$0x33]
    %v55 = vld [vmem:[#allocation2 + $0x2c] sm:$0x3]
    %s56 = scalar_lea.vmem %s0, 36
    %v57 = vld [vmem:[%s56] sm:$0xf]
    %v58 = vld [vmem:[%s56 + $0x4] sm:$0xf]
    %v59 = vld [vmem:[%s56 + $0x8] sm:$0xf]
    %s60 = scalar_lea.vmem [#allocation2], 48
    %v61 = vld [vmem:[%s60] sm:$0xff]
    %v62 = vld [vmem:[%s60 + $0x8] sm:$0xf]
    %v63 = vld [vmem:[%s60 + $0xc] sm:$0xff]
    %v64 = vld [vmem:[%s60 + $0x14] sm:$0xf]
    %v65 = vld [vmem:[%s60 + $0x18] sm:$0xff]
    %v66 = vld [vmem:[%s60 + $0x20] sm:$0xf]
    %v67 = vld [vmem:[%s60 + $0x24] sm:$0x33]
    %v68 = vld [vmem:[%s60 + $0x2c] sm:$0x3]
    %v72 = vunpack.c.l.b16 %v57
    %v73 = vunpack.c.l.b16 %v58
    %v74 = vunpack.c.l.b16 %v59
    %v75 = vpack.c.b16 %v73, %v72
    %v76 = vpack.c.b16 %v74, %v74
    %v85 = vunpack.c.l.b16 %v61
    %v86 = vunpack.c.h.b16 %v61
    %v87 = vunpack.c.l.b16 %v62
    %v88 = vunpack.c.l.b16 %v63
    %v89 = vunpack.c.h.b16 %v63
    %v90 = vunpack.c.l.b16 %v64
    %v91 = vunpack.c.l.b16 %v65
    %v92 = vunpack.c.h.b16 %v65
    %v93 = vunpack.c.l.b16 %v66
    %v94 = vunpack.c.l.b16 %v67
    %v95 = vunpack.c.h.b16 %v67
    %v96 = vunpack.c.l.b16 %v68
    %v97 = vpack.c.b16 %v88, %v85
    %v98 = vpack.c.b16 %v89, %v86
    %v99 = vpack.c.b16 %v90, %v87
    %v100 = vpack.c.b16 %v94, %v91
    %v101 = vpack.c.b16 %v95, %v92
    %v102 = vpack.c.b16 %v96, %v93
    %vm106 = vcmask 228352
    %v108 = vsel %vm106, %v75, 0
    %v111 = vsel %vm106, %v76, 0
    %vm113 = vcmask 1045504
    %v115 = vsel %vm113, %v100, 0
    %v118 = vsel %vm113, %v101, 0
    %v121 = vsel %vm113, %v102, 0
    %123 = vmatpush.bf16.msra.mxu0 0
    %124 = vmatpush.bf16.msra.mxu0 0
    %125 = vmatpush.bf16.msra.mxu0 0
    %126 = vmatpush.bf16.msra.mxu0 0
    %127 = vmatpush.bf16.msra.mxu0 0
    %128 = vmatpush.bf16.msra.mxu0 0
    %129 = vmatpush.bf16.msra.mxu0 %v115
    %130 = vmatpush.bf16.msra.mxu0 %v97
    %131 = vmatmul.bf16.gmra.mxu0 %v108
    %v132 = vpop.f32.mrf.mxu0
    %v133 = vadd.f32 0.0, %v132
    %v134 = vpop.f32.mrf.mxu0
    %v135 = vadd.f32 0.0, %v134
    %136 = vmatmul.bf16.gmra.mxu0 %v111
    %v137 = vpop.f32.mrf.mxu0
    %v138 = vadd.f32 0.0, %v137
    %v139 = vpop.f32.mrf.mxu0
    %140 = vdwg.mxu0
    %141 = vmatpush.bf16.msra.mxu0 0
    %142 = vmatpush.bf16.msra.mxu0 0
    %143 = vmatpush.bf16.msra.mxu0 0
    %144 = vmatpush.bf16.msra.mxu0 0
    %145 = vmatpush.bf16.msra.mxu0 0
    %146 = vmatpush.bf16.msra.mxu0 0
    %147 = vmatpush.bf16.msra.mxu0 %v118
    %148 = vmatpush.bf16.msra.mxu0 %v98
    %149 = vmatmul.bf16.gmra.mxu0 %v108
    %v150 = vpop.f32.mrf.mxu0
    %v151 = vadd.f32 0.0, %v150
    %v152 = vpop.f32.mrf.mxu0
    %v153 = vadd.f32 0.0, %v152
    %154 = vmatmul.bf16.gmra.mxu0 %v111
    %v155 = vpop.f32.mrf.mxu0
    %v156 = vadd.f32 0.0, %v155
    %v157 = vpop.f32.mrf.mxu0
    %158 = vdwg.mxu0
    %159 = vmatpush.bf16.msra.mxu0 0
    %160 = vmatpush.bf16.msra.mxu0 0
    %161 = vmatpush.bf16.msra.mxu0 0
    %162 = vmatpush.bf16.msra.mxu0 0
    %163 = vmatpush.bf16.msra.mxu0 0
    %164 = vmatpush.bf16.msra.mxu0 0
    %165 = vmatpush.bf16.msra.mxu0 %v121
    %166 = vmatpush.bf16.msra.mxu0 %v99
    %167 = vmatmul.bf16.gmra.mxu0 %v108
    %v168 = vpop.f32.mrf.mxu0
    %v169 = vadd.f32 0.0, %v168
    %v170 = vpop.f32.mrf.mxu0
    %v171 = vadd.f32 0.0, %v170
    %172 = vmatmul.bf16.gmra.mxu0 %v111
    %v173 = vpop.f32.mrf.mxu0
    %v174 = vadd.f32 0.0, %v173
    %v175 = vpop.f32.mrf.mxu0
    %176 = vdwg.mxu0
    %v180 = vunpack.c.l.b16 %v45
    %v181 = vunpack.c.l.b16 %v46
    %v182 = vunpack.c.l.b16 %v47
    %v183 = vpack.c.b16 %v181, %v180
    %v184 = vpack.c.b16 %v182, %v182
    %v193 = vunpack.c.l.b16 %v48
    %v194 = vunpack.c.h.b16 %v48
    %v195 = vunpack.c.l.b16 %v49
    %v196 = vunpack.c.l.b16 %v50
    %v197 = vunpack.c.h.b16 %v50
    %v198 = vunpack.c.l.b16 %v51
    %v199 = vunpack.c.l.b16 %v52
    %v200 = vunpack.c.h.b16 %v52
    %v201 = vunpack.c.l.b16 %v53
    %v202 = vunpack.c.l.b16 %v54
    %v203 = vunpack.c.h.b16 %v54
    %v204 = vunpack.c.l.b16 %v55
    %v205 = vpack.c.b16 %v196, %v193
    %v206 = vpack.c.b16 %v197, %v194
    %v207 = vpack.c.b16 %v198, %v195
    %v208 = vpack.c.b16 %v202, %v199
    %v209 = vpack.c.b16 %v203, %v200
    %v210 = vpack.c.b16 %v204, %v201
    %v215 = vsel %vm106, %v183, 0
    %v218 = vsel %vm106, %v184, 0
    %v221 = vsel %vm113, %v208, 0
    %v224 = vsel %vm113, %v209, 0
    %v227 = vsel %vm113, %v210, 0
    %229 = vmatpush.bf16.msra.mxu0 0
    %230 = vmatpush.bf16.msra.mxu0 0
    %231 = vmatpush.bf16.msra.mxu0 0
    %232 = vmatpush.bf16.msra.mxu0 0
    %233 = vmatpush.bf16.msra.mxu0 0
    %234 = vmatpush.bf16.msra.mxu0 0
    %235 = vmatpush.bf16.msra.mxu0 %v221
    %236 = vmatpush.bf16.msra.mxu0 %v205
    %237 = vmatmul.bf16.gmra.mxu0 %v215
    %v238 = vpop.f32.mrf.mxu0
    %v239 = vadd.f32 %v133, %v238
    %v240 = vpop.f32.mrf.mxu0
    %v241 = vadd.f32 %v135, %v240
    %242 = vmatmul.bf16.gmra.mxu0 %v218
    %v243 = vpop.f32.mrf.mxu0
    %v244 = vadd.f32 %v138, %v243
    %v245 = vpop.f32.mrf.mxu0
    %246 = vdwg.mxu0
    %247 = vmatpush.bf16.msra.mxu0 0
    %248 = vmatpush.bf16.msra.mxu0 0
    %249 = vmatpush.bf16.msra.mxu0 0
    %250 = vmatpush.bf16.msra.mxu0 0
    %251 = vmatpush.bf16.msra.mxu0 0
    %252 = vmatpush.bf16.msra.mxu0 0
    %253 = vmatpush.bf16.msra.mxu0 %v224
    %254 = vmatpush.bf16.msra.mxu0 %v206
    %255 = vmatmul.bf16.gmra.mxu0 %v215
    %v256 = vpop.f32.mrf.mxu0
    %v257 = vadd.f32 %v151, %v256
    %v258 = vpop.f32.mrf.mxu0
    %v259 = vadd.f32 %v153, %v258
    %260 = vmatmul.bf16.gmra.mxu0 %v218
    %v261 = vpop.f32.mrf.mxu0
    %v262 = vadd.f32 %v156, %v261
    %v263 = vpop.f32.mrf.mxu0
    %264 = vdwg.mxu0
    %265 = vmatpush.bf16.msra.mxu0 0
    %266 = vmatpush.bf16.msra.mxu0 0
    %267 = vmatpush.bf16.msra.mxu0 0
    %268 = vmatpush.bf16.msra.mxu0 0
    %269 = vmatpush.bf16.msra.mxu0 0
    %270 = vmatpush.bf16.msra.mxu0 0
    %271 = vmatpush.bf16.msra.mxu0 %v227
    %272 = vmatpush.bf16.msra.mxu0 %v207
    %273 = vmatmul.bf16.gmra.mxu0 %v215
    %v274 = vpop.f32.mrf.mxu0
    %v275 = vadd.f32 %v169, %v274
    %v276 = vpop.f32.mrf.mxu0
    %v277 = vadd.f32 %v171, %v276
    %278 = vmatmul.bf16.gmra.mxu0 %v218
    %v279 = vpop.f32.mrf.mxu0
    %v280 = vadd.f32 %v174, %v279
    %v281 = vpop.f32.mrf.mxu0
    %282 = vdwg.mxu0
    %s283 = scalar_lea.vmem %s0, 12
    %v284 = vld [vmem:[%s283] sm:$0xf]
    %v285 = vld [vmem:[%s283 + $0x4] sm:$0xf]
    %v286 = vld [vmem:[%s283 + $0x8] sm:$0xf]
    %s287 = scalar_lea.vmem [#allocation2], 96
    %v288 = vld [vmem:[%s287] sm:$0xff]
    %v289 = vld [vmem:[%s287 + $0x8] sm:$0xf]
    %v290 = vld [vmem:[%s287 + $0xc] sm:$0xff]
    %v291 = vld [vmem:[%s287 + $0x14] sm:$0xf]
    %v292 = vld [vmem:[%s287 + $0x18] sm:$0xff]
    %v293 = vld [vmem:[%s287 + $0x20] sm:$0xf]
    %v294 = vld [vmem:[%s287 + $0x24] sm:$0x33]
    %v295 = vld [vmem:[%s287 + $0x2c] sm:$0x3]
    %v299 = vunpack.c.l.b16 %v284
    %v300 = vunpack.c.l.b16 %v285
    %v301 = vunpack.c.l.b16 %v286
    %v302 = vpack.c.b16 %v300, %v299
    %v303 = vpack.c.b16 %v301, %v301
    %v312 = vunpack.c.l.b16 %v288
    %v313 = vunpack.c.h.b16 %v288
    %v314 = vunpack.c.l.b16 %v289
    %v315 = vunpack.c.l.b16 %v290
    %v316 = vunpack.c.h.b16 %v290
    %v317 = vunpack.c.l.b16 %v291
    %v318 = vunpack.c.l.b16 %v292
    %v319 = vunpack.c.h.b16 %v292
    %v320 = vunpack.c.l.b16 %v293
    %v321 = vunpack.c.l.b16 %v294
    %v322 = vunpack.c.h.b16 %v294
    %v323 = vunpack.c.l.b16 %v295
    %v324 = vpack.c.b16 %v315, %v312
    %v325 = vpack.c.b16 %v316, %v313
    %v326 = vpack.c.b16 %v317, %v314
    %v327 = vpack.c.b16 %v321, %v318
    %v328 = vpack.c.b16 %v322, %v319
    %v329 = vpack.c.b16 %v323, %v320
    %v334 = vsel %vm106, %v302, 0
    %v337 = vsel %vm106, %v303, 0
    %v340 = vsel %vm113, %v327, 0
    %v343 = vsel %vm113, %v328, 0
    %v346 = vsel %vm113, %v329, 0
    %348 = vmatpush.bf16.msra.mxu0 0
    %349 = vmatpush.bf16.msra.mxu0 0
    %350 = vmatpush.bf16.msra.mxu0 0
    %351 = vmatpush.bf16.msra.mxu0 0
    %352 = vmatpush.bf16.msra.mxu0 0
    %353 = vmatpush.bf16.msra.mxu0 0
    %354 = vmatpush.bf16.msra.mxu0 %v340
    %355 = vmatpush.bf16.msra.mxu0 %v324
    %356 = vmatmul.bf16.gmra.mxu0 %v334
    %v357 = vpop.f32.mrf.mxu0
    %v358 = vadd.f32 0.0, %v357
    %v359 = vpop.f32.mrf.mxu0
    %v360 = vadd.f32 0.0, %v359
    %361 = vmatmul.bf16.gmra.mxu0 %v337
    %v362 = vpop.f32.mrf.mxu0
    %v363 = vadd.f32 0.0, %v362
    %v364 = vpop.f32.mrf.mxu0
    %365 = vdwg.mxu0
    %366 = vmatpush.bf16.msra.mxu0 0
    %367 = vmatpush.bf16.msra.mxu0 0
    %368 = vmatpush.bf16.msra.mxu0 0
    %369 = vmatpush.bf16.msra.mxu0 0
    %370 = vmatpush.bf16.msra.mxu0 0
    %371 = vmatpush.bf16.msra.mxu0 0
    %372 = vmatpush.bf16.msra.mxu0 %v343
    %373 = vmatpush.bf16.msra.mxu0 %v325
    %374 = vmatmul.bf16.gmra.mxu0 %v334
    %v375 = vpop.f32.mrf.mxu0
    %v376 = vadd.f32 0.0, %v375
    %v377 = vpop.f32.mrf.mxu0
    %v378 = vadd.f32 0.0, %v377
    %379 = vmatmul.bf16.gmra.mxu0 %v337
    %v380 = vpop.f32.mrf.mxu0
    %v381 = vadd.f32 0.0, %v380
    %v382 = vpop.f32.mrf.mxu0
    %383 = vdwg.mxu0
    %384 = vmatpush.bf16.msra.mxu0 0
    %385 = vmatpush.bf16.msra.mxu0 0
    %386 = vmatpush.bf16.msra.mxu0 0
    %387 = vmatpush.bf16.msra.mxu0 0
    %388 = vmatpush.bf16.msra.mxu0 0
    %389 = vmatpush.bf16.msra.mxu0 0
    %390 = vmatpush.bf16.msra.mxu0 %v346
    %391 = vmatpush.bf16.msra.mxu0 %v326
    %392 = vmatmul.bf16.gmra.mxu0 %v334
    %v393 = vpop.f32.mrf.mxu0
    %v394 = vadd.f32 0.0, %v393
    %v395 = vpop.f32.mrf.mxu0
    %v396 = vadd.f32 0.0, %v395
    %397 = vmatmul.bf16.gmra.mxu0 %v337
    %v398 = vpop.f32.mrf.mxu0
    %v399 = vadd.f32 0.0, %v398
    %v400 = vpop.f32.mrf.mxu0
    %401 = vdwg.mxu0
    %v402 = vadd.f32 %v239, %v358
    %v403 = vadd.f32 %v257, %v376
    %v404 = vadd.f32 %v275, %v394
    %v405 = vadd.f32 %v241, %v360
    %v406 = vadd.f32 %v259, %v378
    %v407 = vadd.f32 %v277, %v396
    %v408 = vadd.f32 %v244, %v363
    %v409 = vadd.f32 %v262, %v381
    %v410 = vadd.f32 %v280, %v399
    %s411 = scalar_lea.vmem %s0, 48
    %v412 = vld [vmem:[%s411] sm:$0xf]
    %v413 = vld [vmem:[%s411 + $0x4] sm:$0xf]
    %v414 = vld [vmem:[%s411 + $0x8] sm:$0xf]
    %s415 = scalar_lea.vmem [#allocation2], 144
    %v416 = vld [vmem:[%s415] sm:$0xff]
    %v417 = vld [vmem:[%s415 + $0x8] sm:$0xf]
    %v418 = vld [vmem:[%s415 + $0xc] sm:$0xff]
    %v419 = vld [vmem:[%s415 + $0x14] sm:$0xf]
    %v420 = vld [vmem:[%s415 + $0x18] sm:$0xff]
    %v421 = vld [vmem:[%s415 + $0x20] sm:$0xf]
    %v422 = vld [vmem:[%s415 + $0x24] sm:$0x33]
    %v423 = vld [vmem:[%s415 + $0x2c] sm:$0x3]
    %v427 = vunpack.c.l.b16 %v412
    %v428 = vunpack.c.l.b16 %v413
    %v429 = vunpack.c.l.b16 %v414
    %v430 = vpack.c.b16 %v428, %v427
    %v431 = vpack.c.b16 %v429, %v429
    %v440 = vunpack.c.l.b16 %v416
    %v441 = vunpack.c.h.b16 %v416
    %v442 = vunpack.c.l.b16 %v417
    %v443 = vunpack.c.l.b16 %v418
    %v444 = vunpack.c.h.b16 %v418
    %v445 = vunpack.c.l.b16 %v419
    %v446 = vunpack.c.l.b16 %v420
    %v447 = vunpack.c.h.b16 %v420
    %v448 = vunpack.c.l.b16 %v421
    %v449 = vunpack.c.l.b16 %v422
    %v450 = vunpack.c.h.b16 %v422
    %v451 = vunpack.c.l.b16 %v423
    %v452 = vpack.c.b16 %v443, %v440
    %v453 = vpack.c.b16 %v444, %v441
    %v454 = vpack.c.b16 %v445, %v442
    %v455 = vpack.c.b16 %v449, %v446
    %v456 = vpack.c.b16 %v450, %v447
    %v457 = vpack.c.b16 %v451, %v448
    %v462 = vsel %vm106, %v430, 0
    %v465 = vsel %vm106, %v431, 0
    %v468 = vsel %vm113, %v455, 0
    %v471 = vsel %vm113, %v456, 0
    %v474 = vsel %vm113, %v457, 0
    %476 = vmatpush.bf16.msra.mxu0 0
    %477 = vmatpush.bf16.msra.mxu0 0
    %478 = vmatpush.bf16.msra.mxu0 0
    %479 = vmatpush.bf16.msra.mxu0 0
    %480 = vmatpush.bf16.msra.mxu0 0
    %481 = vmatpush.bf16.msra.mxu0 0
    %482 = vmatpush.bf16.msra.mxu0 %v468
    %483 = vmatpush.bf16.msra.mxu0 %v452
    %484 = vmatmul.bf16.gmra.mxu0 %v462
    %v485 = vpop.f32.mrf.mxu0
    %v486 = vadd.f32 0.0, %v485
    %v487 = vpop.f32.mrf.mxu0
    %v488 = vadd.f32 0.0, %v487
    %489 = vmatmul.bf16.gmra.mxu0 %v465
    %v490 = vpop.f32.mrf.mxu0
    %v491 = vadd.f32 0.0, %v490
    %v492 = vpop.f32.mrf.mxu0
    %493 = vdwg.mxu0
    %494 = vmatpush.bf16.msra.mxu0 0
    %495 = vmatpush.bf16.msra.mxu0 0
    %496 = vmatpush.bf16.msra.mxu0 0
    %497 = vmatpush.bf16.msra.mxu0 0
    %498 = vmatpush.bf16.msra.mxu0 0
    %499 = vmatpush.bf16.msra.mxu0 0
    %500 = vmatpush.bf16.msra.mxu0 %v471
    %501 = vmatpush.bf16.msra.mxu0 %v453
    %502 = vmatmul.bf16.gmra.mxu0 %v462
    %v503 = vpop.f32.mrf.mxu0
    %v504 = vadd.f32 0.0, %v503
    %v505 = vpop.f32.mrf.mxu0
    %v506 = vadd.f32 0.0, %v505
    %507 = vmatmul.bf16.gmra.mxu0 %v465
    %v508 = vpop.f32.mrf.mxu0
    %v509 = vadd.f32 0.0, %v508
    %v510 = vpop.f32.mrf.mxu0
    %511 = vdwg.mxu0
    %512 = vmatpush.bf16.msra.mxu0 0
    %513 = vmatpush.bf16.msra.mxu0 0
    %514 = vmatpush.bf16.msra.mxu0 0
    %515 = vmatpush.bf16.msra.mxu0 0
    %516 = vmatpush.bf16.msra.mxu0 0
    %517 = vmatpush.bf16.msra.mxu0 0
    %518 = vmatpush.bf16.msra.mxu0 %v474
    %519 = vmatpush.bf16.msra.mxu0 %v454
    %520 = vmatmul.bf16.gmra.mxu0 %v462
    %v521 = vpop.f32.mrf.mxu0
    %v522 = vadd.f32 0.0, %v521
    %v523 = vpop.f32.mrf.mxu0
    %v524 = vadd.f32 0.0, %v523
    %525 = vmatmul.bf16.gmra.mxu0 %v465
    %v526 = vpop.f32.mrf.mxu0
    %v527 = vadd.f32 0.0, %v526
    %v528 = vpop.f32.mrf.mxu0
    %529 = vdwg.mxu0
    %v530 = vadd.f32 %v402, %v486
    %v531 = vadd.f32 %v403, %v504
    %v532 = vadd.f32 %v404, %v522
    %v533 = vadd.f32 %v405, %v488
    %v534 = vadd.f32 %v406, %v506
    %v535 = vadd.f32 %v407, %v524
    %v536 = vadd.f32 %v408, %v491
    %v537 = vadd.f32 %v409, %v509
    %v538 = vadd.f32 %v410, %v527
    %s539 = scalar_lea.vmem %s0, 24
    %v540 = vld [vmem:[%s539] sm:$0xf]
    %v541 = vld [vmem:[%s539 + $0x4] sm:$0xf]
    %v542 = vld [vmem:[%s539 + $0x8] sm:$0xf]
    %s543 = scalar_lea.vmem [#allocation2], 192
    %v544 = vld [vmem:[%s543] sm:$0xff]
    %v545 = vld [vmem:[%s543 + $0x8] sm:$0xf]
    %v546 = vld [vmem:[%s543 + $0xc] sm:$0xff]
    %v547 = vld [vmem:[%s543 + $0x14] sm:$0xf]
    %v548 = vld [vmem:[%s543 + $0x18] sm:$0xff]
    %v549 = vld [vmem:[%s543 + $0x20] sm:$0xf]
    %v550 = vld [vmem:[%s543 + $0x24] sm:$0x33]
    %v551 = vld [vmem:[%s543 + $0x2c] sm:$0x3]
    %v555 = vunpack.c.l.b16 %v540
    %v556 = vunpack.c.l.b16 %v541
    %v557 = vunpack.c.l.b16 %v542
    %v558 = vpack.c.b16 %v556, %v555
    %v559 = vpack.c.b16 %v557, %v557
    %v568 = vunpack.c.l.b16 %v544
    %v569 = vunpack.c.h.b16 %v544
    %v570 = vunpack.c.l.b16 %v545
    %v571 = vunpack.c.l.b16 %v546
    %v572 = vunpack.c.h.b16 %v546
    %v573 = vunpack.c.l.b16 %v547
    %v574 = vunpack.c.l.b16 %v548
    %v575 = vunpack.c.h.b16 %v548
    %v576 = vunpack.c.l.b16 %v549
    %v577 = vunpack.c.l.b16 %v550
    %v578 = vunpack.c.h.b16 %v550
    %v579 = vunpack.c.l.b16 %v551
    %v580 = vpack.c.b16 %v571, %v568
    %v581 = vpack.c.b16 %v572, %v569
    %v582 = vpack.c.b16 %v573, %v570
    %v583 = vpack.c.b16 %v577, %v574
    %v584 = vpack.c.b16 %v578, %v575
    %v585 = vpack.c.b16 %v579, %v576
    %v590 = vsel %vm106, %v558, 0
    %v593 = vsel %vm106, %v559, 0
    %v596 = vsel %vm113, %v583, 0
    %v599 = vsel %vm113, %v584, 0
    %v602 = vsel %vm113, %v585, 0
    %604 = vmatpush.bf16.msra.mxu0 0
    %605 = vmatpush.bf16.msra.mxu0 0
    %606 = vmatpush.bf16.msra.mxu0 0
    %607 = vmatpush.bf16.msra.mxu0 0
    %608 = vmatpush.bf16.msra.mxu0 0
    %609 = vmatpush.bf16.msra.mxu0 0
    %610 = vmatpush.bf16.msra.mxu0 %v596
    %611 = vmatpush.bf16.msra.mxu0 %v580
    %612 = vmatmul.bf16.gmra.mxu0 %v590
    %v613 = vpop.f32.mrf.mxu0
    %v614 = vadd.f32 0.0, %v613
    %v615 = vpop.f32.mrf.mxu0
    %v616 = vadd.f32 0.0, %v615
    %617 = vmatmul.bf16.gmra.mxu0 %v593
    %v618 = vpop.f32.mrf.mxu0
    %v619 = vadd.f32 0.0, %v618
    %v620 = vpop.f32.mrf.mxu0
    %621 = vdwg.mxu0
    %622 = vmatpush.bf16.msra.mxu0 0
    %623 = vmatpush.bf16.msra.mxu0 0
    %624 = vmatpush.bf16.msra.mxu0 0
    %625 = vmatpush.bf16.msra.mxu0 0
    %626 = vmatpush.bf16.msra.mxu0 0
    %627 = vmatpush.bf16.msra.mxu0 0
    %628 = vmatpush.bf16.msra.mxu0 %v599
    %629 = vmatpush.bf16.msra.mxu0 %v581
    %630 = vmatmul.bf16.gmra.mxu0 %v590
    %v631 = vpop.f32.mrf.mxu0
    %v632 = vadd.f32 0.0, %v631
    %v633 = vpop.f32.mrf.mxu0
    %v634 = vadd.f32 0.0, %v633
    %635 = vmatmul.bf16.gmra.mxu0 %v593
    %v636 = vpop.f32.mrf.mxu0
    %v637 = vadd.f32 0.0, %v636
    %v638 = vpop.f32.mrf.mxu0
    %639 = vdwg.mxu0
    %640 = vmatpush.bf16.msra.mxu0 0
    %641 = vmatpush.bf16.msra.mxu0 0
    %642 = vmatpush.bf16.msra.mxu0 0
    %643 = vmatpush.bf16.msra.mxu0 0
    %644 = vmatpush.bf16.msra.mxu0 0
    %645 = vmatpush.bf16.msra.mxu0 0
    %646 = vmatpush.bf16.msra.mxu0 %v602
    %647 = vmatpush.bf16.msra.mxu0 %v582
    %648 = vmatmul.bf16.gmra.mxu0 %v590
    %v649 = vpop.f32.mrf.mxu0
    %v650 = vadd.f32 0.0, %v649
    %v651 = vpop.f32.mrf.mxu0
    %v652 = vadd.f32 0.0, %v651
    %653 = vmatmul.bf16.gmra.mxu0 %v593
    %v654 = vpop.f32.mrf.mxu0
    %v655 = vadd.f32 0.0, %v654
    %v656 = vpop.f32.mrf.mxu0
    %657 = vdwg.mxu0
    %v658 = vadd.f32 %v530, %v614
    %v659 = vadd.f32 %v531, %v632
    %v660 = vadd.f32 %v532, %v650
    %v661 = vadd.f32 %v533, %v616
    %v662 = vadd.f32 %v534, %v634
    %v663 = vadd.f32 %v535, %v652
    %v664 = vadd.f32 %v536, %v619
    %v665 = vadd.f32 %v537, %v637
    %v666 = vadd.f32 %v538, %v655
    %s667 = scalar_lea.vmem [#allocation2], 240
    %v668 = vld [vmem:[%s667] sm:$0xff]
    %v669 = vld [vmem:[%s667 + $0x8] sm:$0xf]
    %v670 = vld [vmem:[%s667 + $0xc] sm:$0xff]
    %v671 = vld [vmem:[%s667 + $0x14] sm:$0xf]
    %v672 = vld [vmem:[%s667 + $0x18] sm:$0xff]
    %v673 = vld [vmem:[%s667 + $0x20] sm:$0xf]
    %v674 = vld [vmem:[%s667 + $0x24] sm:$0x33]
    %v675 = vld [vmem:[%s667 + $0x2c] sm:$0x3]
    %s676 = scalar_lea.vmem [#allocation2], 288
    %v677 = vld [vmem:[%s676] sm:$0xff]
    %v678 = vld [vmem:[%s676 + $0x8] sm:$0xf]
    %v679 = vld [vmem:[%s676 + $0xc] sm:$0xff]
    %v680 = vld [vmem:[%s676 + $0x14] sm:$0xf]
    %v681 = vld [vmem:[%s676 + $0x18] sm:$0xff]
    %v682 = vld [vmem:[%s676 + $0x20] sm:$0xf]
    %v683 = vld [vmem:[%s676 + $0x24] sm:$0x33]
    %v684 = vld [vmem:[%s676 + $0x2c] sm:$0x3]
    %v693 = vunpack.c.l.b16 %v677
    %v694 = vunpack.c.h.b16 %v677
    %v695 = vunpack.c.l.b16 %v678
    %v696 = vunpack.c.l.b16 %v679
    %v697 = vunpack.c.h.b16 %v679
    %v698 = vunpack.c.l.b16 %v680
    %v699 = vunpack.c.l.b16 %v681
    %v700 = vunpack.c.h.b16 %v681
    %v701 = vunpack.c.l.b16 %v682
    %v702 = vunpack.c.l.b16 %v683
    %v703 = vunpack.c.h.b16 %v683
    %v704 = vunpack.c.l.b16 %v684
    %v705 = vpack.c.b16 %v696, %v693
    %v706 = vpack.c.b16 %v697, %v694
    %v707 = vpack.c.b16 %v698, %v695
    %v708 = vpack.c.b16 %v702, %v699
    %v709 = vpack.c.b16 %v703, %v700
    %v710 = vpack.c.b16 %v704, %v701
    %v715 = vsel %vm113, %v708, 0
    %v718 = vsel %vm113, %v709, 0
    %v721 = vsel %vm113, %v710, 0
    %723 = vmatpush.bf16.msra.mxu0 0
    %724 = vmatpush.bf16.msra.mxu0 0
    %725 = vmatpush.bf16.msra.mxu0 0
    %726 = vmatpush.bf16.msra.mxu0 0
    %727 = vmatpush.bf16.msra.mxu0 0
    %728 = vmatpush.bf16.msra.mxu0 0
    %729 = vmatpush.bf16.msra.mxu0 %v715
    %730 = vmatpush.bf16.msra.mxu0 %v705
    %731 = vmatmul.bf16.gmra.mxu0 %v108
    %v732 = vpop.f32.mrf.mxu0
    %v733 = vadd.f32 0.0, %v732
    %v734 = vpop.f32.mrf.mxu0
    %v735 = vadd.f32 0.0, %v734
    %736 = vmatmul.bf16.gmra.mxu0 %v111
    %v737 = vpop.f32.mrf.mxu0
    %v738 = vadd.f32 0.0, %v737
    %v739 = vpop.f32.mrf.mxu0
    %740 = vdwg.mxu0
    %741 = vmatpush.bf16.msra.mxu0 0
    %742 = vmatpush.bf16.msra.mxu0 0
    %743 = vmatpush.bf16.msra.mxu0 0
    %744 = vmatpush.bf16.msra.mxu0 0
    %745 = vmatpush.bf16.msra.mxu0 0
    %746 = vmatpush.bf16.msra.mxu0 0
    %747 = vmatpush.bf16.msra.mxu0 %v718
    %748 = vmatpush.bf16.msra.mxu0 %v706
    %749 = vmatmul.bf16.gmra.mxu0 %v108
    %v750 = vpop.f32.mrf.mxu0
    %v751 = vadd.f32 0.0, %v750
    %v752 = vpop.f32.mrf.mxu0
    %v753 = vadd.f32 0.0, %v752
    %754 = vmatmul.bf16.gmra.mxu0 %v111
    %v755 = vpop.f32.mrf.mxu0
    %v756 = vadd.f32 0.0, %v755
    %v757 = vpop.f32.mrf.mxu0
    %758 = vdwg.mxu0
    %759 = vmatpush.bf16.msra.mxu0 0
    %760 = vmatpush.bf16.msra.mxu0 0
    %761 = vmatpush.bf16.msra.mxu0 0
    %762 = vmatpush.bf16.msra.mxu0 0
    %763 = vmatpush.bf16.msra.mxu0 0
    %764 = vmatpush.bf16.msra.mxu0 0
    %765 = vmatpush.bf16.msra.mxu0 %v721
    %766 = vmatpush.bf16.msra.mxu0 %v707
    %767 = vmatmul.bf16.gmra.mxu0 %v108
    %v768 = vpop.f32.mrf.mxu0
    %v769 = vadd.f32 0.0, %v768
    %v770 = vpop.f32.mrf.mxu0
    %v771 = vadd.f32 0.0, %v770
    %772 = vmatmul.bf16.gmra.mxu0 %v111
    %v773 = vpop.f32.mrf.mxu0
    %v774 = vadd.f32 0.0, %v773
    %v775 = vpop.f32.mrf.mxu0
    %776 = vdwg.mxu0
    %v785 = vunpack.c.l.b16 %v668
    %v786 = vunpack.c.h.b16 %v668
    %v787 = vunpack.c.l.b16 %v669
    %v788 = vunpack.c.l.b16 %v670
    %v789 = vunpack.c.h.b16 %v670
    %v790 = vunpack.c.l.b16 %v671
    %v791 = vunpack.c.l.b16 %v672
    %v792 = vunpack.c.h.b16 %v672
    %v793 = vunpack.c.l.b16 %v673
    %v794 = vunpack.c.l.b16 %v674
    %v795 = vunpack.c.h.b16 %v674
    %v796 = vunpack.c.l.b16 %v675
    %v797 = vpack.c.b16 %v788, %v785
    %v798 = vpack.c.b16 %v789, %v786
    %v799 = vpack.c.b16 %v790, %v787
    %v800 = vpack.c.b16 %v794, %v791
    %v801 = vpack.c.b16 %v795, %v792
    %v802 = vpack.c.b16 %v796, %v793
    %v807 = vsel %vm113, %v800, 0
    %v810 = vsel %vm113, %v801, 0
    %v813 = vsel %vm113, %v802, 0
    %815 = vmatpush.bf16.msra.mxu0 0
    %816 = vmatpush.bf16.msra.mxu0 0
    %817 = vmatpush.bf16.msra.mxu0 0
    %818 = vmatpush.bf16.msra.mxu0 0
    %819 = vmatpush.bf16.msra.mxu0 0
    %820 = vmatpush.bf16.msra.mxu0 0
    %821 = vmatpush.bf16.msra.mxu0 %v807
    %822 = vmatpush.bf16.msra.mxu0 %v797
    %823 = vmatmul.bf16.gmra.mxu0 %v215
    %v824 = vpop.f32.mrf.mxu0
    %v825 = vadd.f32 %v733, %v824
    %v826 = vpop.f32.mrf.mxu0
    %v827 = vadd.f32 %v735, %v826
    %828 = vmatmul.bf16.gmra.mxu0 %v218
    %v829 = vpop.f32.mrf.mxu0
    %v830 = vadd.f32 %v738, %v829
    %v831 = vpop.f32.mrf.mxu0
    %832 = vdwg.mxu0
    %833 = vmatpush.bf16.msra.mxu0 0
    %834 = vmatpush.bf16.msra.mxu0 0
    %835 = vmatpush.bf16.msra.mxu0 0
    %836 = vmatpush.bf16.msra.mxu0 0
    %837 = vmatpush.bf16.msra.mxu0 0
    %838 = vmatpush.bf16.msra.mxu0 0
    %839 = vmatpush.bf16.msra.mxu0 %v810
    %840 = vmatpush.bf16.msra.mxu0 %v798
    %841 = vmatmul.bf16.gmra.mxu0 %v215
    %v842 = vpop.f32.mrf.mxu0
    %v843 = vadd.f32 %v751, %v842
    %v844 = vpop.f32.mrf.mxu0
    %v845 = vadd.f32 %v753, %v844
    %846 = vmatmul.bf16.gmra.mxu0 %v218
    %v847 = vpop.f32.mrf.mxu0
    %v848 = vadd.f32 %v756, %v847
    %v849 = vpop.f32.mrf.mxu0
    %850 = vdwg.mxu0
    %851 = vmatpush.bf16.msra.mxu0 0
    %852 = vmatpush.bf16.msra.mxu0 0
    %853 = vmatpush.bf16.msra.mxu0 0
    %854 = vmatpush.bf16.msra.mxu0 0
    %855 = vmatpush.bf16.msra.mxu0 0
    %856 = vmatpush.bf16.msra.mxu0 0
    %857 = vmatpush.bf16.msra.mxu0 %v813
    %858 = vmatpush.bf16.msra.mxu0 %v799
    %859 = vmatmul.bf16.gmra.mxu0 %v215
    %v860 = vpop.f32.mrf.mxu0
    %v861 = vadd.f32 %v769, %v860
    %v862 = vpop.f32.mrf.mxu0
    %v863 = vadd.f32 %v771, %v862
    %864 = vmatmul.bf16.gmra.mxu0 %v218
    %v865 = vpop.f32.mrf.mxu0
    %v866 = vadd.f32 %v774, %v865
    %v867 = vpop.f32.mrf.mxu0
    %868 = vdwg.mxu0
    %s869 = scalar_lea.vmem [#allocation2], 336
    %v870 = vld [vmem:[%s869] sm:$0xff]
    %v871 = vld [vmem:[%s869 + $0x8] sm:$0xf]
    %v872 = vld [vmem:[%s869 + $0xc] sm:$0xff]
    %v873 = vld [vmem:[%s869 + $0x14] sm:$0xf]
    %v874 = vld [vmem:[%s869 + $0x18] sm:$0xff]
    %v875 = vld [vmem:[%s869 + $0x20] sm:$0xf]
    %v876 = vld [vmem:[%s869 + $0x24] sm:$0x33]
    %v877 = vld [vmem:[%s869 + $0x2c] sm:$0x3]
    %v886 = vunpack.c.l.b16 %v870
    %v887 = vunpack.c.h.b16 %v870
    %v888 = vunpack.c.l.b16 %v871
    %v889 = vunpack.c.l.b16 %v872
    %v890 = vunpack.c.h.b16 %v872
    %v891 = vunpack.c.l.b16 %v873
    %v892 = vunpack.c.l.b16 %v874
    %v893 = vunpack.c.h.b16 %v874
    %v894 = vunpack.c.l.b16 %v875
    %v895 = vunpack.c.l.b16 %v876
    %v896 = vunpack.c.h.b16 %v876
    %v897 = vunpack.c.l.b16 %v877
    %v898 = vpack.c.b16 %v889, %v886
    %v899 = vpack.c.b16 %v890, %v887
    %v900 = vpack.c.b16 %v891, %v888
    %v901 = vpack.c.b16 %v895, %v892
    %v902 = vpack.c.b16 %v896, %v893
    %v903 = vpack.c.b16 %v897, %v894
    %v908 = vsel %vm113, %v901, 0
    %v911 = vsel %vm113, %v902, 0
    %v914 = vsel %vm113, %v903, 0
    %916 = vmatpush.bf16.msra.mxu0 0
    %917 = vmatpush.bf16.msra.mxu0 0
    %918 = vmatpush.bf16.msra.mxu0 0
    %919 = vmatpush.bf16.msra.mxu0 0
    %920 = vmatpush.bf16.msra.mxu0 0
    %921 = vmatpush.bf16.msra.mxu0 0
    %922 = vmatpush.bf16.msra.mxu0 %v908
    %923 = vmatpush.bf16.msra.mxu0 %v898
    %924 = vmatmul.bf16.gmra.mxu0 %v334
    %v925 = vpop.f32.mrf.mxu0
    %v926 = vadd.f32 0.0, %v925
    %v927 = vpop.f32.mrf.mxu0
    %v928 = vadd.f32 0.0, %v927
    %929 = vmatmul.bf16.gmra.mxu0 %v337
    %v930 = vpop.f32.mrf.mxu0
    %v931 = vadd.f32 0.0, %v930
    %v932 = vpop.f32.mrf.mxu0
    %933 = vdwg.mxu0
    %934 = vmatpush.bf16.msra.mxu0 0
    %935 = vmatpush.bf16.msra.mxu0 0
    %936 = vmatpush.bf16.msra.mxu0 0
    %937 = vmatpush.bf16.msra.mxu0 0
    %938 = vmatpush.bf16.msra.mxu0 0
    %939 = vmatpush.bf16.msra.mxu0 0
    %940 = vmatpush.bf16.msra.mxu0 %v911
    %941 = vmatpush.bf16.msra.mxu0 %v899
    %942 = vmatmul.bf16.gmra.mxu0 %v334
    %v943 = vpop.f32.mrf.mxu0
    %v944 = vadd.f32 0.0, %v943
    %v945 = vpop.f32.mrf.mxu0
    %v946 = vadd.f32 0.0, %v945
    %947 = vmatmul.bf16.gmra.mxu0 %v337
    %v948 = vpop.f32.mrf.mxu0
    %v949 = vadd.f32 0.0, %v948
    %v950 = vpop.f32.mrf.mxu0
    %951 = vdwg.mxu0
    %952 = vmatpush.bf16.msra.mxu0 0
    %953 = vmatpush.bf16.msra.mxu0 0
    %954 = vmatpush.bf16.msra.mxu0 0
    %955 = vmatpush.bf16.msra.mxu0 0
    %956 = vmatpush.bf16.msra.mxu0 0
    %957 = vmatpush.bf16.msra.mxu0 0
    %958 = vmatpush.bf16.msra.mxu0 %v914
    %959 = vmatpush.bf16.msra.mxu0 %v900
    %960 = vmatmul.bf16.gmra.mxu0 %v334
    %v961 = vpop.f32.mrf.mxu0
    %v962 = vadd.f32 0.0, %v961
    %v963 = vpop.f32.mrf.mxu0
    %v964 = vadd.f32 0.0, %v963
    %965 = vmatmul.bf16.gmra.mxu0 %v337
    %v966 = vpop.f32.mrf.mxu0
    %v967 = vadd.f32 0.0, %v966
    %v968 = vpop.f32.mrf.mxu0
    %969 = vdwg.mxu0
    %v970 = vadd.f32 %v825, %v926
    %v971 = vadd.f32 %v843, %v944
    %v972 = vadd.f32 %v861, %v962
    %v973 = vadd.f32 %v827, %v928
    %v974 = vadd.f32 %v845, %v946
    %v975 = vadd.f32 %v863, %v964
    %v976 = vadd.f32 %v830, %v931
    %v977 = vadd.f32 %v848, %v949
    %v978 = vadd.f32 %v866, %v967
    %s979 = scalar_lea.vmem [#allocation2], 384
    %v980 = vld [vmem:[%s979] sm:$0xff]
    %v981 = vld [vmem:[%s979 + $0x8] sm:$0xf]
    %v982 = vld [vmem:[%s979 + $0xc] sm:$0xff]
    %v983 = vld [vmem:[%s979 + $0x14] sm:$0xf]
    %v984 = vld [vmem:[%s979 + $0x18] sm:$0xff]
    %v985 = vld [vmem:[%s979 + $0x20] sm:$0xf]
    %v986 = vld [vmem:[%s979 + $0x24] sm:$0x33]
    %v987 = vld [vmem:[%s979 + $0x2c] sm:$0x3]
    %v996 = vunpack.c.l.b16 %v980
    %v997 = vunpack.c.h.b16 %v980
    %v998 = vunpack.c.l.b16 %v981
    %v999 = vunpack.c.l.b16 %v982
    %v1000 = vunpack.c.h.b16 %v982
    %v1001 = vunpack.c.l.b16 %v983
    %v1002 = vunpack.c.l.b16 %v984
    %v1003 = vunpack.c.h.b16 %v984
    %v1004 = vunpack.c.l.b16 %v985
    %v1005 = vunpack.c.l.b16 %v986
    %v1006 = vunpack.c.h.b16 %v986
    %v1007 = vunpack.c.l.b16 %v987
    %v1008 = vpack.c.b16 %v999, %v996
    %v1009 = vpack.c.b16 %v1000, %v997
    %v1010 = vpack.c.b16 %v1001, %v998
    %v1011 = vpack.c.b16 %v1005, %v1002
    %v1012 = vpack.c.b16 %v1006, %v1003
    %v1013 = vpack.c.b16 %v1007, %v1004
    %v1018 = vsel %vm113, %v1011, 0
    %v1021 = vsel %vm113, %v1012, 0
    %v1024 = vsel %vm113, %v1013, 0
    %1026 = vmatpush.bf16.msra.mxu0 0
    %1027 = vmatpush.bf16.msra.mxu0 0
    %1028 = vmatpush.bf16.msra.mxu0 0
    %1029 = vmatpush.bf16.msra.mxu0 0
    %1030 = vmatpush.bf16.msra.mxu0 0
    %1031 = vmatpush.bf16.msra.mxu0 0
    %1032 = vmatpush.bf16.msra.mxu0 %v1018
    %1033 = vmatpush.bf16.msra.mxu0 %v1008
    %1034 = vmatmul.bf16.gmra.mxu0 %v462
    %v1035 = vpop.f32.mrf.mxu0
    %v1036 = vadd.f32 0.0, %v1035
    %v1037 = vpop.f32.mrf.mxu0
    %v1038 = vadd.f32 0.0, %v1037
    %1039 = vmatmul.bf16.gmra.mxu0 %v465
    %v1040 = vpop.f32.mrf.mxu0
    %v1041 = vadd.f32 0.0, %v1040
    %v1042 = vpop.f32.mrf.mxu0
    %1043 = vdwg.mxu0
    %1044 = vmatpush.bf16.msra.mxu0 0
    %1045 = vmatpush.bf16.msra.mxu0 0
    %1046 = vmatpush.bf16.msra.mxu0 0
    %1047 = vmatpush.bf16.msra.mxu0 0
    %1048 = vmatpush.bf16.msra.mxu0 0
    %1049 = vmatpush.bf16.msra.mxu0 0
    %1050 = vmatpush.bf16.msra.mxu0 %v1021
    %1051 = vmatpush.bf16.msra.mxu0 %v1009
    %1052 = vmatmul.bf16.gmra.mxu0 %v462
    %v1053 = vpop.f32.mrf.mxu0
    %v1054 = vadd.f32 0.0, %v1053
    %v1055 = vpop.f32.mrf.mxu0
    %v1056 = vadd.f32 0.0, %v1055
    %1057 = vmatmul.bf16.gmra.mxu0 %v465
    %v1058 = vpop.f32.mrf.mxu0
    %v1059 = vadd.f32 0.0, %v1058
    %v1060 = vpop.f32.mrf.mxu0
    %1061 = vdwg.mxu0
    %1062 = vmatpush.bf16.msra.mxu0 0
    %1063 = vmatpush.bf16.msra.mxu0 0
    %1064 = vmatpush.bf16.msra.mxu0 0
    %1065 = vmatpush.bf16.msra.mxu0 0
    %1066 = vmatpush.bf16.msra.mxu0 0
    %1067 = vmatpush.bf16.msra.mxu0 0
    %1068 = vmatpush.bf16.msra.mxu0 %v1024
    %1069 = vmatpush.bf16.msra.mxu0 %v1010
    %1070 = vmatmul.bf16.gmra.mxu0 %v462
    %v1071 = vpop.f32.mrf.mxu0
    %v1072 = vadd.f32 0.0, %v1071
    %v1073 = vpop.f32.mrf.mxu0
    %v1074 = vadd.f32 0.0, %v1073
    %1075 = vmatmul.bf16.gmra.mxu0 %v465
    %v1076 = vpop.f32.mrf.mxu0
    %v1077 = vadd.f32 0.0, %v1076
    %v1078 = vpop.f32.mrf.mxu0
    %1079 = vdwg.mxu0
    %v1080 = vadd.f32 %v970, %v1036
    %v1081 = vadd.f32 %v971, %v1054
    %v1082 = vadd.f32 %v972, %v1072
    %v1083 = vadd.f32 %v973, %v1038
    %v1084 = vadd.f32 %v974, %v1056
    %v1085 = vadd.f32 %v975, %v1074
    %v1086 = vadd.f32 %v976, %v1041
    %v1087 = vadd.f32 %v977, %v1059
    %v1088 = vadd.f32 %v978, %v1077
    %s1089 = scalar_lea.vmem [#allocation2], 432
    %v1090 = vld [vmem:[%s1089] sm:$0xff]
    %v1091 = vld [vmem:[%s1089 + $0x8] sm:$0xf]
    %v1092 = vld [vmem:[%s1089 + $0xc] sm:$0xff]
    %v1093 = vld [vmem:[%s1089 + $0x14] sm:$0xf]
    %v1094 = vld [vmem:[%s1089 + $0x18] sm:$0xff]
    %v1095 = vld [vmem:[%s1089 + $0x20] sm:$0xf]
    %v1096 = vld [vmem:[%s1089 + $0x24] sm:$0x33]
    %v1097 = vld [vmem:[%s1089 + $0x2c] sm:$0x3]
    %v1106 = vunpack.c.l.b16 %v1090
    %v1107 = vunpack.c.h.b16 %v1090
    %v1108 = vunpack.c.l.b16 %v1091
    %v1109 = vunpack.c.l.b16 %v1092
    %v1110 = vunpack.c.h.b16 %v1092
    %v1111 = vunpack.c.l.b16 %v1093
    %v1112 = vunpack.c.l.b16 %v1094
    %v1113 = vunpack.c.h.b16 %v1094
    %v1114 = vunpack.c.l.b16 %v1095
    %v1115 = vunpack.c.l.b16 %v1096
    %v1116 = vunpack.c.h.b16 %v1096
    %v1117 = vunpack.c.l.b16 %v1097
    %v1118 = vpack.c.b16 %v1109, %v1106
    %v1119 = vpack.c.b16 %v1110, %v1107
    %v1120 = vpack.c.b16 %v1111, %v1108
    %v1121 = vpack.c.b16 %v1115, %v1112
    %v1122 = vpack.c.b16 %v1116, %v1113
    %v1123 = vpack.c.b16 %v1117, %v1114
    %v1128 = vsel %vm113, %v1121, 0
    %v1131 = vsel %vm113, %v1122, 0
    %v1134 = vsel %vm113, %v1123, 0
    %1136 = vmatpush.bf16.msra.mxu0 0
    %1137 = vmatpush.bf16.msra.mxu0 0
    %1138 = vmatpush.bf16.msra.mxu0 0
    %1139 = vmatpush.bf16.msra.mxu0 0
    %1140 = vmatpush.bf16.msra.mxu0 0
    %1141 = vmatpush.bf16.msra.mxu0 0
    %1142 = vmatpush.bf16.msra.mxu0 %v1128
    %1143 = vmatpush.bf16.msra.mxu0 %v1118
    %1144 = vmatmul.bf16.gmra.mxu0 %v590
    %v1145 = vpop.f32.mrf.mxu0
    %v1146 = vadd.f32 0.0, %v1145
    %v1147 = vpop.f32.mrf.mxu0
    %v1148 = vadd.f32 0.0, %v1147
    %1149 = vmatmul.bf16.gmra.mxu0 %v593
    %v1150 = vpop.f32.mrf.mxu0
    %v1151 = vadd.f32 0.0, %v1150
    %v1152 = vpop.f32.mrf.mxu0
    %1153 = vdwg.mxu0
    %1154 = vmatpush.bf16.msra.mxu0 0
    %1155 = vmatpush.bf16.msra.mxu0 0
    %1156 = vmatpush.bf16.msra.mxu0 0
    %1157 = vmatpush.bf16.msra.mxu0 0
    %1158 = vmatpush.bf16.msra.mxu0 0
    %1159 = vmatpush.bf16.msra.mxu0 0
    %1160 = vmatpush.bf16.msra.mxu0 %v1131
    %1161 = vmatpush.bf16.msra.mxu0 %v1119
    %1162 = vmatmul.bf16.gmra.mxu0 %v590
    %v1163 = vpop.f32.mrf.mxu0
    %v1164 = vadd.f32 0.0, %v1163
    %v1165 = vpop.f32.mrf.mxu0
    %v1166 = vadd.f32 0.0, %v1165
    %1167 = vmatmul.bf16.gmra.mxu0 %v593
    %v1168 = vpop.f32.mrf.mxu0
    %v1169 = vadd.f32 0.0, %v1168
    %v1170 = vpop.f32.mrf.mxu0
    %1171 = vdwg.mxu0
    %1172 = vmatpush.bf16.msra.mxu0 0
    %1173 = vmatpush.bf16.msra.mxu0 0
    %1174 = vmatpush.bf16.msra.mxu0 0
    %1175 = vmatpush.bf16.msra.mxu0 0
    %1176 = vmatpush.bf16.msra.mxu0 0
    %1177 = vmatpush.bf16.msra.mxu0 0
    %1178 = vmatpush.bf16.msra.mxu0 %v1134
    %1179 = vmatpush.bf16.msra.mxu0 %v1120
    %1180 = vmatmul.bf16.gmra.mxu0 %v590
    %v1181 = vpop.f32.mrf.mxu0
    %v1182 = vadd.f32 0.0, %v1181
    %v1183 = vpop.f32.mrf.mxu0
    %v1184 = vadd.f32 0.0, %v1183
    %1185 = vmatmul.bf16.gmra.mxu0 %v593
    %v1186 = vpop.f32.mrf.mxu0
    %v1187 = vadd.f32 0.0, %v1186
    %v1188 = vpop.f32.mrf.mxu0
    %1189 = vdwg.mxu0
    %v1190 = vadd.f32 %v1080, %v1146
    %v1191 = vadd.f32 %v1081, %v1164
    %v1192 = vadd.f32 %v1082, %v1182
    %v1193 = vadd.f32 %v1083, %v1148
    %v1194 = vadd.f32 %v1084, %v1166
    %v1195 = vadd.f32 %v1085, %v1184
    %v1196 = vadd.f32 %v1086, %v1151
    %v1197 = vadd.f32 %v1087, %v1169
    %v1198 = vadd.f32 %v1088, %v1187
    %v1199 = vmax.f32 %v658, %v1190
    %v1200 = vmax.f32 %v659, %v1191
    %v1201 = vmax.f32 %v660, %v1192
    %v1202 = vmax.f32 %v661, %v1193
    %v1203 = vmax.f32 %v662, %v1194
    %v1204 = vmax.f32 %v663, %v1195
    %v1205 = vmax.f32 %v664, %v1196
    %v1206 = vmax.f32 %v665, %v1197
    %v1207 = vmax.f32 %v666, %v1198
    %1208 = vmatpush.bf16.msra.mxu0 0
    %1209 = vmatpush.bf16.msra.mxu0 0
    %1210 = vmatpush.bf16.msra.mxu0 0
    %1211 = vmatpush.bf16.msra.mxu0 0
    %1212 = vmatpush.bf16.msra.mxu0 0
    %1213 = vmatpush.bf16.msra.mxu0 0
    %1214 = vmatpush.bf16.msra.mxu0 %v115
    %1215 = vmatpush.bf16.msra.mxu0 %v97
    %1216 = vmatmul.bf16.gmra.mxu0 %v334
    %v1217 = vpop.f32.mrf.mxu0
    %v1218 = vadd.f32 0.0, %v1217
    %v1219 = vpop.f32.mrf.mxu0
    %v1220 = vadd.f32 0.0, %v1219
    %1221 = vmatmul.bf16.gmra.mxu0 %v337
    %v1222 = vpop.f32.mrf.mxu0
    %v1223 = vadd.f32 0.0, %v1222
    %v1224 = vpop.f32.mrf.mxu0
    %1225 = vdwg.mxu0
    %1226 = vmatpush.bf16.msra.mxu0 0
    %1227 = vmatpush.bf16.msra.mxu0 0
    %1228 = vmatpush.bf16.msra.mxu0 0
    %1229 = vmatpush.bf16.msra.mxu0 0
    %1230 = vmatpush.bf16.msra.mxu0 0
    %1231 = vmatpush.bf16.msra.mxu0 0
    %1232 = vmatpush.bf16.msra.mxu0 %v118
    %1233 = vmatpush.bf16.msra.mxu0 %v98
    %1234 = vmatmul.bf16.gmra.mxu0 %v334
    %v1235 = vpop.f32.mrf.mxu0
    %v1236 = vadd.f32 0.0, %v1235
    %v1237 = vpop.f32.mrf.mxu0
    %v1238 = vadd.f32 0.0, %v1237
    %1239 = vmatmul.bf16.gmra.mxu0 %v337
    %v1240 = vpop.f32.mrf.mxu0
    %v1241 = vadd.f32 0.0, %v1240
    %v1242 = vpop.f32.mrf.mxu0
    %1243 = vdwg.mxu0
    %1244 = vmatpush.bf16.msra.mxu0 0
    %1245 = vmatpush.bf16.msra.mxu0 0
    %1246 = vmatpush.bf16.msra.mxu0 0
    %1247 = vmatpush.bf16.msra.mxu0 0
    %1248 = vmatpush.bf16.msra.mxu0 0
    %1249 = vmatpush.bf16.msra.mxu0 0
    %1250 = vmatpush.bf16.msra.mxu0 %v121
    %1251 = vmatpush.bf16.msra.mxu0 %v99
    %1252 = vmatmul.bf16.gmra.mxu0 %v334
    %v1253 = vpop.f32.mrf.mxu0
    %v1254 = vadd.f32 0.0, %v1253
    %v1255 = vpop.f32.mrf.mxu0
    %v1256 = vadd.f32 0.0, %v1255
    %1257 = vmatmul.bf16.gmra.mxu0 %v337
    %v1258 = vpop.f32.mrf.mxu0
    %v1259 = vadd.f32 0.0, %v1258
    %v1260 = vpop.f32.mrf.mxu0
    %1261 = vdwg.mxu0
    %1262 = vmatpush.bf16.msra.mxu0 0
    %1263 = vmatpush.bf16.msra.mxu0 0
    %1264 = vmatpush.bf16.msra.mxu0 0
    %1265 = vmatpush.bf16.msra.mxu0 0
    %1266 = vmatpush.bf16.msra.mxu0 0
    %1267 = vmatpush.bf16.msra.mxu0 0
    %1268 = vmatpush.bf16.msra.mxu0 %v221
    %1269 = vmatpush.bf16.msra.mxu0 %v205
    %1270 = vmatmul.bf16.gmra.mxu0 %v108
    %v1271 = vpop.f32.mrf.mxu0
    %v1272 = vadd.f32 %v1218, %v1271
    %v1273 = vpop.f32.mrf.mxu0
    %v1274 = vadd.f32 %v1220, %v1273
    %1275 = vmatmul.bf16.gmra.mxu0 %v111
    %v1276 = vpop.f32.mrf.mxu0
    %v1277 = vadd.f32 %v1223, %v1276
    %v1278 = vpop.f32.mrf.mxu0
    %1279 = vdwg.mxu0
    %1280 = vmatpush.bf16.msra.mxu0 0
    %1281 = vmatpush.bf16.msra.mxu0 0
    %1282 = vmatpush.bf16.msra.mxu0 0
    %1283 = vmatpush.bf16.msra.mxu0 0
    %1284 = vmatpush.bf16.msra.mxu0 0
    %1285 = vmatpush.bf16.msra.mxu0 0
    %1286 = vmatpush.bf16.msra.mxu0 %v224
    %1287 = vmatpush.bf16.msra.mxu0 %v206
    %1288 = vmatmul.bf16.gmra.mxu0 %v108
    %v1289 = vpop.f32.mrf.mxu0
    %v1290 = vadd.f32 %v1236, %v1289
    %v1291 = vpop.f32.mrf.mxu0
    %v1292 = vadd.f32 %v1238, %v1291
    %1293 = vmatmul.bf16.gmra.mxu0 %v111
    %v1294 = vpop.f32.mrf.mxu0
    %v1295 = vadd.f32 %v1241, %v1294
    %v1296 = vpop.f32.mrf.mxu0
    %1297 = vdwg.mxu0
    %1298 = vmatpush.bf16.msra.mxu0 0
    %1299 = vmatpush.bf16.msra.mxu0 0
    %1300 = vmatpush.bf16.msra.mxu0 0
    %1301 = vmatpush.bf16.msra.mxu0 0
    %1302 = vmatpush.bf16.msra.mxu0 0
    %1303 = vmatpush.bf16.msra.mxu0 0
    %1304 = vmatpush.bf16.msra.mxu0 %v227
    %1305 = vmatpush.bf16.msra.mxu0 %v207
    %1306 = vmatmul.bf16.gmra.mxu0 %v108
    %v1307 = vpop.f32.mrf.mxu0
    %v1308 = vadd.f32 %v1254, %v1307
    %v1309 = vpop.f32.mrf.mxu0
    %v1310 = vadd.f32 %v1256, %v1309
    %1311 = vmatmul.bf16.gmra.mxu0 %v111
    %v1312 = vpop.f32.mrf.mxu0
    %v1313 = vadd.f32 %v1259, %v1312
    %v1314 = vpop.f32.mrf.mxu0
    %1315 = vdwg.mxu0
    %1316 = vmatpush.bf16.msra.mxu0 0
    %1317 = vmatpush.bf16.msra.mxu0 0
    %1318 = vmatpush.bf16.msra.mxu0 0
    %1319 = vmatpush.bf16.msra.mxu0 0
    %1320 = vmatpush.bf16.msra.mxu0 0
    %1321 = vmatpush.bf16.msra.mxu0 0
    %1322 = vmatpush.bf16.msra.mxu0 %v340
    %1323 = vmatpush.bf16.msra.mxu0 %v324
    %1324 = vmatmul.bf16.gmra.mxu0 %v462
    %v1325 = vpop.f32.mrf.mxu0
    %v1326 = vadd.f32 0.0, %v1325
    %v1327 = vpop.f32.mrf.mxu0
    %v1328 = vadd.f32 0.0, %v1327
    %1329 = vmatmul.bf16.gmra.mxu0 %v465
    %v1330 = vpop.f32.mrf.mxu0
    %v1331 = vadd.f32 0.0, %v1330
    %v1332 = vpop.f32.mrf.mxu0
    %1333 = vdwg.mxu0
    %1334 = vmatpush.bf16.msra.mxu0 0
    %1335 = vmatpush.bf16.msra.mxu0 0
    %1336 = vmatpush.bf16.msra.mxu0 0
    %1337 = vmatpush.bf16.msra.mxu0 0
    %1338 = vmatpush.bf16.msra.mxu0 0
    %1339 = vmatpush.bf16.msra.mxu0 0
    %1340 = vmatpush.bf16.msra.mxu0 %v343
    %1341 = vmatpush.bf16.msra.mxu0 %v325
    %1342 = vmatmul.bf16.gmra.mxu0 %v462
    %v1343 = vpop.f32.mrf.mxu0
    %v1344 = vadd.f32 0.0, %v1343
    %v1345 = vpop.f32.mrf.mxu0
    %v1346 = vadd.f32 0.0, %v1345
    %1347 = vmatmul.bf16.gmra.mxu0 %v465
    %v1348 = vpop.f32.mrf.mxu0
    %v1349 = vadd.f32 0.0, %v1348
    %v1350 = vpop.f32.mrf.mxu0
    %1351 = vdwg.mxu0
    %1352 = vmatpush.bf16.msra.mxu0 0
    %1353 = vmatpush.bf16.msra.mxu0 0
    %1354 = vmatpush.bf16.msra.mxu0 0
    %1355 = vmatpush.bf16.msra.mxu0 0
    %1356 = vmatpush.bf16.msra.mxu0 0
    %1357 = vmatpush.bf16.msra.mxu0 0
    %1358 = vmatpush.bf16.msra.mxu0 %v346
    %1359 = vmatpush.bf16.msra.mxu0 %v326
    %1360 = vmatmul.bf16.gmra.mxu0 %v462
    %v1361 = vpop.f32.mrf.mxu0
    %v1362 = vadd.f32 0.0, %v1361
    %v1363 = vpop.f32.mrf.mxu0
    %v1364 = vadd.f32 0.0, %v1363
    %1365 = vmatmul.bf16.gmra.mxu0 %v465
    %v1366 = vpop.f32.mrf.mxu0
    %v1367 = vadd.f32 0.0, %v1366
    %v1368 = vpop.f32.mrf.mxu0
    %1369 = vdwg.mxu0
    %v1370 = vadd.f32 %v1272, %v1326
    %v1371 = vadd.f32 %v1290, %v1344
    %v1372 = vadd.f32 %v1308, %v1362
    %v1373 = vadd.f32 %v1274, %v1328
    %v1374 = vadd.f32 %v1292, %v1346
    %v1375 = vadd.f32 %v1310, %v1364
    %v1376 = vadd.f32 %v1277, %v1331
    %v1377 = vadd.f32 %v1295, %v1349
    %v1378 = vadd.f32 %v1313, %v1367
    %1379 = vmatpush.bf16.msra.mxu0 0
    %1380 = vmatpush.bf16.msra.mxu0 0
    %1381 = vmatpush.bf16.msra.mxu0 0
    %1382 = vmatpush.bf16.msra.mxu0 0
    %1383 = vmatpush.bf16.msra.mxu0 0
    %1384 = vmatpush.bf16.msra.mxu0 0
    %1385 = vmatpush.bf16.msra.mxu0 %v468
    %1386 = vmatpush.bf16.msra.mxu0 %v452
    %1387 = vmatmul.bf16.gmra.mxu0 %v590
    %v1388 = vpop.f32.mrf.mxu0
    %v1389 = vadd.f32 0.0, %v1388
    %v1390 = vpop.f32.mrf.mxu0
    %v1391 = vadd.f32 0.0, %v1390
    %1392 = vmatmul.bf16.gmra.mxu0 %v593
    %v1393 = vpop.f32.mrf.mxu0
    %v1394 = vadd.f32 0.0, %v1393
    %v1395 = vpop.f32.mrf.mxu0
    %1396 = vdwg.mxu0
    %1397 = vmatpush.bf16.msra.mxu0 0
    %1398 = vmatpush.bf16.msra.mxu0 0
    %1399 = vmatpush.bf16.msra.mxu0 0
    %1400 = vmatpush.bf16.msra.mxu0 0
    %1401 = vmatpush.bf16.msra.mxu0 0
    %1402 = vmatpush.bf16.msra.mxu0 0
    %1403 = vmatpush.bf16.msra.mxu0 %v471
    %1404 = vmatpush.bf16.msra.mxu0 %v453
    %1405 = vmatmul.bf16.gmra.mxu0 %v590
    %v1406 = vpop.f32.mrf.mxu0
    %v1407 = vadd.f32 0.0, %v1406
    %v1408 = vpop.f32.mrf.mxu0
    %v1409 = vadd.f32 0.0, %v1408
    %1410 = vmatmul.bf16.gmra.mxu0 %v593
    %v1411 = vpop.f32.mrf.mxu0
    %v1412 = vadd.f32 0.0, %v1411
    %v1413 = vpop.f32.mrf.mxu0
    %1414 = vdwg.mxu0
    %1415 = vmatpush.bf16.msra.mxu0 0
    %1416 = vmatpush.bf16.msra.mxu0 0
    %1417 = vmatpush.bf16.msra.mxu0 0
    %1418 = vmatpush.bf16.msra.mxu0 0
    %1419 = vmatpush.bf16.msra.mxu0 0
    %1420 = vmatpush.bf16.msra.mxu0 0
    %1421 = vmatpush.bf16.msra.mxu0 %v474
    %1422 = vmatpush.bf16.msra.mxu0 %v454
    %1423 = vmatmul.bf16.gmra.mxu0 %v590
    %v1424 = vpop.f32.mrf.mxu0
    %v1425 = vadd.f32 0.0, %v1424
    %v1426 = vpop.f32.mrf.mxu0
    %v1427 = vadd.f32 0.0, %v1426
    %1428 = vmatmul.bf16.gmra.mxu0 %v593
    %v1429 = vpop.f32.mrf.mxu0
    %v1430 = vadd.f32 0.0, %v1429
    %v1431 = vpop.f32.mrf.mxu0
    %1432 = vdwg.mxu0
    %v1433 = vadd.f32 %v1370, %v1389
    %v1434 = vadd.f32 %v1371, %v1407
    %v1435 = vadd.f32 %v1372, %v1425
    %v1436 = vadd.f32 %v1373, %v1391
    %v1437 = vadd.f32 %v1374, %v1409
    %v1438 = vadd.f32 %v1375, %v1427
    %v1439 = vadd.f32 %v1376, %v1394
    %v1440 = vadd.f32 %v1377, %v1412
    %v1441 = vadd.f32 %v1378, %v1430
    %s1442 = scalar_lea.vmem %s0, 60
    %v1443 = vld [vmem:[%s1442] sm:$0xf]
    %v1444 = vld [vmem:[%s1442 + $0x4] sm:$0xf]
    %v1445 = vld [vmem:[%s1442 + $0x8] sm:$0xf]
    %v1449 = vunpack.c.l.b16 %v1443
    %v1450 = vunpack.c.l.b16 %v1444
    %v1451 = vunpack.c.l.b16 %v1445
    %v1452 = vpack.c.b16 %v1450, %v1449
    %v1453 = vpack.c.b16 %v1451, %v1451
    %v1455 = vsel %vm106, %v1452, 0
    %v1458 = vsel %vm106, %v1453, 0
    %1460 = vmatpush.bf16.msra.mxu0 0
    %1461 = vmatpush.bf16.msra.mxu0 0
    %1462 = vmatpush.bf16.msra.mxu0 0
    %1463 = vmatpush.bf16.msra.mxu0 0
    %1464 = vmatpush.bf16.msra.mxu0 0
    %1465 = vmatpush.bf16.msra.mxu0 0
    %1466 = vmatpush.bf16.msra.mxu0 %v596
    %1467 = vmatpush.bf16.msra.mxu0 %v580
    %1468 = vmatmul.bf16.gmra.mxu0 %v1455
    %v1469 = vpop.f32.mrf.mxu0
    %v1470 = vadd.f32 0.0, %v1469
    %v1471 = vpop.f32.mrf.mxu0
    %v1472 = vadd.f32 0.0, %v1471
    %1473 = vmatmul.bf16.gmra.mxu0 %v1458
    %v1474 = vpop.f32.mrf.mxu0
    %v1475 = vadd.f32 0.0, %v1474
    %v1476 = vpop.f32.mrf.mxu0
    %1477 = vdwg.mxu0
    %1478 = vmatpush.bf16.msra.mxu0 0
    %1479 = vmatpush.bf16.msra.mxu0 0
    %1480 = vmatpush.bf16.msra.mxu0 0
    %1481 = vmatpush.bf16.msra.mxu0 0
    %1482 = vmatpush.bf16.msra.mxu0 0
    %1483 = vmatpush.bf16.msra.mxu0 0
    %1484 = vmatpush.bf16.msra.mxu0 %v599
    %1485 = vmatpush.bf16.msra.mxu0 %v581
    %1486 = vmatmul.bf16.gmra.mxu0 %v1455
    %v1487 = vpop.f32.mrf.mxu0
    %v1488 = vadd.f32 0.0, %v1487
    %v1489 = vpop.f32.mrf.mxu0
    %v1490 = vadd.f32 0.0, %v1489
    %1491 = vmatmul.bf16.gmra.mxu0 %v1458
    %v1492 = vpop.f32.mrf.mxu0
    %v1493 = vadd.f32 0.0, %v1492
    %v1494 = vpop.f32.mrf.mxu0
    %1495 = vdwg.mxu0
    %1496 = vmatpush.bf16.msra.mxu0 0
    %1497 = vmatpush.bf16.msra.mxu0 0
    %1498 = vmatpush.bf16.msra.mxu0 0
    %1499 = vmatpush.bf16.msra.mxu0 0
    %1500 = vmatpush.bf16.msra.mxu0 0
    %1501 = vmatpush.bf16.msra.mxu0 0
    %1502 = vmatpush.bf16.msra.mxu0 %v602
    %1503 = vmatpush.bf16.msra.mxu0 %v582
    %1504 = vmatmul.bf16.gmra.mxu0 %v1455
    %v1505 = vpop.f32.mrf.mxu0
    %v1506 = vadd.f32 0.0, %v1505
    %v1507 = vpop.f32.mrf.mxu0
    %v1508 = vadd.f32 0.0, %v1507
    %1509 = vmatmul.bf16.gmra.mxu0 %v1458
    %v1510 = vpop.f32.mrf.mxu0
    %v1511 = vadd.f32 0.0, %v1510
    %v1512 = vpop.f32.mrf.mxu0
    %1513 = vdwg.mxu0
    %v1514 = vadd.f32 %v1433, %v1470
    %v1515 = vadd.f32 %v1434, %v1488
    %v1516 = vadd.f32 %v1435, %v1506
    %v1517 = vadd.f32 %v1436, %v1472
    %v1518 = vadd.f32 %v1437, %v1490
    %v1519 = vadd.f32 %v1438, %v1508
    %v1520 = vadd.f32 %v1439, %v1475
    %v1521 = vadd.f32 %v1440, %v1493
    %v1522 = vadd.f32 %v1441, %v1511
    %v1523 = vmax.f32 %v1199, %v1514
    %v1524 = vmax.f32 %v1200, %v1515
    %v1525 = vmax.f32 %v1201, %v1516
    %v1526 = vmax.f32 %v1202, %v1517
    %v1527 = vmax.f32 %v1203, %v1518
    %v1528 = vmax.f32 %v1204, %v1519
    %v1529 = vmax.f32 %v1205, %v1520
    %v1530 = vmax.f32 %v1206, %v1521
    %v1531 = vmax.f32 %v1207, %v1522
    %1532 = vmatpush.bf16.msra.mxu0 0
    %1533 = vmatpush.bf16.msra.mxu0 0
    %1534 = vmatpush.bf16.msra.mxu0 0
    %1535 = vmatpush.bf16.msra.mxu0 0
    %1536 = vmatpush.bf16.msra.mxu0 0
    %1537 = vmatpush.bf16.msra.mxu0 0
    %1538 = vmatpush.bf16.msra.mxu0 %v715
    %1539 = vmatpush.bf16.msra.mxu0 %v705
    %1540 = vmatmul.bf16.gmra.mxu0 %v334
    %v1541 = vpop.f32.mrf.mxu0
    %v1542 = vadd.f32 0.0, %v1541
    %v1543 = vpop.f32.mrf.mxu0
    %v1544 = vadd.f32 0.0, %v1543
    %1545 = vmatmul.bf16.gmra.mxu0 %v337
    %v1546 = vpop.f32.mrf.mxu0
    %v1547 = vadd.f32 0.0, %v1546
    %v1548 = vpop.f32.mrf.mxu0
    %1549 = vdwg.mxu0
    %1550 = vmatpush.bf16.msra.mxu0 0
    %1551 = vmatpush.bf16.msra.mxu0 0
    %1552 = vmatpush.bf16.msra.mxu0 0
    %1553 = vmatpush.bf16.msra.mxu0 0
    %1554 = vmatpush.bf16.msra.mxu0 0
    %1555 = vmatpush.bf16.msra.mxu0 0
    %1556 = vmatpush.bf16.msra.mxu0 %v718
    %1557 = vmatpush.bf16.msra.mxu0 %v706
    %1558 = vmatmul.bf16.gmra.mxu0 %v334
    %v1559 = vpop.f32.mrf.mxu0
    %v1560 = vadd.f32 0.0, %v1559
    %v1561 = vpop.f32.mrf.mxu0
    %v1562 = vadd.f32 0.0, %v1561
    %1563 = vmatmul.bf16.gmra.mxu0 %v337
    %v1564 = vpop.f32.mrf.mxu0
    %v1565 = vadd.f32 0.0, %v1564
    %v1566 = vpop.f32.mrf.mxu0
    %1567 = vdwg.mxu0
    %1568 = vmatpush.bf16.msra.mxu0 0
    %1569 = vmatpush.bf16.msra.mxu0 0
    %1570 = vmatpush.bf16.msra.mxu0 0
    %1571 = vmatpush.bf16.msra.mxu0 0
    %1572 = vmatpush.bf16.msra.mxu0 0
    %1573 = vmatpush.bf16.msra.mxu0 0
    %1574 = vmatpush.bf16.msra.mxu0 %v721
    %1575 = vmatpush.bf16.msra.mxu0 %v707
    %1576 = vmatmul.bf16.gmra.mxu0 %v334
    %v1577 = vpop.f32.mrf.mxu0
    %v1578 = vadd.f32 0.0, %v1577
    %v1579 = vpop.f32.mrf.mxu0
    %v1580 = vadd.f32 0.0, %v1579
    %1581 = vmatmul.bf16.gmra.mxu0 %v337
    %v1582 = vpop.f32.mrf.mxu0
    %v1583 = vadd.f32 0.0, %v1582
    %v1584 = vpop.f32.mrf.mxu0
    %1585 = vdwg.mxu0
    %1586 = vmatpush.bf16.msra.mxu0 0
    %1587 = vmatpush.bf16.msra.mxu0 0
    %1588 = vmatpush.bf16.msra.mxu0 0
    %1589 = vmatpush.bf16.msra.mxu0 0
    %1590 = vmatpush.bf16.msra.mxu0 0
    %1591 = vmatpush.bf16.msra.mxu0 0
    %1592 = vmatpush.bf16.msra.mxu0 %v807
    %1593 = vmatpush.bf16.msra.mxu0 %v797
    %1594 = vmatmul.bf16.gmra.mxu0 %v108
    %v1595 = vpop.f32.mrf.mxu0
    %v1596 = vadd.f32 %v1542, %v1595
    %v1597 = vpop.f32.mrf.mxu0
    %v1598 = vadd.f32 %v1544, %v1597
    %1599 = vmatmul.bf16.gmra.mxu0 %v111
    %v1600 = vpop.f32.mrf.mxu0
    %v1601 = vadd.f32 %v1547, %v1600
    %v1602 = vpop.f32.mrf.mxu0
    %1603 = vdwg.mxu0
    %1604 = vmatpush.bf16.msra.mxu0 0
    %1605 = vmatpush.bf16.msra.mxu0 0
    %1606 = vmatpush.bf16.msra.mxu0 0
    %1607 = vmatpush.bf16.msra.mxu0 0
    %1608 = vmatpush.bf16.msra.mxu0 0
    %1609 = vmatpush.bf16.msra.mxu0 0
    %1610 = vmatpush.bf16.msra.mxu0 %v810
    %1611 = vmatpush.bf16.msra.mxu0 %v798
    %1612 = vmatmul.bf16.gmra.mxu0 %v108
    %v1613 = vpop.f32.mrf.mxu0
    %v1614 = vadd.f32 %v1560, %v1613
    %v1615 = vpop.f32.mrf.mxu0
    %v1616 = vadd.f32 %v1562, %v1615
    %1617 = vmatmul.bf16.gmra.mxu0 %v111
    %v1618 = vpop.f32.mrf.mxu0
    %v1619 = vadd.f32 %v1565, %v1618
    %v1620 = vpop.f32.mrf.mxu0
    %1621 = vdwg.mxu0
    %1622 = vmatpush.bf16.msra.mxu0 0
    %1623 = vmatpush.bf16.msra.mxu0 0
    %1624 = vmatpush.bf16.msra.mxu0 0
    %1625 = vmatpush.bf16.msra.mxu0 0
    %1626 = vmatpush.bf16.msra.mxu0 0
    %1627 = vmatpush.bf16.msra.mxu0 0
    %1628 = vmatpush.bf16.msra.mxu0 %v813
    %1629 = vmatpush.bf16.msra.mxu0 %v799
    %1630 = vmatmul.bf16.gmra.mxu0 %v108
    %v1631 = vpop.f32.mrf.mxu0
    %v1632 = vadd.f32 %v1578, %v1631
    %v1633 = vpop.f32.mrf.mxu0
    %v1634 = vadd.f32 %v1580, %v1633
    %1635 = vmatmul.bf16.gmra.mxu0 %v111
    %v1636 = vpop.f32.mrf.mxu0
    %v1637 = vadd.f32 %v1583, %v1636
    %v1638 = vpop.f32.mrf.mxu0
    %1639 = vdwg.mxu0
    %1640 = vmatpush.bf16.msra.mxu0 0
    %1641 = vmatpush.bf16.msra.mxu0 0
    %1642 = vmatpush.bf16.msra.mxu0 0
    %1643 = vmatpush.bf16.msra.mxu0 0
    %1644 = vmatpush.bf16.msra.mxu0 0
    %1645 = vmatpush.bf16.msra.mxu0 0
    %1646 = vmatpush.bf16.msra.mxu0 %v908
    %1647 = vmatpush.bf16.msra.mxu0 %v898
    %1648 = vmatmul.bf16.gmra.mxu0 %v462
    %v1649 = vpop.f32.mrf.mxu0
    %v1650 = vadd.f32 0.0, %v1649
    %v1651 = vpop.f32.mrf.mxu0
    %v1652 = vadd.f32 0.0, %v1651
    %1653 = vmatmul.bf16.gmra.mxu0 %v465
    %v1654 = vpop.f32.mrf.mxu0
    %v1655 = vadd.f32 0.0, %v1654
    %v1656 = vpop.f32.mrf.mxu0
    %1657 = vdwg.mxu0
    %1658 = vmatpush.bf16.msra.mxu0 0
    %1659 = vmatpush.bf16.msra.mxu0 0
    %1660 = vmatpush.bf16.msra.mxu0 0
    %1661 = vmatpush.bf16.msra.mxu0 0
    %1662 = vmatpush.bf16.msra.mxu0 0
    %1663 = vmatpush.bf16.msra.mxu0 0
    %1664 = vmatpush.bf16.msra.mxu0 %v911
    %1665 = vmatpush.bf16.msra.mxu0 %v899
    %1666 = vmatmul.bf16.gmra.mxu0 %v462
    %v1667 = vpop.f32.mrf.mxu0
    %v1668 = vadd.f32 0.0, %v1667
    %v1669 = vpop.f32.mrf.mxu0
    %v1670 = vadd.f32 0.0, %v1669
    %1671 = vmatmul.bf16.gmra.mxu0 %v465
    %v1672 = vpop.f32.mrf.mxu0
    %v1673 = vadd.f32 0.0, %v1672
    %v1674 = vpop.f32.mrf.mxu0
    %1675 = vdwg.mxu0
    %1676 = vmatpush.bf16.msra.mxu0 0
    %1677 = vmatpush.bf16.msra.mxu0 0
    %1678 = vmatpush.bf16.msra.mxu0 0
    %1679 = vmatpush.bf16.msra.mxu0 0
    %1680 = vmatpush.bf16.msra.mxu0 0
    %1681 = vmatpush.bf16.msra.mxu0 0
    %1682 = vmatpush.bf16.msra.mxu0 %v914
    %1683 = vmatpush.bf16.msra.mxu0 %v900
    %1684 = vmatmul.bf16.gmra.mxu0 %v462
    %v1685 = vpop.f32.mrf.mxu0
    %v1686 = vadd.f32 0.0, %v1685
    %v1687 = vpop.f32.mrf.mxu0
    %v1688 = vadd.f32 0.0, %v1687
    %1689 = vmatmul.bf16.gmra.mxu0 %v465
    %v1690 = vpop.f32.mrf.mxu0
    %v1691 = vadd.f32 0.0, %v1690
    %v1692 = vpop.f32.mrf.mxu0
    %1693 = vdwg.mxu0
    %v1694 = vadd.f32 %v1596, %v1650
    %v1695 = vadd.f32 %v1614, %v1668
    %v1696 = vadd.f32 %v1632, %v1686
    %v1697 = vadd.f32 %v1598, %v1652
    %v1698 = vadd.f32 %v1616, %v1670
    %v1699 = vadd.f32 %v1634, %v1688
    %v1700 = vadd.f32 %v1601, %v1655
    %v1701 = vadd.f32 %v1619, %v1673
    %v1702 = vadd.f32 %v1637, %v1691
    %1703 = vmatpush.bf16.msra.mxu0 0
    %1704 = vmatpush.bf16.msra.mxu0 0
    %1705 = vmatpush.bf16.msra.mxu0 0
    %1706 = vmatpush.bf16.msra.mxu0 0
    %1707 = vmatpush.bf16.msra.mxu0 0
    %1708 = vmatpush.bf16.msra.mxu0 0
    %1709 = vmatpush.bf16.msra.mxu0 %v1018
    %1710 = vmatpush.bf16.msra.mxu0 %v1008
    %1711 = vmatmul.bf16.gmra.mxu0 %v590
    %v1712 = vpop.f32.mrf.mxu0
    %v1713 = vadd.f32 0.0, %v1712
    %v1714 = vpop.f32.mrf.mxu0
    %v1715 = vadd.f32 0.0, %v1714
    %1716 = vmatmul.bf16.gmra.mxu0 %v593
    %v1717 = vpop.f32.mrf.mxu0
    %v1718 = vadd.f32 0.0, %v1717
    %v1719 = vpop.f32.mrf.mxu0
    %1720 = vdwg.mxu0
    %1721 = vmatpush.bf16.msra.mxu0 0
    %1722 = vmatpush.bf16.msra.mxu0 0
    %1723 = vmatpush.bf16.msra.mxu0 0
    %1724 = vmatpush.bf16.msra.mxu0 0
    %1725 = vmatpush.bf16.msra.mxu0 0
    %1726 = vmatpush.bf16.msra.mxu0 0
    %1727 = vmatpush.bf16.msra.mxu0 %v1021
    %1728 = vmatpush.bf16.msra.mxu0 %v1009
    %1729 = vmatmul.bf16.gmra.mxu0 %v590
    %v1730 = vpop.f32.mrf.mxu0
    %v1731 = vadd.f32 0.0, %v1730
    %v1732 = vpop.f32.mrf.mxu0
    %v1733 = vadd.f32 0.0, %v1732
    %1734 = vmatmul.bf16.gmra.mxu0 %v593
    %v1735 = vpop.f32.mrf.mxu0
    %v1736 = vadd.f32 0.0, %v1735
    %v1737 = vpop.f32.mrf.mxu0
    %1738 = vdwg.mxu0
    %1739 = vmatpush.bf16.msra.mxu0 0
    %1740 = vmatpush.bf16.msra.mxu0 0
    %1741 = vmatpush.bf16.msra.mxu0 0
    %1742 = vmatpush.bf16.msra.mxu0 0
    %1743 = vmatpush.bf16.msra.mxu0 0
    %1744 = vmatpush.bf16.msra.mxu0 0
    %1745 = vmatpush.bf16.msra.mxu0 %v1024
    %1746 = vmatpush.bf16.msra.mxu0 %v1010
    %1747 = vmatmul.bf16.gmra.mxu0 %v590
    %v1748 = vpop.f32.mrf.mxu0
    %v1749 = vadd.f32 0.0, %v1748
    %v1750 = vpop.f32.mrf.mxu0
    %v1751 = vadd.f32 0.0, %v1750
    %1752 = vmatmul.bf16.gmra.mxu0 %v593
    %v1753 = vpop.f32.mrf.mxu0
    %v1754 = vadd.f32 0.0, %v1753
    %v1755 = vpop.f32.mrf.mxu0
    %1756 = vdwg.mxu0
    %v1757 = vadd.f32 %v1694, %v1713
    %v1758 = vadd.f32 %v1695, %v1731
    %v1759 = vadd.f32 %v1696, %v1749
    %v1760 = vadd.f32 %v1697, %v1715
    %v1761 = vadd.f32 %v1698, %v1733
    %v1762 = vadd.f32 %v1699, %v1751
    %v1763 = vadd.f32 %v1700, %v1718
    %v1764 = vadd.f32 %v1701, %v1736
    %v1765 = vadd.f32 %v1702, %v1754
    %1766 = vmatpush.bf16.msra.mxu0 0
    %1767 = vmatpush.bf16.msra.mxu0 0
    %1768 = vmatpush.bf16.msra.mxu0 0
    %1769 = vmatpush.bf16.msra.mxu0 0
    %1770 = vmatpush.bf16.msra.mxu0 0
    %1771 = vmatpush.bf16.msra.mxu0 0
    %1772 = vmatpush.bf16.msra.mxu0 %v1128
    %1773 = vmatpush.bf16.msra.mxu0 %v1118
    %1774 = vmatmul.bf16.gmra.mxu0 %v1455
    %v1775 = vpop.f32.mrf.mxu0
    %v1776 = vadd.f32 0.0, %v1775
    %v1777 = vpop.f32.mrf.mxu0
    %v1778 = vadd.f32 0.0, %v1777
    %1779 = vmatmul.bf16.gmra.mxu0 %v1458
    %v1780 = vpop.f32.mrf.mxu0
    %v1781 = vadd.f32 0.0, %v1780
    %v1782 = vpop.f32.mrf.mxu0
    %1783 = vdwg.mxu0
    %1784 = vmatpush.bf16.msra.mxu0 0
    %1785 = vmatpush.bf16.msra.mxu0 0
    %1786 = vmatpush.bf16.msra.mxu0 0
    %1787 = vmatpush.bf16.msra.mxu0 0
    %1788 = vmatpush.bf16.msra.mxu0 0
    %1789 = vmatpush.bf16.msra.mxu0 0
    %1790 = vmatpush.bf16.msra.mxu0 %v1131
    %1791 = vmatpush.bf16.msra.mxu0 %v1119
    %1792 = vmatmul.bf16.gmra.mxu0 %v1455
    %v1793 = vpop.f32.mrf.mxu0
    %v1794 = vadd.f32 0.0, %v1793
    %v1795 = vpop.f32.mrf.mxu0
    %v1796 = vadd.f32 0.0, %v1795
    %1797 = vmatmul.bf16.gmra.mxu0 %v1458
    %v1798 = vpop.f32.mrf.mxu0
    %v1799 = vadd.f32 0.0, %v1798
    %v1800 = vpop.f32.mrf.mxu0
    %1801 = vdwg.mxu0
    %1802 = vmatpush.bf16.msra.mxu0 0
    %1803 = vmatpush.bf16.msra.mxu0 0
    %1804 = vmatpush.bf16.msra.mxu0 0
    %1805 = vmatpush.bf16.msra.mxu0 0
    %1806 = vmatpush.bf16.msra.mxu0 0
    %1807 = vmatpush.bf16.msra.mxu0 0
    %1808 = vmatpush.bf16.msra.mxu0 %v1134
    %1809 = vmatpush.bf16.msra.mxu0 %v1120
    %1810 = vmatmul.bf16.gmra.mxu0 %v1455
    %v1811 = vpop.f32.mrf.mxu0
    %v1812 = vadd.f32 0.0, %v1811
    %v1813 = vpop.f32.mrf.mxu0
    %v1814 = vadd.f32 0.0, %v1813
    %1815 = vmatmul.bf16.gmra.mxu0 %v1458
    %v1816 = vpop.f32.mrf.mxu0
    %v1817 = vadd.f32 0.0, %v1816
    %v1818 = vpop.f32.mrf.mxu0
    %1819 = vdwg.mxu0
    %v1820 = vadd.f32 %v1757, %v1776
    %v1821 = vadd.f32 %v1758, %v1794
    %v1822 = vadd.f32 %v1759, %v1812
    %v1823 = vadd.f32 %v1760, %v1778
    %v1824 = vadd.f32 %v1761, %v1796
    %v1825 = vadd.f32 %v1762, %v1814
    %v1826 = vadd.f32 %v1763, %v1781
    %v1827 = vadd.f32 %v1764, %v1799
    %v1828 = vadd.f32 %v1765, %v1817
    %v1829 = vmax.f32 %v1523, %v1820
    %v1830 = vmax.f32 %v1524, %v1821
    %v1831 = vmax.f32 %v1525, %v1822
    %v1832 = vmax.f32 %v1526, %v1823
    %v1833 = vmax.f32 %v1527, %v1824
    %v1834 = vmax.f32 %v1528, %v1825
    %v1835 = vmax.f32 %v1529, %v1826
    %v1836 = vmax.f32 %v1530, %v1827
    %v1837 = vmax.f32 %v1531, %v1828
    %v1838 = vld [vmem:[#allocation4] sm:$0x7]
    %v1840 = vperm.slane %v1838, 0
    %v1841 = vperm.slane %v1838, 1
    %v1842 = vperm.slane %v1838, 2
    %v1846 = vadd.f32 %v1829, %v1840
    %v1847 = vadd.f32 %v1830, %v1841
    %v1848 = vadd.f32 %v1831, %v1842
    %v1849 = vadd.f32 %v1832, %v1840
    %v1850 = vadd.f32 %v1833, %v1841
    %v1851 = vadd.f32 %v1834, %v1842
    %v1852 = vadd.f32 %v1835, %v1840
    %v1853 = vadd.f32 %v1836, %v1841
    %v1854 = vadd.f32 %v1837, %v1842
    %v1855 = vmax.f32 %v1846, 0.0
    %v1856 = vmax.f32 %v1847, 0.0
    %v1857 = vmax.f32 %v1848, 0.0
    %v1858 = vmax.f32 %v1849, 0.0
    %v1859 = vmax.f32 %v1850, 0.0
    %v1860 = vmax.f32 %v1851, 0.0
    %v1861 = vmax.f32 %v1852, 0.0
    %v1862 = vmax.f32 %v1853, 0.0
    %v1863 = vmax.f32 %v1854, 0.0
    %v1864 = vpack.c.bf16 %v1856, %v1855
    %v1865 = vpack.c.bf16 %v1857, %v1857
    %v1866 = vpack.c.bf16 %v1859, %v1858
    %v1867 = vpack.c.bf16 %v1860, %v1860
    %v1868 = vpack.c.bf16 %v1862, %v1861
    %v1869 = vpack.c.bf16 %v1863, %v1863
    %1870 = vst [vmem:[%s3] sm:$0xff] %v1864
    %1871 = vst [vmem:[%s3 + $0x8] sm:$0xf] %v1865
    %1872 = vst [vmem:[%s3 + $0xc] sm:$0xff] %v1866
    %1873 = vst [vmem:[%s3 + $0x14] sm:$0xf] %v1867
    %1874 = vst [vmem:[%s3 + $0x18] sm:$0xff] %v1868
    %1875 = vst [vmem:[%s3 + $0x20] sm:$0xf] %v1869
    // Predicated region
    $region22: #{mynet_forward.3} parent=1 // pred_check
      _
    $region23: #{mynet_forward.3} parent=1 // pred_check_branch
      %1877 = sbr.rel (0) target = $region25
    $region24: #{mynet_forward.3} parent=1 // pred_region
      _
    $region25: #{mynet_forward.3} parent=1 // pred_fallthru
      _
    // Predicated region
    $region26: #{mynet_forward.3} parent=1 // pred_check
      _
    $region27: #{mynet_forward.3} parent=1 // pred_check_branch
      %1879 = sbr.rel (0) target = $region29
    $region28: #{mynet_forward.3} parent=1 // pred_region
      _
    $region29: #{mynet_forward.3} parent=1 // pred_fallthru
      _
    %1880 = vsyncpa [#allocation3], 1
    %1881 = vsyncpa [#allocation5], 1

// kernel: mynet_forward.5
$region0: #{mynet_forward.5}
  #allocation0 [shape = 'u32[]', space=smem, size = 0x4, offset = 0x4, fixed_abs, tag = 'smem constant byte address 0x4 - core index']
  #allocation1 [shape = 'u32[72,128]{1,0:T(1,128)}', space=vmem, size = 0x9000, scoped, tag = 'internal scratch']
  %s0 = inlined_call_operand.vmem [shape: bf16[8,1024], index: 0, kind: input, shape index: {}]
  %s1 = inlined_call_operand.hbm [shape: bf16[1024,128], index: 1, kind: input, shape index: {}]
  %s2 = inlined_call_operand.hbm [shape: f32[1,128], index: 2, kind: input, shape index: {}]
  %s3 = inlined_call_operand.hbm [shape: bf16[128,128], index: 3, kind: input, shape index: {}]
  %s4 = inlined_call_operand.hbm [shape: f32[1,128], index: 4, kind: input, shape index: {}]
  %s5 = inlined_call_operand.hbm [shape: bf16[128,128], index: 5, kind: input, shape index: {}]
  %s6 = inlined_call_operand.hbm [shape: f32[1,128], index: 6, kind: input, shape index: {}]
  %s7 = inlined_call_operand.vmem [shape: f32[8,128], index: 7, kind: output, shape index: {}]
  %s8 = sld [smem:[#allocation0]]
  $region62: #{mynet_forward.5} parent=0
    _
  %s10 = ssub.s32 1, %s8
  %s11 = scalar_select 0, %s10, %s8
  $region1: #{mynet_forward.5} parent=0
    #allocation2 [shape = 'u8[262144]{0}', space=vmem, size = 0x40000, scoped, tag = 'input window, operand 1, single buffered']
    #allocation3 [shape = 's32[1]{0}', space=sflag, size = 0x4, scoped, tag = 'scoped memory for mynet_forward.5']
    #allocation4 [shape = 'u8[512]{0}', space=vmem, size = 0x400, scoped, tag = 'input window, operand 2, single buffered']
    #allocation5 [shape = 's32[1]{0}', space=sflag, size = 0x4, scoped, tag = 'scoped memory for mynet_forward.5']
    #allocation6 [shape = 'u8[32768]{0}', space=vmem, size = 0x8000, scoped, tag = 'input window, operand 3, single buffered']
    #allocation7 [shape = 'u8[512]{0}', space=vmem, size = 0x400, scoped, tag = 'input window, operand 4, single buffered']
    #allocation8 [shape = 's32[1]{0}', space=sflag, size = 0x4, scoped, tag = 'scoped memory for mynet_forward.5']
    #allocation9 [shape = 'u8[32768]{0}', space=vmem, size = 0x8000, scoped, tag = 'input window, operand 5, single buffered']
    #allocation10 [shape = 'u8[512]{0}', space=vmem, size = 0x400, scoped, tag = 'input window, operand 6, single buffered']
    #allocation11 [shape = 's32[1]{0}', space=sflag, size = 0x4, scoped, tag = 'scoped memory for mynet_forward.5']
    %12 = vsyncpa [#allocation3], 0
    %13 = vsyncpa [#allocation5], 0
    %14 = vsyncpa [#allocation8], 0
    %15 = vsyncpa [#allocation11], 0
    // Predicated region
    $region2: #{mynet_forward.5} parent=1 // pred_check
      _
    $region3: #{mynet_forward.5} parent=1 // pred_check_branch
      %17 = sbr.rel (0) target = $region5
    $region4: #{mynet_forward.5} parent=1 // pred_region
      _
    $region5: #{mynet_forward.5} parent=1 // pred_fallthru
      _
    // Predicated region
    $region6: #{mynet_forward.5} parent=1 // pred_check
      _
    $region7: #{mynet_forward.5} parent=1 // pred_check_branch
      %19 = sbr.rel (0) target = $region9
    $region8: #{mynet_forward.5} parent=1 // pred_region
      %21 = vsyncadd [#allocation3], 0
      %s22 = sshll.u32 %s1, 4
      %s23 = int_to_ptr.hbm [resolvable:$true] %s22
      %s24 = sshll.u32 [#allocation2], 4
      %s25 = int_to_ptr.vmem [resolvable:$true] %s24
      %30 = dma.hbm_to_vmem [thread:$0]  %s23, 8192, %s25, [#allocation3], 64, 64, 4
    $region9: #{mynet_forward.5} parent=1 // pred_fallthru
      _
    // Predicated region
    $region10: #{mynet_forward.5} parent=1 // pred_check
      _
    $region11: #{mynet_forward.5} parent=1 // pred_check_branch
      %32 = sbr.rel (0) target = $region13
    $region12: #{mynet_forward.5} parent=1 // pred_region
      %34 = vsyncadd [#allocation5], 0
      %s36 = sshll.u32 %s2, 4
      %s37 = int_to_ptr.hbm [resolvable:$true] %s36
      %s38 = sshll.u32 [#allocation4], 4
      %s39 = int_to_ptr.vmem [resolvable:$true] %s38
      %41 = dma.hbm_to_vmem [thread:$0]  %s37, 16, %s39, [#allocation5]
    $region13: #{mynet_forward.5} parent=1 // pred_fallthru
      _
    // Predicated region
    $region14: #{mynet_forward.5} parent=1 // pred_check
      _
    $region15: #{mynet_forward.5} parent=1 // pred_check_branch
      %43 = sbr.rel (0) target = $region17
    $region16: #{mynet_forward.5} parent=1 // pred_region
      %45 = vsyncadd [#allocation5], 0
      %s46 = sshll.u32 %s3, 4
      %s47 = int_to_ptr.hbm [resolvable:$true] %s46
      %s48 = sshll.u32 [#allocation6], 4
      %s49 = int_to_ptr.vmem [resolvable:$true] %s48
      %54 = dma.hbm_to_vmem [thread:$0]  %s47, 1024, %s49, [#allocation5], 64, 64, 4
    $region17: #{mynet_forward.5} parent=1 // pred_fallthru
      _
    // Predicated region
    $region18: #{mynet_forward.5} parent=1 // pred_check
      _
    $region19: #{mynet_forward.5} parent=1 // pred_check_branch
      %56 = sbr.rel (0) target = $region21
    $region20: #{mynet_forward.5} parent=1 // pred_region
      %58 = vsyncadd [#allocation8], 0
      %s60 = sshll.u32 %s4, 4
      %s61 = int_to_ptr.hbm [resolvable:$true] %s60
      %s62 = sshll.u32 [#allocation7], 4
      %s63 = int_to_ptr.vmem [resolvable:$true] %s62
      %65 = dma.hbm_to_vmem [thread:$0]  %s61, 16, %s63, [#allocation8]
    $region21: #{mynet_forward.5} parent=1 // pred_fallthru
      _
    // Predicated region
    $region22: #{mynet_forward.5} parent=1 // pred_check
      _
    $region23: #{mynet_forward.5} parent=1 // pred_check_branch
      %67 = sbr.rel (0) target = $region25
    $region24: #{mynet_forward.5} parent=1 // pred_region
      %69 = vsyncadd [#allocation8], 0
      %s70 = sshll.u32 %s5, 4
      %s71 = int_to_ptr.hbm [resolvable:$true] %s70
      %s72 = sshll.u32 [#allocation9], 4
      %s73 = int_to_ptr.vmem [resolvable:$true] %s72
      %78 = dma.hbm_to_vmem [thread:$0]  %s71, 1024, %s73, [#allocation8], 64, 64, 4
    $region25: #{mynet_forward.5} parent=1 // pred_fallthru
      _
    // Predicated region
    $region26: #{mynet_forward.5} parent=1 // pred_check
      _
    $region27: #{mynet_forward.5} parent=1 // pred_check_branch
      %80 = sbr.rel (0) target = $region29
    $region28: #{mynet_forward.5} parent=1 // pred_region
      %82 = vsyncadd [#allocation11], 0
      %s84 = sshll.u32 %s6, 4
      %s85 = int_to_ptr.hbm [resolvable:$true] %s84
      %s86 = sshll.u32 [#allocation10], 4
      %s87 = int_to_ptr.vmem [resolvable:$true] %s86
      %89 = dma.hbm_to_vmem [thread:$0]  %s85, 16, %s87, [#allocation11]
    $region29: #{mynet_forward.5} parent=1 // pred_fallthru
      _
    // Predicated region
    $region30: #{mynet_forward.5} parent=1 // pred_check
      _
    $region31: #{mynet_forward.5} parent=1 // pred_check_branch
      %91 = sbr.rel (0) target = $region33
    $region32: #{mynet_forward.5} parent=1 // pred_region
      %93 = dma.done [#allocation3], 8192
    $region33: #{mynet_forward.5} parent=1 // pred_fallthru
      _
    // Predicated region
    $region34: #{mynet_forward.5} parent=1 // pred_check
      _
    $region35: #{mynet_forward.5} parent=1 // pred_check_branch
      %95 = sbr.rel (0) target = $region37
    $region36: #{mynet_forward.5} parent=1 // pred_region
      %97 = dma.done [#allocation5], 16
    $region37: #{mynet_forward.5} parent=1 // pred_fallthru
      _
    // Predicated region
    $region38: #{mynet_forward.5} parent=1 // pred_check
      _
    $region39: #{mynet_forward.5} parent=1 // pred_check_branch
      %99 = sbr.rel (0) target = $region41
    $region40: #{mynet_forward.5} parent=1 // pred_region
      %101 = dma.done [#allocation5], 1024
    $region41: #{mynet_forward.5} parent=1 // pred_fallthru
      _
    // Predicated region
    $region42: #{mynet_forward.5} parent=1 // pred_check
      _
    $region43: #{mynet_forward.5} parent=1 // pred_check_branch
      %103 = sbr.rel (0) target = $region45
    $region44: #{mynet_forward.5} parent=1 // pred_region
      %105 = dma.done [#allocation8], 16
    $region45: #{mynet_forward.5} parent=1 // pred_fallthru
      _
    // Predicated region
    $region46: #{mynet_forward.5} parent=1 // pred_check
      _
    $region47: #{mynet_forward.5} parent=1 // pred_check_branch
      %107 = sbr.rel (0) target = $region49
    $region48: #{mynet_forward.5} parent=1 // pred_region
      %109 = dma.done [#allocation8], 1024
    $region49: #{mynet_forward.5} parent=1 // pred_fallthru
      _
    // Predicated region
    $region50: #{mynet_forward.5} parent=1 // pred_check
      _
    $region51: #{mynet_forward.5} parent=1 // pred_check_branch
      %111 = sbr.rel (0) target = $region53
    $region52: #{mynet_forward.5} parent=1 // pred_region
      %113 = dma.done [#allocation11], 16
    $region53: #{mynet_forward.5} parent=1 // pred_fallthru
      _
    %v114 = vld [vmem:[%s0] sm:$0xff]
    %v115 = vld [vmem:[%s0 + $0x8] sm:$0xff]
    %v116 = vld [vmem:[%s0 + $0x10] sm:$0xff]
    %v117 = vld [vmem:[%s0 + $0x18] sm:$0xff]
    %v118 = vld [vmem:[#allocation2] sm:$0xf]
    %v119 = vld [vmem:[#allocation2 + $0x4] sm:$0xf]
    %v120 = vld [vmem:[#allocation2 + $0x8] sm:$0xf]
    %v121 = vld [vmem:[#allocation2 + $0xc] sm:$0xf]
    %v122 = vld [vmem:[#allocation2 + $0x10] sm:$0xf]
    %v123 = vld [vmem:[#allocation2 + $0x14] sm:$0xf]
    %v124 = vld [vmem:[#allocation2 + $0x18] sm:$0xf]
    %v125 = vld [vmem:[#allocation2 + $0x1c] sm:$0xf]
    %v126 = vld [vmem:[#allocation2 + $0x20] sm:$0xf]
    %v127 = vld [vmem:[#allocation2 + $0x24] sm:$0xf]
    %v128 = vld [vmem:[#allocation2 + $0x28] sm:$0xf]
    %v129 = vld [vmem:[#allocation2 + $0x2c] sm:$0xf]
    %v130 = vld [vmem:[#allocation2 + $0x30] sm:$0xf]
    %v131 = vld [vmem:[#allocation2 + $0x34] sm:$0xf]
    %v132 = vld [vmem:[#allocation2 + $0x38] sm:$0xf]
    %v133 = vld [vmem:[#allocation2 + $0x3c] sm:$0xf]
    %v134 = vld [vmem:[#allocation2 + $0x40] sm:$0xf]
    %v135 = vld [vmem:[#allocation2 + $0x44] sm:$0xf]
    %v136 = vld [vmem:[#allocation2 + $0x48] sm:$0xf]
    %v137 = vld [vmem:[#allocation2 + $0x4c] sm:$0xf]
    %v138 = vld [vmem:[#allocation2 + $0x50] sm:$0xf]
    %v139 = vld [vmem:[#allocation2 + $0x54] sm:$0xf]
    %v140 = vld [vmem:[#allocation2 + $0x58] sm:$0xf]
    %v141 = vld [vmem:[#allocation2 + $0x5c] sm:$0xf]
    %v142 = vld [vmem:[#allocation2 + $0x60] sm:$0xf]
    %v143 = vld [vmem:[#allocation2 + $0x64] sm:$0xf]
    %v144 = vld [vmem:[#allocation2 + $0x68] sm:$0xf]
    %v145 = vld [vmem:[#allocation2 + $0x6c] sm:$0xf]
    %v146 = vld [vmem:[#allocation2 + $0x70] sm:$0xf]
    %v147 = vld [vmem:[#allocation2 + $0x74] sm:$0xf]
    %v148 = vld [vmem:[#allocation2 + $0x78] sm:$0xf]
    %v149 = vld [vmem:[#allocation2 + $0x7c] sm:$0xf]
    %v150 = vld [vmem:[#allocation2 + $0x80] sm:$0xf]
    %v151 = vld [vmem:[#allocation2 + $0x84] sm:$0xf]
    %v152 = vld [vmem:[#allocation2 + $0x88] sm:$0xf]
    %v153 = vld [vmem:[#allocation2 + $0x8c] sm:$0xf]
    %v154 = vld [vmem:[#allocation2 + $0x90] sm:$0xf]
    %v155 = vld [vmem:[#allocation2 + $0x94] sm:$0xf]
    %v156 = vld [vmem:[#allocation2 + $0x98] sm:$0xf]
    %v157 = vld [vmem:[#allocation2 + $0x9c] sm:$0xf]
    %v158 = vld [vmem:[#allocation2 + $0xa0] sm:$0xf]
    %v159 = vld [vmem:[#allocation2 + $0xa4] sm:$0xf]
    %v160 = vld [vmem:[#allocation2 + $0xa8] sm:$0xf]
    %v161 = vld [vmem:[#allocation2 + $0xac] sm:$0xf]
    %v162 = vld [vmem:[#allocation2 + $0xb0] sm:$0xf]
    %v163 = vld [vmem:[#allocation2 + $0xb4] sm:$0xf]
    %v164 = vld [vmem:[#allocation2 + $0xb8] sm:$0xf]
    %v165 = vld [vmem:[#allocation2 + $0xbc] sm:$0xf]
    %v166 = vld [vmem:[#allocation2 + $0xc0] sm:$0xf]
    %v167 = vld [vmem:[#allocation2 + $0xc4] sm:$0xf]
    %v168 = vld [vmem:[#allocation2 + $0xc8] sm:$0xf]
    %v169 = vld [vmem:[#allocation2 + $0xcc] sm:$0xf]
    %v170 = vld [vmem:[#allocation2 + $0xd0] sm:$0xf]
    %v171 = vld [vmem:[#allocation2 + $0xd4] sm:$0xf]
    %v172 = vld [vmem:[#allocation2 + $0xd8] sm:$0xf]
    %v173 = vld [vmem:[#allocation2 + $0xdc] sm:$0xf]
    %v174 = vld [vmem:[#allocation2 + $0xe0] sm:$0xf]
    %v175 = vld [vmem:[#allocation2 + $0xe4] sm:$0xf]
    %v176 = vld [vmem:[#allocation2 + $0xe8] sm:$0xf]
    %v177 = vld [vmem:[#allocation2 + $0xec] sm:$0xf]
    %v178 = vld [vmem:[#allocation2 + $0xf0] sm:$0xf]
    %v179 = vld [vmem:[#allocation2 + $0xf4] sm:$0xf]
    %v180 = vld [vmem:[#allocation2 + $0xf8] sm:$0xf]
    %v181 = vld [vmem:[#allocation2 + $0xfc] sm:$0xf]
    %v182 = vld [vmem:[#allocation2 + $0x100] sm:$0xf]
    %v183 = vld [vmem:[#allocation2 + $0x104] sm:$0xf]
    %v184 = vld [vmem:[#allocation2 + $0x108] sm:$0xf]
    %v185 = vld [vmem:[#allocation2 + $0x10c] sm:$0xf]
    %v186 = vld [vmem:[#allocation2 + $0x110] sm:$0xf]
    %v187 = vld [vmem:[#allocation2 + $0x114] sm:$0xf]
    %v188 = vld [vmem:[#allocation2 + $0x118] sm:$0xf]
    %v189 = vld [vmem:[#allocation2 + $0x11c] sm:$0xf]
    %v190 = vld [vmem:[#allocation2 + $0x120] sm:$0xf]
    %v191 = vld [vmem:[#allocation2 + $0x124] sm:$0xf]
    %v192 = vld [vmem:[#allocation2 + $0x128] sm:$0xf]
    %v193 = vld [vmem:[#allocation2 + $0x12c] sm:$0xf]
    %v194 = vld [vmem:[#allocation2 + $0x130] sm:$0xf]
    %v195 = vld [vmem:[#allocation2 + $0x134] sm:$0xf]
    %v196 = vld [vmem:[#allocation2 + $0x138] sm:$0xf]
    %v197 = vld [vmem:[#allocation2 + $0x13c] sm:$0xf]
    %v198 = vld [vmem:[#allocation2 + $0x140] sm:$0xf]
    %v199 = vld [vmem:[#allocation2 + $0x144] sm:$0xf]
    %v200 = vld [vmem:[#allocation2 + $0x148] sm:$0xf]
    %v201 = vld [vmem:[#allocation2 + $0x14c] sm:$0xf]
    %v202 = vld [vmem:[#allocation2 + $0x150] sm:$0xf]
    %v203 = vld [vmem:[#allocation2 + $0x154] sm:$0xf]
    %v204 = vld [vmem:[#allocation2 + $0x158] sm:$0xf]
    %v205 = vld [vmem:[#allocation2 + $0x15c] sm:$0xf]
    %v206 = vld [vmem:[#allocation2 + $0x160] sm:$0xf]
    %v207 = vld [vmem:[#allocation2 + $0x164] sm:$0xf]
    %v208 = vld [vmem:[#allocation2 + $0x168] sm:$0xf]
    %v209 = vld [vmem:[#allocation2 + $0x16c] sm:$0xf]
    %v210 = vld [vmem:[#allocation2 + $0x170] sm:$0xf]
    %v211 = vld [vmem:[#allocation2 + $0x174] sm:$0xf]
    %v212 = vld [vmem:[#allocation2 + $0x178] sm:$0xf]
    %v213 = vld [vmem:[#allocation2 + $0x17c] sm:$0xf]
    %v214 = vld [vmem:[#allocation2 + $0x180] sm:$0xf]
    %v215 = vld [vmem:[#allocation2 + $0x184] sm:$0xf]
    %v216 = vld [vmem:[#allocation2 + $0x188] sm:$0xf]
    %v217 = vld [vmem:[#allocation2 + $0x18c] sm:$0xf]
    %v218 = vld [vmem:[#allocation2 + $0x190] sm:$0xf]
    %v219 = vld [vmem:[#allocation2 + $0x194] sm:$0xf]
    %v220 = vld [vmem:[#allocation2 + $0x198] sm:$0xf]
    %v221 = vld [vmem:[#allocation2 + $0x19c] sm:$0xf]
    %v222 = vld [vmem:[#allocation2 + $0x1a0] sm:$0xf]
    %v223 = vld [vmem:[#allocation2 + $0x1a4] sm:$0xf]
    %v224 = vld [vmem:[#allocation2 + $0x1a8] sm:$0xf]
    %v225 = vld [vmem:[#allocation2 + $0x1ac] sm:$0xf]
    %v226 = vld [vmem:[#allocation2 + $0x1b0] sm:$0xf]
    %v227 = vld [vmem:[#allocation2 + $0x1b4] sm:$0xf]
    %v228 = vld [vmem:[#allocation2 + $0x1b8] sm:$0xf]
    %v229 = vld [vmem:[#allocation2 + $0x1bc] sm:$0xf]
    %v230 = vld [vmem:[#allocation2 + $0x1c0] sm:$0xf]
    %v231 = vld [vmem:[#allocation2 + $0x1c4] sm:$0xf]
    %v232 = vld [vmem:[#allocation2 + $0x1c8] sm:$0xf]
    %v233 = vld [vmem:[#allocation2 + $0x1cc] sm:$0xf]
    %v234 = vld [vmem:[#allocation2 + $0x1d0] sm:$0xf]
    %v235 = vld [vmem:[#allocation2 + $0x1d4] sm:$0xf]
    %v236 = vld [vmem:[#allocation2 + $0x1d8] sm:$0xf]
    %v237 = vld [vmem:[#allocation2 + $0x1dc] sm:$0xf]
    %v238 = vld [vmem:[#allocation2 + $0x1e0] sm:$0xf]
    %v239 = vld [vmem:[#allocation2 + $0x1e4] sm:$0xf]
    %v240 = vld [vmem:[#allocation2 + $0x1e8] sm:$0xf]
    %v241 = vld [vmem:[#allocation2 + $0x1ec] sm:$0xf]
    %v242 = vld [vmem:[#allocation2 + $0x1f0] sm:$0xf]
    %v243 = vld [vmem:[#allocation2 + $0x1f4] sm:$0xf]
    %v244 = vld [vmem:[#allocation2 + $0x1f8] sm:$0xf]
    %v245 = vld [vmem:[#allocation2 + $0x1fc] sm:$0xf]
    %v246 = vld [vmem:[#allocation4] sm:$0x1]
    %v248 = vperm.slane %v246, 0
    %v254 = vunpack.c.l.b16 %v114
    %v255 = vunpack.c.h.b16 %v114
    %v256 = vunpack.c.l.b16 %v115
    %v257 = vunpack.c.h.b16 %v115
    %v258 = vunpack.c.l.b16 %v116
    %v259 = vunpack.c.h.b16 %v116
    %v260 = vunpack.c.l.b16 %v117
    %v261 = vunpack.c.h.b16 %v117
    %v262 = vpack.c.b16 %v254, %v254
    %v263 = vpack.c.b16 %v255, %v255
    %v264 = vpack.c.b16 %v256, %v256
    %v265 = vpack.c.b16 %v257, %v257
    %v266 = vpack.c.b16 %v258, %v258
    %v267 = vpack.c.b16 %v259, %v259
    %v268 = vpack.c.b16 %v260, %v260
    %v269 = vpack.c.b16 %v261, %v261
    %v406 = vunpack.c.l.b16 %v118
    %v407 = vunpack.c.l.b16 %v119
    %v408 = vunpack.c.l.b16 %v120
    %v409 = vunpack.c.l.b16 %v121
    %v410 = vunpack.c.l.b16 %v122
    %v411 = vunpack.c.l.b16 %v123
    %v412 = vunpack.c.l.b16 %v124
    %v413 = vunpack.c.l.b16 %v125
    %v414 = vunpack.c.l.b16 %v126
    %v415 = vunpack.c.l.b16 %v127
    %v416 = vunpack.c.l.b16 %v128
    %v417 = vunpack.c.l.b16 %v129
    %v418 = vunpack.c.l.b16 %v130
    %v419 = vunpack.c.l.b16 %v131
    %v420 = vunpack.c.l.b16 %v132
    %v421 = vunpack.c.l.b16 %v133
    %v422 = vunpack.c.l.b16 %v134
    %v423 = vunpack.c.l.b16 %v135
    %v424 = vunpack.c.l.b16 %v136
    %v425 = vunpack.c.l.b16 %v137
    %v426 = vunpack.c.l.b16 %v138
    %v427 = vunpack.c.l.b16 %v139
    %v428 = vunpack.c.l.b16 %v140
    %v429 = vunpack.c.l.b16 %v141
    %v430 = vunpack.c.l.b16 %v142
    %v431 = vunpack.c.l.b16 %v143
    %v432 = vunpack.c.l.b16 %v144
    %v433 = vunpack.c.l.b16 %v145
    %v434 = vunpack.c.l.b16 %v146
    %v435 = vunpack.c.l.b16 %v147
    %v436 = vunpack.c.l.b16 %v148
    %v437 = vunpack.c.l.b16 %v149
    %v438 = vunpack.c.l.b16 %v150
    %v439 = vunpack.c.l.b16 %v151
    %v440 = vunpack.c.l.b16 %v152
    %v441 = vunpack.c.l.b16 %v153
    %v442 = vunpack.c.l.b16 %v154
    %v443 = vunpack.c.l.b16 %v155
    %v444 = vunpack.c.l.b16 %v156
    %v445 = vunpack.c.l.b16 %v157
    %v446 = vunpack.c.l.b16 %v158
    %v447 = vunpack.c.l.b16 %v159
    %v448 = vunpack.c.l.b16 %v160
    %v449 = vunpack.c.l.b16 %v161
    %v450 = vunpack.c.l.b16 %v162
    %v451 = vunpack.c.l.b16 %v163
    %v452 = vunpack.c.l.b16 %v164
    %v453 = vunpack.c.l.b16 %v165
    %v454 = vunpack.c.l.b16 %v166
    %v455 = vunpack.c.l.b16 %v167
    %v456 = vunpack.c.l.b16 %v168
    %v457 = vunpack.c.l.b16 %v169
    %v458 = vunpack.c.l.b16 %v170
    %v459 = vunpack.c.l.b16 %v171
    %v460 = vunpack.c.l.b16 %v172
    %v461 = vunpack.c.l.b16 %v173
    %v462 = vunpack.c.l.b16 %v174
    %v463 = vunpack.c.l.b16 %v175
    %v464 = vunpack.c.l.b16 %v176
    %v465 = vunpack.c.l.b16 %v177
    %v466 = vunpack.c.l.b16 %v178
    %v467 = vunpack.c.l.b16 %v179
    %v468 = vunpack.c.l.b16 %v180
    %v469 = vunpack.c.l.b16 %v181
    %v470 = vunpack.c.l.b16 %v182
    %v471 = vunpack.c.l.b16 %v183
    %v472 = vunpack.c.l.b16 %v184
    %v473 = vunpack.c.l.b16 %v185
    %v474 = vunpack.c.l.b16 %v186
    %v475 = vunpack.c.l.b16 %v187
    %v476 = vunpack.c.l.b16 %v188
    %v477 = vunpack.c.l.b16 %v189
    %v478 = vunpack.c.l.b16 %v190
    %v479 = vunpack.c.l.b16 %v191
    %v480 = vunpack.c.l.b16 %v192
    %v481 = vunpack.c.l.b16 %v193
    %v482 = vunpack.c.l.b16 %v194
    %v483 = vunpack.c.l.b16 %v195
    %v484 = vunpack.c.l.b16 %v196
    %v485 = vunpack.c.l.b16 %v197
    %v486 = vunpack.c.l.b16 %v198
    %v487 = vunpack.c.l.b16 %v199
    %v488 = vunpack.c.l.b16 %v200
    %v489 = vunpack.c.l.b16 %v201
    %v490 = vunpack.c.l.b16 %v202
    %v491 = vunpack.c.l.b16 %v203
    %v492 = vunpack.c.l.b16 %v204
    %v493 = vunpack.c.l.b16 %v205
    %v494 = vunpack.c.l.b16 %v206
    %v495 = vunpack.c.l.b16 %v207
    %v496 = vunpack.c.l.b16 %v208
    %v497 = vunpack.c.l.b16 %v209
    %v498 = vunpack.c.l.b16 %v210
    %v499 = vunpack.c.l.b16 %v211
    %v500 = vunpack.c.l.b16 %v212
    %v501 = vunpack.c.l.b16 %v213
    %v502 = vunpack.c.l.b16 %v214
    %v503 = vunpack.c.l.b16 %v215
    %v504 = vunpack.c.l.b16 %v216
    %v505 = vunpack.c.l.b16 %v217
    %v506 = vunpack.c.l.b16 %v218
    %v507 = vunpack.c.l.b16 %v219
    %v508 = vunpack.c.l.b16 %v220
    %v509 = vunpack.c.l.b16 %v221
    %v510 = vunpack.c.l.b16 %v222
    %v511 = vunpack.c.l.b16 %v223
    %v512 = vunpack.c.l.b16 %v224
    %v513 = vunpack.c.l.b16 %v225
    %v514 = vunpack.c.l.b16 %v226
    %v515 = vunpack.c.l.b16 %v227
    %v516 = vunpack.c.l.b16 %v228
    %v517 = vunpack.c.l.b16 %v229
    %v518 = vunpack.c.l.b16 %v230
    %v519 = vunpack.c.l.b16 %v231
    %v520 = vunpack.c.l.b16 %v232
    %v521 = vunpack.c.l.b16 %v233
    %v522 = vunpack.c.l.b16 %v234
    %v523 = vunpack.c.l.b16 %v235
    %v524 = vunpack.c.l.b16 %v236
    %v525 = vunpack.c.l.b16 %v237
    %v526 = vunpack.c.l.b16 %v238
    %v527 = vunpack.c.l.b16 %v239
    %v528 = vunpack.c.l.b16 %v240
    %v529 = vunpack.c.l.b16 %v241
    %v530 = vunpack.c.l.b16 %v242
    %v531 = vunpack.c.l.b16 %v243
    %v532 = vunpack.c.l.b16 %v244
    %v533 = vunpack.c.l.b16 %v245
    %v534 = vpack.c.b16 %v407, %v406
    %v535 = vpack.c.b16 %v409, %v408
    %v536 = vpack.c.b16 %v411, %v410
    %v537 = vpack.c.b16 %v413, %v412
    %v538 = vpack.c.b16 %v415, %v414
    %v539 = vpack.c.b16 %v417, %v416
    %v540 = vpack.c.b16 %v419, %v418
    %v541 = vpack.c.b16 %v421, %v420
    %v542 = vpack.c.b16 %v423, %v422
    %v543 = vpack.c.b16 %v425, %v424
    %v544 = vpack.c.b16 %v427, %v426
    %v545 = vpack.c.b16 %v429, %v428
    %v546 = vpack.c.b16 %v431, %v430
    %v547 = vpack.c.b16 %v433, %v432
    %v548 = vpack.c.b16 %v435, %v434
    %v549 = vpack.c.b16 %v437, %v436
    %v550 = vpack.c.b16 %v439, %v438
    %v551 = vpack.c.b16 %v441, %v440
    %v552 = vpack.c.b16 %v443, %v442
    %v553 = vpack.c.b16 %v445, %v444
    %v554 = vpack.c.b16 %v447, %v446
    %v555 = vpack.c.b16 %v449, %v448
    %v556 = vpack.c.b16 %v451, %v450
    %v557 = vpack.c.b16 %v453, %v452
    %v558 = vpack.c.b16 %v455, %v454
    %v559 = vpack.c.b16 %v457, %v456
    %v560 = vpack.c.b16 %v459, %v458
    %v561 = vpack.c.b16 %v461, %v460
    %v562 = vpack.c.b16 %v463, %v462
    %v563 = vpack.c.b16 %v465, %v464
    %v564 = vpack.c.b16 %v467, %v466
    %v565 = vpack.c.b16 %v469, %v468
    %v566 = vpack.c.b16 %v471, %v470
    %v567 = vpack.c.b16 %v473, %v472
    %v568 = vpack.c.b16 %v475, %v474
    %v569 = vpack.c.b16 %v477, %v476
    %v570 = vpack.c.b16 %v479, %v478
    %v571 = vpack.c.b16 %v481, %v480
    %v572 = vpack.c.b16 %v483, %v482
    %v573 = vpack.c.b16 %v485, %v484
    %v574 = vpack.c.b16 %v487, %v486
    %v575 = vpack.c.b16 %v489, %v488
    %v576 = vpack.c.b16 %v491, %v490
    %v577 = vpack.c.b16 %v493, %v492
    %v578 = vpack.c.b16 %v495, %v494
    %v579 = vpack.c.b16 %v497, %v496
    %v580 = vpack.c.b16 %v499, %v498
    %v581 = vpack.c.b16 %v501, %v500
    %v582 = vpack.c.b16 %v503, %v502
    %v583 = vpack.c.b16 %v505, %v504
    %v584 = vpack.c.b16 %v507, %v506
    %v585 = vpack.c.b16 %v509, %v508
    %v586 = vpack.c.b16 %v511, %v510
    %v587 = vpack.c.b16 %v513, %v512
    %v588 = vpack.c.b16 %v515, %v514
    %v589 = vpack.c.b16 %v517, %v516
    %v590 = vpack.c.b16 %v519, %v518
    %v591 = vpack.c.b16 %v521, %v520
    %v592 = vpack.c.b16 %v523, %v522
    %v593 = vpack.c.b16 %v525, %v524
    %v594 = vpack.c.b16 %v527, %v526
    %v595 = vpack.c.b16 %v529, %v528
    %v596 = vpack.c.b16 %v531, %v530
    %v597 = vpack.c.b16 %v533, %v532
    %662 = vmatpush.bf16.msra.mxu0 %v541
    %663 = vmatpush.bf16.msra.mxu0 %v540
    %664 = vmatpush.bf16.msra.mxu0 %v539
    %665 = vmatpush.bf16.msra.mxu0 %v538
    %666 = vmatpush.bf16.msra.mxu0 %v537
    %667 = vmatpush.bf16.msra.mxu0 %v536
    %668 = vmatpush.bf16.msra.mxu0 %v535
    %669 = vmatpush.bf16.msra.mxu0 %v534
    %670 = vmatmul.bf16.gmra.mxu0 %v262
    %v671 = vpop.f32.mrf.mxu0
    %v672 = vadd.f32 %v248, %v671
    %v673 = vpop.f32.mrf.mxu0
    %674 = vdwg.mxu0
    %675 = vmatpush.bf16.msra.mxu0 %v549
    %676 = vmatpush.bf16.msra.mxu0 %v548
    %677 = vmatpush.bf16.msra.mxu0 %v547
    %678 = vmatpush.bf16.msra.mxu0 %v546
    %679 = vmatpush.bf16.msra.mxu0 %v545
    %680 = vmatpush.bf16.msra.mxu0 %v544
    %681 = vmatpush.bf16.msra.mxu0 %v543
    %682 = vmatpush.bf16.msra.mxu0 %v542
    %683 = vmatmul.bf16.gmra.mxu0 %v263
    %v684 = vpop.f32.mrf.mxu0
    %v685 = vadd.f32 %v672, %v684
    %v686 = vpop.f32.mrf.mxu0
    %687 = vdwg.mxu0
    %688 = vmatpush.bf16.msra.mxu0 %v557
    %689 = vmatpush.bf16.msra.mxu0 %v556
    %690 = vmatpush.bf16.msra.mxu0 %v555
    %691 = vmatpush.bf16.msra.mxu0 %v554
    %692 = vmatpush.bf16.msra.mxu0 %v553
    %693 = vmatpush.bf16.msra.mxu0 %v552
    %694 = vmatpush.bf16.msra.mxu0 %v551
    %695 = vmatpush.bf16.msra.mxu0 %v550
    %696 = vmatmul.bf16.gmra.mxu0 %v264
    %v697 = vpop.f32.mrf.mxu0
    %v698 = vadd.f32 %v685, %v697
    %v699 = vpop.f32.mrf.mxu0
    %700 = vdwg.mxu0
    %701 = vmatpush.bf16.msra.mxu0 %v565
    %702 = vmatpush.bf16.msra.mxu0 %v564
    %703 = vmatpush.bf16.msra.mxu0 %v563
    %704 = vmatpush.bf16.msra.mxu0 %v562
    %705 = vmatpush.bf16.msra.mxu0 %v561
    %706 = vmatpush.bf16.msra.mxu0 %v560
    %707 = vmatpush.bf16.msra.mxu0 %v559
    %708 = vmatpush.bf16.msra.mxu0 %v558
    %709 = vmatmul.bf16.gmra.mxu0 %v265
    %v710 = vpop.f32.mrf.mxu0
    %v711 = vadd.f32 %v698, %v710
    %v712 = vpop.f32.mrf.mxu0
    %713 = vdwg.mxu0
    %714 = vmatpush.bf16.msra.mxu0 %v573
    %715 = vmatpush.bf16.msra.mxu0 %v572
    %716 = vmatpush.bf16.msra.mxu0 %v571
    %717 = vmatpush.bf16.msra.mxu0 %v570
    %718 = vmatpush.bf16.msra.mxu0 %v569
    %719 = vmatpush.bf16.msra.mxu0 %v568
    %720 = vmatpush.bf16.msra.mxu0 %v567
    %721 = vmatpush.bf16.msra.mxu0 %v566
    %722 = vmatmul.bf16.gmra.mxu0 %v266
    %v723 = vpop.f32.mrf.mxu0
    %v724 = vadd.f32 %v711, %v723
    %v725 = vpop.f32.mrf.mxu0
    %726 = vdwg.mxu0
    %727 = vmatpush.bf16.msra.mxu0 %v581
    %728 = vmatpush.bf16.msra.mxu0 %v580
    %729 = vmatpush.bf16.msra.mxu0 %v579
    %730 = vmatpush.bf16.msra.mxu0 %v578
    %731 = vmatpush.bf16.msra.mxu0 %v577
    %732 = vmatpush.bf16.msra.mxu0 %v576
    %733 = vmatpush.bf16.msra.mxu0 %v575
    %734 = vmatpush.bf16.msra.mxu0 %v574
    %735 = vmatmul.bf16.gmra.mxu0 %v267
    %v736 = vpop.f32.mrf.mxu0
    %v737 = vadd.f32 %v724, %v736
    %v738 = vpop.f32.mrf.mxu0
    %739 = vdwg.mxu0
    %740 = vmatpush.bf16.msra.mxu0 %v589
    %741 = vmatpush.bf16.msra.mxu0 %v588
    %742 = vmatpush.bf16.msra.mxu0 %v587
    %743 = vmatpush.bf16.msra.mxu0 %v586
    %744 = vmatpush.bf16.msra.mxu0 %v585
    %745 = vmatpush.bf16.msra.mxu0 %v584
    %746 = vmatpush.bf16.msra.mxu0 %v583
    %747 = vmatpush.bf16.msra.mxu0 %v582
    %748 = vmatmul.bf16.gmra.mxu0 %v268
    %v749 = vpop.f32.mrf.mxu0
    %v750 = vadd.f32 %v737, %v749
    %v751 = vpop.f32.mrf.mxu0
    %752 = vdwg.mxu0
    %753 = vmatpush.bf16.msra.mxu0 %v597
    %754 = vmatpush.bf16.msra.mxu0 %v596
    %755 = vmatpush.bf16.msra.mxu0 %v595
    %756 = vmatpush.bf16.msra.mxu0 %v594
    %757 = vmatpush.bf16.msra.mxu0 %v593
    %758 = vmatpush.bf16.msra.mxu0 %v592
    %759 = vmatpush.bf16.msra.mxu0 %v591
    %760 = vmatpush.bf16.msra.mxu0 %v590
    %761 = vmatmul.bf16.gmra.mxu0 %v269
    %v762 = vpop.f32.mrf.mxu0
    %v763 = vadd.f32 %v750, %v762
    %v764 = vpop.f32.mrf.mxu0
    %765 = vdwg.mxu0
    %v766 = vmax.f32 %v763, 0.0
    %v767 = vpack.c.bf16 %v766, %v766
    %v768 = vld [vmem:[#allocation6] sm:$0xf]
    %v769 = vld [vmem:[#allocation6 + $0x4] sm:$0xf]
    %v770 = vld [vmem:[#allocation6 + $0x8] sm:$0xf]
    %v771 = vld [vmem:[#allocation6 + $0xc] sm:$0xf]
    %v772 = vld [vmem:[#allocation6 + $0x10] sm:$0xf]
    %v773 = vld [vmem:[#allocation6 + $0x14] sm:$0xf]
    %v774 = vld [vmem:[#allocation6 + $0x18] sm:$0xf]
    %v775 = vld [vmem:[#allocation6 + $0x1c] sm:$0xf]
    %v776 = vld [vmem:[#allocation6 + $0x20] sm:$0xf]
    %v777 = vld [vmem:[#allocation6 + $0x24] sm:$0xf]
    %v778 = vld [vmem:[#allocation6 + $0x28] sm:$0xf]
    %v779 = vld [vmem:[#allocation6 + $0x2c] sm:$0xf]
    %v780 = vld [vmem:[#allocation6 + $0x30] sm:$0xf]
    %v781 = vld [vmem:[#allocation6 + $0x34] sm:$0xf]
    %v782 = vld [vmem:[#allocation6 + $0x38] sm:$0xf]
    %v783 = vld [vmem:[#allocation6 + $0x3c] sm:$0xf]
    %v784 = vld [vmem:[#allocation7] sm:$0x1]
    %v786 = vperm.slane %v784, 0
    %v804 = vunpack.c.l.b16 %v768
    %v805 = vunpack.c.l.b16 %v769
    %v806 = vunpack.c.l.b16 %v770
    %v807 = vunpack.c.l.b16 %v771
    %v808 = vunpack.c.l.b16 %v772
    %v809 = vunpack.c.l.b16 %v773
    %v810 = vunpack.c.l.b16 %v774
    %v811 = vunpack.c.l.b16 %v775
    %v812 = vunpack.c.l.b16 %v776
    %v813 = vunpack.c.l.b16 %v777
    %v814 = vunpack.c.l.b16 %v778
    %v815 = vunpack.c.l.b16 %v779
    %v816 = vunpack.c.l.b16 %v780
    %v817 = vunpack.c.l.b16 %v781
    %v818 = vunpack.c.l.b16 %v782
    %v819 = vunpack.c.l.b16 %v783
    %v820 = vpack.c.b16 %v805, %v804
    %v821 = vpack.c.b16 %v807, %v806
    %v822 = vpack.c.b16 %v809, %v808
    %v823 = vpack.c.b16 %v811, %v810
    %v824 = vpack.c.b16 %v813, %v812
    %v825 = vpack.c.b16 %v815, %v814
    %v826 = vpack.c.b16 %v817, %v816
    %v827 = vpack.c.b16 %v819, %v818
    %836 = vmatpush.bf16.msra.mxu0 %v827
    %837 = vmatpush.bf16.msra.mxu0 %v826
    %838 = vmatpush.bf16.msra.mxu0 %v825
    %839 = vmatpush.bf16.msra.mxu0 %v824
    %840 = vmatpush.bf16.msra.mxu0 %v823
    %841 = vmatpush.bf16.msra.mxu0 %v822
    %842 = vmatpush.bf16.msra.mxu0 %v821
    %843 = vmatpush.bf16.msra.mxu0 %v820
    %844 = vmatmul.bf16.gmra.mxu0 %v767
    %v845 = vpop.f32.mrf.mxu0
    %v846 = vadd.f32 %v786, %v845
    %v847 = vpop.f32.mrf.mxu0
    %848 = vdwg.mxu0
    %v849 = vmax.f32 %v846, 0.0
    %v850 = vpack.c.bf16 %v849, %v849
    %v851 = vld [vmem:[#allocation9] sm:$0xf]
    %v852 = vld [vmem:[#allocation9 + $0x4] sm:$0xf]
    %v853 = vld [vmem:[#allocation9 + $0x8] sm:$0xf]
    %v854 = vld [vmem:[#allocation9 + $0xc] sm:$0xf]
    %v855 = vld [vmem:[#allocation9 + $0x10] sm:$0xf]
    %v856 = vld [vmem:[#allocation9 + $0x14] sm:$0xf]
    %v857 = vld [vmem:[#allocation9 + $0x18] sm:$0xf]
    %v858 = vld [vmem:[#allocation9 + $0x1c] sm:$0xf]
    %v859 = vld [vmem:[#allocation9 + $0x20] sm:$0xf]
    %v860 = vld [vmem:[#allocation9 + $0x24] sm:$0xf]
    %v861 = vld [vmem:[#allocation9 + $0x28] sm:$0xf]
    %v862 = vld [vmem:[#allocation9 + $0x2c] sm:$0xf]
    %v863 = vld [vmem:[#allocation9 + $0x30] sm:$0xf]
    %v864 = vld [vmem:[#allocation9 + $0x34] sm:$0xf]
    %v865 = vld [vmem:[#allocation9 + $0x38] sm:$0xf]
    %v866 = vld [vmem:[#allocation9 + $0x3c] sm:$0xf]
    %v867 = vld [vmem:[#allocation10] sm:$0x1]
    %v869 = vperm.slane %v867, 0
    %v887 = vunpack.c.l.b16 %v851
    %v888 = vunpack.c.l.b16 %v852
    %v889 = vunpack.c.l.b16 %v853
    %v890 = vunpack.c.l.b16 %v854
    %v891 = vunpack.c.l.b16 %v855
    %v892 = vunpack.c.l.b16 %v856
    %v893 = vunpack.c.l.b16 %v857
    %v894 = vunpack.c.l.b16 %v858
    %v895 = vunpack.c.l.b16 %v859
    %v896 = vunpack.c.l.b16 %v860
    %v897 = vunpack.c.l.b16 %v861
    %v898 = vunpack.c.l.b16 %v862
    %v899 = vunpack.c.l.b16 %v863
    %v900 = vunpack.c.l.b16 %v864
    %v901 = vunpack.c.l.b16 %v865
    %v902 = vunpack.c.l.b16 %v866
    %v903 = vpack.c.b16 %v888, %v887
    %v904 = vpack.c.b16 %v890, %v889
    %v905 = vpack.c.b16 %v892, %v891
    %v906 = vpack.c.b16 %v894, %v893
    %v907 = vpack.c.b16 %v896, %v895
    %v908 = vpack.c.b16 %v898, %v897
    %v909 = vpack.c.b16 %v900, %v899
    %v910 = vpack.c.b16 %v902, %v901
    %919 = vmatpush.bf16.msra.mxu0 %v910
    %920 = vmatpush.bf16.msra.mxu0 %v909
    %921 = vmatpush.bf16.msra.mxu0 %v908
    %922 = vmatpush.bf16.msra.mxu0 %v907
    %923 = vmatpush.bf16.msra.mxu0 %v906
    %924 = vmatpush.bf16.msra.mxu0 %v905
    %925 = vmatpush.bf16.msra.mxu0 %v904
    %926 = vmatpush.bf16.msra.mxu0 %v903
    %927 = vmatmul.bf16.gmra.mxu0 %v850
    %v928 = vpop.f32.mrf.mxu0
    %v929 = vadd.f32 %v869, %v928
    %v930 = vpop.f32.mrf.mxu0
    %931 = vdwg.mxu0
    %932 = vst [vmem:[%s7] sm:$0xff] %v929
    // Predicated region
    $region54: #{mynet_forward.5} parent=1 // pred_check
      _
    $region55: #{mynet_forward.5} parent=1 // pred_check_branch
      %934 = sbr.rel (0) target = $region57
    $region56: #{mynet_forward.5} parent=1 // pred_region
      _
    $region57: #{mynet_forward.5} parent=1 // pred_fallthru
      _
    // Predicated region
    $region58: #{mynet_forward.5} parent=1 // pred_check
      _
    $region59: #{mynet_forward.5} parent=1 // pred_check_branch
      %936 = sbr.rel (0) target = $region61
    $region60: #{mynet_forward.5} parent=1 // pred_region
      _
    $region61: #{mynet_forward.5} parent=1 // pred_fallthru
      _
    %937 = vsyncpa [#allocation3], 1
    %938 = vsyncpa [#allocation5], 1
    %939 = vsyncpa [#allocation8], 1
    %940 = vsyncpa [#allocation11], 1

// kernel: mynet_forward.4
$region0: #{mynet_forward.4}
  #allocation0 [shape = 'u32[]', space=smem, size = 0x4, offset = 0x4, fixed_abs, tag = 'smem constant byte address 0x4 - core index']
  #allocation1 [shape = 'u32[72,128]{1,0:T(1,128)}', space=vmem, size = 0x9000, scoped, tag = 'internal scratch']
  %s0 = inlined_call_operand.vmem [shape: bf16[6,8,384], index: 0, kind: input, shape index: {}]
  %s1 = inlined_call_operand.hbm [shape: bf16[10,384,256], index: 1, kind: input, shape index: {}]
  %s2 = inlined_call_operand.hbm [shape: f32[1,256], index: 2, kind: input, shape index: {}]
  %s3 = inlined_call_operand.vmem [shape: bf16[8,256], index: 3, kind: output, shape index: {}]
  %s4 = sld [smem:[#allocation0]]
  $region30: #{mynet_forward.4} parent=0
    _
  %s6 = ssub.s32 1, %s4
  %s7 = scalar_select 0, %s6, %s4
  $region1: #{mynet_forward.4} parent=0
    #allocation2 [shape = 'u8[1966080]{0}', space=vmem, size = 0x1e0000, scoped, tag = 'input window, operand 1, single buffered']
    #allocation3 [shape = 's32[1]{0}', space=sflag, size = 0x4, scoped, tag = 'scoped memory for mynet_forward.4']
    #allocation4 [shape = 'u8[1024]{0}', space=vmem, size = 0x400, scoped, tag = 'input window, operand 2, single buffered']
    #allocation5 [shape = 's32[1]{0}', space=sflag, size = 0x4, scoped, tag = 'scoped memory for mynet_forward.4']
    %8 = vsyncpa [#allocation3], 0
    %9 = vsyncpa [#allocation5], 0
    // Predicated region
    $region2: #{mynet_forward.4} parent=1 // pred_check
      _
    $region3: #{mynet_forward.4} parent=1 // pred_check_branch
      %11 = sbr.rel (0) target = $region5
    $region4: #{mynet_forward.4} parent=1 // pred_region
      _
    $region5: #{mynet_forward.4} parent=1 // pred_fallthru
      _
    // Predicated region
    $region6: #{mynet_forward.4} parent=1 // pred_check
      _
    $region7: #{mynet_forward.4} parent=1 // pred_check_branch
      %13 = sbr.rel (0) target = $region9
    $region8: #{mynet_forward.4} parent=1 // pred_region
      %15 = vsyncadd [#allocation3], 0
      %s16 = sshll.u32 %s1, 4
      %s17 = int_to_ptr.hbm [resolvable:$true] %s16
      %s18 = sshll.u32 [#allocation2], 4
      %s19 = int_to_ptr.vmem [resolvable:$true] %s18
      %24 = dma.hbm_to_vmem [thread:$0]  %s17, 61440, %s19, [#allocation3], 128, 128, 8
    $region9: #{mynet_forward.4} parent=1 // pred_fallthru
      _
    // Predicated region
    $region10: #{mynet_forward.4} parent=1 // pred_check
      _
    $region11: #{mynet_forward.4} parent=1 // pred_check_branch
      %26 = sbr.rel (0) target = $region13
    $region12: #{mynet_forward.4} parent=1 // pred_region
      %28 = vsyncadd [#allocation5], 0
      %s30 = sshll.u32 %s2, 4
      %s31 = int_to_ptr.hbm [resolvable:$true] %s30
      %s32 = sshll.u32 [#allocation4], 4
      %s33 = int_to_ptr.vmem [resolvable:$true] %s32
      %35 = dma.hbm_to_vmem [thread:$0]  %s31, 32, %s33, [#allocation5]
    $region13: #{mynet_forward.4} parent=1 // pred_fallthru
      _
    // Predicated region
    $region14: #{mynet_forward.4} parent=1 // pred_check
      _
    $region15: #{mynet_forward.4} parent=1 // pred_check_branch
      %37 = sbr.rel (0) target = $region17
    $region16: #{mynet_forward.4} parent=1 // pred_region
      %39 = dma.done [#allocation3], 61440
    $region17: #{mynet_forward.4} parent=1 // pred_fallthru
      _
    // Predicated region
    $region18: #{mynet_forward.4} parent=1 // pred_check
      _
    $region19: #{mynet_forward.4} parent=1 // pred_check_branch
      %41 = sbr.rel (0) target = $region21
    $region20: #{mynet_forward.4} parent=1 // pred_region
      %43 = dma.done [#allocation5], 32
    $region21: #{mynet_forward.4} parent=1 // pred_fallthru
      _
    %v44 = vld [vmem:[%s0] sm:$0xff]
    %v45 = vld [vmem:[%s0 + $0x8] sm:$0xf]
    %v46 = vld [vmem:[#allocation2] sm:$0xff]
    %v47 = vld [vmem:[#allocation2 + $0x8] sm:$0xff]
    %v48 = vld [vmem:[#allocation2 + $0x10] sm:$0xff]
    %v49 = vld [vmem:[#allocation2 + $0x18] sm:$0xff]
    %v50 = vld [vmem:[#allocation2 + $0x20] sm:$0xff]
    %v51 = vld [vmem:[#allocation2 + $0x28] sm:$0xff]
    %v52 = vld [vmem:[#allocation2 + $0x30] sm:$0xff]
    %v53 = vld [vmem:[#allocation2 + $0x38] sm:$0xff]
    %v54 = vld [vmem:[#allocation2 + $0x40] sm:$0xff]
    %v55 = vld [vmem:[#allocation2 + $0x48] sm:$0xff]
    %v56 = vld [vmem:[#allocation2 + $0x50] sm:$0xff]
    %v57 = vld [vmem:[#allocation2 + $0x58] sm:$0xff]
    %v58 = vld [vmem:[#allocation2 + $0x60] sm:$0xff]
    %v59 = vld [vmem:[#allocation2 + $0x68] sm:$0xff]
    %v60 = vld [vmem:[#allocation2 + $0x70] sm:$0xff]
    %v61 = vld [vmem:[#allocation2 + $0x78] sm:$0xff]
    %v62 = vld [vmem:[#allocation2 + $0x80] sm:$0xff]
    %v63 = vld [vmem:[#allocation2 + $0x88] sm:$0xff]
    %v64 = vld [vmem:[#allocation2 + $0x90] sm:$0xff]
    %v65 = vld [vmem:[#allocation2 + $0x98] sm:$0xff]
    %v66 = vld [vmem:[#allocation2 + $0xa0] sm:$0xff]
    %v67 = vld [vmem:[#allocation2 + $0xa8] sm:$0xff]
    %v68 = vld [vmem:[#allocation2 + $0xb0] sm:$0xff]
    %v69 = vld [vmem:[#allocation2 + $0xb8] sm:$0xff]
    %v70 = vld [vmem:[#allocation2 + $0xc0] sm:$0xff]
    %v71 = vld [vmem:[#allocation2 + $0xc8] sm:$0xff]
    %v72 = vld [vmem:[#allocation2 + $0xd0] sm:$0xff]
    %v73 = vld [vmem:[#allocation2 + $0xd8] sm:$0xff]
    %v74 = vld [vmem:[#allocation2 + $0xe0] sm:$0xff]
    %v75 = vld [vmem:[#allocation2 + $0xe8] sm:$0xff]
    %v76 = vld [vmem:[#allocation2 + $0xf0] sm:$0xff]
    %v77 = vld [vmem:[#allocation2 + $0xf8] sm:$0xff]
    %v78 = vld [vmem:[#allocation2 + $0x100] sm:$0xff]
    %v79 = vld [vmem:[#allocation2 + $0x108] sm:$0xff]
    %v80 = vld [vmem:[#allocation2 + $0x110] sm:$0xff]
    %v81 = vld [vmem:[#allocation2 + $0x118] sm:$0xff]
    %v82 = vld [vmem:[#allocation2 + $0x120] sm:$0xff]
    %v83 = vld [vmem:[#allocation2 + $0x128] sm:$0xff]
    %v84 = vld [vmem:[#allocation2 + $0x130] sm:$0xff]
    %v85 = vld [vmem:[#allocation2 + $0x138] sm:$0xff]
    %v86 = vld [vmem:[#allocation2 + $0x140] sm:$0xff]
    %v87 = vld [vmem:[#allocation2 + $0x148] sm:$0xff]
    %v88 = vld [vmem:[#allocation2 + $0x150] sm:$0xff]
    %v89 = vld [vmem:[#allocation2 + $0x158] sm:$0xff]
    %v90 = vld [vmem:[#allocation2 + $0x160] sm:$0xff]
    %v91 = vld [vmem:[#allocation2 + $0x168] sm:$0xff]
    %v92 = vld [vmem:[#allocation2 + $0x170] sm:$0xff]
    %v93 = vld [vmem:[#allocation2 + $0x178] sm:$0xff]
    %s94 = scalar_lea.vmem %s0, 36
    %v95 = vld [vmem:[%s94] sm:$0xff]
    %v96 = vld [vmem:[%s94 + $0x8] sm:$0xf]
    %s97 = scalar_lea.vmem [#allocation2], 384
    %v98 = vld [vmem:[%s97] sm:$0xff]
    %v99 = vld [vmem:[%s97 + $0x8] sm:$0xff]
    %v100 = vld [vmem:[%s97 + $0x10] sm:$0xff]
    %v101 = vld [vmem:[%s97 + $0x18] sm:$0xff]
    %v102 = vld [vmem:[%s97 + $0x20] sm:$0xff]
    %v103 = vld [vmem:[%s97 + $0x28] sm:$0xff]
    %v104 = vld [vmem:[%s97 + $0x30] sm:$0xff]
    %v105 = vld [vmem:[%s97 + $0x38] sm:$0xff]
    %v106 = vld [vmem:[%s97 + $0x40] sm:$0xff]
    %v107 = vld [vmem:[%s97 + $0x48] sm:$0xff]
    %v108 = vld [vmem:[%s97 + $0x50] sm:$0xff]
    %v109 = vld [vmem:[%s97 + $0x58] sm:$0xff]
    %v110 = vld [vmem:[%s97 + $0x60] sm:$0xff]
    %v111 = vld [vmem:[%s97 + $0x68] sm:$0xff]
    %v112 = vld [vmem:[%s97 + $0x70] sm:$0xff]
    %v113 = vld [vmem:[%s97 + $0x78] sm:$0xff]
    %v114 = vld [vmem:[%s97 + $0x80] sm:$0xff]
    %v115 = vld [vmem:[%s97 + $0x88] sm:$0xff]
    %v116 = vld [vmem:[%s97 + $0x90] sm:$0xff]
    %v117 = vld [vmem:[%s97 + $0x98] sm:$0xff]
    %v118 = vld [vmem:[%s97 + $0xa0] sm:$0xff]
    %v119 = vld [vmem:[%s97 + $0xa8] sm:$0xff]
    %v120 = vld [vmem:[%s97 + $0xb0] sm:$0xff]
    %v121 = vld [vmem:[%s97 + $0xb8] sm:$0xff]
    %v122 = vld [vmem:[%s97 + $0xc0] sm:$0xff]
    %v123 = vld [vmem:[%s97 + $0xc8] sm:$0xff]
    %v124 = vld [vmem:[%s97 + $0xd0] sm:$0xff]
    %v125 = vld [vmem:[%s97 + $0xd8] sm:$0xff]
    %v126 = vld [vmem:[%s97 + $0xe0] sm:$0xff]
    %v127 = vld [vmem:[%s97 + $0xe8] sm:$0xff]
    %v128 = vld [vmem:[%s97 + $0xf0] sm:$0xff]
    %v129 = vld [vmem:[%s97 + $0xf8] sm:$0xff]
    %v130 = vld [vmem:[%s97 + $0x100] sm:$0xff]
    %v131 = vld [vmem:[%s97 + $0x108] sm:$0xff]
    %v132 = vld [vmem:[%s97 + $0x110] sm:$0xff]
    %v133 = vld [vmem:[%s97 + $0x118] sm:$0xff]
    %v134 = vld [vmem:[%s97 + $0x120] sm:$0xff]
    %v135 = vld [vmem:[%s97 + $0x128] sm:$0xff]
    %v136 = vld [vmem:[%s97 + $0x130] sm:$0xff]
    %v137 = vld [vmem:[%s97 + $0x138] sm:$0xff]
    %v138 = vld [vmem:[%s97 + $0x140] sm:$0xff]
    %v139 = vld [vmem:[%s97 + $0x148] sm:$0xff]
    %v140 = vld [vmem:[%s97 + $0x150] sm:$0xff]
    %v141 = vld [vmem:[%s97 + $0x158] sm:$0xff]
    %v142 = vld [vmem:[%s97 + $0x160] sm:$0xff]
    %v143 = vld [vmem:[%s97 + $0x168] sm:$0xff]
    %v144 = vld [vmem:[%s97 + $0x170] sm:$0xff]
    %v145 = vld [vmem:[%s97 + $0x178] sm:$0xff]
    %v148 = vunpack.c.l.b16 %v95
    %v149 = vunpack.c.h.b16 %v95
    %v150 = vunpack.c.l.b16 %v96
    %v151 = vpack.c.b16 %v148, %v148
    %v152 = vpack.c.b16 %v149, %v149
    %v153 = vpack.c.b16 %v150, %v150
    %v205 = vunpack.c.l.b16 %v98
    %v206 = vunpack.c.h.b16 %v98
    %v207 = vunpack.c.l.b16 %v99
    %v208 = vunpack.c.h.b16 %v99
    %v209 = vunpack.c.l.b16 %v100
    %v210 = vunpack.c.h.b16 %v100
    %v211 = vunpack.c.l.b16 %v101
    %v212 = vunpack.c.h.b16 %v101
    %v213 = vunpack.c.l.b16 %v102
    %v214 = vunpack.c.h.b16 %v102
    %v215 = vunpack.c.l.b16 %v103
    %v216 = vunpack.c.h.b16 %v103
    %v217 = vunpack.c.l.b16 %v104
    %v218 = vunpack.c.h.b16 %v104
    %v219 = vunpack.c.l.b16 %v105
    %v220 = vunpack.c.h.b16 %v105
    %v221 = vunpack.c.l.b16 %v106
    %v222 = vunpack.c.h.b16 %v106
    %v223 = vunpack.c.l.b16 %v107
    %v224 = vunpack.c.h.b16 %v107
    %v225 = vunpack.c.l.b16 %v108
    %v226 = vunpack.c.h.b16 %v108
    %v227 = vunpack.c.l.b16 %v109
    %v228 = vunpack.c.h.b16 %v109
    %v229 = vunpack.c.l.b16 %v110
    %v230 = vunpack.c.h.b16 %v110
    %v231 = vunpack.c.l.b16 %v111
    %v232 = vunpack.c.h.b16 %v111
    %v233 = vunpack.c.l.b16 %v112
    %v234 = vunpack.c.h.b16 %v112
    %v235 = vunpack.c.l.b16 %v113
    %v236 = vunpack.c.h.b16 %v113
    %v237 = vunpack.c.l.b16 %v114
    %v238 = vunpack.c.h.b16 %v114
    %v239 = vunpack.c.l.b16 %v115
    %v240 = vunpack.c.h.b16 %v115
    %v241 = vunpack.c.l.b16 %v116
    %v242 = vunpack.c.h.b16 %v116
    %v243 = vunpack.c.l.b16 %v117
    %v244 = vunpack.c.h.b16 %v117
    %v245 = vunpack.c.l.b16 %v118
    %v246 = vunpack.c.h.b16 %v118
    %v247 = vunpack.c.l.b16 %v119
    %v248 = vunpack.c.h.b16 %v119
    %v249 = vunpack.c.l.b16 %v120
    %v250 = vunpack.c.h.b16 %v120
    %v251 = vunpack.c.l.b16 %v121
    %v252 = vunpack.c.h.b16 %v121
    %v253 = vunpack.c.l.b16 %v122
    %v254 = vunpack.c.h.b16 %v122
    %v255 = vunpack.c.l.b16 %v123
    %v256 = vunpack.c.h.b16 %v123
    %v257 = vunpack.c.l.b16 %v124
    %v258 = vunpack.c.h.b16 %v124
    %v259 = vunpack.c.l.b16 %v125
    %v260 = vunpack.c.h.b16 %v125
    %v261 = vunpack.c.l.b16 %v126
    %v262 = vunpack.c.h.b16 %v126
    %v263 = vunpack.c.l.b16 %v127
    %v264 = vunpack.c.h.b16 %v127
    %v265 = vunpack.c.l.b16 %v128
    %v266 = vunpack.c.h.b16 %v128
    %v267 = vunpack.c.l.b16 %v129
    %v268 = vunpack.c.h.b16 %v129
    %v269 = vunpack.c.l.b16 %v130
    %v270 = vunpack.c.h.b16 %v130
    %v271 = vunpack.c.l.b16 %v131
    %v272 = vunpack.c.h.b16 %v131
    %v273 = vunpack.c.l.b16 %v132
    %v274 = vunpack.c.h.b16 %v132
    %v275 = vunpack.c.l.b16 %v133
    %v276 = vunpack.c.h.b16 %v133
    %v277 = vunpack.c.l.b16 %v134
    %v278 = vunpack.c.h.b16 %v134
    %v279 = vunpack.c.l.b16 %v135
    %v280 = vunpack.c.h.b16 %v135
    %v281 = vunpack.c.l.b16 %v136
    %v282 = vunpack.c.h.b16 %v136
    %v283 = vunpack.c.l.b16 %v137
    %v284 = vunpack.c.h.b16 %v137
    %v285 = vunpack.c.l.b16 %v138
    %v286 = vunpack.c.h.b16 %v138
    %v287 = vunpack.c.l.b16 %v139
    %v288 = vunpack.c.h.b16 %v139
    %v289 = vunpack.c.l.b16 %v140
    %v290 = vunpack.c.h.b16 %v140
    %v291 = vunpack.c.l.b16 %v141
    %v292 = vunpack.c.h.b16 %v141
    %v293 = vunpack.c.l.b16 %v142
    %v294 = vunpack.c.h.b16 %v142
    %v295 = vunpack.c.l.b16 %v143
    %v296 = vunpack.c.h.b16 %v143
    %v297 = vunpack.c.l.b16 %v144
    %v298 = vunpack.c.h.b16 %v144
    %v299 = vunpack.c.l.b16 %v145
    %v300 = vunpack.c.h.b16 %v145
    %v301 = vpack.c.b16 %v207, %v205
    %v302 = vpack.c.b16 %v208, %v206
    %v303 = vpack.c.b16 %v211, %v209
    %v304 = vpack.c.b16 %v212, %v210
    %v305 = vpack.c.b16 %v215, %v213
    %v306 = vpack.c.b16 %v216, %v214
    %v307 = vpack.c.b16 %v219, %v217
    %v308 = vpack.c.b16 %v220, %v218
    %v309 = vpack.c.b16 %v223, %v221
    %v310 = vpack.c.b16 %v224, %v222
    %v311 = vpack.c.b16 %v227, %v225
    %v312 = vpack.c.b16 %v228, %v226
    %v313 = vpack.c.b16 %v231, %v229
    %v314 = vpack.c.b16 %v232, %v230
    %v315 = vpack.c.b16 %v235, %v233
    %v316 = vpack.c.b16 %v236, %v234
    %v317 = vpack.c.b16 %v239, %v237
    %v318 = vpack.c.b16 %v240, %v238
    %v319 = vpack.c.b16 %v243, %v241
    %v320 = vpack.c.b16 %v244, %v242
    %v321 = vpack.c.b16 %v247, %v245
    %v322 = vpack.c.b16 %v248, %v246
    %v323 = vpack.c.b16 %v251, %v249
    %v324 = vpack.c.b16 %v252, %v250
    %v325 = vpack.c.b16 %v255, %v253
    %v326 = vpack.c.b16 %v256, %v254
    %v327 = vpack.c.b16 %v259, %v257
    %v328 = vpack.c.b16 %v260, %v258
    %v329 = vpack.c.b16 %v263, %v261
    %v330 = vpack.c.b16 %v264, %v262
    %v331 = vpack.c.b16 %v267, %v265
    %v332 = vpack.c.b16 %v268, %v266
    %v333 = vpack.c.b16 %v271, %v269
    %v334 = vpack.c.b16 %v272, %v270
    %v335 = vpack.c.b16 %v275, %v273
    %v336 = vpack.c.b16 %v276, %v274
    %v337 = vpack.c.b16 %v279, %v277
    %v338 = vpack.c.b16 %v280, %v278
    %v339 = vpack.c.b16 %v283, %v281
    %v340 = vpack.c.b16 %v284, %v282
    %v341 = vpack.c.b16 %v287, %v285
    %v342 = vpack.c.b16 %v288, %v286
    %v343 = vpack.c.b16 %v291, %v289
    %v344 = vpack.c.b16 %v292, %v290
    %v345 = vpack.c.b16 %v295, %v293
    %v346 = vpack.c.b16 %v296, %v294
    %v347 = vpack.c.b16 %v299, %v297
    %v348 = vpack.c.b16 %v300, %v298
    %397 = vmatpush.bf16.msra.mxu0 %v315
    %398 = vmatpush.bf16.msra.mxu0 %v313
    %399 = vmatpush.bf16.msra.mxu0 %v311
    %400 = vmatpush.bf16.msra.mxu0 %v309
    %401 = vmatpush.bf16.msra.mxu0 %v307
    %402 = vmatpush.bf16.msra.mxu0 %v305
    %403 = vmatpush.bf16.msra.mxu0 %v303
    %404 = vmatpush.bf16.msra.mxu0 %v301
    %405 = vmatmul.bf16.gmra.mxu0 %v151
    %v406 = vpop.f32.mrf.mxu0
    %v407 = vadd.f32 0.0, %v406
    %v408 = vpop.f32.mrf.mxu0
    %409 = vdwg.mxu0
    %410 = vmatpush.bf16.msra.mxu0 %v331
    %411 = vmatpush.bf16.msra.mxu0 %v329
    %412 = vmatpush.bf16.msra.mxu0 %v327
    %413 = vmatpush.bf16.msra.mxu0 %v325
    %414 = vmatpush.bf16.msra.mxu0 %v323
    %415 = vmatpush.bf16.msra.mxu0 %v321
    %416 = vmatpush.bf16.msra.mxu0 %v319
    %417 = vmatpush.bf16.msra.mxu0 %v317
    %418 = vmatmul.bf16.gmra.mxu0 %v152
    %v419 = vpop.f32.mrf.mxu0
    %v420 = vadd.f32 %v407, %v419
    %v421 = vpop.f32.mrf.mxu0
    %422 = vdwg.mxu0
    %423 = vmatpush.bf16.msra.mxu0 %v347
    %424 = vmatpush.bf16.msra.mxu0 %v345
    %425 = vmatpush.bf16.msra.mxu0 %v343
    %426 = vmatpush.bf16.msra.mxu0 %v341
    %427 = vmatpush.bf16.msra.mxu0 %v339
    %428 = vmatpush.bf16.msra.mxu0 %v337
    %429 = vmatpush.bf16.msra.mxu0 %v335
    %430 = vmatpush.bf16.msra.mxu0 %v333
    %431 = vmatmul.bf16.gmra.mxu0 %v153
    %v432 = vpop.f32.mrf.mxu0
    %v433 = vadd.f32 %v420, %v432
    %v434 = vpop.f32.mrf.mxu0
    %435 = vdwg.mxu0
    %436 = vmatpush.bf16.msra.mxu0 %v316
    %437 = vmatpush.bf16.msra.mxu0 %v314
    %438 = vmatpush.bf16.msra.mxu0 %v312
    %439 = vmatpush.bf16.msra.mxu0 %v310
    %440 = vmatpush.bf16.msra.mxu0 %v308
    %441 = vmatpush.bf16.msra.mxu0 %v306
    %442 = vmatpush.bf16.msra.mxu0 %v304
    %443 = vmatpush.bf16.msra.mxu0 %v302
    %444 = vmatmul.bf16.gmra.mxu0 %v151
    %v445 = vpop.f32.mrf.mxu0
    %v446 = vadd.f32 0.0, %v445
    %v447 = vpop.f32.mrf.mxu0
    %448 = vdwg.mxu0
    %449 = vmatpush.bf16.msra.mxu0 %v332
    %450 = vmatpush.bf16.msra.mxu0 %v330
    %451 = vmatpush.bf16.msra.mxu0 %v328
    %452 = vmatpush.bf16.msra.mxu0 %v326
    %453 = vmatpush.bf16.msra.mxu0 %v324
    %454 = vmatpush.bf16.msra.mxu0 %v322
    %455 = vmatpush.bf16.msra.mxu0 %v320
    %456 = vmatpush.bf16.msra.mxu0 %v318
    %457 = vmatmul.bf16.gmra.mxu0 %v152
    %v458 = vpop.f32.mrf.mxu0
    %v459 = vadd.f32 %v446, %v458
    %v460 = vpop.f32.mrf.mxu0
    %461 = vdwg.mxu0
    %462 = vmatpush.bf16.msra.mxu0 %v348
    %463 = vmatpush.bf16.msra.mxu0 %v346
    %464 = vmatpush.bf16.msra.mxu0 %v344
    %465 = vmatpush.bf16.msra.mxu0 %v342
    %466 = vmatpush.bf16.msra.mxu0 %v340
    %467 = vmatpush.bf16.msra.mxu0 %v338
    %468 = vmatpush.bf16.msra.mxu0 %v336
    %469 = vmatpush.bf16.msra.mxu0 %v334
    %470 = vmatmul.bf16.gmra.mxu0 %v153
    %v471 = vpop.f32.mrf.mxu0
    %v472 = vadd.f32 %v459, %v471
    %v473 = vpop.f32.mrf.mxu0
    %474 = vdwg.mxu0
    %v477 = vunpack.c.l.b16 %v44
    %v478 = vunpack.c.h.b16 %v44
    %v479 = vunpack.c.l.b16 %v45
    %v480 = vpack.c.b16 %v477, %v477
    %v481 = vpack.c.b16 %v478, %v478
    %v482 = vpack.c.b16 %v479, %v479
    %v534 = vunpack.c.l.b16 %v46
    %v535 = vunpack.c.h.b16 %v46
    %v536 = vunpack.c.l.b16 %v47
    %v537 = vunpack.c.h.b16 %v47
    %v538 = vunpack.c.l.b16 %v48
    %v539 = vunpack.c.h.b16 %v48
    %v540 = vunpack.c.l.b16 %v49
    %v541 = vunpack.c.h.b16 %v49
    %v542 = vunpack.c.l.b16 %v50
    %v543 = vunpack.c.h.b16 %v50
    %v544 = vunpack.c.l.b16 %v51
    %v545 = vunpack.c.h.b16 %v51
    %v546 = vunpack.c.l.b16 %v52
    %v547 = vunpack.c.h.b16 %v52
    %v548 = vunpack.c.l.b16 %v53
    %v549 = vunpack.c.h.b16 %v53
    %v550 = vunpack.c.l.b16 %v54
    %v551 = vunpack.c.h.b16 %v54
    %v552 = vunpack.c.l.b16 %v55
    %v553 = vunpack.c.h.b16 %v55
    %v554 = vunpack.c.l.b16 %v56
    %v555 = vunpack.c.h.b16 %v56
    %v556 = vunpack.c.l.b16 %v57
    %v557 = vunpack.c.h.b16 %v57
    %v558 = vunpack.c.l.b16 %v58
    %v559 = vunpack.c.h.b16 %v58
    %v560 = vunpack.c.l.b16 %v59
    %v561 = vunpack.c.h.b16 %v59
    %v562 = vunpack.c.l.b16 %v60
    %v563 = vunpack.c.h.b16 %v60
    %v564 = vunpack.c.l.b16 %v61
    %v565 = vunpack.c.h.b16 %v61
    %v566 = vunpack.c.l.b16 %v62
    %v567 = vunpack.c.h.b16 %v62
    %v568 = vunpack.c.l.b16 %v63
    %v569 = vunpack.c.h.b16 %v63
    %v570 = vunpack.c.l.b16 %v64
    %v571 = vunpack.c.h.b16 %v64
    %v572 = vunpack.c.l.b16 %v65
    %v573 = vunpack.c.h.b16 %v65
    %v574 = vunpack.c.l.b16 %v66
    %v575 = vunpack.c.h.b16 %v66
    %v576 = vunpack.c.l.b16 %v67
    %v577 = vunpack.c.h.b16 %v67
    %v578 = vunpack.c.l.b16 %v68
    %v579 = vunpack.c.h.b16 %v68
    %v580 = vunpack.c.l.b16 %v69
    %v581 = vunpack.c.h.b16 %v69
    %v582 = vunpack.c.l.b16 %v70
    %v583 = vunpack.c.h.b16 %v70
    %v584 = vunpack.c.l.b16 %v71
    %v585 = vunpack.c.h.b16 %v71
    %v586 = vunpack.c.l.b16 %v72
    %v587 = vunpack.c.h.b16 %v72
    %v588 = vunpack.c.l.b16 %v73
    %v589 = vunpack.c.h.b16 %v73
    %v590 = vunpack.c.l.b16 %v74
    %v591 = vunpack.c.h.b16 %v74
    %v592 = vunpack.c.l.b16 %v75
    %v593 = vunpack.c.h.b16 %v75
    %v594 = vunpack.c.l.b16 %v76
    %v595 = vunpack.c.h.b16 %v76
    %v596 = vunpack.c.l.b16 %v77
    %v597 = vunpack.c.h.b16 %v77
    %v598 = vunpack.c.l.b16 %v78
    %v599 = vunpack.c.h.b16 %v78
    %v600 = vunpack.c.l.b16 %v79
    %v601 = vunpack.c.h.b16 %v79
    %v602 = vunpack.c.l.b16 %v80
    %v603 = vunpack.c.h.b16 %v80
    %v604 = vunpack.c.l.b16 %v81
    %v605 = vunpack.c.h.b16 %v81
    %v606 = vunpack.c.l.b16 %v82
    %v607 = vunpack.c.h.b16 %v82
    %v608 = vunpack.c.l.b16 %v83
    %v609 = vunpack.c.h.b16 %v83
    %v610 = vunpack.c.l.b16 %v84
    %v611 = vunpack.c.h.b16 %v84
    %v612 = vunpack.c.l.b16 %v85
    %v613 = vunpack.c.h.b16 %v85
    %v614 = vunpack.c.l.b16 %v86
    %v615 = vunpack.c.h.b16 %v86
    %v616 = vunpack.c.l.b16 %v87
    %v617 = vunpack.c.h.b16 %v87
    %v618 = vunpack.c.l.b16 %v88
    %v619 = vunpack.c.h.b16 %v88
    %v620 = vunpack.c.l.b16 %v89
    %v621 = vunpack.c.h.b16 %v89
    %v622 = vunpack.c.l.b16 %v90
    %v623 = vunpack.c.h.b16 %v90
    %v624 = vunpack.c.l.b16 %v91
    %v625 = vunpack.c.h.b16 %v91
    %v626 = vunpack.c.l.b16 %v92
    %v627 = vunpack.c.h.b16 %v92
    %v628 = vunpack.c.l.b16 %v93
    %v629 = vunpack.c.h.b16 %v93
    %v630 = vpack.c.b16 %v536, %v534
    %v631 = vpack.c.b16 %v537, %v535
    %v632 = vpack.c.b16 %v540, %v538
    %v633 = vpack.c.b16 %v541, %v539
    %v634 = vpack.c.b16 %v544, %v542
    %v635 = vpack.c.b16 %v545, %v543
    %v636 = vpack.c.b16 %v548, %v546
    %v637 = vpack.c.b16 %v549, %v547
    %v638 = vpack.c.b16 %v552, %v550
    %v639 = vpack.c.b16 %v553, %v551
    %v640 = vpack.c.b16 %v556, %v554
    %v641 = vpack.c.b16 %v557, %v555
    %v642 = vpack.c.b16 %v560, %v558
    %v643 = vpack.c.b16 %v561, %v559
    %v644 = vpack.c.b16 %v564, %v562
    %v645 = vpack.c.b16 %v565, %v563
    %v646 = vpack.c.b16 %v568, %v566
    %v647 = vpack.c.b16 %v569, %v567
    %v648 = vpack.c.b16 %v572, %v570
    %v649 = vpack.c.b16 %v573, %v571
    %v650 = vpack.c.b16 %v576, %v574
    %v651 = vpack.c.b16 %v577, %v575
    %v652 = vpack.c.b16 %v580, %v578
    %v653 = vpack.c.b16 %v581, %v579
    %v654 = vpack.c.b16 %v584, %v582
    %v655 = vpack.c.b16 %v585, %v583
    %v656 = vpack.c.b16 %v588, %v586
    %v657 = vpack.c.b16 %v589, %v587
    %v658 = vpack.c.b16 %v592, %v590
    %v659 = vpack.c.b16 %v593, %v591
    %v660 = vpack.c.b16 %v596, %v594
    %v661 = vpack.c.b16 %v597, %v595
    %v662 = vpack.c.b16 %v600, %v598
    %v663 = vpack.c.b16 %v601, %v599
    %v664 = vpack.c.b16 %v604, %v602
    %v665 = vpack.c.b16 %v605, %v603
    %v666 = vpack.c.b16 %v608, %v606
    %v667 = vpack.c.b16 %v609, %v607
    %v668 = vpack.c.b16 %v612, %v610
    %v669 = vpack.c.b16 %v613, %v611
    %v670 = vpack.c.b16 %v616, %v614
    %v671 = vpack.c.b16 %v617, %v615
    %v672 = vpack.c.b16 %v620, %v618
    %v673 = vpack.c.b16 %v621, %v619
    %v674 = vpack.c.b16 %v624, %v622
    %v675 = vpack.c.b16 %v625, %v623
    %v676 = vpack.c.b16 %v628, %v626
    %v677 = vpack.c.b16 %v629, %v627
    %726 = vmatpush.bf16.msra.mxu0 %v644
    %727 = vmatpush.bf16.msra.mxu0 %v642
    %728 = vmatpush.bf16.msra.mxu0 %v640
    %729 = vmatpush.bf16.msra.mxu0 %v638
    %730 = vmatpush.bf16.msra.mxu0 %v636
    %731 = vmatpush.bf16.msra.mxu0 %v634
    %732 = vmatpush.bf16.msra.mxu0 %v632
    %733 = vmatpush.bf16.msra.mxu0 %v630
    %734 = vmatmul.bf16.gmra.mxu0 %v480
    %v735 = vpop.f32.mrf.mxu0
    %v736 = vadd.f32 %v433, %v735
    %v737 = vpop.f32.mrf.mxu0
    %738 = vdwg.mxu0
    %739 = vmatpush.bf16.msra.mxu0 %v660
    %740 = vmatpush.bf16.msra.mxu0 %v658
    %741 = vmatpush.bf16.msra.mxu0 %v656
    %742 = vmatpush.bf16.msra.mxu0 %v654
    %743 = vmatpush.bf16.msra.mxu0 %v652
    %744 = vmatpush.bf16.msra.mxu0 %v650
    %745 = vmatpush.bf16.msra.mxu0 %v648
    %746 = vmatpush.bf16.msra.mxu0 %v646
    %747 = vmatmul.bf16.gmra.mxu0 %v481
    %v748 = vpop.f32.mrf.mxu0
    %v749 = vadd.f32 %v736, %v748
    %v750 = vpop.f32.mrf.mxu0
    %751 = vdwg.mxu0
    %752 = vmatpush.bf16.msra.mxu0 %v676
    %753 = vmatpush.bf16.msra.mxu0 %v674
    %754 = vmatpush.bf16.msra.mxu0 %v672
    %755 = vmatpush.bf16.msra.mxu0 %v670
    %756 = vmatpush.bf16.msra.mxu0 %v668
    %757 = vmatpush.bf16.msra.mxu0 %v666
    %758 = vmatpush.bf16.msra.mxu0 %v664
    %759 = vmatpush.bf16.msra.mxu0 %v662
    %760 = vmatmul.bf16.gmra.mxu0 %v482
    %v761 = vpop.f32.mrf.mxu0
    %v762 = vadd.f32 %v749, %v761
    %v763 = vpop.f32.mrf.mxu0
    %764 = vdwg.mxu0
    %765 = vmatpush.bf16.msra.mxu0 %v645
    %766 = vmatpush.bf16.msra.mxu0 %v643
    %767 = vmatpush.bf16.msra.mxu0 %v641
    %768 = vmatpush.bf16.msra.mxu0 %v639
    %769 = vmatpush.bf16.msra.mxu0 %v637
    %770 = vmatpush.bf16.msra.mxu0 %v635
    %771 = vmatpush.bf16.msra.mxu0 %v633
    %772 = vmatpush.bf16.msra.mxu0 %v631
    %773 = vmatmul.bf16.gmra.mxu0 %v480
    %v774 = vpop.f32.mrf.mxu0
    %v775 = vadd.f32 %v472, %v774
    %v776 = vpop.f32.mrf.mxu0
    %777 = vdwg.mxu0
    %778 = vmatpush.bf16.msra.mxu0 %v661
    %779 = vmatpush.bf16.msra.mxu0 %v659
    %780 = vmatpush.bf16.msra.mxu0 %v657
    %781 = vmatpush.bf16.msra.mxu0 %v655
    %782 = vmatpush.bf16.msra.mxu0 %v653
    %783 = vmatpush.bf16.msra.mxu0 %v651
    %784 = vmatpush.bf16.msra.mxu0 %v649
    %785 = vmatpush.bf16.msra.mxu0 %v647
    %786 = vmatmul.bf16.gmra.mxu0 %v481
    %v787 = vpop.f32.mrf.mxu0
    %v788 = vadd.f32 %v775, %v787
    %v789 = vpop.f32.mrf.mxu0
    %790 = vdwg.mxu0
    %791 = vmatpush.bf16.msra.mxu0 %v677
    %792 = vmatpush.bf16.msra.mxu0 %v675
    %793 = vmatpush.bf16.msra.mxu0 %v673
    %794 = vmatpush.bf16.msra.mxu0 %v671
    %795 = vmatpush.bf16.msra.mxu0 %v669
    %796 = vmatpush.bf16.msra.mxu0 %v667
    %797 = vmatpush.bf16.msra.mxu0 %v665
    %798 = vmatpush.bf16.msra.mxu0 %v663
    %799 = vmatmul.bf16.gmra.mxu0 %v482
    %v800 = vpop.f32.mrf.mxu0
    %v801 = vadd.f32 %v788, %v800
    %v802 = vpop.f32.mrf.mxu0
    %803 = vdwg.mxu0
    %s804 = scalar_lea.vmem %s0, 12
    %v805 = vld [vmem:[%s804] sm:$0xff]
    %v806 = vld [vmem:[%s804 + $0x8] sm:$0xf]
    %s807 = scalar_lea.vmem [#allocation2], 768
    %v808 = vld [vmem:[%s807] sm:$0xff]
    %v809 = vld [vmem:[%s807 + $0x8] sm:$0xff]
    %v810 = vld [vmem:[%s807 + $0x10] sm:$0xff]
    %v811 = vld [vmem:[%s807 + $0x18] sm:$0xff]
    %v812 = vld [vmem:[%s807 + $0x20] sm:$0xff]
    %v813 = vld [vmem:[%s807 + $0x28] sm:$0xff]
    %v814 = vld [vmem:[%s807 + $0x30] sm:$0xff]
    %v815 = vld [vmem:[%s807 + $0x38] sm:$0xff]
    %v816 = vld [vmem:[%s807 + $0x40] sm:$0xff]
    %v817 = vld [vmem:[%s807 + $0x48] sm:$0xff]
    %v818 = vld [vmem:[%s807 + $0x50] sm:$0xff]
    %v819 = vld [vmem:[%s807 + $0x58] sm:$0xff]
    %v820 = vld [vmem:[%s807 + $0x60] sm:$0xff]
    %v821 = vld [vmem:[%s807 + $0x68] sm:$0xff]
    %v822 = vld [vmem:[%s807 + $0x70] sm:$0xff]
    %v823 = vld [vmem:[%s807 + $0x78] sm:$0xff]
    %v824 = vld [vmem:[%s807 + $0x80] sm:$0xff]
    %v825 = vld [vmem:[%s807 + $0x88] sm:$0xff]
    %v826 = vld [vmem:[%s807 + $0x90] sm:$0xff]
    %v827 = vld [vmem:[%s807 + $0x98] sm:$0xff]
    %v828 = vld [vmem:[%s807 + $0xa0] sm:$0xff]
    %v829 = vld [vmem:[%s807 + $0xa8] sm:$0xff]
    %v830 = vld [vmem:[%s807 + $0xb0] sm:$0xff]
    %v831 = vld [vmem:[%s807 + $0xb8] sm:$0xff]
    %v832 = vld [vmem:[%s807 + $0xc0] sm:$0xff]
    %v833 = vld [vmem:[%s807 + $0xc8] sm:$0xff]
    %v834 = vld [vmem:[%s807 + $0xd0] sm:$0xff]
    %v835 = vld [vmem:[%s807 + $0xd8] sm:$0xff]
    %v836 = vld [vmem:[%s807 + $0xe0] sm:$0xff]
    %v837 = vld [vmem:[%s807 + $0xe8] sm:$0xff]
    %v838 = vld [vmem:[%s807 + $0xf0] sm:$0xff]
    %v839 = vld [vmem:[%s807 + $0xf8] sm:$0xff]
    %v840 = vld [vmem:[%s807 + $0x100] sm:$0xff]
    %v841 = vld [vmem:[%s807 + $0x108] sm:$0xff]
    %v842 = vld [vmem:[%s807 + $0x110] sm:$0xff]
    %v843 = vld [vmem:[%s807 + $0x118] sm:$0xff]
    %v844 = vld [vmem:[%s807 + $0x120] sm:$0xff]
    %v845 = vld [vmem:[%s807 + $0x128] sm:$0xff]
    %v846 = vld [vmem:[%s807 + $0x130] sm:$0xff]
    %v847 = vld [vmem:[%s807 + $0x138] sm:$0xff]
    %v848 = vld [vmem:[%s807 + $0x140] sm:$0xff]
    %v849 = vld [vmem:[%s807 + $0x148] sm:$0xff]
    %v850 = vld [vmem:[%s807 + $0x150] sm:$0xff]
    %v851 = vld [vmem:[%s807 + $0x158] sm:$0xff]
    %v852 = vld [vmem:[%s807 + $0x160] sm:$0xff]
    %v853 = vld [vmem:[%s807 + $0x168] sm:$0xff]
    %v854 = vld [vmem:[%s807 + $0x170] sm:$0xff]
    %v855 = vld [vmem:[%s807 + $0x178] sm:$0xff]
    %v858 = vunpack.c.l.b16 %v805
    %v859 = vunpack.c.h.b16 %v805
    %v860 = vunpack.c.l.b16 %v806
    %v861 = vpack.c.b16 %v858, %v858
    %v862 = vpack.c.b16 %v859, %v859
    %v863 = vpack.c.b16 %v860, %v860
    %v915 = vunpack.c.l.b16 %v808
    %v916 = vunpack.c.h.b16 %v808
    %v917 = vunpack.c.l.b16 %v809
    %v918 = vunpack.c.h.b16 %v809
    %v919 = vunpack.c.l.b16 %v810
    %v920 = vunpack.c.h.b16 %v810
    %v921 = vunpack.c.l.b16 %v811
    %v922 = vunpack.c.h.b16 %v811
    %v923 = vunpack.c.l.b16 %v812
    %v924 = vunpack.c.h.b16 %v812
    %v925 = vunpack.c.l.b16 %v813
    %v926 = vunpack.c.h.b16 %v813
    %v927 = vunpack.c.l.b16 %v814
    %v928 = vunpack.c.h.b16 %v814
    %v929 = vunpack.c.l.b16 %v815
    %v930 = vunpack.c.h.b16 %v815
    %v931 = vunpack.c.l.b16 %v816
    %v932 = vunpack.c.h.b16 %v816
    %v933 = vunpack.c.l.b16 %v817
    %v934 = vunpack.c.h.b16 %v817
    %v935 = vunpack.c.l.b16 %v818
    %v936 = vunpack.c.h.b16 %v818
    %v937 = vunpack.c.l.b16 %v819
    %v938 = vunpack.c.h.b16 %v819
    %v939 = vunpack.c.l.b16 %v820
    %v940 = vunpack.c.h.b16 %v820
    %v941 = vunpack.c.l.b16 %v821
    %v942 = vunpack.c.h.b16 %v821
    %v943 = vunpack.c.l.b16 %v822
    %v944 = vunpack.c.h.b16 %v822
    %v945 = vunpack.c.l.b16 %v823
    %v946 = vunpack.c.h.b16 %v823
    %v947 = vunpack.c.l.b16 %v824
    %v948 = vunpack.c.h.b16 %v824
    %v949 = vunpack.c.l.b16 %v825
    %v950 = vunpack.c.h.b16 %v825
    %v951 = vunpack.c.l.b16 %v826
    %v952 = vunpack.c.h.b16 %v826
    %v953 = vunpack.c.l.b16 %v827
    %v954 = vunpack.c.h.b16 %v827
    %v955 = vunpack.c.l.b16 %v828
    %v956 = vunpack.c.h.b16 %v828
    %v957 = vunpack.c.l.b16 %v829
    %v958 = vunpack.c.h.b16 %v829
    %v959 = vunpack.c.l.b16 %v830
    %v960 = vunpack.c.h.b16 %v830
    %v961 = vunpack.c.l.b16 %v831
    %v962 = vunpack.c.h.b16 %v831
    %v963 = vunpack.c.l.b16 %v832
    %v964 = vunpack.c.h.b16 %v832
    %v965 = vunpack.c.l.b16 %v833
    %v966 = vunpack.c.h.b16 %v833
    %v967 = vunpack.c.l.b16 %v834
    %v968 = vunpack.c.h.b16 %v834
    %v969 = vunpack.c.l.b16 %v835
    %v970 = vunpack.c.h.b16 %v835
    %v971 = vunpack.c.l.b16 %v836
    %v972 = vunpack.c.h.b16 %v836
    %v973 = vunpack.c.l.b16 %v837
    %v974 = vunpack.c.h.b16 %v837
    %v975 = vunpack.c.l.b16 %v838
    %v976 = vunpack.c.h.b16 %v838
    %v977 = vunpack.c.l.b16 %v839
    %v978 = vunpack.c.h.b16 %v839
    %v979 = vunpack.c.l.b16 %v840
    %v980 = vunpack.c.h.b16 %v840
    %v981 = vunpack.c.l.b16 %v841
    %v982 = vunpack.c.h.b16 %v841
    %v983 = vunpack.c.l.b16 %v842
    %v984 = vunpack.c.h.b16 %v842
    %v985 = vunpack.c.l.b16 %v843
    %v986 = vunpack.c.h.b16 %v843
    %v987 = vunpack.c.l.b16 %v844
    %v988 = vunpack.c.h.b16 %v844
    %v989 = vunpack.c.l.b16 %v845
    %v990 = vunpack.c.h.b16 %v845
    %v991 = vunpack.c.l.b16 %v846
    %v992 = vunpack.c.h.b16 %v846
    %v993 = vunpack.c.l.b16 %v847
    %v994 = vunpack.c.h.b16 %v847
    %v995 = vunpack.c.l.b16 %v848
    %v996 = vunpack.c.h.b16 %v848
    %v997 = vunpack.c.l.b16 %v849
    %v998 = vunpack.c.h.b16 %v849
    %v999 = vunpack.c.l.b16 %v850
    %v1000 = vunpack.c.h.b16 %v850
    %v1001 = vunpack.c.l.b16 %v851
    %v1002 = vunpack.c.h.b16 %v851
    %v1003 = vunpack.c.l.b16 %v852
    %v1004 = vunpack.c.h.b16 %v852
    %v1005 = vunpack.c.l.b16 %v853
    %v1006 = vunpack.c.h.b16 %v853
    %v1007 = vunpack.c.l.b16 %v854
    %v1008 = vunpack.c.h.b16 %v854
    %v1009 = vunpack.c.l.b16 %v855
    %v1010 = vunpack.c.h.b16 %v855
    %v1011 = vpack.c.b16 %v917, %v915
    %v1012 = vpack.c.b16 %v918, %v916
    %v1013 = vpack.c.b16 %v921, %v919
    %v1014 = vpack.c.b16 %v922, %v920
    %v1015 = vpack.c.b16 %v925, %v923
    %v1016 = vpack.c.b16 %v926, %v924
    %v1017 = vpack.c.b16 %v929, %v927
    %v1018 = vpack.c.b16 %v930, %v928
    %v1019 = vpack.c.b16 %v933, %v931
    %v1020 = vpack.c.b16 %v934, %v932
    %v1021 = vpack.c.b16 %v937, %v935
    %v1022 = vpack.c.b16 %v938, %v936
    %v1023 = vpack.c.b16 %v941, %v939
    %v1024 = vpack.c.b16 %v942, %v940
    %v1025 = vpack.c.b16 %v945, %v943
    %v1026 = vpack.c.b16 %v946, %v944
    %v1027 = vpack.c.b16 %v949, %v947
    %v1028 = vpack.c.b16 %v950, %v948
    %v1029 = vpack.c.b16 %v953, %v951
    %v1030 = vpack.c.b16 %v954, %v952
    %v1031 = vpack.c.b16 %v957, %v955
    %v1032 = vpack.c.b16 %v958, %v956
    %v1033 = vpack.c.b16 %v961, %v959
    %v1034 = vpack.c.b16 %v962, %v960
    %v1035 = vpack.c.b16 %v965, %v963
    %v1036 = vpack.c.b16 %v966, %v964
    %v1037 = vpack.c.b16 %v969, %v967
    %v1038 = vpack.c.b16 %v970, %v968
    %v1039 = vpack.c.b16 %v973, %v971
    %v1040 = vpack.c.b16 %v974, %v972
    %v1041 = vpack.c.b16 %v977, %v975
    %v1042 = vpack.c.b16 %v978, %v976
    %v1043 = vpack.c.b16 %v981, %v979
    %v1044 = vpack.c.b16 %v982, %v980
    %v1045 = vpack.c.b16 %v985, %v983
    %v1046 = vpack.c.b16 %v986, %v984
    %v1047 = vpack.c.b16 %v989, %v987
    %v1048 = vpack.c.b16 %v990, %v988
    %v1049 = vpack.c.b16 %v993, %v991
    %v1050 = vpack.c.b16 %v994, %v992
    %v1051 = vpack.c.b16 %v997, %v995
    %v1052 = vpack.c.b16 %v998, %v996
    %v1053 = vpack.c.b16 %v1001, %v999
    %v1054 = vpack.c.b16 %v1002, %v1000
    %v1055 = vpack.c.b16 %v1005, %v1003
    %v1056 = vpack.c.b16 %v1006, %v1004
    %v1057 = vpack.c.b16 %v1009, %v1007
    %v1058 = vpack.c.b16 %v1010, %v1008
    %1107 = vmatpush.bf16.msra.mxu0 %v1025
    %1108 = vmatpush.bf16.msra.mxu0 %v1023
    %1109 = vmatpush.bf16.msra.mxu0 %v1021
    %1110 = vmatpush.bf16.msra.mxu0 %v1019
    %1111 = vmatpush.bf16.msra.mxu0 %v1017
    %1112 = vmatpush.bf16.msra.mxu0 %v1015
    %1113 = vmatpush.bf16.msra.mxu0 %v1013
    %1114 = vmatpush.bf16.msra.mxu0 %v1011
    %1115 = vmatmul.bf16.gmra.mxu0 %v861
    %v1116 = vpop.f32.mrf.mxu0
    %v1117 = vadd.f32 0.0, %v1116
    %v1118 = vpop.f32.mrf.mxu0
    %1119 = vdwg.mxu0
    %1120 = vmatpush.bf16.msra.mxu0 %v1041
    %1121 = vmatpush.bf16.msra.mxu0 %v1039
    %1122 = vmatpush.bf16.msra.mxu0 %v1037
    %1123 = vmatpush.bf16.msra.mxu0 %v1035
    %1124 = vmatpush.bf16.msra.mxu0 %v1033
    %1125 = vmatpush.bf16.msra.mxu0 %v1031
    %1126 = vmatpush.bf16.msra.mxu0 %v1029
    %1127 = vmatpush.bf16.msra.mxu0 %v1027
    %1128 = vmatmul.bf16.gmra.mxu0 %v862
    %v1129 = vpop.f32.mrf.mxu0
    %v1130 = vadd.f32 %v1117, %v1129
    %v1131 = vpop.f32.mrf.mxu0
    %1132 = vdwg.mxu0
    %1133 = vmatpush.bf16.msra.mxu0 %v1057
    %1134 = vmatpush.bf16.msra.mxu0 %v1055
    %1135 = vmatpush.bf16.msra.mxu0 %v1053
    %1136 = vmatpush.bf16.msra.mxu0 %v1051
    %1137 = vmatpush.bf16.msra.mxu0 %v1049
    %1138 = vmatpush.bf16.msra.mxu0 %v1047
    %1139 = vmatpush.bf16.msra.mxu0 %v1045
    %1140 = vmatpush.bf16.msra.mxu0 %v1043
    %1141 = vmatmul.bf16.gmra.mxu0 %v863
    %v1142 = vpop.f32.mrf.mxu0
    %v1143 = vadd.f32 %v1130, %v1142
    %v1144 = vpop.f32.mrf.mxu0
    %1145 = vdwg.mxu0
    %1146 = vmatpush.bf16.msra.mxu0 %v1026
    %1147 = vmatpush.bf16.msra.mxu0 %v1024
    %1148 = vmatpush.bf16.msra.mxu0 %v1022
    %1149 = vmatpush.bf16.msra.mxu0 %v1020
    %1150 = vmatpush.bf16.msra.mxu0 %v1018
    %1151 = vmatpush.bf16.msra.mxu0 %v1016
    %1152 = vmatpush.bf16.msra.mxu0 %v1014
    %1153 = vmatpush.bf16.msra.mxu0 %v1012
    %1154 = vmatmul.bf16.gmra.mxu0 %v861
    %v1155 = vpop.f32.mrf.mxu0
    %v1156 = vadd.f32 0.0, %v1155
    %v1157 = vpop.f32.mrf.mxu0
    %1158 = vdwg.mxu0
    %1159 = vmatpush.bf16.msra.mxu0 %v1042
    %1160 = vmatpush.bf16.msra.mxu0 %v1040
    %1161 = vmatpush.bf16.msra.mxu0 %v1038
    %1162 = vmatpush.bf16.msra.mxu0 %v1036
    %1163 = vmatpush.bf16.msra.mxu0 %v1034
    %1164 = vmatpush.bf16.msra.mxu0 %v1032
    %1165 = vmatpush.bf16.msra.mxu0 %v1030
    %1166 = vmatpush.bf16.msra.mxu0 %v1028
    %1167 = vmatmul.bf16.gmra.mxu0 %v862
    %v1168 = vpop.f32.mrf.mxu0
    %v1169 = vadd.f32 %v1156, %v1168
    %v1170 = vpop.f32.mrf.mxu0
    %1171 = vdwg.mxu0
    %1172 = vmatpush.bf16.msra.mxu0 %v1058
    %1173 = vmatpush.bf16.msra.mxu0 %v1056
    %1174 = vmatpush.bf16.msra.mxu0 %v1054
    %1175 = vmatpush.bf16.msra.mxu0 %v1052
    %1176 = vmatpush.bf16.msra.mxu0 %v1050
    %1177 = vmatpush.bf16.msra.mxu0 %v1048
    %1178 = vmatpush.bf16.msra.mxu0 %v1046
    %1179 = vmatpush.bf16.msra.mxu0 %v1044
    %1180 = vmatmul.bf16.gmra.mxu0 %v863
    %v1181 = vpop.f32.mrf.mxu0
    %v1182 = vadd.f32 %v1169, %v1181
    %v1183 = vpop.f32.mrf.mxu0
    %1184 = vdwg.mxu0
    %v1185 = vadd.f32 %v762, %v1143
    %v1186 = vadd.f32 %v801, %v1182
    %s1187 = scalar_lea.vmem %s0, 48
    %v1188 = vld [vmem:[%s1187] sm:$0xff]
    %v1189 = vld [vmem:[%s1187 + $0x8] sm:$0xf]
    %s1190 = scalar_lea.vmem [#allocation2], 1152
    %v1191 = vld [vmem:[%s1190] sm:$0xff]
    %v1192 = vld [vmem:[%s1190 + $0x8] sm:$0xff]
    %v1193 = vld [vmem:[%s1190 + $0x10] sm:$0xff]
    %v1194 = vld [vmem:[%s1190 + $0x18] sm:$0xff]
    %v1195 = vld [vmem:[%s1190 + $0x20] sm:$0xff]
    %v1196 = vld [vmem:[%s1190 + $0x28] sm:$0xff]
    %v1197 = vld [vmem:[%s1190 + $0x30] sm:$0xff]
    %v1198 = vld [vmem:[%s1190 + $0x38] sm:$0xff]
    %v1199 = vld [vmem:[%s1190 + $0x40] sm:$0xff]
    %v1200 = vld [vmem:[%s1190 + $0x48] sm:$0xff]
    %v1201 = vld [vmem:[%s1190 + $0x50] sm:$0xff]
    %v1202 = vld [vmem:[%s1190 + $0x58] sm:$0xff]
    %v1203 = vld [vmem:[%s1190 + $0x60] sm:$0xff]
    %v1204 = vld [vmem:[%s1190 + $0x68] sm:$0xff]
    %v1205 = vld [vmem:[%s1190 + $0x70] sm:$0xff]
    %v1206 = vld [vmem:[%s1190 + $0x78] sm:$0xff]
    %v1207 = vld [vmem:[%s1190 + $0x80] sm:$0xff]
    %v1208 = vld [vmem:[%s1190 + $0x88] sm:$0xff]
    %v1209 = vld [vmem:[%s1190 + $0x90] sm:$0xff]
    %v1210 = vld [vmem:[%s1190 + $0x98] sm:$0xff]
    %v1211 = vld [vmem:[%s1190 + $0xa0] sm:$0xff]
    %v1212 = vld [vmem:[%s1190 + $0xa8] sm:$0xff]
    %v1213 = vld [vmem:[%s1190 + $0xb0] sm:$0xff]
    %v1214 = vld [vmem:[%s1190 + $0xb8] sm:$0xff]
    %v1215 = vld [vmem:[%s1190 + $0xc0] sm:$0xff]
    %v1216 = vld [vmem:[%s1190 + $0xc8] sm:$0xff]
    %v1217 = vld [vmem:[%s1190 + $0xd0] sm:$0xff]
    %v1218 = vld [vmem:[%s1190 + $0xd8] sm:$0xff]
    %v1219 = vld [vmem:[%s1190 + $0xe0] sm:$0xff]
    %v1220 = vld [vmem:[%s1190 + $0xe8] sm:$0xff]
    %v1221 = vld [vmem:[%s1190 + $0xf0] sm:$0xff]
    %v1222 = vld [vmem:[%s1190 + $0xf8] sm:$0xff]
    %v1223 = vld [vmem:[%s1190 + $0x100] sm:$0xff]
    %v1224 = vld [vmem:[%s1190 + $0x108] sm:$0xff]
    %v1225 = vld [vmem:[%s1190 + $0x110] sm:$0xff]
    %v1226 = vld [vmem:[%s1190 + $0x118] sm:$0xff]
    %v1227 = vld [vmem:[%s1190 + $0x120] sm:$0xff]
    %v1228 = vld [vmem:[%s1190 + $0x128] sm:$0xff]
    %v1229 = vld [vmem:[%s1190 + $0x130] sm:$0xff]
    %v1230 = vld [vmem:[%s1190 + $0x138] sm:$0xff]
    %v1231 = vld [vmem:[%s1190 + $0x140] sm:$0xff]
    %v1232 = vld [vmem:[%s1190 + $0x148] sm:$0xff]
    %v1233 = vld [vmem:[%s1190 + $0x150] sm:$0xff]
    %v1234 = vld [vmem:[%s1190 + $0x158] sm:$0xff]
    %v1235 = vld [vmem:[%s1190 + $0x160] sm:$0xff]
    %v1236 = vld [vmem:[%s1190 + $0x168] sm:$0xff]
    %v1237 = vld [vmem:[%s1190 + $0x170] sm:$0xff]
    %v1238 = vld [vmem:[%s1190 + $0x178] sm:$0xff]
    %v1241 = vunpack.c.l.b16 %v1188
    %v1242 = vunpack.c.h.b16 %v1188
    %v1243 = vunpack.c.l.b16 %v1189
    %v1244 = vpack.c.b16 %v1241, %v1241
    %v1245 = vpack.c.b16 %v1242, %v1242
    %v1246 = vpack.c.b16 %v1243, %v1243
    %v1298 = vunpack.c.l.b16 %v1191
    %v1299 = vunpack.c.h.b16 %v1191
    %v1300 = vunpack.c.l.b16 %v1192
    %v1301 = vunpack.c.h.b16 %v1192
    %v1302 = vunpack.c.l.b16 %v1193
    %v1303 = vunpack.c.h.b16 %v1193
    %v1304 = vunpack.c.l.b16 %v1194
    %v1305 = vunpack.c.h.b16 %v1194
    %v1306 = vunpack.c.l.b16 %v1195
    %v1307 = vunpack.c.h.b16 %v1195
    %v1308 = vunpack.c.l.b16 %v1196
    %v1309 = vunpack.c.h.b16 %v1196
    %v1310 = vunpack.c.l.b16 %v1197
    %v1311 = vunpack.c.h.b16 %v1197
    %v1312 = vunpack.c.l.b16 %v1198
    %v1313 = vunpack.c.h.b16 %v1198
    %v1314 = vunpack.c.l.b16 %v1199
    %v1315 = vunpack.c.h.b16 %v1199
    %v1316 = vunpack.c.l.b16 %v1200
    %v1317 = vunpack.c.h.b16 %v1200
    %v1318 = vunpack.c.l.b16 %v1201
    %v1319 = vunpack.c.h.b16 %v1201
    %v1320 = vunpack.c.l.b16 %v1202
    %v1321 = vunpack.c.h.b16 %v1202
    %v1322 = vunpack.c.l.b16 %v1203
    %v1323 = vunpack.c.h.b16 %v1203
    %v1324 = vunpack.c.l.b16 %v1204
    %v1325 = vunpack.c.h.b16 %v1204
    %v1326 = vunpack.c.l.b16 %v1205
    %v1327 = vunpack.c.h.b16 %v1205
    %v1328 = vunpack.c.l.b16 %v1206
    %v1329 = vunpack.c.h.b16 %v1206
    %v1330 = vunpack.c.l.b16 %v1207
    %v1331 = vunpack.c.h.b16 %v1207
    %v1332 = vunpack.c.l.b16 %v1208
    %v1333 = vunpack.c.h.b16 %v1208
    %v1334 = vunpack.c.l.b16 %v1209
    %v1335 = vunpack.c.h.b16 %v1209
    %v1336 = vunpack.c.l.b16 %v1210
    %v1337 = vunpack.c.h.b16 %v1210
    %v1338 = vunpack.c.l.b16 %v1211
    %v1339 = vunpack.c.h.b16 %v1211
    %v1340 = vunpack.c.l.b16 %v1212
    %v1341 = vunpack.c.h.b16 %v1212
    %v1342 = vunpack.c.l.b16 %v1213
    %v1343 = vunpack.c.h.b16 %v1213
    %v1344 = vunpack.c.l.b16 %v1214
    %v1345 = vunpack.c.h.b16 %v1214
    %v1346 = vunpack.c.l.b16 %v1215
    %v1347 = vunpack.c.h.b16 %v1215
    %v1348 = vunpack.c.l.b16 %v1216
    %v1349 = vunpack.c.h.b16 %v1216
    %v1350 = vunpack.c.l.b16 %v1217
    %v1351 = vunpack.c.h.b16 %v1217
    %v1352 = vunpack.c.l.b16 %v1218
    %v1353 = vunpack.c.h.b16 %v1218
    %v1354 = vunpack.c.l.b16 %v1219
    %v1355 = vunpack.c.h.b16 %v1219
    %v1356 = vunpack.c.l.b16 %v1220
    %v1357 = vunpack.c.h.b16 %v1220
    %v1358 = vunpack.c.l.b16 %v1221
    %v1359 = vunpack.c.h.b16 %v1221
    %v1360 = vunpack.c.l.b16 %v1222
    %v1361 = vunpack.c.h.b16 %v1222
    %v1362 = vunpack.c.l.b16 %v1223
    %v1363 = vunpack.c.h.b16 %v1223
    %v1364 = vunpack.c.l.b16 %v1224
    %v1365 = vunpack.c.h.b16 %v1224
    %v1366 = vunpack.c.l.b16 %v1225
    %v1367 = vunpack.c.h.b16 %v1225
    %v1368 = vunpack.c.l.b16 %v1226
    %v1369 = vunpack.c.h.b16 %v1226
    %v1370 = vunpack.c.l.b16 %v1227
    %v1371 = vunpack.c.h.b16 %v1227
    %v1372 = vunpack.c.l.b16 %v1228
    %v1373 = vunpack.c.h.b16 %v1228
    %v1374 = vunpack.c.l.b16 %v1229
    %v1375 = vunpack.c.h.b16 %v1229
    %v1376 = vunpack.c.l.b16 %v1230
    %v1377 = vunpack.c.h.b16 %v1230
    %v1378 = vunpack.c.l.b16 %v1231
    %v1379 = vunpack.c.h.b16 %v1231
    %v1380 = vunpack.c.l.b16 %v1232
    %v1381 = vunpack.c.h.b16 %v1232
    %v1382 = vunpack.c.l.b16 %v1233
    %v1383 = vunpack.c.h.b16 %v1233
    %v1384 = vunpack.c.l.b16 %v1234
    %v1385 = vunpack.c.h.b16 %v1234
    %v1386 = vunpack.c.l.b16 %v1235
    %v1387 = vunpack.c.h.b16 %v1235
    %v1388 = vunpack.c.l.b16 %v1236
    %v1389 = vunpack.c.h.b16 %v1236
    %v1390 = vunpack.c.l.b16 %v1237
    %v1391 = vunpack.c.h.b16 %v1237
    %v1392 = vunpack.c.l.b16 %v1238
    %v1393 = vunpack.c.h.b16 %v1238
    %v1394 = vpack.c.b16 %v1300, %v1298
    %v1395 = vpack.c.b16 %v1301, %v1299
    %v1396 = vpack.c.b16 %v1304, %v1302
    %v1397 = vpack.c.b16 %v1305, %v1303
    %v1398 = vpack.c.b16 %v1308, %v1306
    %v1399 = vpack.c.b16 %v1309, %v1307
    %v1400 = vpack.c.b16 %v1312, %v1310
    %v1401 = vpack.c.b16 %v1313, %v1311
    %v1402 = vpack.c.b16 %v1316, %v1314
    %v1403 = vpack.c.b16 %v1317, %v1315
    %v1404 = vpack.c.b16 %v1320, %v1318
    %v1405 = vpack.c.b16 %v1321, %v1319
    %v1406 = vpack.c.b16 %v1324, %v1322
    %v1407 = vpack.c.b16 %v1325, %v1323
    %v1408 = vpack.c.b16 %v1328, %v1326
    %v1409 = vpack.c.b16 %v1329, %v1327
    %v1410 = vpack.c.b16 %v1332, %v1330
    %v1411 = vpack.c.b16 %v1333, %v1331
    %v1412 = vpack.c.b16 %v1336, %v1334
    %v1413 = vpack.c.b16 %v1337, %v1335
    %v1414 = vpack.c.b16 %v1340, %v1338
    %v1415 = vpack.c.b16 %v1341, %v1339
    %v1416 = vpack.c.b16 %v1344, %v1342
    %v1417 = vpack.c.b16 %v1345, %v1343
    %v1418 = vpack.c.b16 %v1348, %v1346
    %v1419 = vpack.c.b16 %v1349, %v1347
    %v1420 = vpack.c.b16 %v1352, %v1350
    %v1421 = vpack.c.b16 %v1353, %v1351
    %v1422 = vpack.c.b16 %v1356, %v1354
    %v1423 = vpack.c.b16 %v1357, %v1355
    %v1424 = vpack.c.b16 %v1360, %v1358
    %v1425 = vpack.c.b16 %v1361, %v1359
    %v1426 = vpack.c.b16 %v1364, %v1362
    %v1427 = vpack.c.b16 %v1365, %v1363
    %v1428 = vpack.c.b16 %v1368, %v1366
    %v1429 = vpack.c.b16 %v1369, %v1367
    %v1430 = vpack.c.b16 %v1372, %v1370
    %v1431 = vpack.c.b16 %v1373, %v1371
    %v1432 = vpack.c.b16 %v1376, %v1374
    %v1433 = vpack.c.b16 %v1377, %v1375
    %v1434 = vpack.c.b16 %v1380, %v1378
    %v1435 = vpack.c.b16 %v1381, %v1379
    %v1436 = vpack.c.b16 %v1384, %v1382
    %v1437 = vpack.c.b16 %v1385, %v1383
    %v1438 = vpack.c.b16 %v1388, %v1386
    %v1439 = vpack.c.b16 %v1389, %v1387
    %v1440 = vpack.c.b16 %v1392, %v1390
    %v1441 = vpack.c.b16 %v1393, %v1391
    %1490 = vmatpush.bf16.msra.mxu0 %v1408
    %1491 = vmatpush.bf16.msra.mxu0 %v1406
    %1492 = vmatpush.bf16.msra.mxu0 %v1404
    %1493 = vmatpush.bf16.msra.mxu0 %v1402
    %1494 = vmatpush.bf16.msra.mxu0 %v1400
    %1495 = vmatpush.bf16.msra.mxu0 %v1398
    %1496 = vmatpush.bf16.msra.mxu0 %v1396
    %1497 = vmatpush.bf16.msra.mxu0 %v1394
    %1498 = vmatmul.bf16.gmra.mxu0 %v1244
    %v1499 = vpop.f32.mrf.mxu0
    %v1500 = vadd.f32 0.0, %v1499
    %v1501 = vpop.f32.mrf.mxu0
    %1502 = vdwg.mxu0
    %1503 = vmatpush.bf16.msra.mxu0 %v1424
    %1504 = vmatpush.bf16.msra.mxu0 %v1422
    %1505 = vmatpush.bf16.msra.mxu0 %v1420
    %1506 = vmatpush.bf16.msra.mxu0 %v1418
    %1507 = vmatpush.bf16.msra.mxu0 %v1416
    %1508 = vmatpush.bf16.msra.mxu0 %v1414
    %1509 = vmatpush.bf16.msra.mxu0 %v1412
    %1510 = vmatpush.bf16.msra.mxu0 %v1410
    %1511 = vmatmul.bf16.gmra.mxu0 %v1245
    %v1512 = vpop.f32.mrf.mxu0
    %v1513 = vadd.f32 %v1500, %v1512
    %v1514 = vpop.f32.mrf.mxu0
    %1515 = vdwg.mxu0
    %1516 = vmatpush.bf16.msra.mxu0 %v1440
    %1517 = vmatpush.bf16.msra.mxu0 %v1438
    %1518 = vmatpush.bf16.msra.mxu0 %v1436
    %1519 = vmatpush.bf16.msra.mxu0 %v1434
    %1520 = vmatpush.bf16.msra.mxu0 %v1432
    %1521 = vmatpush.bf16.msra.mxu0 %v1430
    %1522 = vmatpush.bf16.msra.mxu0 %v1428
    %1523 = vmatpush.bf16.msra.mxu0 %v1426
    %1524 = vmatmul.bf16.gmra.mxu0 %v1246
    %v1525 = vpop.f32.mrf.mxu0
    %v1526 = vadd.f32 %v1513, %v1525
    %v1527 = vpop.f32.mrf.mxu0
    %1528 = vdwg.mxu0
    %1529 = vmatpush.bf16.msra.mxu0 %v1409
    %1530 = vmatpush.bf16.msra.mxu0 %v1407
    %1531 = vmatpush.bf16.msra.mxu0 %v1405
    %1532 = vmatpush.bf16.msra.mxu0 %v1403
    %1533 = vmatpush.bf16.msra.mxu0 %v1401
    %1534 = vmatpush.bf16.msra.mxu0 %v1399
    %1535 = vmatpush.bf16.msra.mxu0 %v1397
    %1536 = vmatpush.bf16.msra.mxu0 %v1395
    %1537 = vmatmul.bf16.gmra.mxu0 %v1244
    %v1538 = vpop.f32.mrf.mxu0
    %v1539 = vadd.f32 0.0, %v1538
    %v1540 = vpop.f32.mrf.mxu0
    %1541 = vdwg.mxu0
    %1542 = vmatpush.bf16.msra.mxu0 %v1425
    %1543 = vmatpush.bf16.msra.mxu0 %v1423
    %1544 = vmatpush.bf16.msra.mxu0 %v1421
    %1545 = vmatpush.bf16.msra.mxu0 %v1419
    %1546 = vmatpush.bf16.msra.mxu0 %v1417
    %1547 = vmatpush.bf16.msra.mxu0 %v1415
    %1548 = vmatpush.bf16.msra.mxu0 %v1413
    %1549 = vmatpush.bf16.msra.mxu0 %v1411
    %1550 = vmatmul.bf16.gmra.mxu0 %v1245
    %v1551 = vpop.f32.mrf.mxu0
    %v1552 = vadd.f32 %v1539, %v1551
    %v1553 = vpop.f32.mrf.mxu0
    %1554 = vdwg.mxu0
    %1555 = vmatpush.bf16.msra.mxu0 %v1441
    %1556 = vmatpush.bf16.msra.mxu0 %v1439
    %1557 = vmatpush.bf16.msra.mxu0 %v1437
    %1558 = vmatpush.bf16.msra.mxu0 %v1435
    %1559 = vmatpush.bf16.msra.mxu0 %v1433
    %1560 = vmatpush.bf16.msra.mxu0 %v1431
    %1561 = vmatpush.bf16.msra.mxu0 %v1429
    %1562 = vmatpush.bf16.msra.mxu0 %v1427
    %1563 = vmatmul.bf16.gmra.mxu0 %v1246
    %v1564 = vpop.f32.mrf.mxu0
    %v1565 = vadd.f32 %v1552, %v1564
    %v1566 = vpop.f32.mrf.mxu0
    %1567 = vdwg.mxu0
    %v1568 = vadd.f32 %v1185, %v1526
    %v1569 = vadd.f32 %v1186, %v1565
    %s1570 = scalar_lea.vmem %s0, 24
    %v1571 = vld [vmem:[%s1570] sm:$0xff]
    %v1572 = vld [vmem:[%s1570 + $0x8] sm:$0xf]
    %s1573 = scalar_lea.vmem [#allocation2], 1536
    %v1574 = vld [vmem:[%s1573] sm:$0xff]
    %v1575 = vld [vmem:[%s1573 + $0x8] sm:$0xff]
    %v1576 = vld [vmem:[%s1573 + $0x10] sm:$0xff]
    %v1577 = vld [vmem:[%s1573 + $0x18] sm:$0xff]
    %v1578 = vld [vmem:[%s1573 + $0x20] sm:$0xff]
    %v1579 = vld [vmem:[%s1573 + $0x28] sm:$0xff]
    %v1580 = vld [vmem:[%s1573 + $0x30] sm:$0xff]
    %v1581 = vld [vmem:[%s1573 + $0x38] sm:$0xff]
    %v1582 = vld [vmem:[%s1573 + $0x40] sm:$0xff]
    %v1583 = vld [vmem:[%s1573 + $0x48] sm:$0xff]
    %v1584 = vld [vmem:[%s1573 + $0x50] sm:$0xff]
    %v1585 = vld [vmem:[%s1573 + $0x58] sm:$0xff]
    %v1586 = vld [vmem:[%s1573 + $0x60] sm:$0xff]
    %v1587 = vld [vmem:[%s1573 + $0x68] sm:$0xff]
    %v1588 = vld [vmem:[%s1573 + $0x70] sm:$0xff]
    %v1589 = vld [vmem:[%s1573 + $0x78] sm:$0xff]
    %v1590 = vld [vmem:[%s1573 + $0x80] sm:$0xff]
    %v1591 = vld [vmem:[%s1573 + $0x88] sm:$0xff]
    %v1592 = vld [vmem:[%s1573 + $0x90] sm:$0xff]
    %v1593 = vld [vmem:[%s1573 + $0x98] sm:$0xff]
    %v1594 = vld [vmem:[%s1573 + $0xa0] sm:$0xff]
    %v1595 = vld [vmem:[%s1573 + $0xa8] sm:$0xff]
    %v1596 = vld [vmem:[%s1573 + $0xb0] sm:$0xff]
    %v1597 = vld [vmem:[%s1573 + $0xb8] sm:$0xff]
    %v1598 = vld [vmem:[%s1573 + $0xc0] sm:$0xff]
    %v1599 = vld [vmem:[%s1573 + $0xc8] sm:$0xff]
    %v1600 = vld [vmem:[%s1573 + $0xd0] sm:$0xff]
    %v1601 = vld [vmem:[%s1573 + $0xd8] sm:$0xff]
    %v1602 = vld [vmem:[%s1573 + $0xe0] sm:$0xff]
    %v1603 = vld [vmem:[%s1573 + $0xe8] sm:$0xff]
    %v1604 = vld [vmem:[%s1573 + $0xf0] sm:$0xff]
    %v1605 = vld [vmem:[%s1573 + $0xf8] sm:$0xff]
    %v1606 = vld [vmem:[%s1573 + $0x100] sm:$0xff]
    %v1607 = vld [vmem:[%s1573 + $0x108] sm:$0xff]
    %v1608 = vld [vmem:[%s1573 + $0x110] sm:$0xff]
    %v1609 = vld [vmem:[%s1573 + $0x118] sm:$0xff]
    %v1610 = vld [vmem:[%s1573 + $0x120] sm:$0xff]
    %v1611 = vld [vmem:[%s1573 + $0x128] sm:$0xff]
    %v1612 = vld [vmem:[%s1573 + $0x130] sm:$0xff]
    %v1613 = vld [vmem:[%s1573 + $0x138] sm:$0xff]
    %v1614 = vld [vmem:[%s1573 + $0x140] sm:$0xff]
    %v1615 = vld [vmem:[%s1573 + $0x148] sm:$0xff]
    %v1616 = vld [vmem:[%s1573 + $0x150] sm:$0xff]
    %v1617 = vld [vmem:[%s1573 + $0x158] sm:$0xff]
    %v1618 = vld [vmem:[%s1573 + $0x160] sm:$0xff]
    %v1619 = vld [vmem:[%s1573 + $0x168] sm:$0xff]
    %v1620 = vld [vmem:[%s1573 + $0x170] sm:$0xff]
    %v1621 = vld [vmem:[%s1573 + $0x178] sm:$0xff]
    %v1624 = vunpack.c.l.b16 %v1571
    %v1625 = vunpack.c.h.b16 %v1571
    %v1626 = vunpack.c.l.b16 %v1572
    %v1627 = vpack.c.b16 %v1624, %v1624
    %v1628 = vpack.c.b16 %v1625, %v1625
    %v1629 = vpack.c.b16 %v1626, %v1626
    %v1681 = vunpack.c.l.b16 %v1574
    %v1682 = vunpack.c.h.b16 %v1574
    %v1683 = vunpack.c.l.b16 %v1575
    %v1684 = vunpack.c.h.b16 %v1575
    %v1685 = vunpack.c.l.b16 %v1576
    %v1686 = vunpack.c.h.b16 %v1576
    %v1687 = vunpack.c.l.b16 %v1577
    %v1688 = vunpack.c.h.b16 %v1577
    %v1689 = vunpack.c.l.b16 %v1578
    %v1690 = vunpack.c.h.b16 %v1578
    %v1691 = vunpack.c.l.b16 %v1579
    %v1692 = vunpack.c.h.b16 %v1579
    %v1693 = vunpack.c.l.b16 %v1580
    %v1694 = vunpack.c.h.b16 %v1580
    %v1695 = vunpack.c.l.b16 %v1581
    %v1696 = vunpack.c.h.b16 %v1581
    %v1697 = vunpack.c.l.b16 %v1582
    %v1698 = vunpack.c.h.b16 %v1582
    %v1699 = vunpack.c.l.b16 %v1583
    %v1700 = vunpack.c.h.b16 %v1583
    %v1701 = vunpack.c.l.b16 %v1584
    %v1702 = vunpack.c.h.b16 %v1584
    %v1703 = vunpack.c.l.b16 %v1585
    %v1704 = vunpack.c.h.b16 %v1585
    %v1705 = vunpack.c.l.b16 %v1586
    %v1706 = vunpack.c.h.b16 %v1586
    %v1707 = vunpack.c.l.b16 %v1587
    %v1708 = vunpack.c.h.b16 %v1587
    %v1709 = vunpack.c.l.b16 %v1588
    %v1710 = vunpack.c.h.b16 %v1588
    %v1711 = vunpack.c.l.b16 %v1589
    %v1712 = vunpack.c.h.b16 %v1589
    %v1713 = vunpack.c.l.b16 %v1590
    %v1714 = vunpack.c.h.b16 %v1590
    %v1715 = vunpack.c.l.b16 %v1591
    %v1716 = vunpack.c.h.b16 %v1591
    %v1717 = vunpack.c.l.b16 %v1592
    %v1718 = vunpack.c.h.b16 %v1592
    %v1719 = vunpack.c.l.b16 %v1593
    %v1720 = vunpack.c.h.b16 %v1593
    %v1721 = vunpack.c.l.b16 %v1594
    %v1722 = vunpack.c.h.b16 %v1594
    %v1723 = vunpack.c.l.b16 %v1595
    %v1724 = vunpack.c.h.b16 %v1595
    %v1725 = vunpack.c.l.b16 %v1596
    %v1726 = vunpack.c.h.b16 %v1596
    %v1727 = vunpack.c.l.b16 %v1597
    %v1728 = vunpack.c.h.b16 %v1597
    %v1729 = vunpack.c.l.b16 %v1598
    %v1730 = vunpack.c.h.b16 %v1598
    %v1731 = vunpack.c.l.b16 %v1599
    %v1732 = vunpack.c.h.b16 %v1599
    %v1733 = vunpack.c.l.b16 %v1600
    %v1734 = vunpack.c.h.b16 %v1600
    %v1735 = vunpack.c.l.b16 %v1601
    %v1736 = vunpack.c.h.b16 %v1601
    %v1737 = vunpack.c.l.b16 %v1602
    %v1738 = vunpack.c.h.b16 %v1602
    %v1739 = vunpack.c.l.b16 %v1603
    %v1740 = vunpack.c.h.b16 %v1603
    %v1741 = vunpack.c.l.b16 %v1604
    %v1742 = vunpack.c.h.b16 %v1604
    %v1743 = vunpack.c.l.b16 %v1605
    %v1744 = vunpack.c.h.b16 %v1605
    %v1745 = vunpack.c.l.b16 %v1606
    %v1746 = vunpack.c.h.b16 %v1606
    %v1747 = vunpack.c.l.b16 %v1607
    %v1748 = vunpack.c.h.b16 %v1607
    %v1749 = vunpack.c.l.b16 %v1608
    %v1750 = vunpack.c.h.b16 %v1608
    %v1751 = vunpack.c.l.b16 %v1609
    %v1752 = vunpack.c.h.b16 %v1609
    %v1753 = vunpack.c.l.b16 %v1610
    %v1754 = vunpack.c.h.b16 %v1610
    %v1755 = vunpack.c.l.b16 %v1611
    %v1756 = vunpack.c.h.b16 %v1611
    %v1757 = vunpack.c.l.b16 %v1612
    %v1758 = vunpack.c.h.b16 %v1612
    %v1759 = vunpack.c.l.b16 %v1613
    %v1760 = vunpack.c.h.b16 %v1613
    %v1761 = vunpack.c.l.b16 %v1614
    %v1762 = vunpack.c.h.b16 %v1614
    %v1763 = vunpack.c.l.b16 %v1615
    %v1764 = vunpack.c.h.b16 %v1615
    %v1765 = vunpack.c.l.b16 %v1616
    %v1766 = vunpack.c.h.b16 %v1616
    %v1767 = vunpack.c.l.b16 %v1617
    %v1768 = vunpack.c.h.b16 %v1617
    %v1769 = vunpack.c.l.b16 %v1618
    %v1770 = vunpack.c.h.b16 %v1618
    %v1771 = vunpack.c.l.b16 %v1619
    %v1772 = vunpack.c.h.b16 %v1619
    %v1773 = vunpack.c.l.b16 %v1620
    %v1774 = vunpack.c.h.b16 %v1620
    %v1775 = vunpack.c.l.b16 %v1621
    %v1776 = vunpack.c.h.b16 %v1621
    %v1777 = vpack.c.b16 %v1683, %v1681
    %v1778 = vpack.c.b16 %v1684, %v1682
    %v1779 = vpack.c.b16 %v1687, %v1685
    %v1780 = vpack.c.b16 %v1688, %v1686
    %v1781 = vpack.c.b16 %v1691, %v1689
    %v1782 = vpack.c.b16 %v1692, %v1690
    %v1783 = vpack.c.b16 %v1695, %v1693
    %v1784 = vpack.c.b16 %v1696, %v1694
    %v1785 = vpack.c.b16 %v1699, %v1697
    %v1786 = vpack.c.b16 %v1700, %v1698
    %v1787 = vpack.c.b16 %v1703, %v1701
    %v1788 = vpack.c.b16 %v1704, %v1702
    %v1789 = vpack.c.b16 %v1707, %v1705
    %v1790 = vpack.c.b16 %v1708, %v1706
    %v1791 = vpack.c.b16 %v1711, %v1709
    %v1792 = vpack.c.b16 %v1712, %v1710
    %v1793 = vpack.c.b16 %v1715, %v1713
    %v1794 = vpack.c.b16 %v1716, %v1714
    %v1795 = vpack.c.b16 %v1719, %v1717
    %v1796 = vpack.c.b16 %v1720, %v1718
    %v1797 = vpack.c.b16 %v1723, %v1721
    %v1798 = vpack.c.b16 %v1724, %v1722
    %v1799 = vpack.c.b16 %v1727, %v1725
    %v1800 = vpack.c.b16 %v1728, %v1726
    %v1801 = vpack.c.b16 %v1731, %v1729
    %v1802 = vpack.c.b16 %v1732, %v1730
    %v1803 = vpack.c.b16 %v1735, %v1733
    %v1804 = vpack.c.b16 %v1736, %v1734
    %v1805 = vpack.c.b16 %v1739, %v1737
    %v1806 = vpack.c.b16 %v1740, %v1738
    %v1807 = vpack.c.b16 %v1743, %v1741
    %v1808 = vpack.c.b16 %v1744, %v1742
    %v1809 = vpack.c.b16 %v1747, %v1745
    %v1810 = vpack.c.b16 %v1748, %v1746
    %v1811 = vpack.c.b16 %v1751, %v1749
    %v1812 = vpack.c.b16 %v1752, %v1750
    %v1813 = vpack.c.b16 %v1755, %v1753
    %v1814 = vpack.c.b16 %v1756, %v1754
    %v1815 = vpack.c.b16 %v1759, %v1757
    %v1816 = vpack.c.b16 %v1760, %v1758
    %v1817 = vpack.c.b16 %v1763, %v1761
    %v1818 = vpack.c.b16 %v1764, %v1762
    %v1819 = vpack.c.b16 %v1767, %v1765
    %v1820 = vpack.c.b16 %v1768, %v1766
    %v1821 = vpack.c.b16 %v1771, %v1769
    %v1822 = vpack.c.b16 %v1772, %v1770
    %v1823 = vpack.c.b16 %v1775, %v1773
    %v1824 = vpack.c.b16 %v1776, %v1774
    %1873 = vmatpush.bf16.msra.mxu0 %v1791
    %1874 = vmatpush.bf16.msra.mxu0 %v1789
    %1875 = vmatpush.bf16.msra.mxu0 %v1787
    %1876 = vmatpush.bf16.msra.mxu0 %v1785
    %1877 = vmatpush.bf16.msra.mxu0 %v1783
    %1878 = vmatpush.bf16.msra.mxu0 %v1781
    %1879 = vmatpush.bf16.msra.mxu0 %v1779
    %1880 = vmatpush.bf16.msra.mxu0 %v1777
    %1881 = vmatmul.bf16.gmra.mxu0 %v1627
    %v1882 = vpop.f32.mrf.mxu0
    %v1883 = vadd.f32 0.0, %v1882
    %v1884 = vpop.f32.mrf.mxu0
    %1885 = vdwg.mxu0
    %1886 = vmatpush.bf16.msra.mxu0 %v1807
    %1887 = vmatpush.bf16.msra.mxu0 %v1805
    %1888 = vmatpush.bf16.msra.mxu0 %v1803
    %1889 = vmatpush.bf16.msra.mxu0 %v1801
    %1890 = vmatpush.bf16.msra.mxu0 %v1799
    %1891 = vmatpush.bf16.msra.mxu0 %v1797
    %1892 = vmatpush.bf16.msra.mxu0 %v1795
    %1893 = vmatpush.bf16.msra.mxu0 %v1793
    %1894 = vmatmul.bf16.gmra.mxu0 %v1628
    %v1895 = vpop.f32.mrf.mxu0
    %v1896 = vadd.f32 %v1883, %v1895
    %v1897 = vpop.f32.mrf.mxu0
    %1898 = vdwg.mxu0
    %1899 = vmatpush.bf16.msra.mxu0 %v1823
    %1900 = vmatpush.bf16.msra.mxu0 %v1821
    %1901 = vmatpush.bf16.msra.mxu0 %v1819
    %1902 = vmatpush.bf16.msra.mxu0 %v1817
    %1903 = vmatpush.bf16.msra.mxu0 %v1815
    %1904 = vmatpush.bf16.msra.mxu0 %v1813
    %1905 = vmatpush.bf16.msra.mxu0 %v1811
    %1906 = vmatpush.bf16.msra.mxu0 %v1809
    %1907 = vmatmul.bf16.gmra.mxu0 %v1629
    %v1908 = vpop.f32.mrf.mxu0
    %v1909 = vadd.f32 %v1896, %v1908
    %v1910 = vpop.f32.mrf.mxu0
    %1911 = vdwg.mxu0
    %1912 = vmatpush.bf16.msra.mxu0 %v1792
    %1913 = vmatpush.bf16.msra.mxu0 %v1790
    %1914 = vmatpush.bf16.msra.mxu0 %v1788
    %1915 = vmatpush.bf16.msra.mxu0 %v1786
    %1916 = vmatpush.bf16.msra.mxu0 %v1784
    %1917 = vmatpush.bf16.msra.mxu0 %v1782
    %1918 = vmatpush.bf16.msra.mxu0 %v1780
    %1919 = vmatpush.bf16.msra.mxu0 %v1778
    %1920 = vmatmul.bf16.gmra.mxu0 %v1627
    %v1921 = vpop.f32.mrf.mxu0
    %v1922 = vadd.f32 0.0, %v1921
    %v1923 = vpop.f32.mrf.mxu0
    %1924 = vdwg.mxu0
    %1925 = vmatpush.bf16.msra.mxu0 %v1808
    %1926 = vmatpush.bf16.msra.mxu0 %v1806
    %1927 = vmatpush.bf16.msra.mxu0 %v1804
    %1928 = vmatpush.bf16.msra.mxu0 %v1802
    %1929 = vmatpush.bf16.msra.mxu0 %v1800
    %1930 = vmatpush.bf16.msra.mxu0 %v1798
    %1931 = vmatpush.bf16.msra.mxu0 %v1796
    %1932 = vmatpush.bf16.msra.mxu0 %v1794
    %1933 = vmatmul.bf16.gmra.mxu0 %v1628
    %v1934 = vpop.f32.mrf.mxu0
    %v1935 = vadd.f32 %v1922, %v1934
    %v1936 = vpop.f32.mrf.mxu0
    %1937 = vdwg.mxu0
    %1938 = vmatpush.bf16.msra.mxu0 %v1824
    %1939 = vmatpush.bf16.msra.mxu0 %v1822
    %1940 = vmatpush.bf16.msra.mxu0 %v1820
    %1941 = vmatpush.bf16.msra.mxu0 %v1818
    %1942 = vmatpush.bf16.msra.mxu0 %v1816
    %1943 = vmatpush.bf16.msra.mxu0 %v1814
    %1944 = vmatpush.bf16.msra.mxu0 %v1812
    %1945 = vmatpush.bf16.msra.mxu0 %v1810
    %1946 = vmatmul.bf16.gmra.mxu0 %v1629
    %v1947 = vpop.f32.mrf.mxu0
    %v1948 = vadd.f32 %v1935, %v1947
    %v1949 = vpop.f32.mrf.mxu0
    %1950 = vdwg.mxu0
    %v1951 = vadd.f32 %v1568, %v1909
    %v1952 = vadd.f32 %v1569, %v1948
    %s1953 = scalar_lea.vmem [#allocation2], 1920
    %v1954 = vld [vmem:[%s1953] sm:$0xff]
    %v1955 = vld [vmem:[%s1953 + $0x8] sm:$0xff]
    %v1956 = vld [vmem:[%s1953 + $0x10] sm:$0xff]
    %v1957 = vld [vmem:[%s1953 + $0x18] sm:$0xff]
    %v1958 = vld [vmem:[%s1953 + $0x20] sm:$0xff]
    %v1959 = vld [vmem:[%s1953 + $0x28] sm:$0xff]
    %v1960 = vld [vmem:[%s1953 + $0x30] sm:$0xff]
    %v1961 = vld [vmem:[%s1953 + $0x38] sm:$0xff]
    %v1962 = vld [vmem:[%s1953 + $0x40] sm:$0xff]
    %v1963 = vld [vmem:[%s1953 + $0x48] sm:$0xff]
    %v1964 = vld [vmem:[%s1953 + $0x50] sm:$0xff]
    %v1965 = vld [vmem:[%s1953 + $0x58] sm:$0xff]
    %v1966 = vld [vmem:[%s1953 + $0x60] sm:$0xff]
    %v1967 = vld [vmem:[%s1953 + $0x68] sm:$0xff]
    %v1968 = vld [vmem:[%s1953 + $0x70] sm:$0xff]
    %v1969 = vld [vmem:[%s1953 + $0x78] sm:$0xff]
    %v1970 = vld [vmem:[%s1953 + $0x80] sm:$0xff]
    %v1971 = vld [vmem:[%s1953 + $0x88] sm:$0xff]
    %v1972 = vld [vmem:[%s1953 + $0x90] sm:$0xff]
    %v1973 = vld [vmem:[%s1953 + $0x98] sm:$0xff]
    %v1974 = vld [vmem:[%s1953 + $0xa0] sm:$0xff]
    %v1975 = vld [vmem:[%s1953 + $0xa8] sm:$0xff]
    %v1976 = vld [vmem:[%s1953 + $0xb0] sm:$0xff]
    %v1977 = vld [vmem:[%s1953 + $0xb8] sm:$0xff]
    %v1978 = vld [vmem:[%s1953 + $0xc0] sm:$0xff]
    %v1979 = vld [vmem:[%s1953 + $0xc8] sm:$0xff]
    %v1980 = vld [vmem:[%s1953 + $0xd0] sm:$0xff]
    %v1981 = vld [vmem:[%s1953 + $0xd8] sm:$0xff]
    %v1982 = vld [vmem:[%s1953 + $0xe0] sm:$0xff]
    %v1983 = vld [vmem:[%s1953 + $0xe8] sm:$0xff]
    %v1984 = vld [vmem:[%s1953 + $0xf0] sm:$0xff]
    %v1985 = vld [vmem:[%s1953 + $0xf8] sm:$0xff]
    %v1986 = vld [vmem:[%s1953 + $0x100] sm:$0xff]
    %v1987 = vld [vmem:[%s1953 + $0x108] sm:$0xff]
    %v1988 = vld [vmem:[%s1953 + $0x110] sm:$0xff]
    %v1989 = vld [vmem:[%s1953 + $0x118] sm:$0xff]
    %v1990 = vld [vmem:[%s1953 + $0x120] sm:$0xff]
    %v1991 = vld [vmem:[%s1953 + $0x128] sm:$0xff]
    %v1992 = vld [vmem:[%s1953 + $0x130] sm:$0xff]
    %v1993 = vld [vmem:[%s1953 + $0x138] sm:$0xff]
    %v1994 = vld [vmem:[%s1953 + $0x140] sm:$0xff]
    %v1995 = vld [vmem:[%s1953 + $0x148] sm:$0xff]
    %v1996 = vld [vmem:[%s1953 + $0x150] sm:$0xff]
    %v1997 = vld [vmem:[%s1953 + $0x158] sm:$0xff]
    %v1998 = vld [vmem:[%s1953 + $0x160] sm:$0xff]
    %v1999 = vld [vmem:[%s1953 + $0x168] sm:$0xff]
    %v2000 = vld [vmem:[%s1953 + $0x170] sm:$0xff]
    %v2001 = vld [vmem:[%s1953 + $0x178] sm:$0xff]
    %s2002 = scalar_lea.vmem [#allocation2], 2304
    %v2003 = vld [vmem:[%s2002] sm:$0xff]
    %v2004 = vld [vmem:[%s2002 + $0x8] sm:$0xff]
    %v2005 = vld [vmem:[%s2002 + $0x10] sm:$0xff]
    %v2006 = vld [vmem:[%s2002 + $0x18] sm:$0xff]
    %v2007 = vld [vmem:[%s2002 + $0x20] sm:$0xff]
    %v2008 = vld [vmem:[%s2002 + $0x28] sm:$0xff]
    %v2009 = vld [vmem:[%s2002 + $0x30] sm:$0xff]
    %v2010 = vld [vmem:[%s2002 + $0x38] sm:$0xff]
    %v2011 = vld [vmem:[%s2002 + $0x40] sm:$0xff]
    %v2012 = vld [vmem:[%s2002 + $0x48] sm:$0xff]
    %v2013 = vld [vmem:[%s2002 + $0x50] sm:$0xff]
    %v2014 = vld [vmem:[%s2002 + $0x58] sm:$0xff]
    %v2015 = vld [vmem:[%s2002 + $0x60] sm:$0xff]
    %v2016 = vld [vmem:[%s2002 + $0x68] sm:$0xff]
    %v2017 = vld [vmem:[%s2002 + $0x70] sm:$0xff]
    %v2018 = vld [vmem:[%s2002 + $0x78] sm:$0xff]
    %v2019 = vld [vmem:[%s2002 + $0x80] sm:$0xff]
    %v2020 = vld [vmem:[%s2002 + $0x88] sm:$0xff]
    %v2021 = vld [vmem:[%s2002 + $0x90] sm:$0xff]
    %v2022 = vld [vmem:[%s2002 + $0x98] sm:$0xff]
    %v2023 = vld [vmem:[%s2002 + $0xa0] sm:$0xff]
    %v2024 = vld [vmem:[%s2002 + $0xa8] sm:$0xff]
    %v2025 = vld [vmem:[%s2002 + $0xb0] sm:$0xff]
    %v2026 = vld [vmem:[%s2002 + $0xb8] sm:$0xff]
    %v2027 = vld [vmem:[%s2002 + $0xc0] sm:$0xff]
    %v2028 = vld [vmem:[%s2002 + $0xc8] sm:$0xff]
    %v2029 = vld [vmem:[%s2002 + $0xd0] sm:$0xff]
    %v2030 = vld [vmem:[%s2002 + $0xd8] sm:$0xff]
    %v2031 = vld [vmem:[%s2002 + $0xe0] sm:$0xff]
    %v2032 = vld [vmem:[%s2002 + $0xe8] sm:$0xff]
    %v2033 = vld [vmem:[%s2002 + $0xf0] sm:$0xff]
    %v2034 = vld [vmem:[%s2002 + $0xf8] sm:$0xff]
    %v2035 = vld [vmem:[%s2002 + $0x100] sm:$0xff]
    %v2036 = vld [vmem:[%s2002 + $0x108] sm:$0xff]
    %v2037 = vld [vmem:[%s2002 + $0x110] sm:$0xff]
    %v2038 = vld [vmem:[%s2002 + $0x118] sm:$0xff]
    %v2039 = vld [vmem:[%s2002 + $0x120] sm:$0xff]
    %v2040 = vld [vmem:[%s2002 + $0x128] sm:$0xff]
    %v2041 = vld [vmem:[%s2002 + $0x130] sm:$0xff]
    %v2042 = vld [vmem:[%s2002 + $0x138] sm:$0xff]
    %v2043 = vld [vmem:[%s2002 + $0x140] sm:$0xff]
    %v2044 = vld [vmem:[%s2002 + $0x148] sm:$0xff]
    %v2045 = vld [vmem:[%s2002 + $0x150] sm:$0xff]
    %v2046 = vld [vmem:[%s2002 + $0x158] sm:$0xff]
    %v2047 = vld [vmem:[%s2002 + $0x160] sm:$0xff]
    %v2048 = vld [vmem:[%s2002 + $0x168] sm:$0xff]
    %v2049 = vld [vmem:[%s2002 + $0x170] sm:$0xff]
    %v2050 = vld [vmem:[%s2002 + $0x178] sm:$0xff]
    %v2099 = vunpack.c.l.b16 %v2003
    %v2100 = vunpack.c.h.b16 %v2003
    %v2101 = vunpack.c.l.b16 %v2004
    %v2102 = vunpack.c.h.b16 %v2004
    %v2103 = vunpack.c.l.b16 %v2005
    %v2104 = vunpack.c.h.b16 %v2005
    %v2105 = vunpack.c.l.b16 %v2006
    %v2106 = vunpack.c.h.b16 %v2006
    %v2107 = vunpack.c.l.b16 %v2007
    %v2108 = vunpack.c.h.b16 %v2007
    %v2109 = vunpack.c.l.b16 %v2008
    %v2110 = vunpack.c.h.b16 %v2008
    %v2111 = vunpack.c.l.b16 %v2009
    %v2112 = vunpack.c.h.b16 %v2009
    %v2113 = vunpack.c.l.b16 %v2010
    %v2114 = vunpack.c.h.b16 %v2010
    %v2115 = vunpack.c.l.b16 %v2011
    %v2116 = vunpack.c.h.b16 %v2011
    %v2117 = vunpack.c.l.b16 %v2012
    %v2118 = vunpack.c.h.b16 %v2012
    %v2119 = vunpack.c.l.b16 %v2013
    %v2120 = vunpack.c.h.b16 %v2013
    %v2121 = vunpack.c.l.b16 %v2014
    %v2122 = vunpack.c.h.b16 %v2014
    %v2123 = vunpack.c.l.b16 %v2015
    %v2124 = vunpack.c.h.b16 %v2015
    %v2125 = vunpack.c.l.b16 %v2016
    %v2126 = vunpack.c.h.b16 %v2016
    %v2127 = vunpack.c.l.b16 %v2017
    %v2128 = vunpack.c.h.b16 %v2017
    %v2129 = vunpack.c.l.b16 %v2018
    %v2130 = vunpack.c.h.b16 %v2018
    %v2131 = vunpack.c.l.b16 %v2019
    %v2132 = vunpack.c.h.b16 %v2019
    %v2133 = vunpack.c.l.b16 %v2020
    %v2134 = vunpack.c.h.b16 %v2020
    %v2135 = vunpack.c.l.b16 %v2021
    %v2136 = vunpack.c.h.b16 %v2021
    %v2137 = vunpack.c.l.b16 %v2022
    %v2138 = vunpack.c.h.b16 %v2022
    %v2139 = vunpack.c.l.b16 %v2023
    %v2140 = vunpack.c.h.b16 %v2023
    %v2141 = vunpack.c.l.b16 %v2024
    %v2142 = vunpack.c.h.b16 %v2024
    %v2143 = vunpack.c.l.b16 %v2025
    %v2144 = vunpack.c.h.b16 %v2025
    %v2145 = vunpack.c.l.b16 %v2026
    %v2146 = vunpack.c.h.b16 %v2026
    %v2147 = vunpack.c.l.b16 %v2027
    %v2148 = vunpack.c.h.b16 %v2027
    %v2149 = vunpack.c.l.b16 %v2028
    %v2150 = vunpack.c.h.b16 %v2028
    %v2151 = vunpack.c.l.b16 %v2029
    %v2152 = vunpack.c.h.b16 %v2029
    %v2153 = vunpack.c.l.b16 %v2030
    %v2154 = vunpack.c.h.b16 %v2030
    %v2155 = vunpack.c.l.b16 %v2031
    %v2156 = vunpack.c.h.b16 %v2031
    %v2157 = vunpack.c.l.b16 %v2032
    %v2158 = vunpack.c.h.b16 %v2032
    %v2159 = vunpack.c.l.b16 %v2033
    %v2160 = vunpack.c.h.b16 %v2033
    %v2161 = vunpack.c.l.b16 %v2034
    %v2162 = vunpack.c.h.b16 %v2034
    %v2163 = vunpack.c.l.b16 %v2035
    %v2164 = vunpack.c.h.b16 %v2035
    %v2165 = vunpack.c.l.b16 %v2036
    %v2166 = vunpack.c.h.b16 %v2036
    %v2167 = vunpack.c.l.b16 %v2037
    %v2168 = vunpack.c.h.b16 %v2037
    %v2169 = vunpack.c.l.b16 %v2038
    %v2170 = vunpack.c.h.b16 %v2038
    %v2171 = vunpack.c.l.b16 %v2039
    %v2172 = vunpack.c.h.b16 %v2039
    %v2173 = vunpack.c.l.b16 %v2040
    %v2174 = vunpack.c.h.b16 %v2040
    %v2175 = vunpack.c.l.b16 %v2041
    %v2176 = vunpack.c.h.b16 %v2041
    %v2177 = vunpack.c.l.b16 %v2042
    %v2178 = vunpack.c.h.b16 %v2042
    %v2179 = vunpack.c.l.b16 %v2043
    %v2180 = vunpack.c.h.b16 %v2043
    %v2181 = vunpack.c.l.b16 %v2044
    %v2182 = vunpack.c.h.b16 %v2044
    %v2183 = vunpack.c.l.b16 %v2045
    %v2184 = vunpack.c.h.b16 %v2045
    %v2185 = vunpack.c.l.b16 %v2046
    %v2186 = vunpack.c.h.b16 %v2046
    %v2187 = vunpack.c.l.b16 %v2047
    %v2188 = vunpack.c.h.b16 %v2047
    %v2189 = vunpack.c.l.b16 %v2048
    %v2190 = vunpack.c.h.b16 %v2048
    %v2191 = vunpack.c.l.b16 %v2049
    %v2192 = vunpack.c.h.b16 %v2049
    %v2193 = vunpack.c.l.b16 %v2050
    %v2194 = vunpack.c.h.b16 %v2050
    %v2195 = vpack.c.b16 %v2101, %v2099
    %v2196 = vpack.c.b16 %v2102, %v2100
    %v2197 = vpack.c.b16 %v2105, %v2103
    %v2198 = vpack.c.b16 %v2106, %v2104
    %v2199 = vpack.c.b16 %v2109, %v2107
    %v2200 = vpack.c.b16 %v2110, %v2108
    %v2201 = vpack.c.b16 %v2113, %v2111
    %v2202 = vpack.c.b16 %v2114, %v2112
    %v2203 = vpack.c.b16 %v2117, %v2115
    %v2204 = vpack.c.b16 %v2118, %v2116
    %v2205 = vpack.c.b16 %v2121, %v2119
    %v2206 = vpack.c.b16 %v2122, %v2120
    %v2207 = vpack.c.b16 %v2125, %v2123
    %v2208 = vpack.c.b16 %v2126, %v2124
    %v2209 = vpack.c.b16 %v2129, %v2127
    %v2210 = vpack.c.b16 %v2130, %v2128
    %v2211 = vpack.c.b16 %v2133, %v2131
    %v2212 = vpack.c.b16 %v2134, %v2132
    %v2213 = vpack.c.b16 %v2137, %v2135
    %v2214 = vpack.c.b16 %v2138, %v2136
    %v2215 = vpack.c.b16 %v2141, %v2139
    %v2216 = vpack.c.b16 %v2142, %v2140
    %v2217 = vpack.c.b16 %v2145, %v2143
    %v2218 = vpack.c.b16 %v2146, %v2144
    %v2219 = vpack.c.b16 %v2149, %v2147
    %v2220 = vpack.c.b16 %v2150, %v2148
    %v2221 = vpack.c.b16 %v2153, %v2151
    %v2222 = vpack.c.b16 %v2154, %v2152
    %v2223 = vpack.c.b16 %v2157, %v2155
    %v2224 = vpack.c.b16 %v2158, %v2156
    %v2225 = vpack.c.b16 %v2161, %v2159
    %v2226 = vpack.c.b16 %v2162, %v2160
    %v2227 = vpack.c.b16 %v2165, %v2163
    %v2228 = vpack.c.b16 %v2166, %v2164
    %v2229 = vpack.c.b16 %v2169, %v2167
    %v2230 = vpack.c.b16 %v2170, %v2168
    %v2231 = vpack.c.b16 %v2173, %v2171
    %v2232 = vpack.c.b16 %v2174, %v2172
    %v2233 = vpack.c.b16 %v2177, %v2175
    %v2234 = vpack.c.b16 %v2178, %v2176
    %v2235 = vpack.c.b16 %v2181, %v2179
    %v2236 = vpack.c.b16 %v2182, %v2180
    %v2237 = vpack.c.b16 %v2185, %v2183
    %v2238 = vpack.c.b16 %v2186, %v2184
    %v2239 = vpack.c.b16 %v2189, %v2187
    %v2240 = vpack.c.b16 %v2190, %v2188
    %v2241 = vpack.c.b16 %v2193, %v2191
    %v2242 = vpack.c.b16 %v2194, %v2192
    %2291 = vmatpush.bf16.msra.mxu0 %v2209
    %2292 = vmatpush.bf16.msra.mxu0 %v2207
    %2293 = vmatpush.bf16.msra.mxu0 %v2205
    %2294 = vmatpush.bf16.msra.mxu0 %v2203
    %2295 = vmatpush.bf16.msra.mxu0 %v2201
    %2296 = vmatpush.bf16.msra.mxu0 %v2199
    %2297 = vmatpush.bf16.msra.mxu0 %v2197
    %2298 = vmatpush.bf16.msra.mxu0 %v2195
    %2299 = vmatmul.bf16.gmra.mxu0 %v151
    %v2300 = vpop.f32.mrf.mxu0
    %v2301 = vadd.f32 0.0, %v2300
    %v2302 = vpop.f32.mrf.mxu0
    %2303 = vdwg.mxu0
    %2304 = vmatpush.bf16.msra.mxu0 %v2225
    %2305 = vmatpush.bf16.msra.mxu0 %v2223
    %2306 = vmatpush.bf16.msra.mxu0 %v2221
    %2307 = vmatpush.bf16.msra.mxu0 %v2219
    %2308 = vmatpush.bf16.msra.mxu0 %v2217
    %2309 = vmatpush.bf16.msra.mxu0 %v2215
    %2310 = vmatpush.bf16.msra.mxu0 %v2213
    %2311 = vmatpush.bf16.msra.mxu0 %v2211
    %2312 = vmatmul.bf16.gmra.mxu0 %v152
    %v2313 = vpop.f32.mrf.mxu0
    %v2314 = vadd.f32 %v2301, %v2313
    %v2315 = vpop.f32.mrf.mxu0
    %2316 = vdwg.mxu0
    %2317 = vmatpush.bf16.msra.mxu0 %v2241
    %2318 = vmatpush.bf16.msra.mxu0 %v2239
    %2319 = vmatpush.bf16.msra.mxu0 %v2237
    %2320 = vmatpush.bf16.msra.mxu0 %v2235
    %2321 = vmatpush.bf16.msra.mxu0 %v2233
    %2322 = vmatpush.bf16.msra.mxu0 %v2231
    %2323 = vmatpush.bf16.msra.mxu0 %v2229
    %2324 = vmatpush.bf16.msra.mxu0 %v2227
    %2325 = vmatmul.bf16.gmra.mxu0 %v153
    %v2326 = vpop.f32.mrf.mxu0
    %v2327 = vadd.f32 %v2314, %v2326
    %v2328 = vpop.f32.mrf.mxu0
    %2329 = vdwg.mxu0
    %2330 = vmatpush.bf16.msra.mxu0 %v2210
    %2331 = vmatpush.bf16.msra.mxu0 %v2208
    %2332 = vmatpush.bf16.msra.mxu0 %v2206
    %2333 = vmatpush.bf16.msra.mxu0 %v2204
    %2334 = vmatpush.bf16.msra.mxu0 %v2202
    %2335 = vmatpush.bf16.msra.mxu0 %v2200
    %2336 = vmatpush.bf16.msra.mxu0 %v2198
    %2337 = vmatpush.bf16.msra.mxu0 %v2196
    %2338 = vmatmul.bf16.gmra.mxu0 %v151
    %v2339 = vpop.f32.mrf.mxu0
    %v2340 = vadd.f32 0.0, %v2339
    %v2341 = vpop.f32.mrf.mxu0
    %2342 = vdwg.mxu0
    %2343 = vmatpush.bf16.msra.mxu0 %v2226
    %2344 = vmatpush.bf16.msra.mxu0 %v2224
    %2345 = vmatpush.bf16.msra.mxu0 %v2222
    %2346 = vmatpush.bf16.msra.mxu0 %v2220
    %2347 = vmatpush.bf16.msra.mxu0 %v2218
    %2348 = vmatpush.bf16.msra.mxu0 %v2216
    %2349 = vmatpush.bf16.msra.mxu0 %v2214
    %2350 = vmatpush.bf16.msra.mxu0 %v2212
    %2351 = vmatmul.bf16.gmra.mxu0 %v152
    %v2352 = vpop.f32.mrf.mxu0
    %v2353 = vadd.f32 %v2340, %v2352
    %v2354 = vpop.f32.mrf.mxu0
    %2355 = vdwg.mxu0
    %2356 = vmatpush.bf16.msra.mxu0 %v2242
    %2357 = vmatpush.bf16.msra.mxu0 %v2240
    %2358 = vmatpush.bf16.msra.mxu0 %v2238
    %2359 = vmatpush.bf16.msra.mxu0 %v2236
    %2360 = vmatpush.bf16.msra.mxu0 %v2234
    %2361 = vmatpush.bf16.msra.mxu0 %v2232
    %2362 = vmatpush.bf16.msra.mxu0 %v2230
    %2363 = vmatpush.bf16.msra.mxu0 %v2228
    %2364 = vmatmul.bf16.gmra.mxu0 %v153
    %v2365 = vpop.f32.mrf.mxu0
    %v2366 = vadd.f32 %v2353, %v2365
    %v2367 = vpop.f32.mrf.mxu0
    %2368 = vdwg.mxu0
    %v2417 = vunpack.c.l.b16 %v1954
    %v2418 = vunpack.c.h.b16 %v1954
    %v2419 = vunpack.c.l.b16 %v1955
    %v2420 = vunpack.c.h.b16 %v1955
    %v2421 = vunpack.c.l.b16 %v1956
    %v2422 = vunpack.c.h.b16 %v1956
    %v2423 = vunpack.c.l.b16 %v1957
    %v2424 = vunpack.c.h.b16 %v1957
    %v2425 = vunpack.c.l.b16 %v1958
    %v2426 = vunpack.c.h.b16 %v1958
    %v2427 = vunpack.c.l.b16 %v1959
    %v2428 = vunpack.c.h.b16 %v1959
    %v2429 = vunpack.c.l.b16 %v1960
    %v2430 = vunpack.c.h.b16 %v1960
    %v2431 = vunpack.c.l.b16 %v1961
    %v2432 = vunpack.c.h.b16 %v1961
    %v2433 = vunpack.c.l.b16 %v1962
    %v2434 = vunpack.c.h.b16 %v1962
    %v2435 = vunpack.c.l.b16 %v1963
    %v2436 = vunpack.c.h.b16 %v1963
    %v2437 = vunpack.c.l.b16 %v1964
    %v2438 = vunpack.c.h.b16 %v1964
    %v2439 = vunpack.c.l.b16 %v1965
    %v2440 = vunpack.c.h.b16 %v1965
    %v2441 = vunpack.c.l.b16 %v1966
    %v2442 = vunpack.c.h.b16 %v1966
    %v2443 = vunpack.c.l.b16 %v1967
    %v2444 = vunpack.c.h.b16 %v1967
    %v2445 = vunpack.c.l.b16 %v1968
    %v2446 = vunpack.c.h.b16 %v1968
    %v2447 = vunpack.c.l.b16 %v1969
    %v2448 = vunpack.c.h.b16 %v1969
    %v2449 = vunpack.c.l.b16 %v1970
    %v2450 = vunpack.c.h.b16 %v1970
    %v2451 = vunpack.c.l.b16 %v1971
    %v2452 = vunpack.c.h.b16 %v1971
    %v2453 = vunpack.c.l.b16 %v1972
    %v2454 = vunpack.c.h.b16 %v1972
    %v2455 = vunpack.c.l.b16 %v1973
    %v2456 = vunpack.c.h.b16 %v1973
    %v2457 = vunpack.c.l.b16 %v1974
    %v2458 = vunpack.c.h.b16 %v1974
    %v2459 = vunpack.c.l.b16 %v1975
    %v2460 = vunpack.c.h.b16 %v1975
    %v2461 = vunpack.c.l.b16 %v1976
    %v2462 = vunpack.c.h.b16 %v1976
    %v2463 = vunpack.c.l.b16 %v1977
    %v2464 = vunpack.c.h.b16 %v1977
    %v2465 = vunpack.c.l.b16 %v1978
    %v2466 = vunpack.c.h.b16 %v1978
    %v2467 = vunpack.c.l.b16 %v1979
    %v2468 = vunpack.c.h.b16 %v1979
    %v2469 = vunpack.c.l.b16 %v1980
    %v2470 = vunpack.c.h.b16 %v1980
    %v2471 = vunpack.c.l.b16 %v1981
    %v2472 = vunpack.c.h.b16 %v1981
    %v2473 = vunpack.c.l.b16 %v1982
    %v2474 = vunpack.c.h.b16 %v1982
    %v2475 = vunpack.c.l.b16 %v1983
    %v2476 = vunpack.c.h.b16 %v1983
    %v2477 = vunpack.c.l.b16 %v1984
    %v2478 = vunpack.c.h.b16 %v1984
    %v2479 = vunpack.c.l.b16 %v1985
    %v2480 = vunpack.c.h.b16 %v1985
    %v2481 = vunpack.c.l.b16 %v1986
    %v2482 = vunpack.c.h.b16 %v1986
    %v2483 = vunpack.c.l.b16 %v1987
    %v2484 = vunpack.c.h.b16 %v1987
    %v2485 = vunpack.c.l.b16 %v1988
    %v2486 = vunpack.c.h.b16 %v1988
    %v2487 = vunpack.c.l.b16 %v1989
    %v2488 = vunpack.c.h.b16 %v1989
    %v2489 = vunpack.c.l.b16 %v1990
    %v2490 = vunpack.c.h.b16 %v1990
    %v2491 = vunpack.c.l.b16 %v1991
    %v2492 = vunpack.c.h.b16 %v1991
    %v2493 = vunpack.c.l.b16 %v1992
    %v2494 = vunpack.c.h.b16 %v1992
    %v2495 = vunpack.c.l.b16 %v1993
    %v2496 = vunpack.c.h.b16 %v1993
    %v2497 = vunpack.c.l.b16 %v1994
    %v2498 = vunpack.c.h.b16 %v1994
    %v2499 = vunpack.c.l.b16 %v1995
    %v2500 = vunpack.c.h.b16 %v1995
    %v2501 = vunpack.c.l.b16 %v1996
    %v2502 = vunpack.c.h.b16 %v1996
    %v2503 = vunpack.c.l.b16 %v1997
    %v2504 = vunpack.c.h.b16 %v1997
    %v2505 = vunpack.c.l.b16 %v1998
    %v2506 = vunpack.c.h.b16 %v1998
    %v2507 = vunpack.c.l.b16 %v1999
    %v2508 = vunpack.c.h.b16 %v1999
    %v2509 = vunpack.c.l.b16 %v2000
    %v2510 = vunpack.c.h.b16 %v2000
    %v2511 = vunpack.c.l.b16 %v2001
    %v2512 = vunpack.c.h.b16 %v2001
    %v2513 = vpack.c.b16 %v2419, %v2417
    %v2514 = vpack.c.b16 %v2420, %v2418
    %v2515 = vpack.c.b16 %v2423, %v2421
    %v2516 = vpack.c.b16 %v2424, %v2422
    %v2517 = vpack.c.b16 %v2427, %v2425
    %v2518 = vpack.c.b16 %v2428, %v2426
    %v2519 = vpack.c.b16 %v2431, %v2429
    %v2520 = vpack.c.b16 %v2432, %v2430
    %v2521 = vpack.c.b16 %v2435, %v2433
    %v2522 = vpack.c.b16 %v2436, %v2434
    %v2523 = vpack.c.b16 %v2439, %v2437
    %v2524 = vpack.c.b16 %v2440, %v2438
    %v2525 = vpack.c.b16 %v2443, %v2441
    %v2526 = vpack.c.b16 %v2444, %v2442
    %v2527 = vpack.c.b16 %v2447, %v2445
    %v2528 = vpack.c.b16 %v2448, %v2446
    %v2529 = vpack.c.b16 %v2451, %v2449
    %v2530 = vpack.c.b16 %v2452, %v2450
    %v2531 = vpack.c.b16 %v2455, %v2453
    %v2532 = vpack.c.b16 %v2456, %v2454
    %v2533 = vpack.c.b16 %v2459, %v2457
    %v2534 = vpack.c.b16 %v2460, %v2458
    %v2535 = vpack.c.b16 %v2463, %v2461
    %v2536 = vpack.c.b16 %v2464, %v2462
    %v2537 = vpack.c.b16 %v2467, %v2465
    %v2538 = vpack.c.b16 %v2468, %v2466
    %v2539 = vpack.c.b16 %v2471, %v2469
    %v2540 = vpack.c.b16 %v2472, %v2470
    %v2541 = vpack.c.b16 %v2475, %v2473
    %v2542 = vpack.c.b16 %v2476, %v2474
    %v2543 = vpack.c.b16 %v2479, %v2477
    %v2544 = vpack.c.b16 %v2480, %v2478
    %v2545 = vpack.c.b16 %v2483, %v2481
    %v2546 = vpack.c.b16 %v2484, %v2482
    %v2547 = vpack.c.b16 %v2487, %v2485
    %v2548 = vpack.c.b16 %v2488, %v2486
    %v2549 = vpack.c.b16 %v2491, %v2489
    %v2550 = vpack.c.b16 %v2492, %v2490
    %v2551 = vpack.c.b16 %v2495, %v2493
    %v2552 = vpack.c.b16 %v2496, %v2494
    %v2553 = vpack.c.b16 %v2499, %v2497
    %v2554 = vpack.c.b16 %v2500, %v2498
    %v2555 = vpack.c.b16 %v2503, %v2501
    %v2556 = vpack.c.b16 %v2504, %v2502
    %v2557 = vpack.c.b16 %v2507, %v2505
    %v2558 = vpack.c.b16 %v2508, %v2506
    %v2559 = vpack.c.b16 %v2511, %v2509
    %v2560 = vpack.c.b16 %v2512, %v2510
    %2609 = vmatpush.bf16.msra.mxu0 %v2527
    %2610 = vmatpush.bf16.msra.mxu0 %v2525
    %2611 = vmatpush.bf16.msra.mxu0 %v2523
    %2612 = vmatpush.bf16.msra.mxu0 %v2521
    %2613 = vmatpush.bf16.msra.mxu0 %v2519
    %2614 = vmatpush.bf16.msra.mxu0 %v2517
    %2615 = vmatpush.bf16.msra.mxu0 %v2515
    %2616 = vmatpush.bf16.msra.mxu0 %v2513
    %2617 = vmatmul.bf16.gmra.mxu0 %v480
    %v2618 = vpop.f32.mrf.mxu0
    %v2619 = vadd.f32 %v2327, %v2618
    %v2620 = vpop.f32.mrf.mxu0
    %2621 = vdwg.mxu0
    %2622 = vmatpush.bf16.msra.mxu0 %v2543
    %2623 = vmatpush.bf16.msra.mxu0 %v2541
    %2624 = vmatpush.bf16.msra.mxu0 %v2539
    %2625 = vmatpush.bf16.msra.mxu0 %v2537
    %2626 = vmatpush.bf16.msra.mxu0 %v2535
    %2627 = vmatpush.bf16.msra.mxu0 %v2533
    %2628 = vmatpush.bf16.msra.mxu0 %v2531
    %2629 = vmatpush.bf16.msra.mxu0 %v2529
    %2630 = vmatmul.bf16.gmra.mxu0 %v481
    %v2631 = vpop.f32.mrf.mxu0
    %v2632 = vadd.f32 %v2619, %v2631
    %v2633 = vpop.f32.mrf.mxu0
    %2634 = vdwg.mxu0
    %2635 = vmatpush.bf16.msra.mxu0 %v2559
    %2636 = vmatpush.bf16.msra.mxu0 %v2557
    %2637 = vmatpush.bf16.msra.mxu0 %v2555
    %2638 = vmatpush.bf16.msra.mxu0 %v2553
    %2639 = vmatpush.bf16.msra.mxu0 %v2551
    %2640 = vmatpush.bf16.msra.mxu0 %v2549
    %2641 = vmatpush.bf16.msra.mxu0 %v2547
    %2642 = vmatpush.bf16.msra.mxu0 %v2545
    %2643 = vmatmul.bf16.gmra.mxu0 %v482
    %v2644 = vpop.f32.mrf.mxu0
    %v2645 = vadd.f32 %v2632, %v2644
    %v2646 = vpop.f32.mrf.mxu0
    %2647 = vdwg.mxu0
    %2648 = vmatpush.bf16.msra.mxu0 %v2528
    %2649 = vmatpush.bf16.msra.mxu0 %v2526
    %2650 = vmatpush.bf16.msra.mxu0 %v2524
    %2651 = vmatpush.bf16.msra.mxu0 %v2522
    %2652 = vmatpush.bf16.msra.mxu0 %v2520
    %2653 = vmatpush.bf16.msra.mxu0 %v2518
    %2654 = vmatpush.bf16.msra.mxu0 %v2516
    %2655 = vmatpush.bf16.msra.mxu0 %v2514
    %2656 = vmatmul.bf16.gmra.mxu0 %v480
    %v2657 = vpop.f32.mrf.mxu0
    %v2658 = vadd.f32 %v2366, %v2657
    %v2659 = vpop.f32.mrf.mxu0
    %2660 = vdwg.mxu0
    %2661 = vmatpush.bf16.msra.mxu0 %v2544
    %2662 = vmatpush.bf16.msra.mxu0 %v2542
    %2663 = vmatpush.bf16.msra.mxu0 %v2540
    %2664 = vmatpush.bf16.msra.mxu0 %v2538
    %2665 = vmatpush.bf16.msra.mxu0 %v2536
    %2666 = vmatpush.bf16.msra.mxu0 %v2534
    %2667 = vmatpush.bf16.msra.mxu0 %v2532
    %2668 = vmatpush.bf16.msra.mxu0 %v2530
    %2669 = vmatmul.bf16.gmra.mxu0 %v481
    %v2670 = vpop.f32.mrf.mxu0
    %v2671 = vadd.f32 %v2658, %v2670
    %v2672 = vpop.f32.mrf.mxu0
    %2673 = vdwg.mxu0
    %2674 = vmatpush.bf16.msra.mxu0 %v2560
    %2675 = vmatpush.bf16.msra.mxu0 %v2558
    %2676 = vmatpush.bf16.msra.mxu0 %v2556
    %2677 = vmatpush.bf16.msra.mxu0 %v2554
    %2678 = vmatpush.bf16.msra.mxu0 %v2552
    %2679 = vmatpush.bf16.msra.mxu0 %v2550
    %2680 = vmatpush.bf16.msra.mxu0 %v2548
    %2681 = vmatpush.bf16.msra.mxu0 %v2546
    %2682 = vmatmul.bf16.gmra.mxu0 %v482
    %v2683 = vpop.f32.mrf.mxu0
    %v2684 = vadd.f32 %v2671, %v2683
    %v2685 = vpop.f32.mrf.mxu0
    %2686 = vdwg.mxu0
    %s2687 = scalar_lea.vmem [#allocation2], 2688
    %v2688 = vld [vmem:[%s2687] sm:$0xff]
    %v2689 = vld [vmem:[%s2687 + $0x8] sm:$0xff]
    %v2690 = vld [vmem:[%s2687 + $0x10] sm:$0xff]
    %v2691 = vld [vmem:[%s2687 + $0x18] sm:$0xff]
    %v2692 = vld [vmem:[%s2687 + $0x20] sm:$0xff]
    %v2693 = vld [vmem:[%s2687 + $0x28] sm:$0xff]
    %v2694 = vld [vmem:[%s2687 + $0x30] sm:$0xff]
    %v2695 = vld [vmem:[%s2687 + $0x38] sm:$0xff]
    %v2696 = vld [vmem:[%s2687 + $0x40] sm:$0xff]
    %v2697 = vld [vmem:[%s2687 + $0x48] sm:$0xff]
    %v2698 = vld [vmem:[%s2687 + $0x50] sm:$0xff]
    %v2699 = vld [vmem:[%s2687 + $0x58] sm:$0xff]
    %v2700 = vld [vmem:[%s2687 + $0x60] sm:$0xff]
    %v2701 = vld [vmem:[%s2687 + $0x68] sm:$0xff]
    %v2702 = vld [vmem:[%s2687 + $0x70] sm:$0xff]
    %v2703 = vld [vmem:[%s2687 + $0x78] sm:$0xff]
    %v2704 = vld [vmem:[%s2687 + $0x80] sm:$0xff]
    %v2705 = vld [vmem:[%s2687 + $0x88] sm:$0xff]
    %v2706 = vld [vmem:[%s2687 + $0x90] sm:$0xff]
    %v2707 = vld [vmem:[%s2687 + $0x98] sm:$0xff]
    %v2708 = vld [vmem:[%s2687 + $0xa0] sm:$0xff]
    %v2709 = vld [vmem:[%s2687 + $0xa8] sm:$0xff]
    %v2710 = vld [vmem:[%s2687 + $0xb0] sm:$0xff]
    %v2711 = vld [vmem:[%s2687 + $0xb8] sm:$0xff]
    %v2712 = vld [vmem:[%s2687 + $0xc0] sm:$0xff]
    %v2713 = vld [vmem:[%s2687 + $0xc8] sm:$0xff]
    %v2714 = vld [vmem:[%s2687 + $0xd0] sm:$0xff]
    %v2715 = vld [vmem:[%s2687 + $0xd8] sm:$0xff]
    %v2716 = vld [vmem:[%s2687 + $0xe0] sm:$0xff]
    %v2717 = vld [vmem:[%s2687 + $0xe8] sm:$0xff]
    %v2718 = vld [vmem:[%s2687 + $0xf0] sm:$0xff]
    %v2719 = vld [vmem:[%s2687 + $0xf8] sm:$0xff]
    %v2720 = vld [vmem:[%s2687 + $0x100] sm:$0xff]
    %v2721 = vld [vmem:[%s2687 + $0x108] sm:$0xff]
    %v2722 = vld [vmem:[%s2687 + $0x110] sm:$0xff]
    %v2723 = vld [vmem:[%s2687 + $0x118] sm:$0xff]
    %v2724 = vld [vmem:[%s2687 + $0x120] sm:$0xff]
    %v2725 = vld [vmem:[%s2687 + $0x128] sm:$0xff]
    %v2726 = vld [vmem:[%s2687 + $0x130] sm:$0xff]
    %v2727 = vld [vmem:[%s2687 + $0x138] sm:$0xff]
    %v2728 = vld [vmem:[%s2687 + $0x140] sm:$0xff]
    %v2729 = vld [vmem:[%s2687 + $0x148] sm:$0xff]
    %v2730 = vld [vmem:[%s2687 + $0x150] sm:$0xff]
    %v2731 = vld [vmem:[%s2687 + $0x158] sm:$0xff]
    %v2732 = vld [vmem:[%s2687 + $0x160] sm:$0xff]
    %v2733 = vld [vmem:[%s2687 + $0x168] sm:$0xff]
    %v2734 = vld [vmem:[%s2687 + $0x170] sm:$0xff]
    %v2735 = vld [vmem:[%s2687 + $0x178] sm:$0xff]
    %v2784 = vunpack.c.l.b16 %v2688
    %v2785 = vunpack.c.h.b16 %v2688
    %v2786 = vunpack.c.l.b16 %v2689
    %v2787 = vunpack.c.h.b16 %v2689
    %v2788 = vunpack.c.l.b16 %v2690
    %v2789 = vunpack.c.h.b16 %v2690
    %v2790 = vunpack.c.l.b16 %v2691
    %v2791 = vunpack.c.h.b16 %v2691
    %v2792 = vunpack.c.l.b16 %v2692
    %v2793 = vunpack.c.h.b16 %v2692
    %v2794 = vunpack.c.l.b16 %v2693
    %v2795 = vunpack.c.h.b16 %v2693
    %v2796 = vunpack.c.l.b16 %v2694
    %v2797 = vunpack.c.h.b16 %v2694
    %v2798 = vunpack.c.l.b16 %v2695
    %v2799 = vunpack.c.h.b16 %v2695
    %v2800 = vunpack.c.l.b16 %v2696
    %v2801 = vunpack.c.h.b16 %v2696
    %v2802 = vunpack.c.l.b16 %v2697
    %v2803 = vunpack.c.h.b16 %v2697
    %v2804 = vunpack.c.l.b16 %v2698
    %v2805 = vunpack.c.h.b16 %v2698
    %v2806 = vunpack.c.l.b16 %v2699
    %v2807 = vunpack.c.h.b16 %v2699
    %v2808 = vunpack.c.l.b16 %v2700
    %v2809 = vunpack.c.h.b16 %v2700
    %v2810 = vunpack.c.l.b16 %v2701
    %v2811 = vunpack.c.h.b16 %v2701
    %v2812 = vunpack.c.l.b16 %v2702
    %v2813 = vunpack.c.h.b16 %v2702
    %v2814 = vunpack.c.l.b16 %v2703
    %v2815 = vunpack.c.h.b16 %v2703
    %v2816 = vunpack.c.l.b16 %v2704
    %v2817 = vunpack.c.h.b16 %v2704
    %v2818 = vunpack.c.l.b16 %v2705
    %v2819 = vunpack.c.h.b16 %v2705
    %v2820 = vunpack.c.l.b16 %v2706
    %v2821 = vunpack.c.h.b16 %v2706
    %v2822 = vunpack.c.l.b16 %v2707
    %v2823 = vunpack.c.h.b16 %v2707
    %v2824 = vunpack.c.l.b16 %v2708
    %v2825 = vunpack.c.h.b16 %v2708
    %v2826 = vunpack.c.l.b16 %v2709
    %v2827 = vunpack.c.h.b16 %v2709
    %v2828 = vunpack.c.l.b16 %v2710
    %v2829 = vunpack.c.h.b16 %v2710
    %v2830 = vunpack.c.l.b16 %v2711
    %v2831 = vunpack.c.h.b16 %v2711
    %v2832 = vunpack.c.l.b16 %v2712
    %v2833 = vunpack.c.h.b16 %v2712
    %v2834 = vunpack.c.l.b16 %v2713
    %v2835 = vunpack.c.h.b16 %v2713
    %v2836 = vunpack.c.l.b16 %v2714
    %v2837 = vunpack.c.h.b16 %v2714
    %v2838 = vunpack.c.l.b16 %v2715
    %v2839 = vunpack.c.h.b16 %v2715
    %v2840 = vunpack.c.l.b16 %v2716
    %v2841 = vunpack.c.h.b16 %v2716
    %v2842 = vunpack.c.l.b16 %v2717
    %v2843 = vunpack.c.h.b16 %v2717
    %v2844 = vunpack.c.l.b16 %v2718
    %v2845 = vunpack.c.h.b16 %v2718
    %v2846 = vunpack.c.l.b16 %v2719
    %v2847 = vunpack.c.h.b16 %v2719
    %v2848 = vunpack.c.l.b16 %v2720
    %v2849 = vunpack.c.h.b16 %v2720
    %v2850 = vunpack.c.l.b16 %v2721
    %v2851 = vunpack.c.h.b16 %v2721
    %v2852 = vunpack.c.l.b16 %v2722
    %v2853 = vunpack.c.h.b16 %v2722
    %v2854 = vunpack.c.l.b16 %v2723
    %v2855 = vunpack.c.h.b16 %v2723
    %v2856 = vunpack.c.l.b16 %v2724
    %v2857 = vunpack.c.h.b16 %v2724
    %v2858 = vunpack.c.l.b16 %v2725
    %v2859 = vunpack.c.h.b16 %v2725
    %v2860 = vunpack.c.l.b16 %v2726
    %v2861 = vunpack.c.h.b16 %v2726
    %v2862 = vunpack.c.l.b16 %v2727
    %v2863 = vunpack.c.h.b16 %v2727
    %v2864 = vunpack.c.l.b16 %v2728
    %v2865 = vunpack.c.h.b16 %v2728
    %v2866 = vunpack.c.l.b16 %v2729
    %v2867 = vunpack.c.h.b16 %v2729
    %v2868 = vunpack.c.l.b16 %v2730
    %v2869 = vunpack.c.h.b16 %v2730
    %v2870 = vunpack.c.l.b16 %v2731
    %v2871 = vunpack.c.h.b16 %v2731
    %v2872 = vunpack.c.l.b16 %v2732
    %v2873 = vunpack.c.h.b16 %v2732
    %v2874 = vunpack.c.l.b16 %v2733
    %v2875 = vunpack.c.h.b16 %v2733
    %v2876 = vunpack.c.l.b16 %v2734
    %v2877 = vunpack.c.h.b16 %v2734
    %v2878 = vunpack.c.l.b16 %v2735
    %v2879 = vunpack.c.h.b16 %v2735
    %v2880 = vpack.c.b16 %v2786, %v2784
    %v2881 = vpack.c.b16 %v2787, %v2785
    %v2882 = vpack.c.b16 %v2790, %v2788
    %v2883 = vpack.c.b16 %v2791, %v2789
    %v2884 = vpack.c.b16 %v2794, %v2792
    %v2885 = vpack.c.b16 %v2795, %v2793
    %v2886 = vpack.c.b16 %v2798, %v2796
    %v2887 = vpack.c.b16 %v2799, %v2797
    %v2888 = vpack.c.b16 %v2802, %v2800
    %v2889 = vpack.c.b16 %v2803, %v2801
    %v2890 = vpack.c.b16 %v2806, %v2804
    %v2891 = vpack.c.b16 %v2807, %v2805
    %v2892 = vpack.c.b16 %v2810, %v2808
    %v2893 = vpack.c.b16 %v2811, %v2809
    %v2894 = vpack.c.b16 %v2814, %v2812
    %v2895 = vpack.c.b16 %v2815, %v2813
    %v2896 = vpack.c.b16 %v2818, %v2816
    %v2897 = vpack.c.b16 %v2819, %v2817
    %v2898 = vpack.c.b16 %v2822, %v2820
    %v2899 = vpack.c.b16 %v2823, %v2821
    %v2900 = vpack.c.b16 %v2826, %v2824
    %v2901 = vpack.c.b16 %v2827, %v2825
    %v2902 = vpack.c.b16 %v2830, %v2828
    %v2903 = vpack.c.b16 %v2831, %v2829
    %v2904 = vpack.c.b16 %v2834, %v2832
    %v2905 = vpack.c.b16 %v2835, %v2833
    %v2906 = vpack.c.b16 %v2838, %v2836
    %v2907 = vpack.c.b16 %v2839, %v2837
    %v2908 = vpack.c.b16 %v2842, %v2840
    %v2909 = vpack.c.b16 %v2843, %v2841
    %v2910 = vpack.c.b16 %v2846, %v2844
    %v2911 = vpack.c.b16 %v2847, %v2845
    %v2912 = vpack.c.b16 %v2850, %v2848
    %v2913 = vpack.c.b16 %v2851, %v2849
    %v2914 = vpack.c.b16 %v2854, %v2852
    %v2915 = vpack.c.b16 %v2855, %v2853
    %v2916 = vpack.c.b16 %v2858, %v2856
    %v2917 = vpack.c.b16 %v2859, %v2857
    %v2918 = vpack.c.b16 %v2862, %v2860
    %v2919 = vpack.c.b16 %v2863, %v2861
    %v2920 = vpack.c.b16 %v2866, %v2864
    %v2921 = vpack.c.b16 %v2867, %v2865
    %v2922 = vpack.c.b16 %v2870, %v2868
    %v2923 = vpack.c.b16 %v2871, %v2869
    %v2924 = vpack.c.b16 %v2874, %v2872
    %v2925 = vpack.c.b16 %v2875, %v2873
    %v2926 = vpack.c.b16 %v2878, %v2876
    %v2927 = vpack.c.b16 %v2879, %v2877
    %2976 = vmatpush.bf16.msra.mxu0 %v2894
    %2977 = vmatpush.bf16.msra.mxu0 %v2892
    %2978 = vmatpush.bf16.msra.mxu0 %v2890
    %2979 = vmatpush.bf16.msra.mxu0 %v2888
    %2980 = vmatpush.bf16.msra.mxu0 %v2886
    %2981 = vmatpush.bf16.msra.mxu0 %v2884
    %2982 = vmatpush.bf16.msra.mxu0 %v2882
    %2983 = vmatpush.bf16.msra.mxu0 %v2880
    %2984 = vmatmul.bf16.gmra.mxu0 %v861
    %v2985 = vpop.f32.mrf.mxu0
    %v2986 = vadd.f32 0.0, %v2985
    %v2987 = vpop.f32.mrf.mxu0
    %2988 = vdwg.mxu0
    %2989 = vmatpush.bf16.msra.mxu0 %v2910
    %2990 = vmatpush.bf16.msra.mxu0 %v2908
    %2991 = vmatpush.bf16.msra.mxu0 %v2906
    %2992 = vmatpush.bf16.msra.mxu0 %v2904
    %2993 = vmatpush.bf16.msra.mxu0 %v2902
    %2994 = vmatpush.bf16.msra.mxu0 %v2900
    %2995 = vmatpush.bf16.msra.mxu0 %v2898
    %2996 = vmatpush.bf16.msra.mxu0 %v2896
    %2997 = vmatmul.bf16.gmra.mxu0 %v862
    %v2998 = vpop.f32.mrf.mxu0
    %v2999 = vadd.f32 %v2986, %v2998
    %v3000 = vpop.f32.mrf.mxu0
    %3001 = vdwg.mxu0
    %3002 = vmatpush.bf16.msra.mxu0 %v2926
    %3003 = vmatpush.bf16.msra.mxu0 %v2924
    %3004 = vmatpush.bf16.msra.mxu0 %v2922
    %3005 = vmatpush.bf16.msra.mxu0 %v2920
    %3006 = vmatpush.bf16.msra.mxu0 %v2918
    %3007 = vmatpush.bf16.msra.mxu0 %v2916
    %3008 = vmatpush.bf16.msra.mxu0 %v2914
    %3009 = vmatpush.bf16.msra.mxu0 %v2912
    %3010 = vmatmul.bf16.gmra.mxu0 %v863
    %v3011 = vpop.f32.mrf.mxu0
    %v3012 = vadd.f32 %v2999, %v3011
    %v3013 = vpop.f32.mrf.mxu0
    %3014 = vdwg.mxu0
    %3015 = vmatpush.bf16.msra.mxu0 %v2895
    %3016 = vmatpush.bf16.msra.mxu0 %v2893
    %3017 = vmatpush.bf16.msra.mxu0 %v2891
    %3018 = vmatpush.bf16.msra.mxu0 %v2889
    %3019 = vmatpush.bf16.msra.mxu0 %v2887
    %3020 = vmatpush.bf16.msra.mxu0 %v2885
    %3021 = vmatpush.bf16.msra.mxu0 %v2883
    %3022 = vmatpush.bf16.msra.mxu0 %v2881
    %3023 = vmatmul.bf16.gmra.mxu0 %v861
    %v3024 = vpop.f32.mrf.mxu0
    %v3025 = vadd.f32 0.0, %v3024
    %v3026 = vpop.f32.mrf.mxu0
    %3027 = vdwg.mxu0
    %3028 = vmatpush.bf16.msra.mxu0 %v2911
    %3029 = vmatpush.bf16.msra.mxu0 %v2909
    %3030 = vmatpush.bf16.msra.mxu0 %v2907
    %3031 = vmatpush.bf16.msra.mxu0 %v2905
    %3032 = vmatpush.bf16.msra.mxu0 %v2903
    %3033 = vmatpush.bf16.msra.mxu0 %v2901
    %3034 = vmatpush.bf16.msra.mxu0 %v2899
    %3035 = vmatpush.bf16.msra.mxu0 %v2897
    %3036 = vmatmul.bf16.gmra.mxu0 %v862
    %v3037 = vpop.f32.mrf.mxu0
    %v3038 = vadd.f32 %v3025, %v3037
    %v3039 = vpop.f32.mrf.mxu0
    %3040 = vdwg.mxu0
    %3041 = vmatpush.bf16.msra.mxu0 %v2927
    %3042 = vmatpush.bf16.msra.mxu0 %v2925
    %3043 = vmatpush.bf16.msra.mxu0 %v2923
    %3044 = vmatpush.bf16.msra.mxu0 %v2921
    %3045 = vmatpush.bf16.msra.mxu0 %v2919
    %3046 = vmatpush.bf16.msra.mxu0 %v2917
    %3047 = vmatpush.bf16.msra.mxu0 %v2915
    %3048 = vmatpush.bf16.msra.mxu0 %v2913
    %3049 = vmatmul.bf16.gmra.mxu0 %v863
    %v3050 = vpop.f32.mrf.mxu0
    %v3051 = vadd.f32 %v3038, %v3050
    %v3052 = vpop.f32.mrf.mxu0
    %3053 = vdwg.mxu0
    %v3054 = vadd.f32 %v2645, %v3012
    %v3055 = vadd.f32 %v2684, %v3051
    %s3056 = scalar_lea.vmem [#allocation2], 3072
    %v3057 = vld [vmem:[%s3056] sm:$0xff]
    %v3058 = vld [vmem:[%s3056 + $0x8] sm:$0xff]
    %v3059 = vld [vmem:[%s3056 + $0x10] sm:$0xff]
    %v3060 = vld [vmem:[%s3056 + $0x18] sm:$0xff]
    %v3061 = vld [vmem:[%s3056 + $0x20] sm:$0xff]
    %v3062 = vld [vmem:[%s3056 + $0x28] sm:$0xff]
    %v3063 = vld [vmem:[%s3056 + $0x30] sm:$0xff]
    %v3064 = vld [vmem:[%s3056 + $0x38] sm:$0xff]
    %v3065 = vld [vmem:[%s3056 + $0x40] sm:$0xff]
    %v3066 = vld [vmem:[%s3056 + $0x48] sm:$0xff]
    %v3067 = vld [vmem:[%s3056 + $0x50] sm:$0xff]
    %v3068 = vld [vmem:[%s3056 + $0x58] sm:$0xff]
    %v3069 = vld [vmem:[%s3056 + $0x60] sm:$0xff]
    %v3070 = vld [vmem:[%s3056 + $0x68] sm:$0xff]
    %v3071 = vld [vmem:[%s3056 + $0x70] sm:$0xff]
    %v3072 = vld [vmem:[%s3056 + $0x78] sm:$0xff]
    %v3073 = vld [vmem:[%s3056 + $0x80] sm:$0xff]
    %v3074 = vld [vmem:[%s3056 + $0x88] sm:$0xff]
    %v3075 = vld [vmem:[%s3056 + $0x90] sm:$0xff]
    %v3076 = vld [vmem:[%s3056 + $0x98] sm:$0xff]
    %v3077 = vld [vmem:[%s3056 + $0xa0] sm:$0xff]
    %v3078 = vld [vmem:[%s3056 + $0xa8] sm:$0xff]
    %v3079 = vld [vmem:[%s3056 + $0xb0] sm:$0xff]
    %v3080 = vld [vmem:[%s3056 + $0xb8] sm:$0xff]
    %v3081 = vld [vmem:[%s3056 + $0xc0] sm:$0xff]
    %v3082 = vld [vmem:[%s3056 + $0xc8] sm:$0xff]
    %v3083 = vld [vmem:[%s3056 + $0xd0] sm:$0xff]
    %v3084 = vld [vmem:[%s3056 + $0xd8] sm:$0xff]
    %v3085 = vld [vmem:[%s3056 + $0xe0] sm:$0xff]
    %v3086 = vld [vmem:[%s3056 + $0xe8] sm:$0xff]
    %v3087 = vld [vmem:[%s3056 + $0xf0] sm:$0xff]
    %v3088 = vld [vmem:[%s3056 + $0xf8] sm:$0xff]
    %v3089 = vld [vmem:[%s3056 + $0x100] sm:$0xff]
    %v3090 = vld [vmem:[%s3056 + $0x108] sm:$0xff]
    %v3091 = vld [vmem:[%s3056 + $0x110] sm:$0xff]
    %v3092 = vld [vmem:[%s3056 + $0x118] sm:$0xff]
    %v3093 = vld [vmem:[%s3056 + $0x120] sm:$0xff]
    %v3094 = vld [vmem:[%s3056 + $0x128] sm:$0xff]
    %v3095 = vld [vmem:[%s3056 + $0x130] sm:$0xff]
    %v3096 = vld [vmem:[%s3056 + $0x138] sm:$0xff]
    %v3097 = vld [vmem:[%s3056 + $0x140] sm:$0xff]
    %v3098 = vld [vmem:[%s3056 + $0x148] sm:$0xff]
    %v3099 = vld [vmem:[%s3056 + $0x150] sm:$0xff]
    %v3100 = vld [vmem:[%s3056 + $0x158] sm:$0xff]
    %v3101 = vld [vmem:[%s3056 + $0x160] sm:$0xff]
    %v3102 = vld [vmem:[%s3056 + $0x168] sm:$0xff]
    %v3103 = vld [vmem:[%s3056 + $0x170] sm:$0xff]
    %v3104 = vld [vmem:[%s3056 + $0x178] sm:$0xff]
    %v3153 = vunpack.c.l.b16 %v3057
    %v3154 = vunpack.c.h.b16 %v3057
    %v3155 = vunpack.c.l.b16 %v3058
    %v3156 = vunpack.c.h.b16 %v3058
    %v3157 = vunpack.c.l.b16 %v3059
    %v3158 = vunpack.c.h.b16 %v3059
    %v3159 = vunpack.c.l.b16 %v3060
    %v3160 = vunpack.c.h.b16 %v3060
    %v3161 = vunpack.c.l.b16 %v3061
    %v3162 = vunpack.c.h.b16 %v3061
    %v3163 = vunpack.c.l.b16 %v3062
    %v3164 = vunpack.c.h.b16 %v3062
    %v3165 = vunpack.c.l.b16 %v3063
    %v3166 = vunpack.c.h.b16 %v3063
    %v3167 = vunpack.c.l.b16 %v3064
    %v3168 = vunpack.c.h.b16 %v3064
    %v3169 = vunpack.c.l.b16 %v3065
    %v3170 = vunpack.c.h.b16 %v3065
    %v3171 = vunpack.c.l.b16 %v3066
    %v3172 = vunpack.c.h.b16 %v3066
    %v3173 = vunpack.c.l.b16 %v3067
    %v3174 = vunpack.c.h.b16 %v3067
    %v3175 = vunpack.c.l.b16 %v3068
    %v3176 = vunpack.c.h.b16 %v3068
    %v3177 = vunpack.c.l.b16 %v3069
    %v3178 = vunpack.c.h.b16 %v3069
    %v3179 = vunpack.c.l.b16 %v3070
    %v3180 = vunpack.c.h.b16 %v3070
    %v3181 = vunpack.c.l.b16 %v3071
    %v3182 = vunpack.c.h.b16 %v3071
    %v3183 = vunpack.c.l.b16 %v3072
    %v3184 = vunpack.c.h.b16 %v3072
    %v3185 = vunpack.c.l.b16 %v3073
    %v3186 = vunpack.c.h.b16 %v3073
    %v3187 = vunpack.c.l.b16 %v3074
    %v3188 = vunpack.c.h.b16 %v3074
    %v3189 = vunpack.c.l.b16 %v3075
    %v3190 = vunpack.c.h.b16 %v3075
    %v3191 = vunpack.c.l.b16 %v3076
    %v3192 = vunpack.c.h.b16 %v3076
    %v3193 = vunpack.c.l.b16 %v3077
    %v3194 = vunpack.c.h.b16 %v3077
    %v3195 = vunpack.c.l.b16 %v3078
    %v3196 = vunpack.c.h.b16 %v3078
    %v3197 = vunpack.c.l.b16 %v3079
    %v3198 = vunpack.c.h.b16 %v3079
    %v3199 = vunpack.c.l.b16 %v3080
    %v3200 = vunpack.c.h.b16 %v3080
    %v3201 = vunpack.c.l.b16 %v3081
    %v3202 = vunpack.c.h.b16 %v3081
    %v3203 = vunpack.c.l.b16 %v3082
    %v3204 = vunpack.c.h.b16 %v3082
    %v3205 = vunpack.c.l.b16 %v3083
    %v3206 = vunpack.c.h.b16 %v3083
    %v3207 = vunpack.c.l.b16 %v3084
    %v3208 = vunpack.c.h.b16 %v3084
    %v3209 = vunpack.c.l.b16 %v3085
    %v3210 = vunpack.c.h.b16 %v3085
    %v3211 = vunpack.c.l.b16 %v3086
    %v3212 = vunpack.c.h.b16 %v3086
    %v3213 = vunpack.c.l.b16 %v3087
    %v3214 = vunpack.c.h.b16 %v3087
    %v3215 = vunpack.c.l.b16 %v3088
    %v3216 = vunpack.c.h.b16 %v3088
    %v3217 = vunpack.c.l.b16 %v3089
    %v3218 = vunpack.c.h.b16 %v3089
    %v3219 = vunpack.c.l.b16 %v3090
    %v3220 = vunpack.c.h.b16 %v3090
    %v3221 = vunpack.c.l.b16 %v3091
    %v3222 = vunpack.c.h.b16 %v3091
    %v3223 = vunpack.c.l.b16 %v3092
    %v3224 = vunpack.c.h.b16 %v3092
    %v3225 = vunpack.c.l.b16 %v3093
    %v3226 = vunpack.c.h.b16 %v3093
    %v3227 = vunpack.c.l.b16 %v3094
    %v3228 = vunpack.c.h.b16 %v3094
    %v3229 = vunpack.c.l.b16 %v3095
    %v3230 = vunpack.c.h.b16 %v3095
    %v3231 = vunpack.c.l.b16 %v3096
    %v3232 = vunpack.c.h.b16 %v3096
    %v3233 = vunpack.c.l.b16 %v3097
    %v3234 = vunpack.c.h.b16 %v3097
    %v3235 = vunpack.c.l.b16 %v3098
    %v3236 = vunpack.c.h.b16 %v3098
    %v3237 = vunpack.c.l.b16 %v3099
    %v3238 = vunpack.c.h.b16 %v3099
    %v3239 = vunpack.c.l.b16 %v3100
    %v3240 = vunpack.c.h.b16 %v3100
    %v3241 = vunpack.c.l.b16 %v3101
    %v3242 = vunpack.c.h.b16 %v3101
    %v3243 = vunpack.c.l.b16 %v3102
    %v3244 = vunpack.c.h.b16 %v3102
    %v3245 = vunpack.c.l.b16 %v3103
    %v3246 = vunpack.c.h.b16 %v3103
    %v3247 = vunpack.c.l.b16 %v3104
    %v3248 = vunpack.c.h.b16 %v3104
    %v3249 = vpack.c.b16 %v3155, %v3153
    %v3250 = vpack.c.b16 %v3156, %v3154
    %v3251 = vpack.c.b16 %v3159, %v3157
    %v3252 = vpack.c.b16 %v3160, %v3158
    %v3253 = vpack.c.b16 %v3163, %v3161
    %v3254 = vpack.c.b16 %v3164, %v3162
    %v3255 = vpack.c.b16 %v3167, %v3165
    %v3256 = vpack.c.b16 %v3168, %v3166
    %v3257 = vpack.c.b16 %v3171, %v3169
    %v3258 = vpack.c.b16 %v3172, %v3170
    %v3259 = vpack.c.b16 %v3175, %v3173
    %v3260 = vpack.c.b16 %v3176, %v3174
    %v3261 = vpack.c.b16 %v3179, %v3177
    %v3262 = vpack.c.b16 %v3180, %v3178
    %v3263 = vpack.c.b16 %v3183, %v3181
    %v3264 = vpack.c.b16 %v3184, %v3182
    %v3265 = vpack.c.b16 %v3187, %v3185
    %v3266 = vpack.c.b16 %v3188, %v3186
    %v3267 = vpack.c.b16 %v3191, %v3189
    %v3268 = vpack.c.b16 %v3192, %v3190
    %v3269 = vpack.c.b16 %v3195, %v3193
    %v3270 = vpack.c.b16 %v3196, %v3194
    %v3271 = vpack.c.b16 %v3199, %v3197
    %v3272 = vpack.c.b16 %v3200, %v3198
    %v3273 = vpack.c.b16 %v3203, %v3201
    %v3274 = vpack.c.b16 %v3204, %v3202
    %v3275 = vpack.c.b16 %v3207, %v3205
    %v3276 = vpack.c.b16 %v3208, %v3206
    %v3277 = vpack.c.b16 %v3211, %v3209
    %v3278 = vpack.c.b16 %v3212, %v3210
    %v3279 = vpack.c.b16 %v3215, %v3213
    %v3280 = vpack.c.b16 %v3216, %v3214
    %v3281 = vpack.c.b16 %v3219, %v3217
    %v3282 = vpack.c.b16 %v3220, %v3218
    %v3283 = vpack.c.b16 %v3223, %v3221
    %v3284 = vpack.c.b16 %v3224, %v3222
    %v3285 = vpack.c.b16 %v3227, %v3225
    %v3286 = vpack.c.b16 %v3228, %v3226
    %v3287 = vpack.c.b16 %v3231, %v3229
    %v3288 = vpack.c.b16 %v3232, %v3230
    %v3289 = vpack.c.b16 %v3235, %v3233
    %v3290 = vpack.c.b16 %v3236, %v3234
    %v3291 = vpack.c.b16 %v3239, %v3237
    %v3292 = vpack.c.b16 %v3240, %v3238
    %v3293 = vpack.c.b16 %v3243, %v3241
    %v3294 = vpack.c.b16 %v3244, %v3242
    %v3295 = vpack.c.b16 %v3247, %v3245
    %v3296 = vpack.c.b16 %v3248, %v3246
    %3345 = vmatpush.bf16.msra.mxu0 %v3263
    %3346 = vmatpush.bf16.msra.mxu0 %v3261
    %3347 = vmatpush.bf16.msra.mxu0 %v3259
    %3348 = vmatpush.bf16.msra.mxu0 %v3257
    %3349 = vmatpush.bf16.msra.mxu0 %v3255
    %3350 = vmatpush.bf16.msra.mxu0 %v3253
    %3351 = vmatpush.bf16.msra.mxu0 %v3251
    %3352 = vmatpush.bf16.msra.mxu0 %v3249
    %3353 = vmatmul.bf16.gmra.mxu0 %v1244
    %v3354 = vpop.f32.mrf.mxu0
    %v3355 = vadd.f32 0.0, %v3354
    %v3356 = vpop.f32.mrf.mxu0
    %3357 = vdwg.mxu0
    %3358 = vmatpush.bf16.msra.mxu0 %v3279
    %3359 = vmatpush.bf16.msra.mxu0 %v3277
    %3360 = vmatpush.bf16.msra.mxu0 %v3275
    %3361 = vmatpush.bf16.msra.mxu0 %v3273
    %3362 = vmatpush.bf16.msra.mxu0 %v3271
    %3363 = vmatpush.bf16.msra.mxu0 %v3269
    %3364 = vmatpush.bf16.msra.mxu0 %v3267
    %3365 = vmatpush.bf16.msra.mxu0 %v3265
    %3366 = vmatmul.bf16.gmra.mxu0 %v1245
    %v3367 = vpop.f32.mrf.mxu0
    %v3368 = vadd.f32 %v3355, %v3367
    %v3369 = vpop.f32.mrf.mxu0
    %3370 = vdwg.mxu0
    %3371 = vmatpush.bf16.msra.mxu0 %v3295
    %3372 = vmatpush.bf16.msra.mxu0 %v3293
    %3373 = vmatpush.bf16.msra.mxu0 %v3291
    %3374 = vmatpush.bf16.msra.mxu0 %v3289
    %3375 = vmatpush.bf16.msra.mxu0 %v3287
    %3376 = vmatpush.bf16.msra.mxu0 %v3285
    %3377 = vmatpush.bf16.msra.mxu0 %v3283
    %3378 = vmatpush.bf16.msra.mxu0 %v3281
    %3379 = vmatmul.bf16.gmra.mxu0 %v1246
    %v3380 = vpop.f32.mrf.mxu0
    %v3381 = vadd.f32 %v3368, %v3380
    %v3382 = vpop.f32.mrf.mxu0
    %3383 = vdwg.mxu0
    %3384 = vmatpush.bf16.msra.mxu0 %v3264
    %3385 = vmatpush.bf16.msra.mxu0 %v3262
    %3386 = vmatpush.bf16.msra.mxu0 %v3260
    %3387 = vmatpush.bf16.msra.mxu0 %v3258
    %3388 = vmatpush.bf16.msra.mxu0 %v3256
    %3389 = vmatpush.bf16.msra.mxu0 %v3254
    %3390 = vmatpush.bf16.msra.mxu0 %v3252
    %3391 = vmatpush.bf16.msra.mxu0 %v3250
    %3392 = vmatmul.bf16.gmra.mxu0 %v1244
    %v3393 = vpop.f32.mrf.mxu0
    %v3394 = vadd.f32 0.0, %v3393
    %v3395 = vpop.f32.mrf.mxu0
    %3396 = vdwg.mxu0
    %3397 = vmatpush.bf16.msra.mxu0 %v3280
    %3398 = vmatpush.bf16.msra.mxu0 %v3278
    %3399 = vmatpush.bf16.msra.mxu0 %v3276
    %3400 = vmatpush.bf16.msra.mxu0 %v3274
    %3401 = vmatpush.bf16.msra.mxu0 %v3272
    %3402 = vmatpush.bf16.msra.mxu0 %v3270
    %3403 = vmatpush.bf16.msra.mxu0 %v3268
    %3404 = vmatpush.bf16.msra.mxu0 %v3266
    %3405 = vmatmul.bf16.gmra.mxu0 %v1245
    %v3406 = vpop.f32.mrf.mxu0
    %v3407 = vadd.f32 %v3394, %v3406
    %v3408 = vpop.f32.mrf.mxu0
    %3409 = vdwg.mxu0
    %3410 = vmatpush.bf16.msra.mxu0 %v3296
    %3411 = vmatpush.bf16.msra.mxu0 %v3294
    %3412 = vmatpush.bf16.msra.mxu0 %v3292
    %3413 = vmatpush.bf16.msra.mxu0 %v3290
    %3414 = vmatpush.bf16.msra.mxu0 %v3288
    %3415 = vmatpush.bf16.msra.mxu0 %v3286
    %3416 = vmatpush.bf16.msra.mxu0 %v3284
    %3417 = vmatpush.bf16.msra.mxu0 %v3282
    %3418 = vmatmul.bf16.gmra.mxu0 %v1246
    %v3419 = vpop.f32.mrf.mxu0
    %v3420 = vadd.f32 %v3407, %v3419
    %v3421 = vpop.f32.mrf.mxu0
    %3422 = vdwg.mxu0
    %v3423 = vadd.f32 %v3054, %v3381
    %v3424 = vadd.f32 %v3055, %v3420
    %s3425 = scalar_lea.vmem [#allocation2], 3456
    %v3426 = vld [vmem:[%s3425] sm:$0xff]
    %v3427 = vld [vmem:[%s3425 + $0x8] sm:$0xff]
    %v3428 = vld [vmem:[%s3425 + $0x10] sm:$0xff]
    %v3429 = vld [vmem:[%s3425 + $0x18] sm:$0xff]
    %v3430 = vld [vmem:[%s3425 + $0x20] sm:$0xff]
    %v3431 = vld [vmem:[%s3425 + $0x28] sm:$0xff]
    %v3432 = vld [vmem:[%s3425 + $0x30] sm:$0xff]
    %v3433 = vld [vmem:[%s3425 + $0x38] sm:$0xff]
    %v3434 = vld [vmem:[%s3425 + $0x40] sm:$0xff]
    %v3435 = vld [vmem:[%s3425 + $0x48] sm:$0xff]
    %v3436 = vld [vmem:[%s3425 + $0x50] sm:$0xff]
    %v3437 = vld [vmem:[%s3425 + $0x58] sm:$0xff]
    %v3438 = vld [vmem:[%s3425 + $0x60] sm:$0xff]
    %v3439 = vld [vmem:[%s3425 + $0x68] sm:$0xff]
    %v3440 = vld [vmem:[%s3425 + $0x70] sm:$0xff]
    %v3441 = vld [vmem:[%s3425 + $0x78] sm:$0xff]
    %v3442 = vld [vmem:[%s3425 + $0x80] sm:$0xff]
    %v3443 = vld [vmem:[%s3425 + $0x88] sm:$0xff]
    %v3444 = vld [vmem:[%s3425 + $0x90] sm:$0xff]
    %v3445 = vld [vmem:[%s3425 + $0x98] sm:$0xff]
    %v3446 = vld [vmem:[%s3425 + $0xa0] sm:$0xff]
    %v3447 = vld [vmem:[%s3425 + $0xa8] sm:$0xff]
    %v3448 = vld [vmem:[%s3425 + $0xb0] sm:$0xff]
    %v3449 = vld [vmem:[%s3425 + $0xb8] sm:$0xff]
    %v3450 = vld [vmem:[%s3425 + $0xc0] sm:$0xff]
    %v3451 = vld [vmem:[%s3425 + $0xc8] sm:$0xff]
    %v3452 = vld [vmem:[%s3425 + $0xd0] sm:$0xff]
    %v3453 = vld [vmem:[%s3425 + $0xd8] sm:$0xff]
    %v3454 = vld [vmem:[%s3425 + $0xe0] sm:$0xff]
    %v3455 = vld [vmem:[%s3425 + $0xe8] sm:$0xff]
    %v3456 = vld [vmem:[%s3425 + $0xf0] sm:$0xff]
    %v3457 = vld [vmem:[%s3425 + $0xf8] sm:$0xff]
    %v3458 = vld [vmem:[%s3425 + $0x100] sm:$0xff]
    %v3459 = vld [vmem:[%s3425 + $0x108] sm:$0xff]
    %v3460 = vld [vmem:[%s3425 + $0x110] sm:$0xff]
    %v3461 = vld [vmem:[%s3425 + $0x118] sm:$0xff]
    %v3462 = vld [vmem:[%s3425 + $0x120] sm:$0xff]
    %v3463 = vld [vmem:[%s3425 + $0x128] sm:$0xff]
    %v3464 = vld [vmem:[%s3425 + $0x130] sm:$0xff]
    %v3465 = vld [vmem:[%s3425 + $0x138] sm:$0xff]
    %v3466 = vld [vmem:[%s3425 + $0x140] sm:$0xff]
    %v3467 = vld [vmem:[%s3425 + $0x148] sm:$0xff]
    %v3468 = vld [vmem:[%s3425 + $0x150] sm:$0xff]
    %v3469 = vld [vmem:[%s3425 + $0x158] sm:$0xff]
    %v3470 = vld [vmem:[%s3425 + $0x160] sm:$0xff]
    %v3471 = vld [vmem:[%s3425 + $0x168] sm:$0xff]
    %v3472 = vld [vmem:[%s3425 + $0x170] sm:$0xff]
    %v3473 = vld [vmem:[%s3425 + $0x178] sm:$0xff]
    %v3522 = vunpack.c.l.b16 %v3426
    %v3523 = vunpack.c.h.b16 %v3426
    %v3524 = vunpack.c.l.b16 %v3427
    %v3525 = vunpack.c.h.b16 %v3427
    %v3526 = vunpack.c.l.b16 %v3428
    %v3527 = vunpack.c.h.b16 %v3428
    %v3528 = vunpack.c.l.b16 %v3429
    %v3529 = vunpack.c.h.b16 %v3429
    %v3530 = vunpack.c.l.b16 %v3430
    %v3531 = vunpack.c.h.b16 %v3430
    %v3532 = vunpack.c.l.b16 %v3431
    %v3533 = vunpack.c.h.b16 %v3431
    %v3534 = vunpack.c.l.b16 %v3432
    %v3535 = vunpack.c.h.b16 %v3432
    %v3536 = vunpack.c.l.b16 %v3433
    %v3537 = vunpack.c.h.b16 %v3433
    %v3538 = vunpack.c.l.b16 %v3434
    %v3539 = vunpack.c.h.b16 %v3434
    %v3540 = vunpack.c.l.b16 %v3435
    %v3541 = vunpack.c.h.b16 %v3435
    %v3542 = vunpack.c.l.b16 %v3436
    %v3543 = vunpack.c.h.b16 %v3436
    %v3544 = vunpack.c.l.b16 %v3437
    %v3545 = vunpack.c.h.b16 %v3437
    %v3546 = vunpack.c.l.b16 %v3438
    %v3547 = vunpack.c.h.b16 %v3438
    %v3548 = vunpack.c.l.b16 %v3439
    %v3549 = vunpack.c.h.b16 %v3439
    %v3550 = vunpack.c.l.b16 %v3440
    %v3551 = vunpack.c.h.b16 %v3440
    %v3552 = vunpack.c.l.b16 %v3441
    %v3553 = vunpack.c.h.b16 %v3441
    %v3554 = vunpack.c.l.b16 %v3442
    %v3555 = vunpack.c.h.b16 %v3442
    %v3556 = vunpack.c.l.b16 %v3443
    %v3557 = vunpack.c.h.b16 %v3443
    %v3558 = vunpack.c.l.b16 %v3444
    %v3559 = vunpack.c.h.b16 %v3444
    %v3560 = vunpack.c.l.b16 %v3445
    %v3561 = vunpack.c.h.b16 %v3445
    %v3562 = vunpack.c.l.b16 %v3446
    %v3563 = vunpack.c.h.b16 %v3446
    %v3564 = vunpack.c.l.b16 %v3447
    %v3565 = vunpack.c.h.b16 %v3447
    %v3566 = vunpack.c.l.b16 %v3448
    %v3567 = vunpack.c.h.b16 %v3448
    %v3568 = vunpack.c.l.b16 %v3449
    %v3569 = vunpack.c.h.b16 %v3449
    %v3570 = vunpack.c.l.b16 %v3450
    %v3571 = vunpack.c.h.b16 %v3450
    %v3572 = vunpack.c.l.b16 %v3451
    %v3573 = vunpack.c.h.b16 %v3451
    %v3574 = vunpack.c.l.b16 %v3452
    %v3575 = vunpack.c.h.b16 %v3452
    %v3576 = vunpack.c.l.b16 %v3453
    %v3577 = vunpack.c.h.b16 %v3453
    %v3578 = vunpack.c.l.b16 %v3454
    %v3579 = vunpack.c.h.b16 %v3454
    %v3580 = vunpack.c.l.b16 %v3455
    %v3581 = vunpack.c.h.b16 %v3455
    %v3582 = vunpack.c.l.b16 %v3456
    %v3583 = vunpack.c.h.b16 %v3456
    %v3584 = vunpack.c.l.b16 %v3457
    %v3585 = vunpack.c.h.b16 %v3457
    %v3586 = vunpack.c.l.b16 %v3458
    %v3587 = vunpack.c.h.b16 %v3458
    %v3588 = vunpack.c.l.b16 %v3459
    %v3589 = vunpack.c.h.b16 %v3459
    %v3590 = vunpack.c.l.b16 %v3460
    %v3591 = vunpack.c.h.b16 %v3460
    %v3592 = vunpack.c.l.b16 %v3461
    %v3593 = vunpack.c.h.b16 %v3461
    %v3594 = vunpack.c.l.b16 %v3462
    %v3595 = vunpack.c.h.b16 %v3462
    %v3596 = vunpack.c.l.b16 %v3463
    %v3597 = vunpack.c.h.b16 %v3463
    %v3598 = vunpack.c.l.b16 %v3464
    %v3599 = vunpack.c.h.b16 %v3464
    %v3600 = vunpack.c.l.b16 %v3465
    %v3601 = vunpack.c.h.b16 %v3465
    %v3602 = vunpack.c.l.b16 %v3466
    %v3603 = vunpack.c.h.b16 %v3466
    %v3604 = vunpack.c.l.b16 %v3467
    %v3605 = vunpack.c.h.b16 %v3467
    %v3606 = vunpack.c.l.b16 %v3468
    %v3607 = vunpack.c.h.b16 %v3468
    %v3608 = vunpack.c.l.b16 %v3469
    %v3609 = vunpack.c.h.b16 %v3469
    %v3610 = vunpack.c.l.b16 %v3470
    %v3611 = vunpack.c.h.b16 %v3470
    %v3612 = vunpack.c.l.b16 %v3471
    %v3613 = vunpack.c.h.b16 %v3471
    %v3614 = vunpack.c.l.b16 %v3472
    %v3615 = vunpack.c.h.b16 %v3472
    %v3616 = vunpack.c.l.b16 %v3473
    %v3617 = vunpack.c.h.b16 %v3473
    %v3618 = vpack.c.b16 %v3524, %v3522
    %v3619 = vpack.c.b16 %v3525, %v3523
    %v3620 = vpack.c.b16 %v3528, %v3526
    %v3621 = vpack.c.b16 %v3529, %v3527
    %v3622 = vpack.c.b16 %v3532, %v3530
    %v3623 = vpack.c.b16 %v3533, %v3531
    %v3624 = vpack.c.b16 %v3536, %v3534
    %v3625 = vpack.c.b16 %v3537, %v3535
    %v3626 = vpack.c.b16 %v3540, %v3538
    %v3627 = vpack.c.b16 %v3541, %v3539
    %v3628 = vpack.c.b16 %v3544, %v3542
    %v3629 = vpack.c.b16 %v3545, %v3543
    %v3630 = vpack.c.b16 %v3548, %v3546
    %v3631 = vpack.c.b16 %v3549, %v3547
    %v3632 = vpack.c.b16 %v3552, %v3550
    %v3633 = vpack.c.b16 %v3553, %v3551
    %v3634 = vpack.c.b16 %v3556, %v3554
    %v3635 = vpack.c.b16 %v3557, %v3555
    %v3636 = vpack.c.b16 %v3560, %v3558
    %v3637 = vpack.c.b16 %v3561, %v3559
    %v3638 = vpack.c.b16 %v3564, %v3562
    %v3639 = vpack.c.b16 %v3565, %v3563
    %v3640 = vpack.c.b16 %v3568, %v3566
    %v3641 = vpack.c.b16 %v3569, %v3567
    %v3642 = vpack.c.b16 %v3572, %v3570
    %v3643 = vpack.c.b16 %v3573, %v3571
    %v3644 = vpack.c.b16 %v3576, %v3574
    %v3645 = vpack.c.b16 %v3577, %v3575
    %v3646 = vpack.c.b16 %v3580, %v3578
    %v3647 = vpack.c.b16 %v3581, %v3579
    %v3648 = vpack.c.b16 %v3584, %v3582
    %v3649 = vpack.c.b16 %v3585, %v3583
    %v3650 = vpack.c.b16 %v3588, %v3586
    %v3651 = vpack.c.b16 %v3589, %v3587
    %v3652 = vpack.c.b16 %v3592, %v3590
    %v3653 = vpack.c.b16 %v3593, %v3591
    %v3654 = vpack.c.b16 %v3596, %v3594
    %v3655 = vpack.c.b16 %v3597, %v3595
    %v3656 = vpack.c.b16 %v3600, %v3598
    %v3657 = vpack.c.b16 %v3601, %v3599
    %v3658 = vpack.c.b16 %v3604, %v3602
    %v3659 = vpack.c.b16 %v3605, %v3603
    %v3660 = vpack.c.b16 %v3608, %v3606
    %v3661 = vpack.c.b16 %v3609, %v3607
    %v3662 = vpack.c.b16 %v3612, %v3610
    %v3663 = vpack.c.b16 %v3613, %v3611
    %v3664 = vpack.c.b16 %v3616, %v3614
    %v3665 = vpack.c.b16 %v3617, %v3615
    %3714 = vmatpush.bf16.msra.mxu0 %v3632
    %3715 = vmatpush.bf16.msra.mxu0 %v3630
    %3716 = vmatpush.bf16.msra.mxu0 %v3628
    %3717 = vmatpush.bf16.msra.mxu0 %v3626
    %3718 = vmatpush.bf16.msra.mxu0 %v3624
    %3719 = vmatpush.bf16.msra.mxu0 %v3622
    %3720 = vmatpush.bf16.msra.mxu0 %v3620
    %3721 = vmatpush.bf16.msra.mxu0 %v3618
    %3722 = vmatmul.bf16.gmra.mxu0 %v1627
    %v3723 = vpop.f32.mrf.mxu0
    %v3724 = vadd.f32 0.0, %v3723
    %v3725 = vpop.f32.mrf.mxu0
    %3726 = vdwg.mxu0
    %3727 = vmatpush.bf16.msra.mxu0 %v3648
    %3728 = vmatpush.bf16.msra.mxu0 %v3646
    %3729 = vmatpush.bf16.msra.mxu0 %v3644
    %3730 = vmatpush.bf16.msra.mxu0 %v3642
    %3731 = vmatpush.bf16.msra.mxu0 %v3640
    %3732 = vmatpush.bf16.msra.mxu0 %v3638
    %3733 = vmatpush.bf16.msra.mxu0 %v3636
    %3734 = vmatpush.bf16.msra.mxu0 %v3634
    %3735 = vmatmul.bf16.gmra.mxu0 %v1628
    %v3736 = vpop.f32.mrf.mxu0
    %v3737 = vadd.f32 %v3724, %v3736
    %v3738 = vpop.f32.mrf.mxu0
    %3739 = vdwg.mxu0
    %3740 = vmatpush.bf16.msra.mxu0 %v3664
    %3741 = vmatpush.bf16.msra.mxu0 %v3662
    %3742 = vmatpush.bf16.msra.mxu0 %v3660
    %3743 = vmatpush.bf16.msra.mxu0 %v3658
    %3744 = vmatpush.bf16.msra.mxu0 %v3656
    %3745 = vmatpush.bf16.msra.mxu0 %v3654
    %3746 = vmatpush.bf16.msra.mxu0 %v3652
    %3747 = vmatpush.bf16.msra.mxu0 %v3650
    %3748 = vmatmul.bf16.gmra.mxu0 %v1629
    %v3749 = vpop.f32.mrf.mxu0
    %v3750 = vadd.f32 %v3737, %v3749
    %v3751 = vpop.f32.mrf.mxu0
    %3752 = vdwg.mxu0
    %3753 = vmatpush.bf16.msra.mxu0 %v3633
    %3754 = vmatpush.bf16.msra.mxu0 %v3631
    %3755 = vmatpush.bf16.msra.mxu0 %v3629
    %3756 = vmatpush.bf16.msra.mxu0 %v3627
    %3757 = vmatpush.bf16.msra.mxu0 %v3625
    %3758 = vmatpush.bf16.msra.mxu0 %v3623
    %3759 = vmatpush.bf16.msra.mxu0 %v3621
    %3760 = vmatpush.bf16.msra.mxu0 %v3619
    %3761 = vmatmul.bf16.gmra.mxu0 %v1627
    %v3762 = vpop.f32.mrf.mxu0
    %v3763 = vadd.f32 0.0, %v3762
    %v3764 = vpop.f32.mrf.mxu0
    %3765 = vdwg.mxu0
    %3766 = vmatpush.bf16.msra.mxu0 %v3649
    %3767 = vmatpush.bf16.msra.mxu0 %v3647
    %3768 = vmatpush.bf16.msra.mxu0 %v3645
    %3769 = vmatpush.bf16.msra.mxu0 %v3643
    %3770 = vmatpush.bf16.msra.mxu0 %v3641
    %3771 = vmatpush.bf16.msra.mxu0 %v3639
    %3772 = vmatpush.bf16.msra.mxu0 %v3637
    %3773 = vmatpush.bf16.msra.mxu0 %v3635
    %3774 = vmatmul.bf16.gmra.mxu0 %v1628
    %v3775 = vpop.f32.mrf.mxu0
    %v3776 = vadd.f32 %v3763, %v3775
    %v3777 = vpop.f32.mrf.mxu0
    %3778 = vdwg.mxu0
    %3779 = vmatpush.bf16.msra.mxu0 %v3665
    %3780 = vmatpush.bf16.msra.mxu0 %v3663
    %3781 = vmatpush.bf16.msra.mxu0 %v3661
    %3782 = vmatpush.bf16.msra.mxu0 %v3659
    %3783 = vmatpush.bf16.msra.mxu0 %v3657
    %3784 = vmatpush.bf16.msra.mxu0 %v3655
    %3785 = vmatpush.bf16.msra.mxu0 %v3653
    %3786 = vmatpush.bf16.msra.mxu0 %v3651
    %3787 = vmatmul.bf16.gmra.mxu0 %v1629
    %v3788 = vpop.f32.mrf.mxu0
    %v3789 = vadd.f32 %v3776, %v3788
    %v3790 = vpop.f32.mrf.mxu0
    %3791 = vdwg.mxu0
    %v3792 = vadd.f32 %v3423, %v3750
    %v3793 = vadd.f32 %v3424, %v3789
    %v3794 = vmax.f32 %v1951, %v3792
    %v3795 = vmax.f32 %v1952, %v3793
    %3796 = vmatpush.bf16.msra.mxu0 %v315
    %3797 = vmatpush.bf16.msra.mxu0 %v313
    %3798 = vmatpush.bf16.msra.mxu0 %v311
    %3799 = vmatpush.bf16.msra.mxu0 %v309
    %3800 = vmatpush.bf16.msra.mxu0 %v307
    %3801 = vmatpush.bf16.msra.mxu0 %v305
    %3802 = vmatpush.bf16.msra.mxu0 %v303
    %3803 = vmatpush.bf16.msra.mxu0 %v301
    %3804 = vmatmul.bf16.gmra.mxu0 %v861
    %v3805 = vpop.f32.mrf.mxu0
    %v3806 = vadd.f32 0.0, %v3805
    %v3807 = vpop.f32.mrf.mxu0
    %3808 = vdwg.mxu0
    %3809 = vmatpush.bf16.msra.mxu0 %v331
    %3810 = vmatpush.bf16.msra.mxu0 %v329
    %3811 = vmatpush.bf16.msra.mxu0 %v327
    %3812 = vmatpush.bf16.msra.mxu0 %v325
    %3813 = vmatpush.bf16.msra.mxu0 %v323
    %3814 = vmatpush.bf16.msra.mxu0 %v321
    %3815 = vmatpush.bf16.msra.mxu0 %v319
    %3816 = vmatpush.bf16.msra.mxu0 %v317
    %3817 = vmatmul.bf16.gmra.mxu0 %v862
    %v3818 = vpop.f32.mrf.mxu0
    %v3819 = vadd.f32 %v3806, %v3818
    %v3820 = vpop.f32.mrf.mxu0
    %3821 = vdwg.mxu0
    %3822 = vmatpush.bf16.msra.mxu0 %v347
    %3823 = vmatpush.bf16.msra.mxu0 %v345
    %3824 = vmatpush.bf16.msra.mxu0 %v343
    %3825 = vmatpush.bf16.msra.mxu0 %v341
    %3826 = vmatpush.bf16.msra.mxu0 %v339
    %3827 = vmatpush.bf16.msra.mxu0 %v337
    %3828 = vmatpush.bf16.msra.mxu0 %v335
    %3829 = vmatpush.bf16.msra.mxu0 %v333
    %3830 = vmatmul.bf16.gmra.mxu0 %v863
    %v3831 = vpop.f32.mrf.mxu0
    %v3832 = vadd.f32 %v3819, %v3831
    %v3833 = vpop.f32.mrf.mxu0
    %3834 = vdwg.mxu0
    %3835 = vmatpush.bf16.msra.mxu0 %v316
    %3836 = vmatpush.bf16.msra.mxu0 %v314
    %3837 = vmatpush.bf16.msra.mxu0 %v312
    %3838 = vmatpush.bf16.msra.mxu0 %v310
    %3839 = vmatpush.bf16.msra.mxu0 %v308
    %3840 = vmatpush.bf16.msra.mxu0 %v306
    %3841 = vmatpush.bf16.msra.mxu0 %v304
    %3842 = vmatpush.bf16.msra.mxu0 %v302
    %3843 = vmatmul.bf16.gmra.mxu0 %v861
    %v3844 = vpop.f32.mrf.mxu0
    %v3845 = vadd.f32 0.0, %v3844
    %v3846 = vpop.f32.mrf.mxu0
    %3847 = vdwg.mxu0
    %3848 = vmatpush.bf16.msra.mxu0 %v332
    %3849 = vmatpush.bf16.msra.mxu0 %v330
    %3850 = vmatpush.bf16.msra.mxu0 %v328
    %3851 = vmatpush.bf16.msra.mxu0 %v326
    %3852 = vmatpush.bf16.msra.mxu0 %v324
    %3853 = vmatpush.bf16.msra.mxu0 %v322
    %3854 = vmatpush.bf16.msra.mxu0 %v320
    %3855 = vmatpush.bf16.msra.mxu0 %v318
    %3856 = vmatmul.bf16.gmra.mxu0 %v862
    %v3857 = vpop.f32.mrf.mxu0
    %v3858 = vadd.f32 %v3845, %v3857
    %v3859 = vpop.f32.mrf.mxu0
    %3860 = vdwg.mxu0
    %3861 = vmatpush.bf16.msra.mxu0 %v348
    %3862 = vmatpush.bf16.msra.mxu0 %v346
    %3863 = vmatpush.bf16.msra.mxu0 %v344
    %3864 = vmatpush.bf16.msra.mxu0 %v342
    %3865 = vmatpush.bf16.msra.mxu0 %v340
    %3866 = vmatpush.bf16.msra.mxu0 %v338
    %3867 = vmatpush.bf16.msra.mxu0 %v336
    %3868 = vmatpush.bf16.msra.mxu0 %v334
    %3869 = vmatmul.bf16.gmra.mxu0 %v863
    %v3870 = vpop.f32.mrf.mxu0
    %v3871 = vadd.f32 %v3858, %v3870
    %v3872 = vpop.f32.mrf.mxu0
    %3873 = vdwg.mxu0
    %3874 = vmatpush.bf16.msra.mxu0 %v644
    %3875 = vmatpush.bf16.msra.mxu0 %v642
    %3876 = vmatpush.bf16.msra.mxu0 %v640
    %3877 = vmatpush.bf16.msra.mxu0 %v638
    %3878 = vmatpush.bf16.msra.mxu0 %v636
    %3879 = vmatpush.bf16.msra.mxu0 %v634
    %3880 = vmatpush.bf16.msra.mxu0 %v632
    %3881 = vmatpush.bf16.msra.mxu0 %v630
    %3882 = vmatmul.bf16.gmra.mxu0 %v151
    %v3883 = vpop.f32.mrf.mxu0
    %v3884 = vadd.f32 %v3832, %v3883
    %v3885 = vpop.f32.mrf.mxu0
    %3886 = vdwg.mxu0
    %3887 = vmatpush.bf16.msra.mxu0 %v660
    %3888 = vmatpush.bf16.msra.mxu0 %v658
    %3889 = vmatpush.bf16.msra.mxu0 %v656
    %3890 = vmatpush.bf16.msra.mxu0 %v654
    %3891 = vmatpush.bf16.msra.mxu0 %v652
    %3892 = vmatpush.bf16.msra.mxu0 %v650
    %3893 = vmatpush.bf16.msra.mxu0 %v648
    %3894 = vmatpush.bf16.msra.mxu0 %v646
    %3895 = vmatmul.bf16.gmra.mxu0 %v152
    %v3896 = vpop.f32.mrf.mxu0
    %v3897 = vadd.f32 %v3884, %v3896
    %v3898 = vpop.f32.mrf.mxu0
    %3899 = vdwg.mxu0
    %3900 = vmatpush.bf16.msra.mxu0 %v676
    %3901 = vmatpush.bf16.msra.mxu0 %v674
    %3902 = vmatpush.bf16.msra.mxu0 %v672
    %3903 = vmatpush.bf16.msra.mxu0 %v670
    %3904 = vmatpush.bf16.msra.mxu0 %v668
    %3905 = vmatpush.bf16.msra.mxu0 %v666
    %3906 = vmatpush.bf16.msra.mxu0 %v664
    %3907 = vmatpush.bf16.msra.mxu0 %v662
    %3908 = vmatmul.bf16.gmra.mxu0 %v153
    %v3909 = vpop.f32.mrf.mxu0
    %v3910 = vadd.f32 %v3897, %v3909
    %v3911 = vpop.f32.mrf.mxu0
    %3912 = vdwg.mxu0
    %3913 = vmatpush.bf16.msra.mxu0 %v645
    %3914 = vmatpush.bf16.msra.mxu0 %v643
    %3915 = vmatpush.bf16.msra.mxu0 %v641
    %3916 = vmatpush.bf16.msra.mxu0 %v639
    %3917 = vmatpush.bf16.msra.mxu0 %v637
    %3918 = vmatpush.bf16.msra.mxu0 %v635
    %3919 = vmatpush.bf16.msra.mxu0 %v633
    %3920 = vmatpush.bf16.msra.mxu0 %v631
    %3921 = vmatmul.bf16.gmra.mxu0 %v151
    %v3922 = vpop.f32.mrf.mxu0
    %v3923 = vadd.f32 %v3871, %v3922
    %v3924 = vpop.f32.mrf.mxu0
    %3925 = vdwg.mxu0
    %3926 = vmatpush.bf16.msra.mxu0 %v661
    %3927 = vmatpush.bf16.msra.mxu0 %v659
    %3928 = vmatpush.bf16.msra.mxu0 %v657
    %3929 = vmatpush.bf16.msra.mxu0 %v655
    %3930 = vmatpush.bf16.msra.mxu0 %v653
    %3931 = vmatpush.bf16.msra.mxu0 %v651
    %3932 = vmatpush.bf16.msra.mxu0 %v649
    %3933 = vmatpush.bf16.msra.mxu0 %v647
    %3934 = vmatmul.bf16.gmra.mxu0 %v152
    %v3935 = vpop.f32.mrf.mxu0
    %v3936 = vadd.f32 %v3923, %v3935
    %v3937 = vpop.f32.mrf.mxu0
    %3938 = vdwg.mxu0
    %3939 = vmatpush.bf16.msra.mxu0 %v677
    %3940 = vmatpush.bf16.msra.mxu0 %v675
    %3941 = vmatpush.bf16.msra.mxu0 %v673
    %3942 = vmatpush.bf16.msra.mxu0 %v671
    %3943 = vmatpush.bf16.msra.mxu0 %v669
    %3944 = vmatpush.bf16.msra.mxu0 %v667
    %3945 = vmatpush.bf16.msra.mxu0 %v665
    %3946 = vmatpush.bf16.msra.mxu0 %v663
    %3947 = vmatmul.bf16.gmra.mxu0 %v153
    %v3948 = vpop.f32.mrf.mxu0
    %v3949 = vadd.f32 %v3936, %v3948
    %v3950 = vpop.f32.mrf.mxu0
    %3951 = vdwg.mxu0
    %3952 = vmatpush.bf16.msra.mxu0 %v1025
    %3953 = vmatpush.bf16.msra.mxu0 %v1023
    %3954 = vmatpush.bf16.msra.mxu0 %v1021
    %3955 = vmatpush.bf16.msra.mxu0 %v1019
    %3956 = vmatpush.bf16.msra.mxu0 %v1017
    %3957 = vmatpush.bf16.msra.mxu0 %v1015
    %3958 = vmatpush.bf16.msra.mxu0 %v1013
    %3959 = vmatpush.bf16.msra.mxu0 %v1011
    %3960 = vmatmul.bf16.gmra.mxu0 %v1244
    %v3961 = vpop.f32.mrf.mxu0
    %v3962 = vadd.f32 0.0, %v3961
    %v3963 = vpop.f32.mrf.mxu0
    %3964 = vdwg.mxu0
    %3965 = vmatpush.bf16.msra.mxu0 %v1041
    %3966 = vmatpush.bf16.msra.mxu0 %v1039
    %3967 = vmatpush.bf16.msra.mxu0 %v1037
    %3968 = vmatpush.bf16.msra.mxu0 %v1035
    %3969 = vmatpush.bf16.msra.mxu0 %v1033
    %3970 = vmatpush.bf16.msra.mxu0 %v1031
    %3971 = vmatpush.bf16.msra.mxu0 %v1029
    %3972 = vmatpush.bf16.msra.mxu0 %v1027
    %3973 = vmatmul.bf16.gmra.mxu0 %v1245
    %v3974 = vpop.f32.mrf.mxu0
    %v3975 = vadd.f32 %v3962, %v3974
    %v3976 = vpop.f32.mrf.mxu0
    %3977 = vdwg.mxu0
    %3978 = vmatpush.bf16.msra.mxu0 %v1057
    %3979 = vmatpush.bf16.msra.mxu0 %v1055
    %3980 = vmatpush.bf16.msra.mxu0 %v1053
    %3981 = vmatpush.bf16.msra.mxu0 %v1051
    %3982 = vmatpush.bf16.msra.mxu0 %v1049
    %3983 = vmatpush.bf16.msra.mxu0 %v1047
    %3984 = vmatpush.bf16.msra.mxu0 %v1045
    %3985 = vmatpush.bf16.msra.mxu0 %v1043
    %3986 = vmatmul.bf16.gmra.mxu0 %v1246
    %v3987 = vpop.f32.mrf.mxu0
    %v3988 = vadd.f32 %v3975, %v3987
    %v3989 = vpop.f32.mrf.mxu0
    %3990 = vdwg.mxu0
    %3991 = vmatpush.bf16.msra.mxu0 %v1026
    %3992 = vmatpush.bf16.msra.mxu0 %v1024
    %3993 = vmatpush.bf16.msra.mxu0 %v1022
    %3994 = vmatpush.bf16.msra.mxu0 %v1020
    %3995 = vmatpush.bf16.msra.mxu0 %v1018
    %3996 = vmatpush.bf16.msra.mxu0 %v1016
    %3997 = vmatpush.bf16.msra.mxu0 %v1014
    %3998 = vmatpush.bf16.msra.mxu0 %v1012
    %3999 = vmatmul.bf16.gmra.mxu0 %v1244
    %v4000 = vpop.f32.mrf.mxu0
    %v4001 = vadd.f32 0.0, %v4000
    %v4002 = vpop.f32.mrf.mxu0
    %4003 = vdwg.mxu0
    %4004 = vmatpush.bf16.msra.mxu0 %v1042
    %4005 = vmatpush.bf16.msra.mxu0 %v1040
    %4006 = vmatpush.bf16.msra.mxu0 %v1038
    %4007 = vmatpush.bf16.msra.mxu0 %v1036
    %4008 = vmatpush.bf16.msra.mxu0 %v1034
    %4009 = vmatpush.bf16.msra.mxu0 %v1032
    %4010 = vmatpush.bf16.msra.mxu0 %v1030
    %4011 = vmatpush.bf16.msra.mxu0 %v1028
    %4012 = vmatmul.bf16.gmra.mxu0 %v1245
    %v4013 = vpop.f32.mrf.mxu0
    %v4014 = vadd.f32 %v4001, %v4013
    %v4015 = vpop.f32.mrf.mxu0
    %4016 = vdwg.mxu0
    %4017 = vmatpush.bf16.msra.mxu0 %v1058
    %4018 = vmatpush.bf16.msra.mxu0 %v1056
    %4019 = vmatpush.bf16.msra.mxu0 %v1054
    %4020 = vmatpush.bf16.msra.mxu0 %v1052
    %4021 = vmatpush.bf16.msra.mxu0 %v1050
    %4022 = vmatpush.bf16.msra.mxu0 %v1048
    %4023 = vmatpush.bf16.msra.mxu0 %v1046
    %4024 = vmatpush.bf16.msra.mxu0 %v1044
    %4025 = vmatmul.bf16.gmra.mxu0 %v1246
    %v4026 = vpop.f32.mrf.mxu0
    %v4027 = vadd.f32 %v4014, %v4026
    %v4028 = vpop.f32.mrf.mxu0
    %4029 = vdwg.mxu0
    %v4030 = vadd.f32 %v3910, %v3988
    %v4031 = vadd.f32 %v3949, %v4027
    %4032 = vmatpush.bf16.msra.mxu0 %v1408
    %4033 = vmatpush.bf16.msra.mxu0 %v1406
    %4034 = vmatpush.bf16.msra.mxu0 %v1404
    %4035 = vmatpush.bf16.msra.mxu0 %v1402
    %4036 = vmatpush.bf16.msra.mxu0 %v1400
    %4037 = vmatpush.bf16.msra.mxu0 %v1398
    %4038 = vmatpush.bf16.msra.mxu0 %v1396
    %4039 = vmatpush.bf16.msra.mxu0 %v1394
    %4040 = vmatmul.bf16.gmra.mxu0 %v1627
    %v4041 = vpop.f32.mrf.mxu0
    %v4042 = vadd.f32 0.0, %v4041
    %v4043 = vpop.f32.mrf.mxu0
    %4044 = vdwg.mxu0
    %4045 = vmatpush.bf16.msra.mxu0 %v1424
    %4046 = vmatpush.bf16.msra.mxu0 %v1422
    %4047 = vmatpush.bf16.msra.mxu0 %v1420
    %4048 = vmatpush.bf16.msra.mxu0 %v1418
    %4049 = vmatpush.bf16.msra.mxu0 %v1416
    %4050 = vmatpush.bf16.msra.mxu0 %v1414
    %4051 = vmatpush.bf16.msra.mxu0 %v1412
    %4052 = vmatpush.bf16.msra.mxu0 %v1410
    %4053 = vmatmul.bf16.gmra.mxu0 %v1628
    %v4054 = vpop.f32.mrf.mxu0
    %v4055 = vadd.f32 %v4042, %v4054
    %v4056 = vpop.f32.mrf.mxu0
    %4057 = vdwg.mxu0
    %4058 = vmatpush.bf16.msra.mxu0 %v1440
    %4059 = vmatpush.bf16.msra.mxu0 %v1438
    %4060 = vmatpush.bf16.msra.mxu0 %v1436
    %4061 = vmatpush.bf16.msra.mxu0 %v1434
    %4062 = vmatpush.bf16.msra.mxu0 %v1432
    %4063 = vmatpush.bf16.msra.mxu0 %v1430
    %4064 = vmatpush.bf16.msra.mxu0 %v1428
    %4065 = vmatpush.bf16.msra.mxu0 %v1426
    %4066 = vmatmul.bf16.gmra.mxu0 %v1629
    %v4067 = vpop.f32.mrf.mxu0
    %v4068 = vadd.f32 %v4055, %v4067
    %v4069 = vpop.f32.mrf.mxu0
    %4070 = vdwg.mxu0
    %4071 = vmatpush.bf16.msra.mxu0 %v1409
    %4072 = vmatpush.bf16.msra.mxu0 %v1407
    %4073 = vmatpush.bf16.msra.mxu0 %v1405
    %4074 = vmatpush.bf16.msra.mxu0 %v1403
    %4075 = vmatpush.bf16.msra.mxu0 %v1401
    %4076 = vmatpush.bf16.msra.mxu0 %v1399
    %4077 = vmatpush.bf16.msra.mxu0 %v1397
    %4078 = vmatpush.bf16.msra.mxu0 %v1395
    %4079 = vmatmul.bf16.gmra.mxu0 %v1627
    %v4080 = vpop.f32.mrf.mxu0
    %v4081 = vadd.f32 0.0, %v4080
    %v4082 = vpop.f32.mrf.mxu0
    %4083 = vdwg.mxu0
    %4084 = vmatpush.bf16.msra.mxu0 %v1425
    %4085 = vmatpush.bf16.msra.mxu0 %v1423
    %4086 = vmatpush.bf16.msra.mxu0 %v1421
    %4087 = vmatpush.bf16.msra.mxu0 %v1419
    %4088 = vmatpush.bf16.msra.mxu0 %v1417
    %4089 = vmatpush.bf16.msra.mxu0 %v1415
    %4090 = vmatpush.bf16.msra.mxu0 %v1413
    %4091 = vmatpush.bf16.msra.mxu0 %v1411
    %4092 = vmatmul.bf16.gmra.mxu0 %v1628
    %v4093 = vpop.f32.mrf.mxu0
    %v4094 = vadd.f32 %v4081, %v4093
    %v4095 = vpop.f32.mrf.mxu0
    %4096 = vdwg.mxu0
    %4097 = vmatpush.bf16.msra.mxu0 %v1441
    %4098 = vmatpush.bf16.msra.mxu0 %v1439
    %4099 = vmatpush.bf16.msra.mxu0 %v1437
    %4100 = vmatpush.bf16.msra.mxu0 %v1435
    %4101 = vmatpush.bf16.msra.mxu0 %v1433
    %4102 = vmatpush.bf16.msra.mxu0 %v1431
    %4103 = vmatpush.bf16.msra.mxu0 %v1429
    %4104 = vmatpush.bf16.msra.mxu0 %v1427
    %4105 = vmatmul.bf16.gmra.mxu0 %v1629
    %v4106 = vpop.f32.mrf.mxu0
    %v4107 = vadd.f32 %v4094, %v4106
    %v4108 = vpop.f32.mrf.mxu0
    %4109 = vdwg.mxu0
    %v4110 = vadd.f32 %v4030, %v4068
    %v4111 = vadd.f32 %v4031, %v4107
    %s4112 = scalar_lea.vmem %s0, 60
    %v4113 = vld [vmem:[%s4112] sm:$0xff]
    %v4114 = vld [vmem:[%s4112 + $0x8] sm:$0xf]
    %v4117 = vunpack.c.l.b16 %v4113
    %v4118 = vunpack.c.h.b16 %v4113
    %v4119 = vunpack.c.l.b16 %v4114
    %v4120 = vpack.c.b16 %v4117, %v4117
    %v4121 = vpack.c.b16 %v4118, %v4118
    %v4122 = vpack.c.b16 %v4119, %v4119
    %4126 = vmatpush.bf16.msra.mxu0 %v1791
    %4127 = vmatpush.bf16.msra.mxu0 %v1789
    %4128 = vmatpush.bf16.msra.mxu0 %v1787
    %4129 = vmatpush.bf16.msra.mxu0 %v1785
    %4130 = vmatpush.bf16.msra.mxu0 %v1783
    %4131 = vmatpush.bf16.msra.mxu0 %v1781
    %4132 = vmatpush.bf16.msra.mxu0 %v1779
    %4133 = vmatpush.bf16.msra.mxu0 %v1777
    %4134 = vmatmul.bf16.gmra.mxu0 %v4120
    %v4135 = vpop.f32.mrf.mxu0
    %v4136 = vadd.f32 0.0, %v4135
    %v4137 = vpop.f32.mrf.mxu0
    %4138 = vdwg.mxu0
    %4139 = vmatpush.bf16.msra.mxu0 %v1807
    %4140 = vmatpush.bf16.msra.mxu0 %v1805
    %4141 = vmatpush.bf16.msra.mxu0 %v1803
    %4142 = vmatpush.bf16.msra.mxu0 %v1801
    %4143 = vmatpush.bf16.msra.mxu0 %v1799
    %4144 = vmatpush.bf16.msra.mxu0 %v1797
    %4145 = vmatpush.bf16.msra.mxu0 %v1795
    %4146 = vmatpush.bf16.msra.mxu0 %v1793
    %4147 = vmatmul.bf16.gmra.mxu0 %v4121
    %v4148 = vpop.f32.mrf.mxu0
    %v4149 = vadd.f32 %v4136, %v4148
    %v4150 = vpop.f32.mrf.mxu0
    %4151 = vdwg.mxu0
    %4152 = vmatpush.bf16.msra.mxu0 %v1823
    %4153 = vmatpush.bf16.msra.mxu0 %v1821
    %4154 = vmatpush.bf16.msra.mxu0 %v1819
    %4155 = vmatpush.bf16.msra.mxu0 %v1817
    %4156 = vmatpush.bf16.msra.mxu0 %v1815
    %4157 = vmatpush.bf16.msra.mxu0 %v1813
    %4158 = vmatpush.bf16.msra.mxu0 %v1811
    %4159 = vmatpush.bf16.msra.mxu0 %v1809
    %4160 = vmatmul.bf16.gmra.mxu0 %v4122
    %v4161 = vpop.f32.mrf.mxu0
    %v4162 = vadd.f32 %v4149, %v4161
    %v4163 = vpop.f32.mrf.mxu0
    %4164 = vdwg.mxu0
    %4165 = vmatpush.bf16.msra.mxu0 %v1792
    %4166 = vmatpush.bf16.msra.mxu0 %v1790
    %4167 = vmatpush.bf16.msra.mxu0 %v1788
    %4168 = vmatpush.bf16.msra.mxu0 %v1786
    %4169 = vmatpush.bf16.msra.mxu0 %v1784
    %4170 = vmatpush.bf16.msra.mxu0 %v1782
    %4171 = vmatpush.bf16.msra.mxu0 %v1780
    %4172 = vmatpush.bf16.msra.mxu0 %v1778
    %4173 = vmatmul.bf16.gmra.mxu0 %v4120
    %v4174 = vpop.f32.mrf.mxu0
    %v4175 = vadd.f32 0.0, %v4174
    %v4176 = vpop.f32.mrf.mxu0
    %4177 = vdwg.mxu0
    %4178 = vmatpush.bf16.msra.mxu0 %v1808
    %4179 = vmatpush.bf16.msra.mxu0 %v1806
    %4180 = vmatpush.bf16.msra.mxu0 %v1804
    %4181 = vmatpush.bf16.msra.mxu0 %v1802
    %4182 = vmatpush.bf16.msra.mxu0 %v1800
    %4183 = vmatpush.bf16.msra.mxu0 %v1798
    %4184 = vmatpush.bf16.msra.mxu0 %v1796
    %4185 = vmatpush.bf16.msra.mxu0 %v1794
    %4186 = vmatmul.bf16.gmra.mxu0 %v4121
    %v4187 = vpop.f32.mrf.mxu0
    %v4188 = vadd.f32 %v4175, %v4187
    %v4189 = vpop.f32.mrf.mxu0
    %4190 = vdwg.mxu0
    %4191 = vmatpush.bf16.msra.mxu0 %v1824
    %4192 = vmatpush.bf16.msra.mxu0 %v1822
    %4193 = vmatpush.bf16.msra.mxu0 %v1820
    %4194 = vmatpush.bf16.msra.mxu0 %v1818
    %4195 = vmatpush.bf16.msra.mxu0 %v1816
    %4196 = vmatpush.bf16.msra.mxu0 %v1814
    %4197 = vmatpush.bf16.msra.mxu0 %v1812
    %4198 = vmatpush.bf16.msra.mxu0 %v1810
    %4199 = vmatmul.bf16.gmra.mxu0 %v4122
    %v4200 = vpop.f32.mrf.mxu0
    %v4201 = vadd.f32 %v4188, %v4200
    %v4202 = vpop.f32.mrf.mxu0
    %4203 = vdwg.mxu0
    %v4204 = vadd.f32 %v4110, %v4162
    %v4205 = vadd.f32 %v4111, %v4201
    %v4206 = vmax.f32 %v3794, %v4204
    %v4207 = vmax.f32 %v3795, %v4205
    %4208 = vmatpush.bf16.msra.mxu0 %v2209
    %4209 = vmatpush.bf16.msra.mxu0 %v2207
    %4210 = vmatpush.bf16.msra.mxu0 %v2205
    %4211 = vmatpush.bf16.msra.mxu0 %v2203
    %4212 = vmatpush.bf16.msra.mxu0 %v2201
    %4213 = vmatpush.bf16.msra.mxu0 %v2199
    %4214 = vmatpush.bf16.msra.mxu0 %v2197
    %4215 = vmatpush.bf16.msra.mxu0 %v2195
    %4216 = vmatmul.bf16.gmra.mxu0 %v861
    %v4217 = vpop.f32.mrf.mxu0
    %v4218 = vadd.f32 0.0, %v4217
    %v4219 = vpop.f32.mrf.mxu0
    %4220 = vdwg.mxu0
    %4221 = vmatpush.bf16.msra.mxu0 %v2225
    %4222 = vmatpush.bf16.msra.mxu0 %v2223
    %4223 = vmatpush.bf16.msra.mxu0 %v2221
    %4224 = vmatpush.bf16.msra.mxu0 %v2219
    %4225 = vmatpush.bf16.msra.mxu0 %v2217
    %4226 = vmatpush.bf16.msra.mxu0 %v2215
    %4227 = vmatpush.bf16.msra.mxu0 %v2213
    %4228 = vmatpush.bf16.msra.mxu0 %v2211
    %4229 = vmatmul.bf16.gmra.mxu0 %v862
    %v4230 = vpop.f32.mrf.mxu0
    %v4231 = vadd.f32 %v4218, %v4230
    %v4232 = vpop.f32.mrf.mxu0
    %4233 = vdwg.mxu0
    %4234 = vmatpush.bf16.msra.mxu0 %v2241
    %4235 = vmatpush.bf16.msra.mxu0 %v2239
    %4236 = vmatpush.bf16.msra.mxu0 %v2237
    %4237 = vmatpush.bf16.msra.mxu0 %v2235
    %4238 = vmatpush.bf16.msra.mxu0 %v2233
    %4239 = vmatpush.bf16.msra.mxu0 %v2231
    %4240 = vmatpush.bf16.msra.mxu0 %v2229
    %4241 = vmatpush.bf16.msra.mxu0 %v2227
    %4242 = vmatmul.bf16.gmra.mxu0 %v863
    %v4243 = vpop.f32.mrf.mxu0
    %v4244 = vadd.f32 %v4231, %v4243
    %v4245 = vpop.f32.mrf.mxu0
    %4246 = vdwg.mxu0
    %4247 = vmatpush.bf16.msra.mxu0 %v2210
    %4248 = vmatpush.bf16.msra.mxu0 %v2208
    %4249 = vmatpush.bf16.msra.mxu0 %v2206
    %4250 = vmatpush.bf16.msra.mxu0 %v2204
    %4251 = vmatpush.bf16.msra.mxu0 %v2202
    %4252 = vmatpush.bf16.msra.mxu0 %v2200
    %4253 = vmatpush.bf16.msra.mxu0 %v2198
    %4254 = vmatpush.bf16.msra.mxu0 %v2196
    %4255 = vmatmul.bf16.gmra.mxu0 %v861
    %v4256 = vpop.f32.mrf.mxu0
    %v4257 = vadd.f32 0.0, %v4256
    %v4258 = vpop.f32.mrf.mxu0
    %4259 = vdwg.mxu0
    %4260 = vmatpush.bf16.msra.mxu0 %v2226
    %4261 = vmatpush.bf16.msra.mxu0 %v2224
    %4262 = vmatpush.bf16.msra.mxu0 %v2222
    %4263 = vmatpush.bf16.msra.mxu0 %v2220
    %4264 = vmatpush.bf16.msra.mxu0 %v2218
    %4265 = vmatpush.bf16.msra.mxu0 %v2216
    %4266 = vmatpush.bf16.msra.mxu0 %v2214
    %4267 = vmatpush.bf16.msra.mxu0 %v2212
    %4268 = vmatmul.bf16.gmra.mxu0 %v862
    %v4269 = vpop.f32.mrf.mxu0
    %v4270 = vadd.f32 %v4257, %v4269
    %v4271 = vpop.f32.mrf.mxu0
    %4272 = vdwg.mxu0
    %4273 = vmatpush.bf16.msra.mxu0 %v2242
    %4274 = vmatpush.bf16.msra.mxu0 %v2240
    %4275 = vmatpush.bf16.msra.mxu0 %v2238
    %4276 = vmatpush.bf16.msra.mxu0 %v2236
    %4277 = vmatpush.bf16.msra.mxu0 %v2234
    %4278 = vmatpush.bf16.msra.mxu0 %v2232
    %4279 = vmatpush.bf16.msra.mxu0 %v2230
    %4280 = vmatpush.bf16.msra.mxu0 %v2228
    %4281 = vmatmul.bf16.gmra.mxu0 %v863
    %v4282 = vpop.f32.mrf.mxu0
    %v4283 = vadd.f32 %v4270, %v4282
    %v4284 = vpop.f32.mrf.mxu0
    %4285 = vdwg.mxu0
    %4286 = vmatpush.bf16.msra.mxu0 %v2527
    %4287 = vmatpush.bf16.msra.mxu0 %v2525
    %4288 = vmatpush.bf16.msra.mxu0 %v2523
    %4289 = vmatpush.bf16.msra.mxu0 %v2521
    %4290 = vmatpush.bf16.msra.mxu0 %v2519
    %4291 = vmatpush.bf16.msra.mxu0 %v2517
    %4292 = vmatpush.bf16.msra.mxu0 %v2515
    %4293 = vmatpush.bf16.msra.mxu0 %v2513
    %4294 = vmatmul.bf16.gmra.mxu0 %v151
    %v4295 = vpop.f32.mrf.mxu0
    %v4296 = vadd.f32 %v4244, %v4295
    %v4297 = vpop.f32.mrf.mxu0
    %4298 = vdwg.mxu0
    %4299 = vmatpush.bf16.msra.mxu0 %v2543
    %4300 = vmatpush.bf16.msra.mxu0 %v2541
    %4301 = vmatpush.bf16.msra.mxu0 %v2539
    %4302 = vmatpush.bf16.msra.mxu0 %v2537
    %4303 = vmatpush.bf16.msra.mxu0 %v2535
    %4304 = vmatpush.bf16.msra.mxu0 %v2533
    %4305 = vmatpush.bf16.msra.mxu0 %v2531
    %4306 = vmatpush.bf16.msra.mxu0 %v2529
    %4307 = vmatmul.bf16.gmra.mxu0 %v152
    %v4308 = vpop.f32.mrf.mxu0
    %v4309 = vadd.f32 %v4296, %v4308
    %v4310 = vpop.f32.mrf.mxu0
    %4311 = vdwg.mxu0
    %4312 = vmatpush.bf16.msra.mxu0 %v2559
    %4313 = vmatpush.bf16.msra.mxu0 %v2557
    %4314 = vmatpush.bf16.msra.mxu0 %v2555
    %4315 = vmatpush.bf16.msra.mxu0 %v2553
    %4316 = vmatpush.bf16.msra.mxu0 %v2551
    %4317 = vmatpush.bf16.msra.mxu0 %v2549
    %4318 = vmatpush.bf16.msra.mxu0 %v2547
    %4319 = vmatpush.bf16.msra.mxu0 %v2545
    %4320 = vmatmul.bf16.gmra.mxu0 %v153
    %v4321 = vpop.f32.mrf.mxu0
    %v4322 = vadd.f32 %v4309, %v4321
    %v4323 = vpop.f32.mrf.mxu0
    %4324 = vdwg.mxu0
    %4325 = vmatpush.bf16.msra.mxu0 %v2528
    %4326 = vmatpush.bf16.msra.mxu0 %v2526
    %4327 = vmatpush.bf16.msra.mxu0 %v2524
    %4328 = vmatpush.bf16.msra.mxu0 %v2522
    %4329 = vmatpush.bf16.msra.mxu0 %v2520
    %4330 = vmatpush.bf16.msra.mxu0 %v2518
    %4331 = vmatpush.bf16.msra.mxu0 %v2516
    %4332 = vmatpush.bf16.msra.mxu0 %v2514
    %4333 = vmatmul.bf16.gmra.mxu0 %v151
    %v4334 = vpop.f32.mrf.mxu0
    %v4335 = vadd.f32 %v4283, %v4334
    %v4336 = vpop.f32.mrf.mxu0
    %4337 = vdwg.mxu0
    %4338 = vmatpush.bf16.msra.mxu0 %v2544
    %4339 = vmatpush.bf16.msra.mxu0 %v2542
    %4340 = vmatpush.bf16.msra.mxu0 %v2540
    %4341 = vmatpush.bf16.msra.mxu0 %v2538
    %4342 = vmatpush.bf16.msra.mxu0 %v2536
    %4343 = vmatpush.bf16.msra.mxu0 %v2534
    %4344 = vmatpush.bf16.msra.mxu0 %v2532
    %4345 = vmatpush.bf16.msra.mxu0 %v2530
    %4346 = vmatmul.bf16.gmra.mxu0 %v152
    %v4347 = vpop.f32.mrf.mxu0
    %v4348 = vadd.f32 %v4335, %v4347
    %v4349 = vpop.f32.mrf.mxu0
    %4350 = vdwg.mxu0
    %4351 = vmatpush.bf16.msra.mxu0 %v2560
    %4352 = vmatpush.bf16.msra.mxu0 %v2558
    %4353 = vmatpush.bf16.msra.mxu0 %v2556
    %4354 = vmatpush.bf16.msra.mxu0 %v2554
    %4355 = vmatpush.bf16.msra.mxu0 %v2552
    %4356 = vmatpush.bf16.msra.mxu0 %v2550
    %4357 = vmatpush.bf16.msra.mxu0 %v2548
    %4358 = vmatpush.bf16.msra.mxu0 %v2546
    %4359 = vmatmul.bf16.gmra.mxu0 %v153
    %v4360 = vpop.f32.mrf.mxu0
    %v4361 = vadd.f32 %v4348, %v4360
    %v4362 = vpop.f32.mrf.mxu0
    %4363 = vdwg.mxu0
    %4364 = vmatpush.bf16.msra.mxu0 %v2894
    %4365 = vmatpush.bf16.msra.mxu0 %v2892
    %4366 = vmatpush.bf16.msra.mxu0 %v2890
    %4367 = vmatpush.bf16.msra.mxu0 %v2888
    %4368 = vmatpush.bf16.msra.mxu0 %v2886
    %4369 = vmatpush.bf16.msra.mxu0 %v2884
    %4370 = vmatpush.bf16.msra.mxu0 %v2882
    %4371 = vmatpush.bf16.msra.mxu0 %v2880
    %4372 = vmatmul.bf16.gmra.mxu0 %v1244
    %v4373 = vpop.f32.mrf.mxu0
    %v4374 = vadd.f32 0.0, %v4373
    %v4375 = vpop.f32.mrf.mxu0
    %4376 = vdwg.mxu0
    %4377 = vmatpush.bf16.msra.mxu0 %v2910
    %4378 = vmatpush.bf16.msra.mxu0 %v2908
    %4379 = vmatpush.bf16.msra.mxu0 %v2906
    %4380 = vmatpush.bf16.msra.mxu0 %v2904
    %4381 = vmatpush.bf16.msra.mxu0 %v2902
    %4382 = vmatpush.bf16.msra.mxu0 %v2900
    %4383 = vmatpush.bf16.msra.mxu0 %v2898
    %4384 = vmatpush.bf16.msra.mxu0 %v2896
    %4385 = vmatmul.bf16.gmra.mxu0 %v1245
    %v4386 = vpop.f32.mrf.mxu0
    %v4387 = vadd.f32 %v4374, %v4386
    %v4388 = vpop.f32.mrf.mxu0
    %4389 = vdwg.mxu0
    %4390 = vmatpush.bf16.msra.mxu0 %v2926
    %4391 = vmatpush.bf16.msra.mxu0 %v2924
    %4392 = vmatpush.bf16.msra.mxu0 %v2922
    %4393 = vmatpush.bf16.msra.mxu0 %v2920
    %4394 = vmatpush.bf16.msra.mxu0 %v2918
    %4395 = vmatpush.bf16.msra.mxu0 %v2916
    %4396 = vmatpush.bf16.msra.mxu0 %v2914
    %4397 = vmatpush.bf16.msra.mxu0 %v2912
    %4398 = vmatmul.bf16.gmra.mxu0 %v1246
    %v4399 = vpop.f32.mrf.mxu0
    %v4400 = vadd.f32 %v4387, %v4399
    %v4401 = vpop.f32.mrf.mxu0
    %4402 = vdwg.mxu0
    %4403 = vmatpush.bf16.msra.mxu0 %v2895
    %4404 = vmatpush.bf16.msra.mxu0 %v2893
    %4405 = vmatpush.bf16.msra.mxu0 %v2891
    %4406 = vmatpush.bf16.msra.mxu0 %v2889
    %4407 = vmatpush.bf16.msra.mxu0 %v2887
    %4408 = vmatpush.bf16.msra.mxu0 %v2885
    %4409 = vmatpush.bf16.msra.mxu0 %v2883
    %4410 = vmatpush.bf16.msra.mxu0 %v2881
    %4411 = vmatmul.bf16.gmra.mxu0 %v1244
    %v4412 = vpop.f32.mrf.mxu0
    %v4413 = vadd.f32 0.0, %v4412
    %v4414 = vpop.f32.mrf.mxu0
    %4415 = vdwg.mxu0
    %4416 = vmatpush.bf16.msra.mxu0 %v2911
    %4417 = vmatpush.bf16.msra.mxu0 %v2909
    %4418 = vmatpush.bf16.msra.mxu0 %v2907
    %4419 = vmatpush.bf16.msra.mxu0 %v2905
    %4420 = vmatpush.bf16.msra.mxu0 %v2903
    %4421 = vmatpush.bf16.msra.mxu0 %v2901
    %4422 = vmatpush.bf16.msra.mxu0 %v2899
    %4423 = vmatpush.bf16.msra.mxu0 %v2897
    %4424 = vmatmul.bf16.gmra.mxu0 %v1245
    %v4425 = vpop.f32.mrf.mxu0
    %v4426 = vadd.f32 %v4413, %v4425
    %v4427 = vpop.f32.mrf.mxu0
    %4428 = vdwg.mxu0
    %4429 = vmatpush.bf16.msra.mxu0 %v2927
    %4430 = vmatpush.bf16.msra.mxu0 %v2925
    %4431 = vmatpush.bf16.msra.mxu0 %v2923
    %4432 = vmatpush.bf16.msra.mxu0 %v2921
    %4433 = vmatpush.bf16.msra.mxu0 %v2919
    %4434 = vmatpush.bf16.msra.mxu0 %v2917
    %4435 = vmatpush.bf16.msra.mxu0 %v2915
    %4436 = vmatpush.bf16.msra.mxu0 %v2913
    %4437 = vmatmul.bf16.gmra.mxu0 %v1246
    %v4438 = vpop.f32.mrf.mxu0
    %v4439 = vadd.f32 %v4426, %v4438
    %v4440 = vpop.f32.mrf.mxu0
    %4441 = vdwg.mxu0
    %v4442 = vadd.f32 %v4322, %v4400
    %v4443 = vadd.f32 %v4361, %v4439
    %4444 = vmatpush.bf16.msra.mxu0 %v3263
    %4445 = vmatpush.bf16.msra.mxu0 %v3261
    %4446 = vmatpush.bf16.msra.mxu0 %v3259
    %4447 = vmatpush.bf16.msra.mxu0 %v3257
    %4448 = vmatpush.bf16.msra.mxu0 %v3255
    %4449 = vmatpush.bf16.msra.mxu0 %v3253
    %4450 = vmatpush.bf16.msra.mxu0 %v3251
    %4451 = vmatpush.bf16.msra.mxu0 %v3249
    %4452 = vmatmul.bf16.gmra.mxu0 %v1627
    %v4453 = vpop.f32.mrf.mxu0
    %v4454 = vadd.f32 0.0, %v4453
    %v4455 = vpop.f32.mrf.mxu0
    %4456 = vdwg.mxu0
    %4457 = vmatpush.bf16.msra.mxu0 %v3279
    %4458 = vmatpush.bf16.msra.mxu0 %v3277
    %4459 = vmatpush.bf16.msra.mxu0 %v3275
    %4460 = vmatpush.bf16.msra.mxu0 %v3273
    %4461 = vmatpush.bf16.msra.mxu0 %v3271
    %4462 = vmatpush.bf16.msra.mxu0 %v3269
    %4463 = vmatpush.bf16.msra.mxu0 %v3267
    %4464 = vmatpush.bf16.msra.mxu0 %v3265
    %4465 = vmatmul.bf16.gmra.mxu0 %v1628
    %v4466 = vpop.f32.mrf.mxu0
    %v4467 = vadd.f32 %v4454, %v4466
    %v4468 = vpop.f32.mrf.mxu0
    %4469 = vdwg.mxu0
    %4470 = vmatpush.bf16.msra.mxu0 %v3295
    %4471 = vmatpush.bf16.msra.mxu0 %v3293
    %4472 = vmatpush.bf16.msra.mxu0 %v3291
    %4473 = vmatpush.bf16.msra.mxu0 %v3289
    %4474 = vmatpush.bf16.msra.mxu0 %v3287
    %4475 = vmatpush.bf16.msra.mxu0 %v3285
    %4476 = vmatpush.bf16.msra.mxu0 %v3283
    %4477 = vmatpush.bf16.msra.mxu0 %v3281
    %4478 = vmatmul.bf16.gmra.mxu0 %v1629
    %v4479 = vpop.f32.mrf.mxu0
    %v4480 = vadd.f32 %v4467, %v4479
    %v4481 = vpop.f32.mrf.mxu0
    %4482 = vdwg.mxu0
    %4483 = vmatpush.bf16.msra.mxu0 %v3264
    %4484 = vmatpush.bf16.msra.mxu0 %v3262
    %4485 = vmatpush.bf16.msra.mxu0 %v3260
    %4486 = vmatpush.bf16.msra.mxu0 %v3258
    %4487 = vmatpush.bf16.msra.mxu0 %v3256
    %4488 = vmatpush.bf16.msra.mxu0 %v3254
    %4489 = vmatpush.bf16.msra.mxu0 %v3252
    %4490 = vmatpush.bf16.msra.mxu0 %v3250
    %4491 = vmatmul.bf16.gmra.mxu0 %v1627
    %v4492 = vpop.f32.mrf.mxu0
    %v4493 = vadd.f32 0.0, %v4492
    %v4494 = vpop.f32.mrf.mxu0
    %4495 = vdwg.mxu0
    %4496 = vmatpush.bf16.msra.mxu0 %v3280
    %4497 = vmatpush.bf16.msra.mxu0 %v3278
    %4498 = vmatpush.bf16.msra.mxu0 %v3276
    %4499 = vmatpush.bf16.msra.mxu0 %v3274
    %4500 = vmatpush.bf16.msra.mxu0 %v3272
    %4501 = vmatpush.bf16.msra.mxu0 %v3270
    %4502 = vmatpush.bf16.msra.mxu0 %v3268
    %4503 = vmatpush.bf16.msra.mxu0 %v3266
    %4504 = vmatmul.bf16.gmra.mxu0 %v1628
    %v4505 = vpop.f32.mrf.mxu0
    %v4506 = vadd.f32 %v4493, %v4505
    %v4507 = vpop.f32.mrf.mxu0
    %4508 = vdwg.mxu0
    %4509 = vmatpush.bf16.msra.mxu0 %v3296
    %4510 = vmatpush.bf16.msra.mxu0 %v3294
    %4511 = vmatpush.bf16.msra.mxu0 %v3292
    %4512 = vmatpush.bf16.msra.mxu0 %v3290
    %4513 = vmatpush.bf16.msra.mxu0 %v3288
    %4514 = vmatpush.bf16.msra.mxu0 %v3286
    %4515 = vmatpush.bf16.msra.mxu0 %v3284
    %4516 = vmatpush.bf16.msra.mxu0 %v3282
    %4517 = vmatmul.bf16.gmra.mxu0 %v1629
    %v4518 = vpop.f32.mrf.mxu0
    %v4519 = vadd.f32 %v4506, %v4518
    %v4520 = vpop.f32.mrf.mxu0
    %4521 = vdwg.mxu0
    %v4522 = vadd.f32 %v4442, %v4480
    %v4523 = vadd.f32 %v4443, %v4519
    %4524 = vmatpush.bf16.msra.mxu0 %v3632
    %4525 = vmatpush.bf16.msra.mxu0 %v3630
    %4526 = vmatpush.bf16.msra.mxu0 %v3628
    %4527 = vmatpush.bf16.msra.mxu0 %v3626
    %4528 = vmatpush.bf16.msra.mxu0 %v3624
    %4529 = vmatpush.bf16.msra.mxu0 %v3622
    %4530 = vmatpush.bf16.msra.mxu0 %v3620
    %4531 = vmatpush.bf16.msra.mxu0 %v3618
    %4532 = vmatmul.bf16.gmra.mxu0 %v4120
    %v4533 = vpop.f32.mrf.mxu0
    %v4534 = vadd.f32 0.0, %v4533
    %v4535 = vpop.f32.mrf.mxu0
    %4536 = vdwg.mxu0
    %4537 = vmatpush.bf16.msra.mxu0 %v3648
    %4538 = vmatpush.bf16.msra.mxu0 %v3646
    %4539 = vmatpush.bf16.msra.mxu0 %v3644
    %4540 = vmatpush.bf16.msra.mxu0 %v3642
    %4541 = vmatpush.bf16.msra.mxu0 %v3640
    %4542 = vmatpush.bf16.msra.mxu0 %v3638
    %4543 = vmatpush.bf16.msra.mxu0 %v3636
    %4544 = vmatpush.bf16.msra.mxu0 %v3634
    %4545 = vmatmul.bf16.gmra.mxu0 %v4121
    %v4546 = vpop.f32.mrf.mxu0
    %v4547 = vadd.f32 %v4534, %v4546
    %v4548 = vpop.f32.mrf.mxu0
    %4549 = vdwg.mxu0
    %4550 = vmatpush.bf16.msra.mxu0 %v3664
    %4551 = vmatpush.bf16.msra.mxu0 %v3662
    %4552 = vmatpush.bf16.msra.mxu0 %v3660
    %4553 = vmatpush.bf16.msra.mxu0 %v3658
    %4554 = vmatpush.bf16.msra.mxu0 %v3656
    %4555 = vmatpush.bf16.msra.mxu0 %v3654
    %4556 = vmatpush.bf16.msra.mxu0 %v3652
    %4557 = vmatpush.bf16.msra.mxu0 %v3650
    %4558 = vmatmul.bf16.gmra.mxu0 %v4122
    %v4559 = vpop.f32.mrf.mxu0
    %v4560 = vadd.f32 %v4547, %v4559
    %v4561 = vpop.f32.mrf.mxu0
    %4562 = vdwg.mxu0
    %4563 = vmatpush.bf16.msra.mxu0 %v3633
    %4564 = vmatpush.bf16.msra.mxu0 %v3631
    %4565 = vmatpush.bf16.msra.mxu0 %v3629
    %4566 = vmatpush.bf16.msra.mxu0 %v3627
    %4567 = vmatpush.bf16.msra.mxu0 %v3625
    %4568 = vmatpush.bf16.msra.mxu0 %v3623
    %4569 = vmatpush.bf16.msra.mxu0 %v3621
    %4570 = vmatpush.bf16.msra.mxu0 %v3619
    %4571 = vmatmul.bf16.gmra.mxu0 %v4120
    %v4572 = vpop.f32.mrf.mxu0
    %v4573 = vadd.f32 0.0, %v4572
    %v4574 = vpop.f32.mrf.mxu0
    %4575 = vdwg.mxu0
    %4576 = vmatpush.bf16.msra.mxu0 %v3649
    %4577 = vmatpush.bf16.msra.mxu0 %v3647
    %4578 = vmatpush.bf16.msra.mxu0 %v3645
    %4579 = vmatpush.bf16.msra.mxu0 %v3643
    %4580 = vmatpush.bf16.msra.mxu0 %v3641
    %4581 = vmatpush.bf16.msra.mxu0 %v3639
    %4582 = vmatpush.bf16.msra.mxu0 %v3637
    %4583 = vmatpush.bf16.msra.mxu0 %v3635
    %4584 = vmatmul.bf16.gmra.mxu0 %v4121
    %v4585 = vpop.f32.mrf.mxu0
    %v4586 = vadd.f32 %v4573, %v4585
    %v4587 = vpop.f32.mrf.mxu0
    %4588 = vdwg.mxu0
    %4589 = vmatpush.bf16.msra.mxu0 %v3665
    %4590 = vmatpush.bf16.msra.mxu0 %v3663
    %4591 = vmatpush.bf16.msra.mxu0 %v3661
    %4592 = vmatpush.bf16.msra.mxu0 %v3659
    %4593 = vmatpush.bf16.msra.mxu0 %v3657
    %4594 = vmatpush.bf16.msra.mxu0 %v3655
    %4595 = vmatpush.bf16.msra.mxu0 %v3653
    %4596 = vmatpush.bf16.msra.mxu0 %v3651
    %4597 = vmatmul.bf16.gmra.mxu0 %v4122
    %v4598 = vpop.f32.mrf.mxu0
    %v4599 = vadd.f32 %v4586, %v4598
    %v4600 = vpop.f32.mrf.mxu0
    %4601 = vdwg.mxu0
    %v4602 = vadd.f32 %v4522, %v4560
    %v4603 = vadd.f32 %v4523, %v4599
    %v4604 = vmax.f32 %v4206, %v4602
    %v4605 = vmax.f32 %v4207, %v4603
    %v4606 = vld [vmem:[#allocation4] sm:$0x3]
    %v4608 = vperm.slane %v4606, 0
    %v4609 = vperm.slane %v4606, 1
    %v4612 = vadd.f32 %v4604, %v4608
    %v4613 = vadd.f32 %v4605, %v4609
    %v4614 = vmax.f32 %v4612, 0.0
    %v4615 = vmax.f32 %v4613, 0.0
    %v4616 = vpack.c.bf16 %v4615, %v4614
    %4617 = vst [vmem:[%s3] sm:$0xff] %v4616
    // Predicated region
    $region22: #{mynet_forward.4} parent=1 // pred_check
      _
    $region23: #{mynet_forward.4} parent=1 // pred_check_branch
      %4619 = sbr.rel (0) target = $region25
    $region24: #{mynet_forward.4} parent=1 // pred_region
      _
    $region25: #{mynet_forward.4} parent=1 // pred_fallthru
      _
    // Predicated region
    $region26: #{mynet_forward.4} parent=1 // pred_check
      _
    $region27: #{mynet_forward.4} parent=1 // pred_check_branch
      %4621 = sbr.rel (0) target = $region29
    $region28: #{mynet_forward.4} parent=1 // pred_region
      _
    $region29: #{mynet_forward.4} parent=1 // pred_fallthru
      _
    %4622 = vsyncpa [#allocation3], 1
    %4623 = vsyncpa [#allocation5], 1

</llo_original>
